<compile_context>
chip_gen: v7x
topology: tpu7x:2x2x1
jax: 0.10.0
libtpu: 0.0.40
codegen_flags: <defaults>
</compile_context>

<pallas_src>
import functools

import jax
import jax.numpy as jnp
import numpy as np
from jax.experimental import pallas as pl
from jax.experimental.pallas import tpu as pltpu

# Highway block hyper-params (from the module defaults).
K_SZS = (2, 2, 2, 2, 2, 1, 1)
DILS = (1, 2, 4, 8, 16, 1, 1)
N_HW = len(K_SZS)
N_QLOG = 41          # qlog_classifier output channels
OUT_PAD = 128        # lane-dense padded output width (41 qlog + 1 skip + pad)
LANE = 128


# ----------------------------- kernel helpers ------------------------------
def _relu(x):
    return jnp.maximum(x, 0.0)


def _mm(x, w_bf16):
    # bf16 x bf16 matmul on the MXU, f32 accumulation.
    return jnp.dot(x.astype(jnp.bfloat16), w_bf16,
                   preferred_element_type=jnp.float32)


def _highway_stack(x, w_ref, b_ref, masks, seq_len):
    """x: (M, C) f32; w_ref: (N_HW, 2C, 2C) bf16 (rows [0:C]=current tap,
    rows [C:2C]=previous tap); b_ref: (N_HW, 1, 2C) f32; masks: {dil: (M,1) bf16}."""
    M, C = x.shape
    for li, (k, dil) in enumerate(zip(K_SZS, DILS)):
        w_full = w_ref[li]                  # (2C, 2C) bf16
        b = b_ref[li]                       # (1, 2C)  f32
        x_bf = x.astype(jnp.bfloat16)       # one cast per layer for the MXU
        if k == 2 and dil < seq_len:
            # Causal previous tap: roll rows toward higher indices by `dil`
            # (XLU sublane rotate, no slice/concat copy), then zero the first
            # `dil` rows of *every* sample with the hoisted per-dilation mask,
            # so neither the wrapped rows nor cross-sample rows leak.
            x_prev = (pltpu.roll(x, shift=dil, axis=0)
                      .astype(jnp.bfloat16) * masks[dil])
            xin = jnp.concatenate([x_bf, x_prev], axis=-1)   # (M, 2C) bf16
            w = w_full                                       # fused 2C-deep matmul
        else:
            # k == 1, or dilation >= per-sample length (previous tap all zero).
            xin = x_bf
            w = w_full[:C, :]
        y = jnp.dot(xin, w, preferred_element_type=jnp.float32) + b   # (M, 2C)
        h1 = y[:, :C]
        h2 = y[:, C:]
        gate = jax.nn.sigmoid(h1)
        x = x + gate * (h2 - x)
    return x


# --------------------------------- kernel ----------------------------------
def seqmodel_kernel(
    seq_len,
    x_ref,
    # enc.mlp
    enc_w1, enc_b1, enc_w2, enc_b2,
    # enc.h_block (pre-stacked per layer)
    enc_hw_w, enc_hw_b,
    # clf.front_1x1
    fr_w, fr_b,
    # clf.h_block
    clf_hw_w, clf_hw_b,
    # clf.last_1x1
    l1_w, l1_b, l2_w, l2_b,
    # clf.classifier first conv (second conv is folded into h1_w/h1_b)
    c1_w, c1_b,
    # merged qlog/skip heads (head1 has c2 folded in)
    h1_w, h1_b, h2_w, h2_b,
    # output (lane-dense, 128 wide)
    out_ref,
):
    M = x_ref.shape[0]
    # time index within each sample of the flattened slab
    t_idx = jax.lax.broadcasted_iota(jnp.int32, (M, 1), 0) % seq_len

    # Hoisted per-dilation causal masks (bf16 0/1), shared by both highway
    # stacks (computed once instead of per layer).
    masks = {}
    for dil in sorted({d for kk, d in zip(K_SZS, DILS) if kk == 2 and d < seq_len}):
        masks[dil] = (t_idx >= dil).astype(jnp.bfloat16)

    x = x_ref[...]                                        # (M, in_pad) f32

    # ---- enc: SeqFeatEnc ----
    h = _relu(_mm(x, enc_w1[...]) + enc_b1[...])          # (M, e_ch)
    h = _mm(h, enc_w2[...]) + enc_b2[...]                 # (M, d_ch)
    h = _highway_stack(h, enc_hw_w, enc_hw_b, masks, seq_len)

    # ---- clf: SeqClassifier ----
    h = _mm(h, fr_w[...]) + fr_b[...]                     # (M, e_ch)
    h = _highway_stack(h, clf_hw_w, clf_hw_b, masks, seq_len)
    h = _relu(_mm(h, l1_w[...]) + l1_b[...])
    h = _relu(_mm(h, l2_w[...]) + l2_b[...])
    h = _relu(_mm(h, c1_w[...]) + c1_b[...])
    # clf.classifier's second conv (c2) + .squeeze(1) no-op are folded into
    # h1_w / h1_b (pure algebra, done once in prepare_params).

    # ---- heads (merged, single lane-dense output) ----
    hh = _relu(_mm(h, h1_w[...]) + h1_b[...])             # (M, 2*e_ch)
    out = _mm(hh, h2_w[...]) + h2_b[...]                  # (M, OUT_PAD)
    out_ref[...] = out.astype(out_ref.dtype)


# ------------------------- parameter preprocessing --------------------------
def prepare_params(raw):
    """Stack/fuse/cast the raw (PyTorch-like) params for the kernel.

    Run ONCE at model-load time (not on every forward)."""
    (enc_w1, enc_b1, enc_w2, enc_b2, enc_hwp, enc_hwc, enc_hb,
     fr_w, fr_b, clf_hwp, clf_hwc, clf_hb,
     l1_w, l1_b, l2_w, l2_b, c1_w, c1_b, c2_w, c2_b,
     q1_w, q1_b, q2_w, q2_b, s1_w, s1_b, s2_w, s2_b) = raw

    bf = lambda a: a.astype(jnp.bfloat16)

    def hw_stack(wp, wc):
        # (N_HW, 2C, 2C): rows [0:C] = current tap, rows [C:2C] = previous tap
        return bf(jnp.concatenate([wc, wp], axis=1))

    e_ch = q1_w.shape[0]
    in_dim = enc_w1.shape[0]
    in_pad = ((in_dim + LANE - 1) // LANE) * LANE

    # Lane-pad enc_w1's contraction rows so the lane-padded input slab
    # contracts exactly (padding rows are zero).
    enc_w1_p = jnp.zeros((in_pad, enc_w1.shape[1]), jnp.float32)
    enc_w1_p = enc_w1_p.at[:in_dim].set(enc_w1)

    # Merged first head layer: h -> [qlog_hidden | skip_hidden], with
    # clf.classifier's c2 conv folded in (no nonlinearity between c2 and the
    # heads' first conv).  Products kept in f32, cast to bf16 exactly once.
    head1_w_raw = jnp.concatenate([q1_w, s1_w], axis=1)            # (e, 2e)
    head1_b_raw = jnp.concatenate([q1_b, s1_b], axis=1)            # (1, 2e)
    head1_w = bf(jnp.dot(c2_w, head1_w_raw,
                         precision=jax.lax.Precision.HIGHEST))     # (e, 2e)
    head1_b = jnp.dot(c2_b, head1_w_raw,
                      precision=jax.lax.Precision.HIGHEST) + head1_b_raw

    # Merged second head layer: block-diagonal, padded to 128 lanes.
    head2_w = jnp.zeros((2 * e_ch, OUT_PAD), jnp.float32)
    head2_w = head2_w.at[:e_ch, :N_QLOG].set(q2_w)
    head2_w = head2_w.at[e_ch:, N_QLOG:N_QLOG + 1].set(s2_w)
    head2_b = jnp.zeros((1, OUT_PAD), jnp.float32)
    head2_b = head2_b.at[:, :N_QLOG].set(q2_b)
    head2_b = head2_b.at[:, N_QLOG:N_QLOG + 1].set(s2_b)

    return (
        bf(enc_w1_p), enc_b1, bf(enc_w2), enc_b2,
        hw_stack(enc_hwp, enc_hwc), enc_hb,
        bf(fr_w), fr_b,
        hw_stack(clf_hwp, clf_hwc), clf_hb,
        bf(l1_w), l1_b, bf(l2_w), l2_b,
        bf(c1_w), c1_b,
        head1_w, head1_b, bf(head2_w), head2_b,
    )


# -------------------------------- wrapper -----------------------------------
def _pick_b_blk(B, T, max_rows=2048):
    """Largest divisor of B with b_blk*T <= max_rows and (b_blk*T) % 8 == 0
    (sublane alignment); prefer an even grid length >= 2 (v7x: two TensorCores)
    as long as it costs at most 2x in block size."""
    divs = [d for d in range(1, B + 1)
            if B % d == 0 and d * T <= max_rows
            and ((d * T) % 8 == 0 or d == B)]
    if not divs:
        return B          # single full-array block
    best = max(divs)
    even = [d for d in divs if (B // d) >= 2 and (B // d) % 2 == 0]
    if even and max(even) * 2 >= best:
        best = max(even)
    return best


def seqmodel_forward(x_btc, params, *, b_blk=None):
    """x_btc: (B, T, input_dim) f32; params: output of prepare_params.
    Returns (x_qlog (B, 41, T), x_skip (B, T)) matching the PyTorch module."""
    B, T, in_dim = x_btc.shape
    in_pad = ((in_dim + LANE - 1) // LANE) * LANE

    if b_blk is None:
        b_blk = _pick_b_blk(B, T)
    assert B % b_blk == 0, "b_blk must divide B"
    M = b_blk * T
    grid = (B // b_blk,)

    x_flat = x_btc.reshape(B * T, in_dim)
    if in_pad != in_dim:
        x_flat = jnp.pad(x_flat, ((0, 0), (0, in_pad - in_dim)))

    in_specs = [pl.BlockSpec((M, in_pad), lambda g: (g, 0))]
    for p in params:
        nd = p.ndim
        in_specs.append(pl.BlockSpec(p.shape, (lambda g, nd=nd: (0,) * nd)))

    out_flat = pl.pallas_call(
        functools.partial(seqmodel_kernel, T),
        grid=grid,
        in_specs=in_specs,
        out_specs=pl.BlockSpec((M, OUT_PAD), lambda g: (g, 0)),
        out_shape=jax.ShapeDtypeStruct((B * T, OUT_PAD), jnp.float32),
        compiler_params=pltpu.CompilerParams(
            dimension_semantics=("parallel",),
            vmem_limit_bytes=48 * 1024 * 1024),
    )(x_flat, *params)

    out = out_flat.reshape(B, T, OUT_PAD)
    # Match PyTorch output conventions: x_qlog is NCT (B, 41, T); x_skip is (B, T).
    x_qlog = jnp.transpose(out[..., :N_QLOG], (0, 2, 1))
    x_skip = out[..., N_QLOG]
    return x_qlog, x_skip


# ------------------------- parameter initialization -------------------------
def init_params(key, input_dim, e_ch, d_ch):
    keys = iter(jax.random.split(key, 64))

    def w(shape, scale=0.1):
        return scale * jax.random.normal(next(keys), shape, dtype=jnp.float32)

    def b(c):
        return 0.01 * jax.random.normal(next(keys), (1, c), dtype=jnp.float32)

    def hw_stack(ch):
        wp = w((N_HW, ch, 2 * ch))
        wc = w((N_HW, ch, 2 * ch))
        bb = 0.01 * jax.random.normal(next(keys), (N_HW, 1, 2 * ch), dtype=jnp.float32)
        return wp, wc, bb

    params = []
    # enc.mlp
    params += [w((input_dim, e_ch)), b(e_ch), w((e_ch, d_ch)), b(d_ch)]
    # enc.h_block
    params += list(hw_stack(d_ch))
    # clf.front_1x1
    params += [w((d_ch, e_ch)), b(e_ch)]
    # clf.h_block
    params += list(hw_stack(e_ch))
    # clf.last_1x1
    params += [w((e_ch, e_ch)), b(e_ch), w((e_ch, e_ch)), b(e_ch)]
    # clf.classifier
    params += [w((e_ch, e_ch)), b(e_ch), w((e_ch, e_ch)), b(e_ch)]
    # qlog_classifier
    params += [w((e_ch, e_ch)), b(e_ch), w((e_ch, N_QLOG)), b(N_QLOG)]
    # skip_classifier
    params += [w((e_ch, e_ch)), b(e_ch), w((e_ch, 1)), b(1)]
    return params


# --------------------------- pure-JAX reference ------------------------------
# Same math as the PyTorch module (unfused / unfolded), with matmul inputs
# rounded to bf16 like the kernel (f32 accumulation).
def reference_forward(x_btc, raw_params):
    (enc_w1, enc_b1, enc_w2, enc_b2, enc_hwp, enc_hwc, enc_hb,
     fr_w, fr_b, clf_hwp, clf_hwc, clf_hb,
     l1_w, l1_b, l2_w, l2_b, c1_w, c1_b, c2_w, c2_b,
     q1_w, q1_b, q2_w, q2_b, s1_w, s1_b, s2_w, s2_b) = raw_params

    def dot(a, w):
        return jnp.dot(a.astype(jnp.bfloat16), w.astype(jnp.bfloat16),
                       preferred_element_type=jnp.float32)

    def hw(x, wp, wc, bb):
        T, C = x.shape
        for li, (k, dil) in enumerate(zip(K_SZS, DILS)):
            y = dot(x, wc[li]) + bb[li]
            if k == 2 and dil < T:
                x_prev = jnp.concatenate(
                    [jnp.zeros((dil, C), jnp.float32), x[: T - dil]], axis=0)
                y = y + dot(x_prev, wp[li])
            h1, h2 = y[:, :C], y[:, C:]
            g = jax.nn.sigmoid(h1)
            x = g * h2 + (1.0 - g) * x
        return x

    def single(x):
        h = jnp.maximum(dot(x, enc_w1) + enc_b1, 0.0)
        h = dot(h, enc_w2) + enc_b2
        h = hw(h, enc_hwp, enc_hwc, enc_hb)
        h = dot(h, fr_w) + fr_b
        h = hw(h, clf_hwp, clf_hwc, clf_hb)
        h = jnp.maximum(dot(h, l1_w) + l1_b, 0.0)
        h = jnp.maximum(dot(h, l2_w) + l2_b, 0.0)
        h = jnp.maximum(dot(h, c1_w) + c1_b, 0.0)
        h = dot(h, c2_w) + c2_b
        q = dot(jnp.maximum(dot(h, q1_w) + q1_b, 0.0), q2_w) + q2_b
        s = dot(jnp.maximum(dot(h, s1_w) + s1_b, 0.0), s2_w) + s2_b
        return q, s[:, 0]

    q, s = jax.vmap(single)(x_btc)
    return jnp.transpose(q, (0, 2, 1)), s


# ----------------------------------- main ------------------------------------
if __name__ == "__main__":
    # Small shapes consistent with the module (real model: input_dim=72/31,
    # e_ch=d_ch=128, T~20 sessions).
    B, T, INPUT_DIM, E_CH, D_CH = 8, 32, 16, 32, 32

    key = jax.random.PRNGKey(0)
    k_x, k_p = jax.random.split(key)
    # Kernel input layout (B, T, C); PyTorch equivalent would be (B, C, T).
    x = jax.random.normal(k_x, (B, T, INPUT_DIM), dtype=jnp.float32)
    raw_params = init_params(k_p, INPUT_DIM, E_CH, D_CH)

    # One-time parameter preparation (stacking / folding / bf16 casts) outside
    # the per-call path; the forward itself is jitted.
    params = jax.block_until_ready(prepare_params(raw_params))
    fwd = jax.jit(seqmodel_forward)

    x_qlog, x_skip = fwd(x, params)
    x_qlog = jax.block_until_ready(x_qlog)
    x_skip = jax.block_until_ready(x_skip)

    assert x_qlog.shape == (B, N_QLOG, T)
    assert x_skip.shape == (B, T)

    # Sanity check against a pure-JAX reference of the module math.  Tolerance
    # is slightly looser than before because the kernel folds c2 into the head
    # matmul (algebraically exact; bf16 rounding order differs).
    ref_qlog, ref_skip = reference_forward(x, raw_params)
    np.testing.assert_allclose(np.asarray(x_qlog), np.asarray(ref_qlog),
                               rtol=2e-2, atol=2e-2)
    np.testing.assert_allclose(np.asarray(x_skip), np.asarray(ref_skip),
                               rtol=2e-2, atol=2e-2)

    print("KERNEL_OK")
</pallas_src>

<mosaic_0001>
module attributes {stable_mosaic.version = 11 : i64} {
  func.func @seqmodel_kernel(%arg0: i32, %arg1: memref<128x128xf32, #tpu.memory_space<vmem>>, %arg2: memref<128x32xbf16, #tpu.memory_space<vmem>>, %arg3: memref<1x32xf32, #tpu.memory_space<vmem>>, %arg4: memref<32x32xbf16, #tpu.memory_space<vmem>>, %arg5: memref<1x32xf32, #tpu.memory_space<vmem>>, %arg6: memref<7x64x64xbf16, #tpu.memory_space<vmem>>, %arg7: memref<7x1x64xf32, #tpu.memory_space<vmem>>, %arg8: memref<32x32xbf16, #tpu.memory_space<vmem>>, %arg9: memref<1x32xf32, #tpu.memory_space<vmem>>, %arg10: memref<7x64x64xbf16, #tpu.memory_space<vmem>>, %arg11: memref<7x1x64xf32, #tpu.memory_space<vmem>>, %arg12: memref<32x32xbf16, #tpu.memory_space<vmem>>, %arg13: memref<1x32xf32, #tpu.memory_space<vmem>>, %arg14: memref<32x32xbf16, #tpu.memory_space<vmem>>, %arg15: memref<1x32xf32, #tpu.memory_space<vmem>>, %arg16: memref<32x32xbf16, #tpu.memory_space<vmem>>, %arg17: memref<1x32xf32, #tpu.memory_space<vmem>>, %arg18: memref<32x64xbf16, #tpu.memory_space<vmem>>, %arg19: memref<1x64xf32, #tpu.memory_space<vmem>>, %arg20: memref<64x128xbf16, #tpu.memory_space<vmem>>, %arg21: memref<1x128xf32, #tpu.memory_space<vmem>>, %arg22: memref<128x128xf32, #tpu.memory_space<vmem>>) attributes {dimension_semantics = [#tpu.dimension_semantics<parallel>], iteration_bounds = array<i64: 2>, scalar_prefetch = 0 : i64, scratch_operands = 0 : i64, tpu.core_type = #tpu.core_type<tc>, window_params = [{transform_indices = @transform_0, window_bounds = array<i64: 128, 128>}, {pipeline_mode = #tpu.pipeline_mode<synchronous>, transform_indices = @transform_1, window_bounds = array<i64: 128, 32>}, {pipeline_mode = #tpu.pipeline_mode<synchronous>, transform_indices = @transform_2, window_bounds = array<i64: 1, 32>}, {pipeline_mode = #tpu.pipeline_mode<synchronous>, transform_indices = @transform_3, window_bounds = array<i64: 32, 32>}, {pipeline_mode = #tpu.pipeline_mode<synchronous>, transform_indices = @transform_4, window_bounds = array<i64: 1, 32>}, {pipeline_mode = #tpu.pipeline_mode<synchronous>, transform_indices = @transform_5, window_bounds = array<i64: 7, 64, 64>}, {pipeline_mode = #tpu.pipeline_mode<synchronous>, transform_indices = @transform_6, window_bounds = array<i64: 7, 1, 64>}, {pipeline_mode = #tpu.pipeline_mode<synchronous>, transform_indices = @transform_7, window_bounds = array<i64: 32, 32>}, {pipeline_mode = #tpu.pipeline_mode<synchronous>, transform_indices = @transform_8, window_bounds = array<i64: 1, 32>}, {pipeline_mode = #tpu.pipeline_mode<synchronous>, transform_indices = @transform_9, window_bounds = array<i64: 7, 64, 64>}, {pipeline_mode = #tpu.pipeline_mode<synchronous>, transform_indices = @transform_10, window_bounds = array<i64: 7, 1, 64>}, {pipeline_mode = #tpu.pipeline_mode<synchronous>, transform_indices = @transform_11, window_bounds = array<i64: 32, 32>}, {pipeline_mode = #tpu.pipeline_mode<synchronous>, transform_indices = @transform_12, window_bounds = array<i64: 1, 32>}, {pipeline_mode = #tpu.pipeline_mode<synchronous>, transform_indices = @transform_13, window_bounds = array<i64: 32, 32>}, {pipeline_mode = #tpu.pipeline_mode<synchronous>, transform_indices = @transform_14, window_bounds = array<i64: 1, 32>}, {pipeline_mode = #tpu.pipeline_mode<synchronous>, transform_indices = @transform_15, window_bounds = array<i64: 32, 32>}, {pipeline_mode = #tpu.pipeline_mode<synchronous>, transform_indices = @transform_16, window_bounds = array<i64: 1, 32>}, {pipeline_mode = #tpu.pipeline_mode<synchronous>, transform_indices = @transform_17, window_bounds = array<i64: 32, 64>}, {pipeline_mode = #tpu.pipeline_mode<synchronous>, transform_indices = @transform_18, window_bounds = array<i64: 1, 64>}, {pipeline_mode = #tpu.pipeline_mode<synchronous>, transform_indices = @transform_19, window_bounds = array<i64: 64, 128>}, {pipeline_mode = #tpu.pipeline_mode<synchronous>, transform_indices = @transform_20, window_bounds = array<i64: 1, 128>}, {transform_indices = @transform_21, window_bounds = array<i64: 128, 128>}]} {
    %0 = tpu.iota {dimensions = array<i32: 0>} : vector<128x1xi32>
    %c32_i32 = arith.constant 32 : i32
    %c0_i32 = arith.constant 0 : i32
    %1 = arith.cmpi eq, %c32_i32, %c0_i32 : i32
    %c1_i32 = arith.constant 1 : i32
    %2 = arith.select %1, %c1_i32, %c32_i32 : i32
    %3 = vector.broadcast %2 : i32 to vector<128x1xi32>
    %4 = arith.remsi %0, %3 : vector<128x1xi32>
    %c0_i32_0 = arith.constant 0 : i32
    %5 = vector.broadcast %c0_i32_0 : i32 to vector<128x1xi32>
    %6 = arith.cmpi ne, %4, %5 : vector<128x1xi32>
    %c0_i32_1 = arith.constant 0 : i32
    %7 = vector.broadcast %c0_i32_1 : i32 to vector<128x1xi32>
    %8 = arith.cmpi slt, %4, %7 : vector<128x1xi32>
    %c0_i32_2 = arith.constant 0 : i32
    %9 = arith.cmpi slt, %2, %c0_i32_2 : i32
    %10 = vector.broadcast %9 : i1 to vector<128x1xi1>
    %11 = vector.broadcast %10 : vector<128x1xi1> to vector<128x1xi1>
    %12 = arith.xori %8, %11 : vector<128x1xi1>
    %13 = arith.andi %12, %6 : vector<128x1xi1>
    %14 = vector.broadcast %2 : i32 to vector<128x1xi32>
    %15 = arith.addi %4, %14 : vector<128x1xi32>
    %16 = arith.select %13, %15, %4 : vector<128x1xi1>, vector<128x1xi32>
    %c1_i32_3 = arith.constant 1 : i32
    %17 = vector.broadcast %c1_i32_3 : i32 to vector<128x1xi32>
    %18 = arith.cmpi sge, %16, %17 : vector<128x1xi32>
    %19 = arith.extui %18 : vector<128x1xi1> to vector<128x1xi32>
    %20 = arith.sitofp %19 : vector<128x1xi32> to vector<128x1xf32>
    %21 = arith.truncf %20 : vector<128x1xf32> to vector<128x1xbf16>
    %c2_i32 = arith.constant 2 : i32
    %22 = vector.broadcast %c2_i32 : i32 to vector<128x1xi32>
    %23 = arith.cmpi sge, %16, %22 : vector<128x1xi32>
    %24 = arith.extui %23 : vector<128x1xi1> to vector<128x1xi32>
    %25 = arith.sitofp %24 : vector<128x1xi32> to vector<128x1xf32>
    %26 = arith.truncf %25 : vector<128x1xf32> to vector<128x1xbf16>
    %c4_i32 = arith.constant 4 : i32
    %27 = vector.broadcast %c4_i32 : i32 to vector<128x1xi32>
    %28 = arith.cmpi sge, %16, %27 : vector<128x1xi32>
    %29 = arith.extui %28 : vector<128x1xi1> to vector<128x1xi32>
    %30 = arith.sitofp %29 : vector<128x1xi32> to vector<128x1xf32>
    %31 = arith.truncf %30 : vector<128x1xf32> to vector<128x1xbf16>
    %c8_i32 = arith.constant 8 : i32
    %32 = vector.broadcast %c8_i32 : i32 to vector<128x1xi32>
    %33 = arith.cmpi sge, %16, %32 : vector<128x1xi32>
    %34 = arith.extui %33 : vector<128x1xi1> to vector<128x1xi32>
    %35 = arith.sitofp %34 : vector<128x1xi32> to vector<128x1xf32>
    %36 = arith.truncf %35 : vector<128x1xf32> to vector<128x1xbf16>
    %c16_i32 = arith.constant 16 : i32
    %37 = vector.broadcast %c16_i32 : i32 to vector<128x1xi32>
    %38 = arith.cmpi sge, %16, %37 : vector<128x1xi32>
    %39 = arith.extui %38 : vector<128x1xi1> to vector<128x1xi32>
    %40 = arith.sitofp %39 : vector<128x1xi32> to vector<128x1xf32>
    %41 = arith.truncf %40 : vector<128x1xf32> to vector<128x1xbf16>
    %c0 = arith.constant 0 : index
    %c0_4 = arith.constant 0 : index
    %42 = vector.load %arg1[%c0, %c0_4] : memref<128x128xf32, #tpu.memory_space<vmem>>, vector<128x128xf32>
    %c0_5 = arith.constant 0 : index
    %c0_6 = arith.constant 0 : index
    %43 = vector.load %arg2[%c0_5, %c0_6] : memref<128x32xbf16, #tpu.memory_space<vmem>>, vector<128x32xbf16>
    %44 = arith.truncf %42 : vector<128x128xf32> to vector<128x128xbf16>
    %cst = arith.constant dense<0.000000e+00> : vector<128x32xf32>
    %45 = tpu.matmul %44, %43, %cst {dimension_numbers = #tpu.dot_dimension_numbers<[1], [0], [0], [1], [0, 0, 1, 1], [], []>} : vector<128x128xbf16>, vector<128x32xbf16>, vector<128x32xf32> -> vector<128x32xf32>
    %c0_7 = arith.constant 0 : index
    %c0_8 = arith.constant 0 : index
    %46 = vector.load %arg3[%c0_7, %c0_8] : memref<1x32xf32, #tpu.memory_space<vmem>>, vector<1x32xf32>
    %47 = vector.broadcast %46 : vector<1x32xf32> to vector<128x32xf32>
    %48 = arith.addf %45, %47 : vector<128x32xf32>
    %cst_9 = arith.constant 0.000000e+00 : f32
    %49 = vector.broadcast %cst_9 : f32 to vector<128x32xf32>
    %50 = arith.maximumf %48, %49 : vector<128x32xf32>
    %c0_10 = arith.constant 0 : index
    %c0_11 = arith.constant 0 : index
    %51 = vector.load %arg4[%c0_10, %c0_11] : memref<32x32xbf16, #tpu.memory_space<vmem>>, vector<32x32xbf16>
    %52 = arith.truncf %50 : vector<128x32xf32> to vector<128x32xbf16>
    %cst_12 = arith.constant dense<0.000000e+00> : vector<128x32xf32>
    %53 = tpu.matmul %52, %51, %cst_12 {dimension_numbers = #tpu.dot_dimension_numbers<[1], [0], [0], [1], [0, 0, 1, 1], [], []>} : vector<128x32xbf16>, vector<32x32xbf16>, vector<128x32xf32> -> vector<128x32xf32>
    %c0_13 = arith.constant 0 : index
    %c0_14 = arith.constant 0 : index
    %54 = vector.load %arg5[%c0_13, %c0_14] : memref<1x32xf32, #tpu.memory_space<vmem>>, vector<1x32xf32>
    %55 = vector.broadcast %54 : vector<1x32xf32> to vector<128x32xf32>
    %56 = arith.addf %53, %55 : vector<128x32xf32>
    %c0_15 = arith.constant 0 : index
    %c0_16 = arith.constant 0 : index
    %c0_17 = arith.constant 0 : index
    %57 = vector.load %arg6[%c0_15, %c0_16, %c0_17] : memref<7x64x64xbf16, #tpu.memory_space<vmem>>, vector<1x64x64xbf16>
    %58 = vector.shape_cast %57 : vector<1x64x64xbf16> to vector<64x64xbf16>
    %c0_18 = arith.constant 0 : index
    %c0_19 = arith.constant 0 : index
    %c0_20 = arith.constant 0 : index
    %59 = vector.load %arg7[%c0_18, %c0_19, %c0_20] : memref<7x1x64xf32, #tpu.memory_space<vmem>>, vector<1x1x64xf32>
    %60 = vector.shape_cast %59 : vector<1x1x64xf32> to vector<1x64xf32>
    %61 = arith.truncf %56 : vector<128x32xf32> to vector<128x32xbf16>
    %c1_i32_21 = arith.constant 1 : i32
    %62 = tpu.dynamic_rotate %56 by %c1_i32_21 dim 0 : vector<128x32xf32>, i32 -> vector<128x32xf32>
    %63 = arith.truncf %62 : vector<128x32xf32> to vector<128x32xbf16>
    %64 = vector.broadcast %21 : vector<128x1xbf16> to vector<128x32xbf16>
    %65 = arith.mulf %63, %64 : vector<128x32xbf16>
    %66 = tpu.concatenate %61, %65 in 1 : vector<128x32xbf16>, vector<128x32xbf16> -> vector<128x64xbf16>
    %cst_22 = arith.constant dense<0.000000e+00> : vector<128x64xf32>
    %67 = tpu.matmul %66, %58, %cst_22 {dimension_numbers = #tpu.dot_dimension_numbers<[1], [0], [0], [1], [0, 0, 1, 1], [], []>} : vector<128x64xbf16>, vector<64x64xbf16>, vector<128x64xf32> -> vector<128x64xf32>
    %68 = vector.broadcast %60 : vector<1x64xf32> to vector<128x64xf32>
    %69 = arith.addf %67, %68 : vector<128x64xf32>
    %70 = vector.extract_strided_slice %69 {offsets = [0, 0], sizes = [128, 32], strides = [1, 1]} : vector<128x64xf32> to vector<128x32xf32>
    %71 = vector.extract_strided_slice %69 {offsets = [0, 32], sizes = [128, 32], strides = [1, 1]} : vector<128x64xf32> to vector<128x32xf32>
    %72 = arith.negf %70 : vector<128x32xf32>
    %73 = math.exp %72 : vector<128x32xf32>
    %cst_23 = arith.constant 1.000000e+00 : f32
    %74 = vector.broadcast %cst_23 : f32 to vector<128x32xf32>
    %75 = arith.addf %74, %73 : vector<128x32xf32>
    %76 = arith.divf %74, %75 : vector<128x32xf32>
    %77 = arith.subf %71, %56 : vector<128x32xf32>
    %78 = arith.mulf %76, %77 : vector<128x32xf32>
    %79 = arith.addf %56, %78 : vector<128x32xf32>
    %c1 = arith.constant 1 : index
    %c0_24 = arith.constant 0 : index
    %c0_25 = arith.constant 0 : index
    %80 = vector.load %arg6[%c1, %c0_24, %c0_25] : memref<7x64x64xbf16, #tpu.memory_space<vmem>>, vector<1x64x64xbf16>
    %81 = vector.shape_cast %80 : vector<1x64x64xbf16> to vector<64x64xbf16>
    %c1_26 = arith.constant 1 : index
    %c0_27 = arith.constant 0 : index
    %c0_28 = arith.constant 0 : index
    %82 = vector.load %arg7[%c1_26, %c0_27, %c0_28] : memref<7x1x64xf32, #tpu.memory_space<vmem>>, vector<1x1x64xf32>
    %83 = vector.shape_cast %82 : vector<1x1x64xf32> to vector<1x64xf32>
    %84 = arith.truncf %79 : vector<128x32xf32> to vector<128x32xbf16>
    %c2_i32_29 = arith.constant 2 : i32
    %85 = tpu.dynamic_rotate %79 by %c2_i32_29 dim 0 : vector<128x32xf32>, i32 -> vector<128x32xf32>
    %86 = arith.truncf %85 : vector<128x32xf32> to vector<128x32xbf16>
    %87 = vector.broadcast %26 : vector<128x1xbf16> to vector<128x32xbf16>
    %88 = arith.mulf %86, %87 : vector<128x32xbf16>
    %89 = tpu.concatenate %84, %88 in 1 : vector<128x32xbf16>, vector<128x32xbf16> -> vector<128x64xbf16>
    %cst_30 = arith.constant dense<0.000000e+00> : vector<128x64xf32>
    %90 = tpu.matmul %89, %81, %cst_30 {dimension_numbers = #tpu.dot_dimension_numbers<[1], [0], [0], [1], [0, 0, 1, 1], [], []>} : vector<128x64xbf16>, vector<64x64xbf16>, vector<128x64xf32> -> vector<128x64xf32>
    %91 = vector.broadcast %83 : vector<1x64xf32> to vector<128x64xf32>
    %92 = arith.addf %90, %91 : vector<128x64xf32>
    %93 = vector.extract_strided_slice %92 {offsets = [0, 0], sizes = [128, 32], strides = [1, 1]} : vector<128x64xf32> to vector<128x32xf32>
    %94 = vector.extract_strided_slice %92 {offsets = [0, 32], sizes = [128, 32], strides = [1, 1]} : vector<128x64xf32> to vector<128x32xf32>
    %95 = arith.negf %93 : vector<128x32xf32>
    %96 = math.exp %95 : vector<128x32xf32>
    %cst_31 = arith.constant 1.000000e+00 : f32
    %97 = vector.broadcast %cst_31 : f32 to vector<128x32xf32>
    %98 = arith.addf %97, %96 : vector<128x32xf32>
    %99 = arith.divf %97, %98 : vector<128x32xf32>
    %100 = arith.subf %94, %79 : vector<128x32xf32>
    %101 = arith.mulf %99, %100 : vector<128x32xf32>
    %102 = arith.addf %79, %101 : vector<128x32xf32>
    %c2 = arith.constant 2 : index
    %c0_32 = arith.constant 0 : index
    %c0_33 = arith.constant 0 : index
    %103 = vector.load %arg6[%c2, %c0_32, %c0_33] : memref<7x64x64xbf16, #tpu.memory_space<vmem>>, vector<1x64x64xbf16>
    %104 = vector.shape_cast %103 : vector<1x64x64xbf16> to vector<64x64xbf16>
    %c2_34 = arith.constant 2 : index
    %c0_35 = arith.constant 0 : index
    %c0_36 = arith.constant 0 : index
    %105 = vector.load %arg7[%c2_34, %c0_35, %c0_36] : memref<7x1x64xf32, #tpu.memory_space<vmem>>, vector<1x1x64xf32>
    %106 = vector.shape_cast %105 : vector<1x1x64xf32> to vector<1x64xf32>
    %107 = arith.truncf %102 : vector<128x32xf32> to vector<128x32xbf16>
    %c4_i32_37 = arith.constant 4 : i32
    %108 = tpu.dynamic_rotate %102 by %c4_i32_37 dim 0 : vector<128x32xf32>, i32 -> vector<128x32xf32>
    %109 = arith.truncf %108 : vector<128x32xf32> to vector<128x32xbf16>
    %110 = vector.broadcast %31 : vector<128x1xbf16> to vector<128x32xbf16>
    %111 = arith.mulf %109, %110 : vector<128x32xbf16>
    %112 = tpu.concatenate %107, %111 in 1 : vector<128x32xbf16>, vector<128x32xbf16> -> vector<128x64xbf16>
    %cst_38 = arith.constant dense<0.000000e+00> : vector<128x64xf32>
    %113 = tpu.matmul %112, %104, %cst_38 {dimension_numbers = #tpu.dot_dimension_numbers<[1], [0], [0], [1], [0, 0, 1, 1], [], []>} : vector<128x64xbf16>, vector<64x64xbf16>, vector<128x64xf32> -> vector<128x64xf32>
    %114 = vector.broadcast %106 : vector<1x64xf32> to vector<128x64xf32>
    %115 = arith.addf %113, %114 : vector<128x64xf32>
    %116 = vector.extract_strided_slice %115 {offsets = [0, 0], sizes = [128, 32], strides = [1, 1]} : vector<128x64xf32> to vector<128x32xf32>
    %117 = vector.extract_strided_slice %115 {offsets = [0, 32], sizes = [128, 32], strides = [1, 1]} : vector<128x64xf32> to vector<128x32xf32>
    %118 = arith.negf %116 : vector<128x32xf32>
    %119 = math.exp %118 : vector<128x32xf32>
    %cst_39 = arith.constant 1.000000e+00 : f32
    %120 = vector.broadcast %cst_39 : f32 to vector<128x32xf32>
    %121 = arith.addf %120, %119 : vector<128x32xf32>
    %122 = arith.divf %120, %121 : vector<128x32xf32>
    %123 = arith.subf %117, %102 : vector<128x32xf32>
    %124 = arith.mulf %122, %123 : vector<128x32xf32>
    %125 = arith.addf %102, %124 : vector<128x32xf32>
    %c3 = arith.constant 3 : index
    %c0_40 = arith.constant 0 : index
    %c0_41 = arith.constant 0 : index
    %126 = vector.load %arg6[%c3, %c0_40, %c0_41] : memref<7x64x64xbf16, #tpu.memory_space<vmem>>, vector<1x64x64xbf16>
    %127 = vector.shape_cast %126 : vector<1x64x64xbf16> to vector<64x64xbf16>
    %c3_42 = arith.constant 3 : index
    %c0_43 = arith.constant 0 : index
    %c0_44 = arith.constant 0 : index
    %128 = vector.load %arg7[%c3_42, %c0_43, %c0_44] : memref<7x1x64xf32, #tpu.memory_space<vmem>>, vector<1x1x64xf32>
    %129 = vector.shape_cast %128 : vector<1x1x64xf32> to vector<1x64xf32>
    %130 = arith.truncf %125 : vector<128x32xf32> to vector<128x32xbf16>
    %c8_i32_45 = arith.constant 8 : i32
    %131 = tpu.dynamic_rotate %125 by %c8_i32_45 dim 0 : vector<128x32xf32>, i32 -> vector<128x32xf32>
    %132 = arith.truncf %131 : vector<128x32xf32> to vector<128x32xbf16>
    %133 = vector.broadcast %36 : vector<128x1xbf16> to vector<128x32xbf16>
    %134 = arith.mulf %132, %133 : vector<128x32xbf16>
    %135 = tpu.concatenate %130, %134 in 1 : vector<128x32xbf16>, vector<128x32xbf16> -> vector<128x64xbf16>
    %cst_46 = arith.constant dense<0.000000e+00> : vector<128x64xf32>
    %136 = tpu.matmul %135, %127, %cst_46 {dimension_numbers = #tpu.dot_dimension_numbers<[1], [0], [0], [1], [0, 0, 1, 1], [], []>} : vector<128x64xbf16>, vector<64x64xbf16>, vector<128x64xf32> -> vector<128x64xf32>
    %137 = vector.broadcast %129 : vector<1x64xf32> to vector<128x64xf32>
    %138 = arith.addf %136, %137 : vector<128x64xf32>
    %139 = vector.extract_strided_slice %138 {offsets = [0, 0], sizes = [128, 32], strides = [1, 1]} : vector<128x64xf32> to vector<128x32xf32>
    %140 = vector.extract_strided_slice %138 {offsets = [0, 32], sizes = [128, 32], strides = [1, 1]} : vector<128x64xf32> to vector<128x32xf32>
    %141 = arith.negf %139 : vector<128x32xf32>
    %142 = math.exp %141 : vector<128x32xf32>
    %cst_47 = arith.constant 1.000000e+00 : f32
    %143 = vector.broadcast %cst_47 : f32 to vector<128x32xf32>
    %144 = arith.addf %143, %142 : vector<128x32xf32>
    %145 = arith.divf %143, %144 : vector<128x32xf32>
    %146 = arith.subf %140, %125 : vector<128x32xf32>
    %147 = arith.mulf %145, %146 : vector<128x32xf32>
    %148 = arith.addf %125, %147 : vector<128x32xf32>
    %c4 = arith.constant 4 : index
    %c0_48 = arith.constant 0 : index
    %c0_49 = arith.constant 0 : index
    %149 = vector.load %arg6[%c4, %c0_48, %c0_49] : memref<7x64x64xbf16, #tpu.memory_space<vmem>>, vector<1x64x64xbf16>
    %150 = vector.shape_cast %149 : vector<1x64x64xbf16> to vector<64x64xbf16>
    %c4_50 = arith.constant 4 : index
    %c0_51 = arith.constant 0 : index
    %c0_52 = arith.constant 0 : index
    %151 = vector.load %arg7[%c4_50, %c0_51, %c0_52] : memref<7x1x64xf32, #tpu.memory_space<vmem>>, vector<1x1x64xf32>
    %152 = vector.shape_cast %151 : vector<1x1x64xf32> to vector<1x64xf32>
    %153 = arith.truncf %148 : vector<128x32xf32> to vector<128x32xbf16>
    %c16_i32_53 = arith.constant 16 : i32
    %154 = tpu.dynamic_rotate %148 by %c16_i32_53 dim 0 : vector<128x32xf32>, i32 -> vector<128x32xf32>
    %155 = arith.truncf %154 : vector<128x32xf32> to vector<128x32xbf16>
    %156 = vector.broadcast %41 : vector<128x1xbf16> to vector<128x32xbf16>
    %157 = arith.mulf %155, %156 : vector<128x32xbf16>
    %158 = tpu.concatenate %153, %157 in 1 : vector<128x32xbf16>, vector<128x32xbf16> -> vector<128x64xbf16>
    %cst_54 = arith.constant dense<0.000000e+00> : vector<128x64xf32>
    %159 = tpu.matmul %158, %150, %cst_54 {dimension_numbers = #tpu.dot_dimension_numbers<[1], [0], [0], [1], [0, 0, 1, 1], [], []>} : vector<128x64xbf16>, vector<64x64xbf16>, vector<128x64xf32> -> vector<128x64xf32>
    %160 = vector.broadcast %152 : vector<1x64xf32> to vector<128x64xf32>
    %161 = arith.addf %159, %160 : vector<128x64xf32>
    %162 = vector.extract_strided_slice %161 {offsets = [0, 0], sizes = [128, 32], strides = [1, 1]} : vector<128x64xf32> to vector<128x32xf32>
    %163 = vector.extract_strided_slice %161 {offsets = [0, 32], sizes = [128, 32], strides = [1, 1]} : vector<128x64xf32> to vector<128x32xf32>
    %164 = arith.negf %162 : vector<128x32xf32>
    %165 = math.exp %164 : vector<128x32xf32>
    %cst_55 = arith.constant 1.000000e+00 : f32
    %166 = vector.broadcast %cst_55 : f32 to vector<128x32xf32>
    %167 = arith.addf %166, %165 : vector<128x32xf32>
    %168 = arith.divf %166, %167 : vector<128x32xf32>
    %169 = arith.subf %163, %148 : vector<128x32xf32>
    %170 = arith.mulf %168, %169 : vector<128x32xf32>
    %171 = arith.addf %148, %170 : vector<128x32xf32>
    %c5 = arith.constant 5 : index
    %c0_56 = arith.constant 0 : index
    %c0_57 = arith.constant 0 : index
    %172 = vector.load %arg6[%c5, %c0_56, %c0_57] : memref<7x64x64xbf16, #tpu.memory_space<vmem>>, vector<1x64x64xbf16>
    %173 = vector.shape_cast %172 : vector<1x64x64xbf16> to vector<64x64xbf16>
    %c5_58 = arith.constant 5 : index
    %c0_59 = arith.constant 0 : index
    %c0_60 = arith.constant 0 : index
    %174 = vector.load %arg7[%c5_58, %c0_59, %c0_60] : memref<7x1x64xf32, #tpu.memory_space<vmem>>, vector<1x1x64xf32>
    %175 = vector.shape_cast %174 : vector<1x1x64xf32> to vector<1x64xf32>
    %176 = arith.truncf %171 : vector<128x32xf32> to vector<128x32xbf16>
    %177 = vector.extract_strided_slice %173 {offsets = [0, 0], sizes = [32, 64], strides = [1, 1]} : vector<64x64xbf16> to vector<32x64xbf16>
    %cst_61 = arith.constant dense<0.000000e+00> : vector<128x64xf32>
    %178 = tpu.matmul %176, %177, %cst_61 {dimension_numbers = #tpu.dot_dimension_numbers<[1], [0], [0], [1], [0, 0, 1, 1], [], []>} : vector<128x32xbf16>, vector<32x64xbf16>, vector<128x64xf32> -> vector<128x64xf32>
    %179 = vector.broadcast %175 : vector<1x64xf32> to vector<128x64xf32>
    %180 = arith.addf %178, %179 : vector<128x64xf32>
    %181 = vector.extract_strided_slice %180 {offsets = [0, 0], sizes = [128, 32], strides = [1, 1]} : vector<128x64xf32> to vector<128x32xf32>
    %182 = vector.extract_strided_slice %180 {offsets = [0, 32], sizes = [128, 32], strides = [1, 1]} : vector<128x64xf32> to vector<128x32xf32>
    %183 = arith.negf %181 : vector<128x32xf32>
    %184 = math.exp %183 : vector<128x32xf32>
    %cst_62 = arith.constant 1.000000e+00 : f32
    %185 = vector.broadcast %cst_62 : f32 to vector<128x32xf32>
    %186 = arith.addf %185, %184 : vector<128x32xf32>
    %187 = arith.divf %185, %186 : vector<128x32xf32>
    %188 = arith.subf %182, %171 : vector<128x32xf32>
    %189 = arith.mulf %187, %188 : vector<128x32xf32>
    %190 = arith.addf %171, %189 : vector<128x32xf32>
    %c6 = arith.constant 6 : index
    %c0_63 = arith.constant 0 : index
    %c0_64 = arith.constant 0 : index
    %191 = vector.load %arg6[%c6, %c0_63, %c0_64] : memref<7x64x64xbf16, #tpu.memory_space<vmem>>, vector<1x64x64xbf16>
    %192 = vector.shape_cast %191 : vector<1x64x64xbf16> to vector<64x64xbf16>
    %c6_65 = arith.constant 6 : index
    %c0_66 = arith.constant 0 : index
    %c0_67 = arith.constant 0 : index
    %193 = vector.load %arg7[%c6_65, %c0_66, %c0_67] : memref<7x1x64xf32, #tpu.memory_space<vmem>>, vector<1x1x64xf32>
    %194 = vector.shape_cast %193 : vector<1x1x64xf32> to vector<1x64xf32>
    %195 = arith.truncf %190 : vector<128x32xf32> to vector<128x32xbf16>
    %196 = vector.extract_strided_slice %192 {offsets = [0, 0], sizes = [32, 64], strides = [1, 1]} : vector<64x64xbf16> to vector<32x64xbf16>
    %cst_68 = arith.constant dense<0.000000e+00> : vector<128x64xf32>
    %197 = tpu.matmul %195, %196, %cst_68 {dimension_numbers = #tpu.dot_dimension_numbers<[1], [0], [0], [1], [0, 0, 1, 1], [], []>} : vector<128x32xbf16>, vector<32x64xbf16>, vector<128x64xf32> -> vector<128x64xf32>
    %198 = vector.broadcast %194 : vector<1x64xf32> to vector<128x64xf32>
    %199 = arith.addf %197, %198 : vector<128x64xf32>
    %200 = vector.extract_strided_slice %199 {offsets = [0, 0], sizes = [128, 32], strides = [1, 1]} : vector<128x64xf32> to vector<128x32xf32>
    %201 = vector.extract_strided_slice %199 {offsets = [0, 32], sizes = [128, 32], strides = [1, 1]} : vector<128x64xf32> to vector<128x32xf32>
    %202 = arith.negf %200 : vector<128x32xf32>
    %203 = math.exp %202 : vector<128x32xf32>
    %cst_69 = arith.constant 1.000000e+00 : f32
    %204 = vector.broadcast %cst_69 : f32 to vector<128x32xf32>
    %205 = arith.addf %204, %203 : vector<128x32xf32>
    %206 = arith.divf %204, %205 : vector<128x32xf32>
    %207 = arith.subf %201, %190 : vector<128x32xf32>
    %208 = arith.mulf %206, %207 : vector<128x32xf32>
    %209 = arith.addf %190, %208 : vector<128x32xf32>
    %c0_70 = arith.constant 0 : index
    %c0_71 = arith.constant 0 : index
    %210 = vector.load %arg8[%c0_70, %c0_71] : memref<32x32xbf16, #tpu.memory_space<vmem>>, vector<32x32xbf16>
    %211 = arith.truncf %209 : vector<128x32xf32> to vector<128x32xbf16>
    %cst_72 = arith.constant dense<0.000000e+00> : vector<128x32xf32>
    %212 = tpu.matmul %211, %210, %cst_72 {dimension_numbers = #tpu.dot_dimension_numbers<[1], [0], [0], [1], [0, 0, 1, 1], [], []>} : vector<128x32xbf16>, vector<32x32xbf16>, vector<128x32xf32> -> vector<128x32xf32>
    %c0_73 = arith.constant 0 : index
    %c0_74 = arith.constant 0 : index
    %213 = vector.load %arg9[%c0_73, %c0_74] : memref<1x32xf32, #tpu.memory_space<vmem>>, vector<1x32xf32>
    %214 = vector.broadcast %213 : vector<1x32xf32> to vector<128x32xf32>
    %215 = arith.addf %212, %214 : vector<128x32xf32>
    %c0_75 = arith.constant 0 : index
    %c0_76 = arith.constant 0 : index
    %c0_77 = arith.constant 0 : index
    %216 = vector.load %arg10[%c0_75, %c0_76, %c0_77] : memref<7x64x64xbf16, #tpu.memory_space<vmem>>, vector<1x64x64xbf16>
    %217 = vector.shape_cast %216 : vector<1x64x64xbf16> to vector<64x64xbf16>
    %c0_78 = arith.constant 0 : index
    %c0_79 = arith.constant 0 : index
    %c0_80 = arith.constant 0 : index
    %218 = vector.load %arg11[%c0_78, %c0_79, %c0_80] : memref<7x1x64xf32, #tpu.memory_space<vmem>>, vector<1x1x64xf32>
    %219 = vector.shape_cast %218 : vector<1x1x64xf32> to vector<1x64xf32>
    %220 = arith.truncf %215 : vector<128x32xf32> to vector<128x32xbf16>
    %c1_i32_81 = arith.constant 1 : i32
    %221 = tpu.dynamic_rotate %215 by %c1_i32_81 dim 0 : vector<128x32xf32>, i32 -> vector<128x32xf32>
    %222 = arith.truncf %221 : vector<128x32xf32> to vector<128x32xbf16>
    %223 = vector.broadcast %21 : vector<128x1xbf16> to vector<128x32xbf16>
    %224 = arith.mulf %222, %223 : vector<128x32xbf16>
    %225 = tpu.concatenate %220, %224 in 1 : vector<128x32xbf16>, vector<128x32xbf16> -> vector<128x64xbf16>
    %cst_82 = arith.constant dense<0.000000e+00> : vector<128x64xf32>
    %226 = tpu.matmul %225, %217, %cst_82 {dimension_numbers = #tpu.dot_dimension_numbers<[1], [0], [0], [1], [0, 0, 1, 1], [], []>} : vector<128x64xbf16>, vector<64x64xbf16>, vector<128x64xf32> -> vector<128x64xf32>
    %227 = vector.broadcast %219 : vector<1x64xf32> to vector<128x64xf32>
    %228 = arith.addf %226, %227 : vector<128x64xf32>
    %229 = vector.extract_strided_slice %228 {offsets = [0, 0], sizes = [128, 32], strides = [1, 1]} : vector<128x64xf32> to vector<128x32xf32>
    %230 = vector.extract_strided_slice %228 {offsets = [0, 32], sizes = [128, 32], strides = [1, 1]} : vector<128x64xf32> to vector<128x32xf32>
    %231 = arith.negf %229 : vector<128x32xf32>
    %232 = math.exp %231 : vector<128x32xf32>
    %cst_83 = arith.constant 1.000000e+00 : f32
    %233 = vector.broadcast %cst_83 : f32 to vector<128x32xf32>
    %234 = arith.addf %233, %232 : vector<128x32xf32>
    %235 = arith.divf %233, %234 : vector<128x32xf32>
    %236 = arith.subf %230, %215 : vector<128x32xf32>
    %237 = arith.mulf %235, %236 : vector<128x32xf32>
    %238 = arith.addf %215, %237 : vector<128x32xf32>
    %c1_84 = arith.constant 1 : index
    %c0_85 = arith.constant 0 : index
    %c0_86 = arith.constant 0 : index
    %239 = vector.load %arg10[%c1_84, %c0_85, %c0_86] : memref<7x64x64xbf16, #tpu.memory_space<vmem>>, vector<1x64x64xbf16>
    %240 = vector.shape_cast %239 : vector<1x64x64xbf16> to vector<64x64xbf16>
    %c1_87 = arith.constant 1 : index
    %c0_88 = arith.constant 0 : index
    %c0_89 = arith.constant 0 : index
    %241 = vector.load %arg11[%c1_87, %c0_88, %c0_89] : memref<7x1x64xf32, #tpu.memory_space<vmem>>, vector<1x1x64xf32>
    %242 = vector.shape_cast %241 : vector<1x1x64xf32> to vector<1x64xf32>
    %243 = arith.truncf %238 : vector<128x32xf32> to vector<128x32xbf16>
    %c2_i32_90 = arith.constant 2 : i32
    %244 = tpu.dynamic_rotate %238 by %c2_i32_90 dim 0 : vector<128x32xf32>, i32 -> vector<128x32xf32>
    %245 = arith.truncf %244 : vector<128x32xf32> to vector<128x32xbf16>
    %246 = vector.broadcast %26 : vector<128x1xbf16> to vector<128x32xbf16>
    %247 = arith.mulf %245, %246 : vector<128x32xbf16>
    %248 = tpu.concatenate %243, %247 in 1 : vector<128x32xbf16>, vector<128x32xbf16> -> vector<128x64xbf16>
    %cst_91 = arith.constant dense<0.000000e+00> : vector<128x64xf32>
    %249 = tpu.matmul %248, %240, %cst_91 {dimension_numbers = #tpu.dot_dimension_numbers<[1], [0], [0], [1], [0, 0, 1, 1], [], []>} : vector<128x64xbf16>, vector<64x64xbf16>, vector<128x64xf32> -> vector<128x64xf32>
    %250 = vector.broadcast %242 : vector<1x64xf32> to vector<128x64xf32>
    %251 = arith.addf %249, %250 : vector<128x64xf32>
    %252 = vector.extract_strided_slice %251 {offsets = [0, 0], sizes = [128, 32], strides = [1, 1]} : vector<128x64xf32> to vector<128x32xf32>
    %253 = vector.extract_strided_slice %251 {offsets = [0, 32], sizes = [128, 32], strides = [1, 1]} : vector<128x64xf32> to vector<128x32xf32>
    %254 = arith.negf %252 : vector<128x32xf32>
    %255 = math.exp %254 : vector<128x32xf32>
    %cst_92 = arith.constant 1.000000e+00 : f32
    %256 = vector.broadcast %cst_92 : f32 to vector<128x32xf32>
    %257 = arith.addf %256, %255 : vector<128x32xf32>
    %258 = arith.divf %256, %257 : vector<128x32xf32>
    %259 = arith.subf %253, %238 : vector<128x32xf32>
    %260 = arith.mulf %258, %259 : vector<128x32xf32>
    %261 = arith.addf %238, %260 : vector<128x32xf32>
    %c2_93 = arith.constant 2 : index
    %c0_94 = arith.constant 0 : index
    %c0_95 = arith.constant 0 : index
    %262 = vector.load %arg10[%c2_93, %c0_94, %c0_95] : memref<7x64x64xbf16, #tpu.memory_space<vmem>>, vector<1x64x64xbf16>
    %263 = vector.shape_cast %262 : vector<1x64x64xbf16> to vector<64x64xbf16>
    %c2_96 = arith.constant 2 : index
    %c0_97 = arith.constant 0 : index
    %c0_98 = arith.constant 0 : index
    %264 = vector.load %arg11[%c2_96, %c0_97, %c0_98] : memref<7x1x64xf32, #tpu.memory_space<vmem>>, vector<1x1x64xf32>
    %265 = vector.shape_cast %264 : vector<1x1x64xf32> to vector<1x64xf32>
    %266 = arith.truncf %261 : vector<128x32xf32> to vector<128x32xbf16>
    %c4_i32_99 = arith.constant 4 : i32
    %267 = tpu.dynamic_rotate %261 by %c4_i32_99 dim 0 : vector<128x32xf32>, i32 -> vector<128x32xf32>
    %268 = arith.truncf %267 : vector<128x32xf32> to vector<128x32xbf16>
    %269 = vector.broadcast %31 : vector<128x1xbf16> to vector<128x32xbf16>
    %270 = arith.mulf %268, %269 : vector<128x32xbf16>
    %271 = tpu.concatenate %266, %270 in 1 : vector<128x32xbf16>, vector<128x32xbf16> -> vector<128x64xbf16>
    %cst_100 = arith.constant dense<0.000000e+00> : vector<128x64xf32>
    %272 = tpu.matmul %271, %263, %cst_100 {dimension_numbers = #tpu.dot_dimension_numbers<[1], [0], [0], [1], [0, 0, 1, 1], [], []>} : vector<128x64xbf16>, vector<64x64xbf16>, vector<128x64xf32> -> vector<128x64xf32>
    %273 = vector.broadcast %265 : vector<1x64xf32> to vector<128x64xf32>
    %274 = arith.addf %272, %273 : vector<128x64xf32>
    %275 = vector.extract_strided_slice %274 {offsets = [0, 0], sizes = [128, 32], strides = [1, 1]} : vector<128x64xf32> to vector<128x32xf32>
    %276 = vector.extract_strided_slice %274 {offsets = [0, 32], sizes = [128, 32], strides = [1, 1]} : vector<128x64xf32> to vector<128x32xf32>
    %277 = arith.negf %275 : vector<128x32xf32>
    %278 = math.exp %277 : vector<128x32xf32>
    %cst_101 = arith.constant 1.000000e+00 : f32
    %279 = vector.broadcast %cst_101 : f32 to vector<128x32xf32>
    %280 = arith.addf %279, %278 : vector<128x32xf32>
    %281 = arith.divf %279, %280 : vector<128x32xf32>
    %282 = arith.subf %276, %261 : vector<128x32xf32>
    %283 = arith.mulf %281, %282 : vector<128x32xf32>
    %284 = arith.addf %261, %283 : vector<128x32xf32>
    %c3_102 = arith.constant 3 : index
    %c0_103 = arith.constant 0 : index
    %c0_104 = arith.constant 0 : index
    %285 = vector.load %arg10[%c3_102, %c0_103, %c0_104] : memref<7x64x64xbf16, #tpu.memory_space<vmem>>, vector<1x64x64xbf16>
    %286 = vector.shape_cast %285 : vector<1x64x64xbf16> to vector<64x64xbf16>
    %c3_105 = arith.constant 3 : index
    %c0_106 = arith.constant 0 : index
    %c0_107 = arith.constant 0 : index
    %287 = vector.load %arg11[%c3_105, %c0_106, %c0_107] : memref<7x1x64xf32, #tpu.memory_space<vmem>>, vector<1x1x64xf32>
    %288 = vector.shape_cast %287 : vector<1x1x64xf32> to vector<1x64xf32>
    %289 = arith.truncf %284 : vector<128x32xf32> to vector<128x32xbf16>
    %c8_i32_108 = arith.constant 8 : i32
    %290 = tpu.dynamic_rotate %284 by %c8_i32_108 dim 0 : vector<128x32xf32>, i32 -> vector<128x32xf32>
    %291 = arith.truncf %290 : vector<128x32xf32> to vector<128x32xbf16>
    %292 = vector.broadcast %36 : vector<128x1xbf16> to vector<128x32xbf16>
    %293 = arith.mulf %291, %292 : vector<128x32xbf16>
    %294 = tpu.concatenate %289, %293 in 1 : vector<128x32xbf16>, vector<128x32xbf16> -> vector<128x64xbf16>
    %cst_109 = arith.constant dense<0.000000e+00> : vector<128x64xf32>
    %295 = tpu.matmul %294, %286, %cst_109 {dimension_numbers = #tpu.dot_dimension_numbers<[1], [0], [0], [1], [0, 0, 1, 1], [], []>} : vector<128x64xbf16>, vector<64x64xbf16>, vector<128x64xf32> -> vector<128x64xf32>
    %296 = vector.broadcast %288 : vector<1x64xf32> to vector<128x64xf32>
    %297 = arith.addf %295, %296 : vector<128x64xf32>
    %298 = vector.extract_strided_slice %297 {offsets = [0, 0], sizes = [128, 32], strides = [1, 1]} : vector<128x64xf32> to vector<128x32xf32>
    %299 = vector.extract_strided_slice %297 {offsets = [0, 32], sizes = [128, 32], strides = [1, 1]} : vector<128x64xf32> to vector<128x32xf32>
    %300 = arith.negf %298 : vector<128x32xf32>
    %301 = math.exp %300 : vector<128x32xf32>
    %cst_110 = arith.constant 1.000000e+00 : f32
    %302 = vector.broadcast %cst_110 : f32 to vector<128x32xf32>
    %303 = arith.addf %302, %301 : vector<128x32xf32>
    %304 = arith.divf %302, %303 : vector<128x32xf32>
    %305 = arith.subf %299, %284 : vector<128x32xf32>
    %306 = arith.mulf %304, %305 : vector<128x32xf32>
    %307 = arith.addf %284, %306 : vector<128x32xf32>
    %c4_111 = arith.constant 4 : index
    %c0_112 = arith.constant 0 : index
    %c0_113 = arith.constant 0 : index
    %308 = vector.load %arg10[%c4_111, %c0_112, %c0_113] : memref<7x64x64xbf16, #tpu.memory_space<vmem>>, vector<1x64x64xbf16>
    %309 = vector.shape_cast %308 : vector<1x64x64xbf16> to vector<64x64xbf16>
    %c4_114 = arith.constant 4 : index
    %c0_115 = arith.constant 0 : index
    %c0_116 = arith.constant 0 : index
    %310 = vector.load %arg11[%c4_114, %c0_115, %c0_116] : memref<7x1x64xf32, #tpu.memory_space<vmem>>, vector<1x1x64xf32>
    %311 = vector.shape_cast %310 : vector<1x1x64xf32> to vector<1x64xf32>
    %312 = arith.truncf %307 : vector<128x32xf32> to vector<128x32xbf16>
    %c16_i32_117 = arith.constant 16 : i32
    %313 = tpu.dynamic_rotate %307 by %c16_i32_117 dim 0 : vector<128x32xf32>, i32 -> vector<128x32xf32>
    %314 = arith.truncf %313 : vector<128x32xf32> to vector<128x32xbf16>
    %315 = vector.broadcast %41 : vector<128x1xbf16> to vector<128x32xbf16>
    %316 = arith.mulf %314, %315 : vector<128x32xbf16>
    %317 = tpu.concatenate %312, %316 in 1 : vector<128x32xbf16>, vector<128x32xbf16> -> vector<128x64xbf16>
    %cst_118 = arith.constant dense<0.000000e+00> : vector<128x64xf32>
    %318 = tpu.matmul %317, %309, %cst_118 {dimension_numbers = #tpu.dot_dimension_numbers<[1], [0], [0], [1], [0, 0, 1, 1], [], []>} : vector<128x64xbf16>, vector<64x64xbf16>, vector<128x64xf32> -> vector<128x64xf32>
    %319 = vector.broadcast %311 : vector<1x64xf32> to vector<128x64xf32>
    %320 = arith.addf %318, %319 : vector<128x64xf32>
    %321 = vector.extract_strided_slice %320 {offsets = [0, 0], sizes = [128, 32], strides = [1, 1]} : vector<128x64xf32> to vector<128x32xf32>
    %322 = vector.extract_strided_slice %320 {offsets = [0, 32], sizes = [128, 32], strides = [1, 1]} : vector<128x64xf32> to vector<128x32xf32>
    %323 = arith.negf %321 : vector<128x32xf32>
    %324 = math.exp %323 : vector<128x32xf32>
    %cst_119 = arith.constant 1.000000e+00 : f32
    %325 = vector.broadcast %cst_119 : f32 to vector<128x32xf32>
    %326 = arith.addf %325, %324 : vector<128x32xf32>
    %327 = arith.divf %325, %326 : vector<128x32xf32>
    %328 = arith.subf %322, %307 : vector<128x32xf32>
    %329 = arith.mulf %327, %328 : vector<128x32xf32>
    %330 = arith.addf %307, %329 : vector<128x32xf32>
    %c5_120 = arith.constant 5 : index
    %c0_121 = arith.constant 0 : index
    %c0_122 = arith.constant 0 : index
    %331 = vector.load %arg10[%c5_120, %c0_121, %c0_122] : memref<7x64x64xbf16, #tpu.memory_space<vmem>>, vector<1x64x64xbf16>
    %332 = vector.shape_cast %331 : vector<1x64x64xbf16> to vector<64x64xbf16>
    %c5_123 = arith.constant 5 : index
    %c0_124 = arith.constant 0 : index
    %c0_125 = arith.constant 0 : index
    %333 = vector.load %arg11[%c5_123, %c0_124, %c0_125] : memref<7x1x64xf32, #tpu.memory_space<vmem>>, vector<1x1x64xf32>
    %334 = vector.shape_cast %333 : vector<1x1x64xf32> to vector<1x64xf32>
    %335 = arith.truncf %330 : vector<128x32xf32> to vector<128x32xbf16>
    %336 = vector.extract_strided_slice %332 {offsets = [0, 0], sizes = [32, 64], strides = [1, 1]} : vector<64x64xbf16> to vector<32x64xbf16>
    %cst_126 = arith.constant dense<0.000000e+00> : vector<128x64xf32>
    %337 = tpu.matmul %335, %336, %cst_126 {dimension_numbers = #tpu.dot_dimension_numbers<[1], [0], [0], [1], [0, 0, 1, 1], [], []>} : vector<128x32xbf16>, vector<32x64xbf16>, vector<128x64xf32> -> vector<128x64xf32>
    %338 = vector.broadcast %334 : vector<1x64xf32> to vector<128x64xf32>
    %339 = arith.addf %337, %338 : vector<128x64xf32>
    %340 = vector.extract_strided_slice %339 {offsets = [0, 0], sizes = [128, 32], strides = [1, 1]} : vector<128x64xf32> to vector<128x32xf32>
    %341 = vector.extract_strided_slice %339 {offsets = [0, 32], sizes = [128, 32], strides = [1, 1]} : vector<128x64xf32> to vector<128x32xf32>
    %342 = arith.negf %340 : vector<128x32xf32>
    %343 = math.exp %342 : vector<128x32xf32>
    %cst_127 = arith.constant 1.000000e+00 : f32
    %344 = vector.broadcast %cst_127 : f32 to vector<128x32xf32>
    %345 = arith.addf %344, %343 : vector<128x32xf32>
    %346 = arith.divf %344, %345 : vector<128x32xf32>
    %347 = arith.subf %341, %330 : vector<128x32xf32>
    %348 = arith.mulf %346, %347 : vector<128x32xf32>
    %349 = arith.addf %330, %348 : vector<128x32xf32>
    %c6_128 = arith.constant 6 : index
    %c0_129 = arith.constant 0 : index
    %c0_130 = arith.constant 0 : index
    %350 = vector.load %arg10[%c6_128, %c0_129, %c0_130] : memref<7x64x64xbf16, #tpu.memory_space<vmem>>, vector<1x64x64xbf16>
    %351 = vector.shape_cast %350 : vector<1x64x64xbf16> to vector<64x64xbf16>
    %c6_131 = arith.constant 6 : index
    %c0_132 = arith.constant 0 : index
    %c0_133 = arith.constant 0 : index
    %352 = vector.load %arg11[%c6_131, %c0_132, %c0_133] : memref<7x1x64xf32, #tpu.memory_space<vmem>>, vector<1x1x64xf32>
    %353 = vector.shape_cast %352 : vector<1x1x64xf32> to vector<1x64xf32>
    %354 = arith.truncf %349 : vector<128x32xf32> to vector<128x32xbf16>
    %355 = vector.extract_strided_slice %351 {offsets = [0, 0], sizes = [32, 64], strides = [1, 1]} : vector<64x64xbf16> to vector<32x64xbf16>
    %cst_134 = arith.constant dense<0.000000e+00> : vector<128x64xf32>
    %356 = tpu.matmul %354, %355, %cst_134 {dimension_numbers = #tpu.dot_dimension_numbers<[1], [0], [0], [1], [0, 0, 1, 1], [], []>} : vector<128x32xbf16>, vector<32x64xbf16>, vector<128x64xf32> -> vector<128x64xf32>
    %357 = vector.broadcast %353 : vector<1x64xf32> to vector<128x64xf32>
    %358 = arith.addf %356, %357 : vector<128x64xf32>
    %359 = vector.extract_strided_slice %358 {offsets = [0, 0], sizes = [128, 32], strides = [1, 1]} : vector<128x64xf32> to vector<128x32xf32>
    %360 = vector.extract_strided_slice %358 {offsets = [0, 32], sizes = [128, 32], strides = [1, 1]} : vector<128x64xf32> to vector<128x32xf32>
    %361 = arith.negf %359 : vector<128x32xf32>
    %362 = math.exp %361 : vector<128x32xf32>
    %cst_135 = arith.constant 1.000000e+00 : f32
    %363 = vector.broadcast %cst_135 : f32 to vector<128x32xf32>
    %364 = arith.addf %363, %362 : vector<128x32xf32>
    %365 = arith.divf %363, %364 : vector<128x32xf32>
    %366 = arith.subf %360, %349 : vector<128x32xf32>
    %367 = arith.mulf %365, %366 : vector<128x32xf32>
    %368 = arith.addf %349, %367 : vector<128x32xf32>
    %c0_136 = arith.constant 0 : index
    %c0_137 = arith.constant 0 : index
    %369 = vector.load %arg12[%c0_136, %c0_137] : memref<32x32xbf16, #tpu.memory_space<vmem>>, vector<32x32xbf16>
    %370 = arith.truncf %368 : vector<128x32xf32> to vector<128x32xbf16>
    %cst_138 = arith.constant dense<0.000000e+00> : vector<128x32xf32>
    %371 = tpu.matmul %370, %369, %cst_138 {dimension_numbers = #tpu.dot_dimension_numbers<[1], [0], [0], [1], [0, 0, 1, 1], [], []>} : vector<128x32xbf16>, vector<32x32xbf16>, vector<128x32xf32> -> vector<128x32xf32>
    %c0_139 = arith.constant 0 : index
    %c0_140 = arith.constant 0 : index
    %372 = vector.load %arg13[%c0_139, %c0_140] : memref<1x32xf32, #tpu.memory_space<vmem>>, vector<1x32xf32>
    %373 = vector.broadcast %372 : vector<1x32xf32> to vector<128x32xf32>
    %374 = arith.addf %371, %373 : vector<128x32xf32>
    %cst_141 = arith.constant 0.000000e+00 : f32
    %375 = vector.broadcast %cst_141 : f32 to vector<128x32xf32>
    %376 = arith.maximumf %374, %375 : vector<128x32xf32>
    %c0_142 = arith.constant 0 : index
    %c0_143 = arith.constant 0 : index
    %377 = vector.load %arg14[%c0_142, %c0_143] : memref<32x32xbf16, #tpu.memory_space<vmem>>, vector<32x32xbf16>
    %378 = arith.truncf %376 : vector<128x32xf32> to vector<128x32xbf16>
    %cst_144 = arith.constant dense<0.000000e+00> : vector<128x32xf32>
    %379 = tpu.matmul %378, %377, %cst_144 {dimension_numbers = #tpu.dot_dimension_numbers<[1], [0], [0], [1], [0, 0, 1, 1], [], []>} : vector<128x32xbf16>, vector<32x32xbf16>, vector<128x32xf32> -> vector<128x32xf32>
    %c0_145 = arith.constant 0 : index
    %c0_146 = arith.constant 0 : index
    %380 = vector.load %arg15[%c0_145, %c0_146] : memref<1x32xf32, #tpu.memory_space<vmem>>, vector<1x32xf32>
    %381 = vector.broadcast %380 : vector<1x32xf32> to vector<128x32xf32>
    %382 = arith.addf %379, %381 : vector<128x32xf32>
    %cst_147 = arith.constant 0.000000e+00 : f32
    %383 = vector.broadcast %cst_147 : f32 to vector<128x32xf32>
    %384 = arith.maximumf %382, %383 : vector<128x32xf32>
    %c0_148 = arith.constant 0 : index
    %c0_149 = arith.constant 0 : index
    %385 = vector.load %arg16[%c0_148, %c0_149] : memref<32x32xbf16, #tpu.memory_space<vmem>>, vector<32x32xbf16>
    %386 = arith.truncf %384 : vector<128x32xf32> to vector<128x32xbf16>
    %cst_150 = arith.constant dense<0.000000e+00> : vector<128x32xf32>
    %387 = tpu.matmul %386, %385, %cst_150 {dimension_numbers = #tpu.dot_dimension_numbers<[1], [0], [0], [1], [0, 0, 1, 1], [], []>} : vector<128x32xbf16>, vector<32x32xbf16>, vector<128x32xf32> -> vector<128x32xf32>
    %c0_151 = arith.constant 0 : index
    %c0_152 = arith.constant 0 : index
    %388 = vector.load %arg17[%c0_151, %c0_152] : memref<1x32xf32, #tpu.memory_space<vmem>>, vector<1x32xf32>
    %389 = vector.broadcast %388 : vector<1x32xf32> to vector<128x32xf32>
    %390 = arith.addf %387, %389 : vector<128x32xf32>
    %cst_153 = arith.constant 0.000000e+00 : f32
    %391 = vector.broadcast %cst_153 : f32 to vector<128x32xf32>
    %392 = arith.maximumf %390, %391 : vector<128x32xf32>
    %c0_154 = arith.constant 0 : index
    %c0_155 = arith.constant 0 : index
    %393 = vector.load %arg18[%c0_154, %c0_155] : memref<32x64xbf16, #tpu.memory_space<vmem>>, vector<32x64xbf16>
    %394 = arith.truncf %392 : vector<128x32xf32> to vector<128x32xbf16>
    %cst_156 = arith.constant dense<0.000000e+00> : vector<128x64xf32>
    %395 = tpu.matmul %394, %393, %cst_156 {dimension_numbers = #tpu.dot_dimension_numbers<[1], [0], [0], [1], [0, 0, 1, 1], [], []>} : vector<128x32xbf16>, vector<32x64xbf16>, vector<128x64xf32> -> vector<128x64xf32>
    %c0_157 = arith.constant 0 : index
    %c0_158 = arith.constant 0 : index
    %396 = vector.load %arg19[%c0_157, %c0_158] : memref<1x64xf32, #tpu.memory_space<vmem>>, vector<1x64xf32>
    %397 = vector.broadcast %396 : vector<1x64xf32> to vector<128x64xf32>
    %398 = arith.addf %395, %397 : vector<128x64xf32>
    %cst_159 = arith.constant 0.000000e+00 : f32
    %399 = vector.broadcast %cst_159 : f32 to vector<128x64xf32>
    %400 = arith.maximumf %398, %399 : vector<128x64xf32>
    %c0_160 = arith.constant 0 : index
    %c0_161 = arith.constant 0 : index
    %401 = vector.load %arg20[%c0_160, %c0_161] : memref<64x128xbf16, #tpu.memory_space<vmem>>, vector<64x128xbf16>
    %402 = arith.truncf %400 : vector<128x64xf32> to vector<128x64xbf16>
    %cst_162 = arith.constant dense<0.000000e+00> : vector<128x128xf32>
    %403 = tpu.matmul %402, %401, %cst_162 {dimension_numbers = #tpu.dot_dimension_numbers<[1], [0], [0], [1], [0, 0, 1, 1], [], []>} : vector<128x64xbf16>, vector<64x128xbf16>, vector<128x128xf32> -> vector<128x128xf32>
    %c0_163 = arith.constant 0 : index
    %c0_164 = arith.constant 0 : index
    %404 = vector.load %arg21[%c0_163, %c0_164] : memref<1x128xf32, #tpu.memory_space<vmem>>, vector<1x128xf32>
    %405 = vector.broadcast %404 : vector<1x128xf32> to vector<128x128xf32>
    %406 = arith.addf %403, %405 : vector<128x128xf32>
    %c0_165 = arith.constant 0 : index
    %c0_166 = arith.constant 0 : index
    %407 = vector.load %arg22[%c0_165, %c0_166] : memref<128x128xf32, #tpu.memory_space<vmem>>, vector<128x128xf32>
    tpu.vector_store %arg22[%c0_165, %c0_166], %406 {strides = array<i32>} : memref<128x128xf32, #tpu.memory_space<vmem>>, vector<128x128xf32>,
    return
  }
  func.func @transform_0(%arg0: i32) -> (i32, i32) {
    %c0_i32 = arith.constant 0 : i32
    %c0_i32_0 = arith.constant 0 : i32
    return %arg0, %c0_i32 : i32, i32
  }
  func.func @transform_1(%arg0: i32) -> (i32, i32) {
    %c0_i32 = arith.constant 0 : i32
    %c0_i32_0 = arith.constant 0 : i32
    %c0_i32_1 = arith.constant 0 : i32
    return %c0_i32, %c0_i32_0 : i32, i32
  }
  func.func @transform_2(%arg0: i32) -> (i32, i32) {
    %c0_i32 = arith.constant 0 : i32
    %c0_i32_0 = arith.constant 0 : i32
    %c0_i32_1 = arith.constant 0 : i32
    return %c0_i32, %c0_i32_0 : i32, i32
  }
  func.func @transform_3(%arg0: i32) -> (i32, i32) {
    %c0_i32 = arith.constant 0 : i32
    %c0_i32_0 = arith.constant 0 : i32
    %c0_i32_1 = arith.constant 0 : i32
    return %c0_i32, %c0_i32_0 : i32, i32
  }
  func.func @transform_4(%arg0: i32) -> (i32, i32) {
    %c0_i32 = arith.constant 0 : i32
    %c0_i32_0 = arith.constant 0 : i32
    %c0_i32_1 = arith.constant 0 : i32
    return %c0_i32, %c0_i32_0 : i32, i32
  }
  func.func @transform_5(%arg0: i32) -> (i32, i32, i32) {
    %c0_i32 = arith.constant 0 : i32
    %c0_i32_0 = arith.constant 0 : i32
    %c0_i32_1 = arith.constant 0 : i32
    %c0_i32_2 = arith.constant 0 : i32
    return %c0_i32, %c0_i32_0, %c0_i32_1 : i32, i32, i32
  }
  func.func @transform_6(%arg0: i32) -> (i32, i32, i32) {
    %c0_i32 = arith.constant 0 : i32
    %c0_i32_0 = arith.constant 0 : i32
    %c0_i32_1 = arith.constant 0 : i32
    %c0_i32_2 = arith.constant 0 : i32
    return %c0_i32, %c0_i32_0, %c0_i32_1 : i32, i32, i32
  }
  func.func @transform_7(%arg0: i32) -> (i32, i32) {
    %c0_i32 = arith.constant 0 : i32
    %c0_i32_0 = arith.constant 0 : i32
    %c0_i32_1 = arith.constant 0 : i32
    return %c0_i32, %c0_i32_0 : i32, i32
  }
  func.func @transform_8(%arg0: i32) -> (i32, i32) {
    %c0_i32 = arith.constant 0 : i32
    %c0_i32_0 = arith.constant 0 : i32
    %c0_i32_1 = arith.constant 0 : i32
    return %c0_i32, %c0_i32_0 : i32, i32
  }
  func.func @transform_9(%arg0: i32) -> (i32, i32, i32) {
    %c0_i32 = arith.constant 0 : i32
    %c0_i32_0 = arith.constant 0 : i32
    %c0_i32_1 = arith.constant 0 : i32
    %c0_i32_2 = arith.constant 0 : i32
    return %c0_i32, %c0_i32_0, %c0_i32_1 : i32, i32, i32
  }
  func.func @transform_10(%arg0: i32) -> (i32, i32, i32) {
    %c0_i32 = arith.constant 0 : i32
    %c0_i32_0 = arith.constant 0 : i32
    %c0_i32_1 = arith.constant 0 : i32
    %c0_i32_2 = arith.constant 0 : i32
    return %c0_i32, %c0_i32_0, %c0_i32_1 : i32, i32, i32
  }
  func.func @transform_11(%arg0: i32) -> (i32, i32) {
    %c0_i32 = arith.constant 0 : i32
    %c0_i32_0 = arith.constant 0 : i32
    %c0_i32_1 = arith.constant 0 : i32
    return %c0_i32, %c0_i32_0 : i32, i32
  }
  func.func @transform_12(%arg0: i32) -> (i32, i32) {
    %c0_i32 = arith.constant 0 : i32
    %c0_i32_0 = arith.constant 0 : i32
    %c0_i32_1 = arith.constant 0 : i32
    return %c0_i32, %c0_i32_0 : i32, i32
  }
  func.func @transform_13(%arg0: i32) -> (i32, i32) {
    %c0_i32 = arith.constant 0 : i32
    %c0_i32_0 = arith.constant 0 : i32
    %c0_i32_1 = arith.constant 0 : i32
    return %c0_i32, %c0_i32_0 : i32, i32
  }
  func.func @transform_14(%arg0: i32) -> (i32, i32) {
    %c0_i32 = arith.constant 0 : i32
    %c0_i32_0 = arith.constant 0 : i32
    %c0_i32_1 = arith.constant 0 : i32
    return %c0_i32, %c0_i32_0 : i32, i32
  }
  func.func @transform_15(%arg0: i32) -> (i32, i32) {
    %c0_i32 = arith.constant 0 : i32
    %c0_i32_0 = arith.constant 0 : i32
    %c0_i32_1 = arith.constant 0 : i32
    return %c0_i32, %c0_i32_0 : i32, i32
  }
  func.func @transform_16(%arg0: i32) -> (i32, i32) {
    %c0_i32 = arith.constant 0 : i32
    %c0_i32_0 = arith.constant 0 : i32
    %c0_i32_1 = arith.constant 0 : i32
    return %c0_i32, %c0_i32_0 : i32, i32
  }
  func.func @transform_17(%arg0: i32) -> (i32, i32) {
    %c0_i32 = arith.constant 0 : i32
    %c0_i32_0 = arith.constant 0 : i32
    %c0_i32_1 = arith.constant 0 : i32
    return %c0_i32, %c0_i32_0 : i32, i32
  }
  func.func @transform_18(%arg0: i32) -> (i32, i32) {
    %c0_i32 = arith.constant 0 : i32
    %c0_i32_0 = arith.constant 0 : i32
    %c0_i32_1 = arith.constant 0 : i32
    return %c0_i32, %c0_i32_0 : i32, i32
  }
  func.func @transform_19(%arg0: i32) -> (i32, i32) {
    %c0_i32 = arith.constant 0 : i32
    %c0_i32_0 = arith.constant 0 : i32
    %c0_i32_1 = arith.constant 0 : i32
    return %c0_i32, %c0_i32_0 : i32, i32
  }
  func.func @transform_20(%arg0: i32) -> (i32, i32) {
    %c0_i32 = arith.constant 0 : i32
    %c0_i32_0 = arith.constant 0 : i32
    %c0_i32_1 = arith.constant 0 : i32
    return %c0_i32, %c0_i32_0 : i32, i32
  }
  func.func @transform_21(%arg0: i32) -> (i32, i32) {
    %c0_i32 = arith.constant 0 : i32
    %c0_i32_0 = arith.constant 0 : i32
    return %arg0, %c0_i32 : i32, i32
  }
}

</mosaic_0001>

<llo_original>
// kernel: seqmodel_forward.1
$region0: #{seqmodel_forward.1}
  #allocation0 [shape = 'u32[]', space=smem, size = 0x4, offset = 0x4, fixed_abs, tag = 'smem constant byte address 0x4 - core index']
  #allocation1 [shape = 'u32[144,128]{1,0:T(1,128)}', space=vmem, size = 0x12000, scoped, tag = 'internal scratch']
  %s0 = inlined_call_operand.vmem [shape: f32[256,128], index: 0, kind: input, shape index: {}]
  %s1 = inlined_call_operand.vmem [shape: bf16[128,32], index: 1, kind: input, shape index: {}]
  %s2 = inlined_call_operand.vmem [shape: f32[1,32], index: 2, kind: input, shape index: {}]
  %s3 = inlined_call_operand.vmem [shape: bf16[32,32], index: 3, kind: input, shape index: {}]
  %s4 = inlined_call_operand.vmem [shape: f32[1,32], index: 4, kind: input, shape index: {}]
  %s5 = inlined_call_operand.vmem [shape: bf16[7,64,64], index: 5, kind: input, shape index: {}]
  %s6 = inlined_call_operand.vmem [shape: f32[7,1,64], index: 6, kind: input, shape index: {}]
  %s7 = inlined_call_operand.vmem [shape: bf16[32,32], index: 7, kind: input, shape index: {}]
  %s8 = inlined_call_operand.vmem [shape: f32[1,32], index: 8, kind: input, shape index: {}]
  %s9 = inlined_call_operand.vmem [shape: bf16[7,64,64], index: 9, kind: input, shape index: {}]
  %s10 = inlined_call_operand.vmem [shape: f32[7,1,64], index: 10, kind: input, shape index: {}]
  %s11 = inlined_call_operand.vmem [shape: bf16[32,32], index: 11, kind: input, shape index: {}]
  %s12 = inlined_call_operand.vmem [shape: f32[1,32], index: 12, kind: input, shape index: {}]
  %s13 = inlined_call_operand.vmem [shape: bf16[32,32], index: 13, kind: input, shape index: {}]
  %s14 = inlined_call_operand.vmem [shape: f32[1,32], index: 14, kind: input, shape index: {}]
  %s15 = inlined_call_operand.vmem [shape: bf16[32,32], index: 15, kind: input, shape index: {}]
  %s16 = inlined_call_operand.vmem [shape: f32[1,32], index: 16, kind: input, shape index: {}]
  %s17 = inlined_call_operand.vmem [shape: bf16[32,64], index: 17, kind: input, shape index: {}]
  %s18 = inlined_call_operand.vmem [shape: f32[1,64], index: 18, kind: input, shape index: {}]
  %s19 = inlined_call_operand.vmem [shape: bf16[64,128], index: 19, kind: input, shape index: {}]
  %s20 = inlined_call_operand.vmem [shape: f32[1,128], index: 20, kind: input, shape index: {}]
  %s21 = inlined_call_operand.vmem [shape: f32[256,128], index: 21, kind: output, shape index: {}]
  %s22 = sld [smem:[#allocation0]]
  $region117: #{seqmodel_forward.1} parent=0
    _
  %s24 = ssub.s32 1, %s22
  %s25 = scalar_select 0, %s24, %s22
  loop: start=0, step=1, limit=4
  $region2: #{seqmodel_forward.1} parent=0 // loop_pre_header
    _
  $region3: #{seqmodel_forward.1} parent=0 // loop_header
    %s27 = sphi 0, %s31
    %p28 = scmp.ge.s32.totalorder %s27, 4
    %s37 = sphi 0, %s39
    %s40 = sphi 0, %s37
    %s41 = sphi 0, %s40
    %s57 = sphi 0, %s41
    %s61 = sphi 0, %s61
    %s63 = sphi 0, %s61
    %s64 = sphi 0, %s63
    %s78 = sphi 0, %s64
    %s82 = sphi 0, %s82
    %s84 = sphi 0, %s82
    %s85 = sphi 0, %s84
    %s99 = sphi 0, %s85
    %s103 = sphi 0, %s103
    %s105 = sphi 0, %s103
    %s106 = sphi 0, %s105
    %s120 = sphi 0, %s106
    %s124 = sphi 0, %s124
    %s126 = sphi 0, %s124
    %s127 = sphi 0, %s126
    %s141 = sphi 0, %s127
    %s145 = sphi 0, %s145
    %s147 = sphi 0, %s145
    %s148 = sphi 0, %s147
    %s162 = sphi 0, %s148
    %s166 = sphi 0, %s166
    %s168 = sphi 0, %s166
    %s169 = sphi 0, %s168
    %s183 = sphi 0, %s169
    %s187 = sphi 0, %s187
    %s189 = sphi 0, %s187
    %s190 = sphi 0, %s189
    %s204 = sphi 0, %s190
    %s208 = sphi 0, %s208
    %s210 = sphi 0, %s208
    %s211 = sphi 0, %s210
    %s225 = sphi 0, %s211
    %s229 = sphi 0, %s229
    %s231 = sphi 0, %s229
    %s232 = sphi 0, %s231
    %s246 = sphi 0, %s232
    %s250 = sphi 0, %s250
    %s252 = sphi 0, %s250
    %s253 = sphi 0, %s252
    %s267 = sphi 0, %s253
    %s271 = sphi 0, %s271
    %s273 = sphi 0, %s271
    %s274 = sphi 0, %s273
    %s288 = sphi 0, %s274
    %s292 = sphi 0, %s292
    %s294 = sphi 0, %s292
    %s295 = sphi 0, %s294
    %s309 = sphi 0, %s295
    %s313 = sphi 0, %s313
    %s315 = sphi 0, %s313
    %s316 = sphi 0, %s315
    %s330 = sphi 0, %s316
    %s334 = sphi 0, %s334
    %s336 = sphi 0, %s334
    %s337 = sphi 0, %s336
    %s351 = sphi 0, %s337
    %s355 = sphi 0, %s355
    %s357 = sphi 0, %s355
    %s358 = sphi 0, %s357
    %s372 = sphi 0, %s358
    %s376 = sphi 0, %s376
    %s378 = sphi 0, %s376
    %s379 = sphi 0, %s378
    %s393 = sphi 0, %s379
    %s397 = sphi 0, %s397
    %s399 = sphi 0, %s397
    %s400 = sphi 0, %s399
    %s414 = sphi 0, %s400
    %s418 = sphi 0, %s418
    %s420 = sphi 0, %s418
    %s421 = sphi 0, %s420
    %s435 = sphi 0, %s421
    %s439 = sphi 0, %s439
    %s441 = sphi 0, %s439
    %s442 = sphi 0, %s441
    %s456 = sphi 0, %s442
    %s460 = sphi 0, %s460
    %s462 = sphi 0, %s460
    %s463 = sphi 0, %s462
    %s477 = sphi 0, %s463
    %s483 = sphi 0, %s485
    %s486 = sphi 0, %s483
    %s487 = sphi 0, %s486
    %s503 = sphi 0, %s487
  $region4: #{seqmodel_forward.1} parent=0 // loop_header_branch
    %30 = sbr.rel (%p28) target = $region8
  $region5: #{seqmodel_forward.1} parent=0 // loop_body
    %s32 = ssub.s32 %s27, 1
    %s33 = ssub.s32 %s27, 2
    %s34 = sadd.s32 %s27, 1
    %s35 = ssub.s32 %s27, %s34
    %p36 = scmp.eq.s32.totalorder %s35, 0
    %s38 = sadd.s32 %s37, 1
    %s39 = scalar_select %p36, %s37, %s38
    %p42 = pneg %p36
    %p43 = scmp.eq.s32.totalorder %s27, 1
    %p44 = por %p42, %p43
    %p45 = scmp.ne.s32.totalorder %s37, %s40
    %p46 = scmp.eq.s32.totalorder %s27, 0
    %p47 = por %p45, %p46
    %p48 = scmp.ne.s32.totalorder %s37, %s40
    %p49 = scmp.eq.s32.totalorder %s32, 1
    %p50 = por %p48, %p49
    %p51 = scmp.ne.s32.totalorder %s40, %s41
    %p52 = scmp.eq.s32.totalorder %s32, 0
    %p53 = por %p51, %p52
    %p54 = scmp.ne.s32.totalorder %s40, %s41
    %p55 = scmp.eq.s32.totalorder %s33, 1
    %p56 = por %p54, %p55
    %p58 = scmp.ne.s32.totalorder %s41, %s57
    %p59 = scmp.eq.s32.totalorder %s33, 0
    %p60 = por %p58, %p59
    %s62 = sadd.s32 %s61, 1
    %p65 = scmp.eq.s32.totalorder %s27, 1
    %p66 = scmp.ne.s32.totalorder %s61, %s63
    %p67 = scmp.eq.s32.totalorder %s27, 0
    %p68 = por %p66, %p67
    %p69 = scmp.ne.s32.totalorder %s61, %s63
    %p70 = scmp.eq.s32.totalorder %s32, 1
    %p71 = por %p69, %p70
    %p72 = scmp.ne.s32.totalorder %s63, %s64
    %p73 = scmp.eq.s32.totalorder %s32, 0
    %p74 = por %p72, %p73
    %p75 = scmp.ne.s32.totalorder %s63, %s64
    %p76 = scmp.eq.s32.totalorder %s33, 1
    %p77 = por %p75, %p76
    %p79 = scmp.ne.s32.totalorder %s64, %s78
    %p80 = scmp.eq.s32.totalorder %s33, 0
    %p81 = por %p79, %p80
    %s83 = sadd.s32 %s82, 1
    %p86 = scmp.eq.s32.totalorder %s27, 1
    %p87 = scmp.ne.s32.totalorder %s82, %s84
    %p88 = scmp.eq.s32.totalorder %s27, 0
    %p89 = por %p87, %p88
    %p90 = scmp.ne.s32.totalorder %s82, %s84
    %p91 = scmp.eq.s32.totalorder %s32, 1
    %p92 = por %p90, %p91
    %p93 = scmp.ne.s32.totalorder %s84, %s85
    %p94 = scmp.eq.s32.totalorder %s32, 0
    %p95 = por %p93, %p94
    %p96 = scmp.ne.s32.totalorder %s84, %s85
    %p97 = scmp.eq.s32.totalorder %s33, 1
    %p98 = por %p96, %p97
    %p100 = scmp.ne.s32.totalorder %s85, %s99
    %p101 = scmp.eq.s32.totalorder %s33, 0
    %p102 = por %p100, %p101
    %s104 = sadd.s32 %s103, 1
    %p107 = scmp.eq.s32.totalorder %s27, 1
    %p108 = scmp.ne.s32.totalorder %s103, %s105
    %p109 = scmp.eq.s32.totalorder %s27, 0
    %p110 = por %p108, %p109
    %p111 = scmp.ne.s32.totalorder %s103, %s105
    %p112 = scmp.eq.s32.totalorder %s32, 1
    %p113 = por %p111, %p112
    %p114 = scmp.ne.s32.totalorder %s105, %s106
    %p115 = scmp.eq.s32.totalorder %s32, 0
    %p116 = por %p114, %p115
    %p117 = scmp.ne.s32.totalorder %s105, %s106
    %p118 = scmp.eq.s32.totalorder %s33, 1
    %p119 = por %p117, %p118
    %p121 = scmp.ne.s32.totalorder %s106, %s120
    %p122 = scmp.eq.s32.totalorder %s33, 0
    %p123 = por %p121, %p122
    %s125 = sadd.s32 %s124, 1
    %p128 = scmp.eq.s32.totalorder %s27, 1
    %p129 = scmp.ne.s32.totalorder %s124, %s126
    %p130 = scmp.eq.s32.totalorder %s27, 0
    %p131 = por %p129, %p130
    %p132 = scmp.ne.s32.totalorder %s124, %s126
    %p133 = scmp.eq.s32.totalorder %s32, 1
    %p134 = por %p132, %p133
    %p135 = scmp.ne.s32.totalorder %s126, %s127
    %p136 = scmp.eq.s32.totalorder %s32, 0
    %p137 = por %p135, %p136
    %p138 = scmp.ne.s32.totalorder %s126, %s127
    %p139 = scmp.eq.s32.totalorder %s33, 1
    %p140 = por %p138, %p139
    %p142 = scmp.ne.s32.totalorder %s127, %s141
    %p143 = scmp.eq.s32.totalorder %s33, 0
    %p144 = por %p142, %p143
    %s146 = sadd.s32 %s145, 1
    %p149 = scmp.eq.s32.totalorder %s27, 1
    %p150 = scmp.ne.s32.totalorder %s145, %s147
    %p151 = scmp.eq.s32.totalorder %s27, 0
    %p152 = por %p150, %p151
    %p153 = scmp.ne.s32.totalorder %s145, %s147
    %p154 = scmp.eq.s32.totalorder %s32, 1
    %p155 = por %p153, %p154
    %p156 = scmp.ne.s32.totalorder %s147, %s148
    %p157 = scmp.eq.s32.totalorder %s32, 0
    %p158 = por %p156, %p157
    %p159 = scmp.ne.s32.totalorder %s147, %s148
    %p160 = scmp.eq.s32.totalorder %s33, 1
    %p161 = por %p159, %p160
    %p163 = scmp.ne.s32.totalorder %s148, %s162
    %p164 = scmp.eq.s32.totalorder %s33, 0
    %p165 = por %p163, %p164
    %s167 = sadd.s32 %s166, 1
    %p170 = scmp.eq.s32.totalorder %s27, 1
    %p171 = scmp.ne.s32.totalorder %s166, %s168
    %p172 = scmp.eq.s32.totalorder %s27, 0
    %p173 = por %p171, %p172
    %p174 = scmp.ne.s32.totalorder %s166, %s168
    %p175 = scmp.eq.s32.totalorder %s32, 1
    %p176 = por %p174, %p175
    %p177 = scmp.ne.s32.totalorder %s168, %s169
    %p178 = scmp.eq.s32.totalorder %s32, 0
    %p179 = por %p177, %p178
    %p180 = scmp.ne.s32.totalorder %s168, %s169
    %p181 = scmp.eq.s32.totalorder %s33, 1
    %p182 = por %p180, %p181
    %p184 = scmp.ne.s32.totalorder %s169, %s183
    %p185 = scmp.eq.s32.totalorder %s33, 0
    %p186 = por %p184, %p185
    %s188 = sadd.s32 %s187, 1
    %p191 = scmp.eq.s32.totalorder %s27, 1
    %p192 = scmp.ne.s32.totalorder %s187, %s189
    %p193 = scmp.eq.s32.totalorder %s27, 0
    %p194 = por %p192, %p193
    %p195 = scmp.ne.s32.totalorder %s187, %s189
    %p196 = scmp.eq.s32.totalorder %s32, 1
    %p197 = por %p195, %p196
    %p198 = scmp.ne.s32.totalorder %s189, %s190
    %p199 = scmp.eq.s32.totalorder %s32, 0
    %p200 = por %p198, %p199
    %p201 = scmp.ne.s32.totalorder %s189, %s190
    %p202 = scmp.eq.s32.totalorder %s33, 1
    %p203 = por %p201, %p202
    %p205 = scmp.ne.s32.totalorder %s190, %s204
    %p206 = scmp.eq.s32.totalorder %s33, 0
    %p207 = por %p205, %p206
    %s209 = sadd.s32 %s208, 1
    %p212 = scmp.eq.s32.totalorder %s27, 1
    %p213 = scmp.ne.s32.totalorder %s208, %s210
    %p214 = scmp.eq.s32.totalorder %s27, 0
    %p215 = por %p213, %p214
    %p216 = scmp.ne.s32.totalorder %s208, %s210
    %p217 = scmp.eq.s32.totalorder %s32, 1
    %p218 = por %p216, %p217
    %p219 = scmp.ne.s32.totalorder %s210, %s211
    %p220 = scmp.eq.s32.totalorder %s32, 0
    %p221 = por %p219, %p220
    %p222 = scmp.ne.s32.totalorder %s210, %s211
    %p223 = scmp.eq.s32.totalorder %s33, 1
    %p224 = por %p222, %p223
    %p226 = scmp.ne.s32.totalorder %s211, %s225
    %p227 = scmp.eq.s32.totalorder %s33, 0
    %p228 = por %p226, %p227
    %s230 = sadd.s32 %s229, 1
    %p233 = scmp.eq.s32.totalorder %s27, 1
    %p234 = scmp.ne.s32.totalorder %s229, %s231
    %p235 = scmp.eq.s32.totalorder %s27, 0
    %p236 = por %p234, %p235
    %p237 = scmp.ne.s32.totalorder %s229, %s231
    %p238 = scmp.eq.s32.totalorder %s32, 1
    %p239 = por %p237, %p238
    %p240 = scmp.ne.s32.totalorder %s231, %s232
    %p241 = scmp.eq.s32.totalorder %s32, 0
    %p242 = por %p240, %p241
    %p243 = scmp.ne.s32.totalorder %s231, %s232
    %p244 = scmp.eq.s32.totalorder %s33, 1
    %p245 = por %p243, %p244
    %p247 = scmp.ne.s32.totalorder %s232, %s246
    %p248 = scmp.eq.s32.totalorder %s33, 0
    %p249 = por %p247, %p248
    %s251 = sadd.s32 %s250, 1
    %p254 = scmp.eq.s32.totalorder %s27, 1
    %p255 = scmp.ne.s32.totalorder %s250, %s252
    %p256 = scmp.eq.s32.totalorder %s27, 0
    %p257 = por %p255, %p256
    %p258 = scmp.ne.s32.totalorder %s250, %s252
    %p259 = scmp.eq.s32.totalorder %s32, 1
    %p260 = por %p258, %p259
    %p261 = scmp.ne.s32.totalorder %s252, %s253
    %p262 = scmp.eq.s32.totalorder %s32, 0
    %p263 = por %p261, %p262
    %p264 = scmp.ne.s32.totalorder %s252, %s253
    %p265 = scmp.eq.s32.totalorder %s33, 1
    %p266 = por %p264, %p265
    %p268 = scmp.ne.s32.totalorder %s253, %s267
    %p269 = scmp.eq.s32.totalorder %s33, 0
    %p270 = por %p268, %p269
    %s272 = sadd.s32 %s271, 1
    %p275 = scmp.eq.s32.totalorder %s27, 1
    %p276 = scmp.ne.s32.totalorder %s271, %s273
    %p277 = scmp.eq.s32.totalorder %s27, 0
    %p278 = por %p276, %p277
    %p279 = scmp.ne.s32.totalorder %s271, %s273
    %p280 = scmp.eq.s32.totalorder %s32, 1
    %p281 = por %p279, %p280
    %p282 = scmp.ne.s32.totalorder %s273, %s274
    %p283 = scmp.eq.s32.totalorder %s32, 0
    %p284 = por %p282, %p283
    %p285 = scmp.ne.s32.totalorder %s273, %s274
    %p286 = scmp.eq.s32.totalorder %s33, 1
    %p287 = por %p285, %p286
    %p289 = scmp.ne.s32.totalorder %s274, %s288
    %p290 = scmp.eq.s32.totalorder %s33, 0
    %p291 = por %p289, %p290
    %s293 = sadd.s32 %s292, 1
    %p296 = scmp.eq.s32.totalorder %s27, 1
    %p297 = scmp.ne.s32.totalorder %s292, %s294
    %p298 = scmp.eq.s32.totalorder %s27, 0
    %p299 = por %p297, %p298
    %p300 = scmp.ne.s32.totalorder %s292, %s294
    %p301 = scmp.eq.s32.totalorder %s32, 1
    %p302 = por %p300, %p301
    %p303 = scmp.ne.s32.totalorder %s294, %s295
    %p304 = scmp.eq.s32.totalorder %s32, 0
    %p305 = por %p303, %p304
    %p306 = scmp.ne.s32.totalorder %s294, %s295
    %p307 = scmp.eq.s32.totalorder %s33, 1
    %p308 = por %p306, %p307
    %p310 = scmp.ne.s32.totalorder %s295, %s309
    %p311 = scmp.eq.s32.totalorder %s33, 0
    %p312 = por %p310, %p311
    %s314 = sadd.s32 %s313, 1
    %p317 = scmp.eq.s32.totalorder %s27, 1
    %p318 = scmp.ne.s32.totalorder %s313, %s315
    %p319 = scmp.eq.s32.totalorder %s27, 0
    %p320 = por %p318, %p319
    %p321 = scmp.ne.s32.totalorder %s313, %s315
    %p322 = scmp.eq.s32.totalorder %s32, 1
    %p323 = por %p321, %p322
    %p324 = scmp.ne.s32.totalorder %s315, %s316
    %p325 = scmp.eq.s32.totalorder %s32, 0
    %p326 = por %p324, %p325
    %p327 = scmp.ne.s32.totalorder %s315, %s316
    %p328 = scmp.eq.s32.totalorder %s33, 1
    %p329 = por %p327, %p328
    %p331 = scmp.ne.s32.totalorder %s316, %s330
    %p332 = scmp.eq.s32.totalorder %s33, 0
    %p333 = por %p331, %p332
    %s335 = sadd.s32 %s334, 1
    %p338 = scmp.eq.s32.totalorder %s27, 1
    %p339 = scmp.ne.s32.totalorder %s334, %s336
    %p340 = scmp.eq.s32.totalorder %s27, 0
    %p341 = por %p339, %p340
    %p342 = scmp.ne.s32.totalorder %s334, %s336
    %p343 = scmp.eq.s32.totalorder %s32, 1
    %p344 = por %p342, %p343
    %p345 = scmp.ne.s32.totalorder %s336, %s337
    %p346 = scmp.eq.s32.totalorder %s32, 0
    %p347 = por %p345, %p346
    %p348 = scmp.ne.s32.totalorder %s336, %s337
    %p349 = scmp.eq.s32.totalorder %s33, 1
    %p350 = por %p348, %p349
    %p352 = scmp.ne.s32.totalorder %s337, %s351
    %p353 = scmp.eq.s32.totalorder %s33, 0
    %p354 = por %p352, %p353
    %s356 = sadd.s32 %s355, 1
    %p359 = scmp.eq.s32.totalorder %s27, 1
    %p360 = scmp.ne.s32.totalorder %s355, %s357
    %p361 = scmp.eq.s32.totalorder %s27, 0
    %p362 = por %p360, %p361
    %p363 = scmp.ne.s32.totalorder %s355, %s357
    %p364 = scmp.eq.s32.totalorder %s32, 1
    %p365 = por %p363, %p364
    %p366 = scmp.ne.s32.totalorder %s357, %s358
    %p367 = scmp.eq.s32.totalorder %s32, 0
    %p368 = por %p366, %p367
    %p369 = scmp.ne.s32.totalorder %s357, %s358
    %p370 = scmp.eq.s32.totalorder %s33, 1
    %p371 = por %p369, %p370
    %p373 = scmp.ne.s32.totalorder %s358, %s372
    %p374 = scmp.eq.s32.totalorder %s33, 0
    %p375 = por %p373, %p374
    %s377 = sadd.s32 %s376, 1
    %p380 = scmp.eq.s32.totalorder %s27, 1
    %p381 = scmp.ne.s32.totalorder %s376, %s378
    %p382 = scmp.eq.s32.totalorder %s27, 0
    %p383 = por %p381, %p382
    %p384 = scmp.ne.s32.totalorder %s376, %s378
    %p385 = scmp.eq.s32.totalorder %s32, 1
    %p386 = por %p384, %p385
    %p387 = scmp.ne.s32.totalorder %s378, %s379
    %p388 = scmp.eq.s32.totalorder %s32, 0
    %p389 = por %p387, %p388
    %p390 = scmp.ne.s32.totalorder %s378, %s379
    %p391 = scmp.eq.s32.totalorder %s33, 1
    %p392 = por %p390, %p391
    %p394 = scmp.ne.s32.totalorder %s379, %s393
    %p395 = scmp.eq.s32.totalorder %s33, 0
    %p396 = por %p394, %p395
    %s398 = sadd.s32 %s397, 1
    %p401 = scmp.eq.s32.totalorder %s27, 1
    %p402 = scmp.ne.s32.totalorder %s397, %s399
    %p403 = scmp.eq.s32.totalorder %s27, 0
    %p404 = por %p402, %p403
    %p405 = scmp.ne.s32.totalorder %s397, %s399
    %p406 = scmp.eq.s32.totalorder %s32, 1
    %p407 = por %p405, %p406
    %p408 = scmp.ne.s32.totalorder %s399, %s400
    %p409 = scmp.eq.s32.totalorder %s32, 0
    %p410 = por %p408, %p409
    %p411 = scmp.ne.s32.totalorder %s399, %s400
    %p412 = scmp.eq.s32.totalorder %s33, 1
    %p413 = por %p411, %p412
    %p415 = scmp.ne.s32.totalorder %s400, %s414
    %p416 = scmp.eq.s32.totalorder %s33, 0
    %p417 = por %p415, %p416
    %s419 = sadd.s32 %s418, 1
    %p422 = scmp.eq.s32.totalorder %s27, 1
    %p423 = scmp.ne.s32.totalorder %s418, %s420
    %p424 = scmp.eq.s32.totalorder %s27, 0
    %p425 = por %p423, %p424
    %p426 = scmp.ne.s32.totalorder %s418, %s420
    %p427 = scmp.eq.s32.totalorder %s32, 1
    %p428 = por %p426, %p427
    %p429 = scmp.ne.s32.totalorder %s420, %s421
    %p430 = scmp.eq.s32.totalorder %s32, 0
    %p431 = por %p429, %p430
    %p432 = scmp.ne.s32.totalorder %s420, %s421
    %p433 = scmp.eq.s32.totalorder %s33, 1
    %p434 = por %p432, %p433
    %p436 = scmp.ne.s32.totalorder %s421, %s435
    %p437 = scmp.eq.s32.totalorder %s33, 0
    %p438 = por %p436, %p437
    %s440 = sadd.s32 %s439, 1
    %p443 = scmp.eq.s32.totalorder %s27, 1
    %p444 = scmp.ne.s32.totalorder %s439, %s441
    %p445 = scmp.eq.s32.totalorder %s27, 0
    %p446 = por %p444, %p445
    %p447 = scmp.ne.s32.totalorder %s439, %s441
    %p448 = scmp.eq.s32.totalorder %s32, 1
    %p449 = por %p447, %p448
    %p450 = scmp.ne.s32.totalorder %s441, %s442
    %p451 = scmp.eq.s32.totalorder %s32, 0
    %p452 = por %p450, %p451
    %p453 = scmp.ne.s32.totalorder %s441, %s442
    %p454 = scmp.eq.s32.totalorder %s33, 1
    %p455 = por %p453, %p454
    %p457 = scmp.ne.s32.totalorder %s442, %s456
    %p458 = scmp.eq.s32.totalorder %s33, 0
    %p459 = por %p457, %p458
    %s461 = sadd.s32 %s460, 1
    %p464 = scmp.eq.s32.totalorder %s27, 1
    %p465 = scmp.ne.s32.totalorder %s460, %s462
    %p466 = scmp.eq.s32.totalorder %s27, 0
    %p467 = por %p465, %p466
    %p468 = scmp.ne.s32.totalorder %s460, %s462
    %p469 = scmp.eq.s32.totalorder %s32, 1
    %p470 = por %p468, %p469
    %p471 = scmp.ne.s32.totalorder %s462, %s463
    %p472 = scmp.eq.s32.totalorder %s32, 0
    %p473 = por %p471, %p472
    %p474 = scmp.ne.s32.totalorder %s462, %s463
    %p475 = scmp.eq.s32.totalorder %s33, 1
    %p476 = por %p474, %p475
    %p478 = scmp.ne.s32.totalorder %s463, %s477
    %p479 = scmp.eq.s32.totalorder %s33, 0
    %p480 = por %p478, %p479
    %s481 = ssub.s32 %s27, %s34
    %p482 = scmp.eq.s32.totalorder %s481, 0
    %s484 = sadd.s32 %s483, 1
    %s485 = scalar_select %p482, %s483, %s484
    %p488 = pneg %p482
    %p489 = scmp.eq.s32.totalorder %s27, 1
    %p490 = por %p488, %p489
    %p491 = scmp.ne.s32.totalorder %s483, %s486
    %p492 = scmp.eq.s32.totalorder %s27, 0
    %p493 = por %p491, %p492
    %p494 = scmp.ne.s32.totalorder %s483, %s486
    %p495 = scmp.eq.s32.totalorder %s32, 1
    %p496 = por %p494, %p495
    %p497 = scmp.ne.s32.totalorder %s486, %s487
    %p498 = scmp.eq.s32.totalorder %s32, 0
    %p499 = por %p497, %p498
    %p500 = scmp.ne.s32.totalorder %s486, %s487
    %p501 = scmp.eq.s32.totalorder %s33, 1
    %p502 = por %p500, %p501
    %p504 = scmp.ne.s32.totalorder %s487, %s503
    %p505 = scmp.eq.s32.totalorder %s33, 0
    %p506 = por %p504, %p505
    %p507 = scmp.le.s32.totalorder 1, %s27
    %p508 = scmp.lt.s32.totalorder %s27, 3
    %p509 = pnand %p507, %p508
    %p510 = pneg %p509
    // Predicated region
    $region9: #{seqmodel_forward.1} parent=5 // pred_check
      _
    $region10: #{seqmodel_forward.1} parent=5 // pred_check_branch
      %512 = sbr.rel (%p509) target = $region12
    $region11: #{seqmodel_forward.1} parent=5 // pred_region
      %s513 = ssub.s32 %s27, 1
      // Predicated region
      $region13: #{seqmodel_forward.1} parent=11 // pred_check
        %p514 = pneg %p74
      $region14: #{seqmodel_forward.1} parent=11 // pred_check_branch
        %516 = sbr.rel (%p514) target = $region16
      $region15: #{seqmodel_forward.1} parent=11 // pred_region
        _
      $region16: #{seqmodel_forward.1} parent=11 // pred_fallthru
        _
      // Predicated region
      $region17: #{seqmodel_forward.1} parent=11 // pred_check
        %p517 = pneg %p95
      $region18: #{seqmodel_forward.1} parent=11 // pred_check_branch
        %519 = sbr.rel (%p517) target = $region20
      $region19: #{seqmodel_forward.1} parent=11 // pred_region
        _
      $region20: #{seqmodel_forward.1} parent=11 // pred_fallthru
        _
      // Predicated region
      $region21: #{seqmodel_forward.1} parent=11 // pred_check
        %p520 = pneg %p116
      $region22: #{seqmodel_forward.1} parent=11 // pred_check_branch
        %522 = sbr.rel (%p520) target = $region24
      $region23: #{seqmodel_forward.1} parent=11 // pred_region
        _
      $region24: #{seqmodel_forward.1} parent=11 // pred_fallthru
        _
      // Predicated region
      $region25: #{seqmodel_forward.1} parent=11 // pred_check
        %p523 = pneg %p137
      $region26: #{seqmodel_forward.1} parent=11 // pred_check_branch
        %525 = sbr.rel (%p523) target = $region28
      $region27: #{seqmodel_forward.1} parent=11 // pred_region
        _
      $region28: #{seqmodel_forward.1} parent=11 // pred_fallthru
        _
      // Predicated region
      $region29: #{seqmodel_forward.1} parent=11 // pred_check
        %p526 = pneg %p158
      $region30: #{seqmodel_forward.1} parent=11 // pred_check_branch
        %528 = sbr.rel (%p526) target = $region32
      $region31: #{seqmodel_forward.1} parent=11 // pred_region
        _
      $region32: #{seqmodel_forward.1} parent=11 // pred_fallthru
        _
      // Predicated region
      $region33: #{seqmodel_forward.1} parent=11 // pred_check
        %p529 = pneg %p179
      $region34: #{seqmodel_forward.1} parent=11 // pred_check_branch
        %531 = sbr.rel (%p529) target = $region36
      $region35: #{seqmodel_forward.1} parent=11 // pred_region
        _
      $region36: #{seqmodel_forward.1} parent=11 // pred_fallthru
        _
      // Predicated region
      $region37: #{seqmodel_forward.1} parent=11 // pred_check
        %p532 = pneg %p200
      $region38: #{seqmodel_forward.1} parent=11 // pred_check_branch
        %534 = sbr.rel (%p532) target = $region40
      $region39: #{seqmodel_forward.1} parent=11 // pred_region
        _
      $region40: #{seqmodel_forward.1} parent=11 // pred_fallthru
        _
      // Predicated region
      $region41: #{seqmodel_forward.1} parent=11 // pred_check
        %p535 = pneg %p221
      $region42: #{seqmodel_forward.1} parent=11 // pred_check_branch
        %537 = sbr.rel (%p535) target = $region44
      $region43: #{seqmodel_forward.1} parent=11 // pred_region
        _
      $region44: #{seqmodel_forward.1} parent=11 // pred_fallthru
        _
      // Predicated region
      $region45: #{seqmodel_forward.1} parent=11 // pred_check
        %p538 = pneg %p242
      $region46: #{seqmodel_forward.1} parent=11 // pred_check_branch
        %540 = sbr.rel (%p538) target = $region48
      $region47: #{seqmodel_forward.1} parent=11 // pred_region
        _
      $region48: #{seqmodel_forward.1} parent=11 // pred_fallthru
        _
      // Predicated region
      $region49: #{seqmodel_forward.1} parent=11 // pred_check
        %p541 = pneg %p263
      $region50: #{seqmodel_forward.1} parent=11 // pred_check_branch
        %543 = sbr.rel (%p541) target = $region52
      $region51: #{seqmodel_forward.1} parent=11 // pred_region
        _
      $region52: #{seqmodel_forward.1} parent=11 // pred_fallthru
        _
      // Predicated region
      $region53: #{seqmodel_forward.1} parent=11 // pred_check
        %p544 = pneg %p284
      $region54: #{seqmodel_forward.1} parent=11 // pred_check_branch
        %546 = sbr.rel (%p544) target = $region56
      $region55: #{seqmodel_forward.1} parent=11 // pred_region
        _
      $region56: #{seqmodel_forward.1} parent=11 // pred_fallthru
        _
      // Predicated region
      $region57: #{seqmodel_forward.1} parent=11 // pred_check
        %p547 = pneg %p305
      $region58: #{seqmodel_forward.1} parent=11 // pred_check_branch
        %549 = sbr.rel (%p547) target = $region60
      $region59: #{seqmodel_forward.1} parent=11 // pred_region
        _
      $region60: #{seqmodel_forward.1} parent=11 // pred_fallthru
        _
      // Predicated region
      $region61: #{seqmodel_forward.1} parent=11 // pred_check
        %p550 = pneg %p326
      $region62: #{seqmodel_forward.1} parent=11 // pred_check_branch
        %552 = sbr.rel (%p550) target = $region64
      $region63: #{seqmodel_forward.1} parent=11 // pred_region
        _
      $region64: #{seqmodel_forward.1} parent=11 // pred_fallthru
        _
      // Predicated region
      $region65: #{seqmodel_forward.1} parent=11 // pred_check
        %p553 = pneg %p347
      $region66: #{seqmodel_forward.1} parent=11 // pred_check_branch
        %555 = sbr.rel (%p553) target = $region68
      $region67: #{seqmodel_forward.1} parent=11 // pred_region
        _
      $region68: #{seqmodel_forward.1} parent=11 // pred_fallthru
        _
      // Predicated region
      $region69: #{seqmodel_forward.1} parent=11 // pred_check
        %p556 = pneg %p368
      $region70: #{seqmodel_forward.1} parent=11 // pred_check_branch
        %558 = sbr.rel (%p556) target = $region72
      $region71: #{seqmodel_forward.1} parent=11 // pred_region
        _
      $region72: #{seqmodel_forward.1} parent=11 // pred_fallthru
        _
      // Predicated region
      $region73: #{seqmodel_forward.1} parent=11 // pred_check
        %p559 = pneg %p389
      $region74: #{seqmodel_forward.1} parent=11 // pred_check_branch
        %561 = sbr.rel (%p559) target = $region76
      $region75: #{seqmodel_forward.1} parent=11 // pred_region
        _
      $region76: #{seqmodel_forward.1} parent=11 // pred_fallthru
        _
      // Predicated region
      $region77: #{seqmodel_forward.1} parent=11 // pred_check
        %p562 = pneg %p410
      $region78: #{seqmodel_forward.1} parent=11 // pred_check_branch
        %564 = sbr.rel (%p562) target = $region80
      $region79: #{seqmodel_forward.1} parent=11 // pred_region
        _
      $region80: #{seqmodel_forward.1} parent=11 // pred_fallthru
        _
      // Predicated region
      $region81: #{seqmodel_forward.1} parent=11 // pred_check
        %p565 = pneg %p431
      $region82: #{seqmodel_forward.1} parent=11 // pred_check_branch
        %567 = sbr.rel (%p565) target = $region84
      $region83: #{seqmodel_forward.1} parent=11 // pred_region
        _
      $region84: #{seqmodel_forward.1} parent=11 // pred_fallthru
        _
      // Predicated region
      $region85: #{seqmodel_forward.1} parent=11 // pred_check
        %p568 = pneg %p452
      $region86: #{seqmodel_forward.1} parent=11 // pred_check_branch
        %570 = sbr.rel (%p568) target = $region88
      $region87: #{seqmodel_forward.1} parent=11 // pred_region
        _
      $region88: #{seqmodel_forward.1} parent=11 // pred_fallthru
        _
      // Predicated region
      $region89: #{seqmodel_forward.1} parent=11 // pred_check
        %p571 = pneg %p473
      $region90: #{seqmodel_forward.1} parent=11 // pred_check_branch
        %573 = sbr.rel (%p571) target = $region92
      $region91: #{seqmodel_forward.1} parent=11 // pred_region
        _
      $region92: #{seqmodel_forward.1} parent=11 // pred_fallthru
        _
    $region12: #{seqmodel_forward.1} parent=5 // pred_fallthru
      _
    %p574 = scmp.lt.s32.totalorder %s27, 2
    // Predicated region
    $region93: #{seqmodel_forward.1} parent=5 // pred_check
      %p575 = pneg %p574
    $region94: #{seqmodel_forward.1} parent=5 // pred_check_branch
      %577 = sbr.rel (%p575) target = $region96
    $region95: #{seqmodel_forward.1} parent=5 // pred_region
      // Predicated region
      $region97: #{seqmodel_forward.1} parent=95 // pred_check
        %p578 = pneg %p47
      $region98: #{seqmodel_forward.1} parent=95 // pred_check_branch
        %580 = sbr.rel (%p578) target = $region100
      $region99: #{seqmodel_forward.1} parent=95 // pred_region
        %s581 = smul.u32 16, %s27
        %p582 = scmp.lt.s32.totalorder %s581, 31
        %s583 = scalar_select %p582, %s581, 31
        %s584 = smul.addr %s583, 8
        %s585 = scalar_lea.vmem %s0, %s584
        %s586 = smul.u32 16, %s27
      $region100: #{seqmodel_forward.1} parent=95 // pred_fallthru
        _
    $region96: #{seqmodel_forward.1} parent=5 // pred_fallthru
      _
    %p587 = scmp.le.s32.totalorder 1, %s27
    %p588 = scmp.lt.s32.totalorder %s27, 3
    %p589 = pnand %p587, %p588
    %p590 = pneg %p589
    // Predicated region
    $region101: #{seqmodel_forward.1} parent=5 // pred_check
      _
    $region102: #{seqmodel_forward.1} parent=5 // pred_check_branch
      %592 = sbr.rel (%p589) target = $region104
    $region103: #{seqmodel_forward.1} parent=5 // pred_region
      %s593 = ssub.s32 %s27, 1
      %s594 = smul.u32 16, %s32
      %p595 = scmp.lt.s32.totalorder %s594, 31
      %s596 = scalar_select %p595, %s594, 31
      %s597 = smul.addr %s596, 8
      %s598 = scalar_lea.vmem %s0, %s597
      %p599 = pneg %p53
      %p600 = pneg %p50
      %p601 = pneg %p74
      %p602 = pneg %p71
      %p603 = pneg %p95
      %p604 = pneg %p92
      %p605 = pneg %p116
      %p606 = pneg %p113
      %p607 = pneg %p137
      %p608 = pneg %p134
      %p609 = pneg %p158
      %p610 = pneg %p155
      %p611 = pneg %p179
      %p612 = pneg %p176
      %p613 = pneg %p200
      %p614 = pneg %p197
      %p615 = pneg %p221
      %p616 = pneg %p218
      %p617 = pneg %p242
      %p618 = pneg %p239
      %p619 = pneg %p263
      %p620 = pneg %p260
      %p621 = pneg %p284
      %p622 = pneg %p281
      %p623 = pneg %p305
      %p624 = pneg %p302
      %p625 = pneg %p326
      %p626 = pneg %p323
      %p627 = pneg %p347
      %p628 = pneg %p344
      %p629 = pneg %p368
      %p630 = pneg %p365
      %p631 = pneg %p389
      %p632 = pneg %p386
      %p633 = pneg %p410
      %p634 = pneg %p407
      %p635 = pneg %p431
      %p636 = pneg %p428
      %p637 = pneg %p452
      %p638 = pneg %p449
      %p639 = pneg %p473
      %p640 = pneg %p470
      %p641 = pneg %p499
      %p642 = pneg %p496
      %s643 = smul.u32 16, %s32
      %p644 = scmp.lt.s32.totalorder %s643, 31
      %s645 = scalar_select %p644, %s643, 31
      %s646 = smul.addr %s645, 8
      %s647 = scalar_lea.vmem %s21, %s646
      %s648 = smul.u32 16, %s32
      %p649 = scmp.lt.s32.totalorder %s648, 31
      %s650 = scalar_select %p649, %s648, 31
      %s651 = smul.addr %s650, 8
      %s652 = scalar_lea.vmem %s0, %s651
      %s653 = smul.u32 16, %s32
      %s654 = smul.u32 16, %s32
      %p655 = scmp.lt.s32.totalorder %s654, 31
      %s656 = scalar_select %p655, %s654, 31
      %s657 = smul.addr %s656, 8
      %s658 = scalar_lea.vmem %s21, %s657
      %s659 = smul.u32 16, %s32
      %v661 = vlaneseq
      %v662 = vshrl.u32 %v661, 7
      %v663 = vadd.s32 %v662, 8
      %v664 = vadd.s32 %v662, 16
      %v665 = vadd.s32 %v662, 24
      %v666 = vadd.s32 %v662, 32
      %v667 = vadd.s32 %v662, 40
      %v668 = vadd.s32 %v662, 48
      %v669 = vadd.s32 %v662, 56
      %v670 = vadd.s32 %v662, 64
      %v671 = vadd.s32 %v662, 72
      %v672 = vadd.s32 %v662, 80
      %v673 = vadd.s32 %v662, 88
      %v674 = vadd.s32 %v662, 96
      %v675 = vadd.s32 %v662, 104
      %v676 = vadd.s32 %v662, 112
      %v677 = vadd.s32 %v662, 120
      %vm678 = vcmp.lt.s32.totalorder %v662, 0
      %v679 = vsub.s32 0, %v662
      %v680 = vsel %vm678, %v679, %v662
      %v681 = vshrl.u32 %v680, 5
      %v682 = vand.u32 %v680, 31
      %v683 = vsub.s32 0, %v682
      %v684 = vsel %vm678, %v683, %v682
      %vm685 = vcmp.lt.s32.totalorder %v663, 0
      %v686 = vsub.s32 0, %v663
      %v687 = vsel %vm685, %v686, %v663
      %v688 = vshrl.u32 %v687, 5
      %v689 = vand.u32 %v687, 31
      %v690 = vsub.s32 0, %v689
      %v691 = vsel %vm685, %v690, %v689
      %vm692 = vcmp.lt.s32.totalorder %v664, 0
      %v693 = vsub.s32 0, %v664
      %v694 = vsel %vm692, %v693, %v664
      %v695 = vshrl.u32 %v694, 5
      %v696 = vand.u32 %v694, 31
      %v697 = vsub.s32 0, %v696
      %v698 = vsel %vm692, %v697, %v696
      %vm699 = vcmp.lt.s32.totalorder %v665, 0
      %v700 = vsub.s32 0, %v665
      %v701 = vsel %vm699, %v700, %v665
      %v702 = vshrl.u32 %v701, 5
      %v703 = vand.u32 %v701, 31
      %v704 = vsub.s32 0, %v703
      %v705 = vsel %vm699, %v704, %v703
      %vm706 = vcmp.lt.s32.totalorder %v666, 0
      %v707 = vsub.s32 0, %v666
      %v708 = vsel %vm706, %v707, %v666
      %v709 = vshrl.u32 %v708, 5
      %v710 = vand.u32 %v708, 31
      %v711 = vsub.s32 0, %v710
      %v712 = vsel %vm706, %v711, %v710
      %vm713 = vcmp.lt.s32.totalorder %v667, 0
      %v714 = vsub.s32 0, %v667
      %v715 = vsel %vm713, %v714, %v667
      %v716 = vshrl.u32 %v715, 5
      %v717 = vand.u32 %v715, 31
      %v718 = vsub.s32 0, %v717
      %v719 = vsel %vm713, %v718, %v717
      %vm720 = vcmp.lt.s32.totalorder %v668, 0
      %v721 = vsub.s32 0, %v668
      %v722 = vsel %vm720, %v721, %v668
      %v723 = vshrl.u32 %v722, 5
      %v724 = vand.u32 %v722, 31
      %v725 = vsub.s32 0, %v724
      %v726 = vsel %vm720, %v725, %v724
      %vm727 = vcmp.lt.s32.totalorder %v669, 0
      %v728 = vsub.s32 0, %v669
      %v729 = vsel %vm727, %v728, %v669
      %v730 = vshrl.u32 %v729, 5
      %v731 = vand.u32 %v729, 31
      %v732 = vsub.s32 0, %v731
      %v733 = vsel %vm727, %v732, %v731
      %vm734 = vcmp.lt.s32.totalorder %v670, 0
      %v735 = vsub.s32 0, %v670
      %v736 = vsel %vm734, %v735, %v670
      %v737 = vshrl.u32 %v736, 5
      %v738 = vand.u32 %v736, 31
      %v739 = vsub.s32 0, %v738
      %v740 = vsel %vm734, %v739, %v738
      %vm741 = vcmp.lt.s32.totalorder %v671, 0
      %v742 = vsub.s32 0, %v671
      %v743 = vsel %vm741, %v742, %v671
      %v744 = vshrl.u32 %v743, 5
      %v745 = vand.u32 %v743, 31
      %v746 = vsub.s32 0, %v745
      %v747 = vsel %vm741, %v746, %v745
      %vm748 = vcmp.lt.s32.totalorder %v672, 0
      %v749 = vsub.s32 0, %v672
      %v750 = vsel %vm748, %v749, %v672
      %v751 = vshrl.u32 %v750, 5
      %v752 = vand.u32 %v750, 31
      %v753 = vsub.s32 0, %v752
      %v754 = vsel %vm748, %v753, %v752
      %vm755 = vcmp.lt.s32.totalorder %v673, 0
      %v756 = vsub.s32 0, %v673
      %v757 = vsel %vm755, %v756, %v673
      %v758 = vshrl.u32 %v757, 5
      %v759 = vand.u32 %v757, 31
      %v760 = vsub.s32 0, %v759
      %v761 = vsel %vm755, %v760, %v759
      %vm762 = vcmp.lt.s32.totalorder %v674, 0
      %v763 = vsub.s32 0, %v674
      %v764 = vsel %vm762, %v763, %v674
      %v765 = vshrl.u32 %v764, 5
      %v766 = vand.u32 %v764, 31
      %v767 = vsub.s32 0, %v766
      %v768 = vsel %vm762, %v767, %v766
      %vm769 = vcmp.lt.s32.totalorder %v675, 0
      %v770 = vsub.s32 0, %v675
      %v771 = vsel %vm769, %v770, %v675
      %v772 = vshrl.u32 %v771, 5
      %v773 = vand.u32 %v771, 31
      %v774 = vsub.s32 0, %v773
      %v775 = vsel %vm769, %v774, %v773
      %vm776 = vcmp.lt.s32.totalorder %v676, 0
      %v777 = vsub.s32 0, %v676
      %v778 = vsel %vm776, %v777, %v676
      %v779 = vshrl.u32 %v778, 5
      %v780 = vand.u32 %v778, 31
      %v781 = vsub.s32 0, %v780
      %v782 = vsel %vm776, %v781, %v780
      %vm783 = vcmp.lt.s32.totalorder %v677, 0
      %v784 = vsub.s32 0, %v677
      %v785 = vsel %vm783, %v784, %v677
      %v786 = vshrl.u32 %v785, 5
      %v787 = vand.u32 %v785, 31
      %v788 = vsub.s32 0, %v787
      %v789 = vsel %vm783, %v788, %v787
      %vm790 = vcmp.ne.s32.totalorder %v684, 0
      %vm791 = vcmp.ne.s32.totalorder %v691, 0
      %vm792 = vcmp.ne.s32.totalorder %v698, 0
      %vm793 = vcmp.ne.s32.totalorder %v705, 0
      %vm794 = vcmp.ne.s32.totalorder %v712, 0
      %vm795 = vcmp.ne.s32.totalorder %v719, 0
      %vm796 = vcmp.ne.s32.totalorder %v726, 0
      %vm797 = vcmp.ne.s32.totalorder %v733, 0
      %vm798 = vcmp.ne.s32.totalorder %v740, 0
      %vm799 = vcmp.ne.s32.totalorder %v747, 0
      %vm800 = vcmp.ne.s32.totalorder %v754, 0
      %vm801 = vcmp.ne.s32.totalorder %v761, 0
      %vm802 = vcmp.ne.s32.totalorder %v768, 0
      %vm803 = vcmp.ne.s32.totalorder %v775, 0
      %vm804 = vcmp.ne.s32.totalorder %v782, 0
      %vm805 = vcmp.ne.s32.totalorder %v789, 0
      %vm806 = vcmp.lt.s32.totalorder %v684, 0
      %vm807 = vcmp.lt.s32.totalorder %v691, 0
      %vm808 = vcmp.lt.s32.totalorder %v698, 0
      %vm809 = vcmp.lt.s32.totalorder %v705, 0
      %vm810 = vcmp.lt.s32.totalorder %v712, 0
      %vm811 = vcmp.lt.s32.totalorder %v719, 0
      %vm812 = vcmp.lt.s32.totalorder %v726, 0
      %vm813 = vcmp.lt.s32.totalorder %v733, 0
      %vm814 = vcmp.lt.s32.totalorder %v740, 0
      %vm815 = vcmp.lt.s32.totalorder %v747, 0
      %vm816 = vcmp.lt.s32.totalorder %v754, 0
      %vm817 = vcmp.lt.s32.totalorder %v761, 0
      %vm818 = vcmp.lt.s32.totalorder %v768, 0
      %vm819 = vcmp.lt.s32.totalorder %v775, 0
      %vm820 = vcmp.lt.s32.totalorder %v782, 0
      %vm821 = vcmp.lt.s32.totalorder %v789, 0
      %vm822 = vmand %vm806, %vm790
      %vm823 = vmand %vm807, %vm791
      %vm824 = vmand %vm808, %vm792
      %vm825 = vmand %vm809, %vm793
      %vm826 = vmand %vm810, %vm794
      %vm827 = vmand %vm811, %vm795
      %vm828 = vmand %vm812, %vm796
      %vm829 = vmand %vm813, %vm797
      %vm830 = vmand %vm814, %vm798
      %vm831 = vmand %vm815, %vm799
      %vm832 = vmand %vm816, %vm800
      %vm833 = vmand %vm817, %vm801
      %vm834 = vmand %vm818, %vm802
      %vm835 = vmand %vm819, %vm803
      %vm836 = vmand %vm820, %vm804
      %vm837 = vmand %vm821, %vm805
      %v838 = vadd.s32 %v684, 32
      %v839 = vadd.s32 %v691, 32
      %v840 = vadd.s32 %v698, 32
      %v841 = vadd.s32 %v705, 32
      %v842 = vadd.s32 %v712, 32
      %v843 = vadd.s32 %v719, 32
      %v844 = vadd.s32 %v726, 32
      %v845 = vadd.s32 %v733, 32
      %v846 = vadd.s32 %v740, 32
      %v847 = vadd.s32 %v747, 32
      %v848 = vadd.s32 %v754, 32
      %v849 = vadd.s32 %v761, 32
      %v850 = vadd.s32 %v768, 32
      %v851 = vadd.s32 %v775, 32
      %v852 = vadd.s32 %v782, 32
      %v853 = vadd.s32 %v789, 32
      %v854 = vsel %vm822, %v838, %v684
      %v855 = vsel %vm823, %v839, %v691
      %v856 = vsel %vm824, %v840, %v698
      %v857 = vsel %vm825, %v841, %v705
      %v858 = vsel %vm826, %v842, %v712
      %v859 = vsel %vm827, %v843, %v719
      %v860 = vsel %vm828, %v844, %v726
      %v861 = vsel %vm829, %v845, %v733
      %v862 = vsel %vm830, %v846, %v740
      %v863 = vsel %vm831, %v847, %v747
      %v864 = vsel %vm832, %v848, %v754
      %v865 = vsel %vm833, %v849, %v761
      %v866 = vsel %vm834, %v850, %v768
      %v867 = vsel %vm835, %v851, %v775
      %v868 = vsel %vm836, %v852, %v782
      %v869 = vsel %vm837, %v853, %v789
      %vm870 = vcmp.ge.s32.totalorder %v854, 1
      %vm871 = vcmp.ge.s32.totalorder %v855, 1
      %vm872 = vcmp.ge.s32.totalorder %v856, 1
      %vm873 = vcmp.ge.s32.totalorder %v857, 1
      %vm874 = vcmp.ge.s32.totalorder %v858, 1
      %vm875 = vcmp.ge.s32.totalorder %v859, 1
      %vm876 = vcmp.ge.s32.totalorder %v860, 1
      %vm877 = vcmp.ge.s32.totalorder %v861, 1
      %vm878 = vcmp.ge.s32.totalorder %v862, 1
      %vm879 = vcmp.ge.s32.totalorder %v863, 1
      %vm880 = vcmp.ge.s32.totalorder %v864, 1
      %vm881 = vcmp.ge.s32.totalorder %v865, 1
      %vm882 = vcmp.ge.s32.totalorder %v866, 1
      %vm883 = vcmp.ge.s32.totalorder %v867, 1
      %vm884 = vcmp.ge.s32.totalorder %v868, 1
      %vm885 = vcmp.ge.s32.totalorder %v869, 1
      %v886 = vsel %vm870, 1, 0
      %v887 = vsel %vm871, 1, 0
      %v888 = vsel %vm872, 1, 0
      %v889 = vsel %vm873, 1, 0
      %v890 = vsel %vm874, 1, 0
      %v891 = vsel %vm875, 1, 0
      %v892 = vsel %vm876, 1, 0
      %v893 = vsel %vm877, 1, 0
      %v894 = vsel %vm878, 1, 0
      %v895 = vsel %vm879, 1, 0
      %v896 = vsel %vm880, 1, 0
      %v897 = vsel %vm881, 1, 0
      %v898 = vsel %vm882, 1, 0
      %v899 = vsel %vm883, 1, 0
      %v900 = vsel %vm884, 1, 0
      %v901 = vsel %vm885, 1, 0
      %v902 = vcvt.s32.f32 %v886
      %v903 = vcvt.s32.f32 %v887
      %v904 = vcvt.s32.f32 %v888
      %v905 = vcvt.s32.f32 %v889
      %v906 = vcvt.s32.f32 %v890
      %v907 = vcvt.s32.f32 %v891
      %v908 = vcvt.s32.f32 %v892
      %v909 = vcvt.s32.f32 %v893
      %v910 = vcvt.s32.f32 %v894
      %v911 = vcvt.s32.f32 %v895
      %v912 = vcvt.s32.f32 %v896
      %v913 = vcvt.s32.f32 %v897
      %v914 = vcvt.s32.f32 %v898
      %v915 = vcvt.s32.f32 %v899
      %v916 = vcvt.s32.f32 %v900
      %v917 = vcvt.s32.f32 %v901
      %v918 = vpack.c.bf16 %v903, %v902
      %v919 = vpack.c.bf16 %v905, %v904
      %v920 = vpack.c.bf16 %v907, %v906
      %v921 = vpack.c.bf16 %v909, %v908
      %v922 = vpack.c.bf16 %v911, %v910
      %v923 = vpack.c.bf16 %v913, %v912
      %v924 = vpack.c.bf16 %v915, %v914
      %v925 = vpack.c.bf16 %v917, %v916
      %vm926 = vcmp.ge.s32.totalorder %v854, 2
      %vm927 = vcmp.ge.s32.totalorder %v855, 2
      %vm928 = vcmp.ge.s32.totalorder %v856, 2
      %vm929 = vcmp.ge.s32.totalorder %v857, 2
      %vm930 = vcmp.ge.s32.totalorder %v858, 2
      %vm931 = vcmp.ge.s32.totalorder %v859, 2
      %vm932 = vcmp.ge.s32.totalorder %v860, 2
      %vm933 = vcmp.ge.s32.totalorder %v861, 2
      %vm934 = vcmp.ge.s32.totalorder %v862, 2
      %vm935 = vcmp.ge.s32.totalorder %v863, 2
      %vm936 = vcmp.ge.s32.totalorder %v864, 2
      %vm937 = vcmp.ge.s32.totalorder %v865, 2
      %vm938 = vcmp.ge.s32.totalorder %v866, 2
      %vm939 = vcmp.ge.s32.totalorder %v867, 2
      %vm940 = vcmp.ge.s32.totalorder %v868, 2
      %vm941 = vcmp.ge.s32.totalorder %v869, 2
      %v942 = vsel %vm926, 1, 0
      %v943 = vsel %vm927, 1, 0
      %v944 = vsel %vm928, 1, 0
      %v945 = vsel %vm929, 1, 0
      %v946 = vsel %vm930, 1, 0
      %v947 = vsel %vm931, 1, 0
      %v948 = vsel %vm932, 1, 0
      %v949 = vsel %vm933, 1, 0
      %v950 = vsel %vm934, 1, 0
      %v951 = vsel %vm935, 1, 0
      %v952 = vsel %vm936, 1, 0
      %v953 = vsel %vm937, 1, 0
      %v954 = vsel %vm938, 1, 0
      %v955 = vsel %vm939, 1, 0
      %v956 = vsel %vm940, 1, 0
      %v957 = vsel %vm941, 1, 0
      %v958 = vcvt.s32.f32 %v942
      %v959 = vcvt.s32.f32 %v943
      %v960 = vcvt.s32.f32 %v944
      %v961 = vcvt.s32.f32 %v945
      %v962 = vcvt.s32.f32 %v946
      %v963 = vcvt.s32.f32 %v947
      %v964 = vcvt.s32.f32 %v948
      %v965 = vcvt.s32.f32 %v949
      %v966 = vcvt.s32.f32 %v950
      %v967 = vcvt.s32.f32 %v951
      %v968 = vcvt.s32.f32 %v952
      %v969 = vcvt.s32.f32 %v953
      %v970 = vcvt.s32.f32 %v954
      %v971 = vcvt.s32.f32 %v955
      %v972 = vcvt.s32.f32 %v956
      %v973 = vcvt.s32.f32 %v957
      %v974 = vpack.c.bf16 %v959, %v958
      %v975 = vpack.c.bf16 %v961, %v960
      %v976 = vpack.c.bf16 %v963, %v962
      %v977 = vpack.c.bf16 %v965, %v964
      %v978 = vpack.c.bf16 %v967, %v966
      %v979 = vpack.c.bf16 %v969, %v968
      %v980 = vpack.c.bf16 %v971, %v970
      %v981 = vpack.c.bf16 %v973, %v972
      %vm982 = vcmp.ge.s32.totalorder %v854, 4
      %vm983 = vcmp.ge.s32.totalorder %v855, 4
      %vm984 = vcmp.ge.s32.totalorder %v856, 4
      %vm985 = vcmp.ge.s32.totalorder %v857, 4
      %vm986 = vcmp.ge.s32.totalorder %v858, 4
      %vm987 = vcmp.ge.s32.totalorder %v859, 4
      %vm988 = vcmp.ge.s32.totalorder %v860, 4
      %vm989 = vcmp.ge.s32.totalorder %v861, 4
      %vm990 = vcmp.ge.s32.totalorder %v862, 4
      %vm991 = vcmp.ge.s32.totalorder %v863, 4
      %vm992 = vcmp.ge.s32.totalorder %v864, 4
      %vm993 = vcmp.ge.s32.totalorder %v865, 4
      %vm994 = vcmp.ge.s32.totalorder %v866, 4
      %vm995 = vcmp.ge.s32.totalorder %v867, 4
      %vm996 = vcmp.ge.s32.totalorder %v868, 4
      %vm997 = vcmp.ge.s32.totalorder %v869, 4
      %v998 = vsel %vm982, 1, 0
      %v999 = vsel %vm983, 1, 0
      %v1000 = vsel %vm984, 1, 0
      %v1001 = vsel %vm985, 1, 0
      %v1002 = vsel %vm986, 1, 0
      %v1003 = vsel %vm987, 1, 0
      %v1004 = vsel %vm988, 1, 0
      %v1005 = vsel %vm989, 1, 0
      %v1006 = vsel %vm990, 1, 0
      %v1007 = vsel %vm991, 1, 0
      %v1008 = vsel %vm992, 1, 0
      %v1009 = vsel %vm993, 1, 0
      %v1010 = vsel %vm994, 1, 0
      %v1011 = vsel %vm995, 1, 0
      %v1012 = vsel %vm996, 1, 0
      %v1013 = vsel %vm997, 1, 0
      %v1014 = vcvt.s32.f32 %v998
      %v1015 = vcvt.s32.f32 %v999
      %v1016 = vcvt.s32.f32 %v1000
      %v1017 = vcvt.s32.f32 %v1001
      %v1018 = vcvt.s32.f32 %v1002
      %v1019 = vcvt.s32.f32 %v1003
      %v1020 = vcvt.s32.f32 %v1004
      %v1021 = vcvt.s32.f32 %v1005
      %v1022 = vcvt.s32.f32 %v1006
      %v1023 = vcvt.s32.f32 %v1007
      %v1024 = vcvt.s32.f32 %v1008
      %v1025 = vcvt.s32.f32 %v1009
      %v1026 = vcvt.s32.f32 %v1010
      %v1027 = vcvt.s32.f32 %v1011
      %v1028 = vcvt.s32.f32 %v1012
      %v1029 = vcvt.s32.f32 %v1013
      %v1030 = vpack.c.bf16 %v1015, %v1014
      %v1031 = vpack.c.bf16 %v1017, %v1016
      %v1032 = vpack.c.bf16 %v1019, %v1018
      %v1033 = vpack.c.bf16 %v1021, %v1020
      %v1034 = vpack.c.bf16 %v1023, %v1022
      %v1035 = vpack.c.bf16 %v1025, %v1024
      %v1036 = vpack.c.bf16 %v1027, %v1026
      %v1037 = vpack.c.bf16 %v1029, %v1028
      %vm1038 = vcmp.ge.s32.totalorder %v854, 8
      %vm1039 = vcmp.ge.s32.totalorder %v855, 8
      %vm1040 = vcmp.ge.s32.totalorder %v856, 8
      %vm1041 = vcmp.ge.s32.totalorder %v857, 8
      %vm1042 = vcmp.ge.s32.totalorder %v858, 8
      %vm1043 = vcmp.ge.s32.totalorder %v859, 8
      %vm1044 = vcmp.ge.s32.totalorder %v860, 8
      %vm1045 = vcmp.ge.s32.totalorder %v861, 8
      %vm1046 = vcmp.ge.s32.totalorder %v862, 8
      %vm1047 = vcmp.ge.s32.totalorder %v863, 8
      %vm1048 = vcmp.ge.s32.totalorder %v864, 8
      %vm1049 = vcmp.ge.s32.totalorder %v865, 8
      %vm1050 = vcmp.ge.s32.totalorder %v866, 8
      %vm1051 = vcmp.ge.s32.totalorder %v867, 8
      %vm1052 = vcmp.ge.s32.totalorder %v868, 8
      %vm1053 = vcmp.ge.s32.totalorder %v869, 8
      %v1054 = vsel %vm1038, 1, 0
      %v1055 = vsel %vm1039, 1, 0
      %v1056 = vsel %vm1040, 1, 0
      %v1057 = vsel %vm1041, 1, 0
      %v1058 = vsel %vm1042, 1, 0
      %v1059 = vsel %vm1043, 1, 0
      %v1060 = vsel %vm1044, 1, 0
      %v1061 = vsel %vm1045, 1, 0
      %v1062 = vsel %vm1046, 1, 0
      %v1063 = vsel %vm1047, 1, 0
      %v1064 = vsel %vm1048, 1, 0
      %v1065 = vsel %vm1049, 1, 0
      %v1066 = vsel %vm1050, 1, 0
      %v1067 = vsel %vm1051, 1, 0
      %v1068 = vsel %vm1052, 1, 0
      %v1069 = vsel %vm1053, 1, 0
      %v1070 = vcvt.s32.f32 %v1054
      %v1071 = vcvt.s32.f32 %v1055
      %v1072 = vcvt.s32.f32 %v1056
      %v1073 = vcvt.s32.f32 %v1057
      %v1074 = vcvt.s32.f32 %v1058
      %v1075 = vcvt.s32.f32 %v1059
      %v1076 = vcvt.s32.f32 %v1060
      %v1077 = vcvt.s32.f32 %v1061
      %v1078 = vcvt.s32.f32 %v1062
      %v1079 = vcvt.s32.f32 %v1063
      %v1080 = vcvt.s32.f32 %v1064
      %v1081 = vcvt.s32.f32 %v1065
      %v1082 = vcvt.s32.f32 %v1066
      %v1083 = vcvt.s32.f32 %v1067
      %v1084 = vcvt.s32.f32 %v1068
      %v1085 = vcvt.s32.f32 %v1069
      %v1086 = vpack.c.bf16 %v1071, %v1070
      %v1087 = vpack.c.bf16 %v1073, %v1072
      %v1088 = vpack.c.bf16 %v1075, %v1074
      %v1089 = vpack.c.bf16 %v1077, %v1076
      %v1090 = vpack.c.bf16 %v1079, %v1078
      %v1091 = vpack.c.bf16 %v1081, %v1080
      %v1092 = vpack.c.bf16 %v1083, %v1082
      %v1093 = vpack.c.bf16 %v1085, %v1084
      %vm1094 = vcmp.ge.s32.totalorder %v854, 16
      %vm1095 = vcmp.ge.s32.totalorder %v855, 16
      %vm1096 = vcmp.ge.s32.totalorder %v856, 16
      %vm1097 = vcmp.ge.s32.totalorder %v857, 16
      %vm1098 = vcmp.ge.s32.totalorder %v858, 16
      %vm1099 = vcmp.ge.s32.totalorder %v859, 16
      %vm1100 = vcmp.ge.s32.totalorder %v860, 16
      %vm1101 = vcmp.ge.s32.totalorder %v861, 16
      %vm1102 = vcmp.ge.s32.totalorder %v862, 16
      %vm1103 = vcmp.ge.s32.totalorder %v863, 16
      %vm1104 = vcmp.ge.s32.totalorder %v864, 16
      %vm1105 = vcmp.ge.s32.totalorder %v865, 16
      %vm1106 = vcmp.ge.s32.totalorder %v866, 16
      %vm1107 = vcmp.ge.s32.totalorder %v867, 16
      %vm1108 = vcmp.ge.s32.totalorder %v868, 16
      %vm1109 = vcmp.ge.s32.totalorder %v869, 16
      %v1110 = vsel %vm1094, 1, 0
      %v1111 = vsel %vm1095, 1, 0
      %v1112 = vsel %vm1096, 1, 0
      %v1113 = vsel %vm1097, 1, 0
      %v1114 = vsel %vm1098, 1, 0
      %v1115 = vsel %vm1099, 1, 0
      %v1116 = vsel %vm1100, 1, 0
      %v1117 = vsel %vm1101, 1, 0
      %v1118 = vsel %vm1102, 1, 0
      %v1119 = vsel %vm1103, 1, 0
      %v1120 = vsel %vm1104, 1, 0
      %v1121 = vsel %vm1105, 1, 0
      %v1122 = vsel %vm1106, 1, 0
      %v1123 = vsel %vm1107, 1, 0
      %v1124 = vsel %vm1108, 1, 0
      %v1125 = vsel %vm1109, 1, 0
      %v1126 = vcvt.s32.f32 %v1110
      %v1127 = vcvt.s32.f32 %v1111
      %v1128 = vcvt.s32.f32 %v1112
      %v1129 = vcvt.s32.f32 %v1113
      %v1130 = vcvt.s32.f32 %v1114
      %v1131 = vcvt.s32.f32 %v1115
      %v1132 = vcvt.s32.f32 %v1116
      %v1133 = vcvt.s32.f32 %v1117
      %v1134 = vcvt.s32.f32 %v1118
      %v1135 = vcvt.s32.f32 %v1119
      %v1136 = vcvt.s32.f32 %v1120
      %v1137 = vcvt.s32.f32 %v1121
      %v1138 = vcvt.s32.f32 %v1122
      %v1139 = vcvt.s32.f32 %v1123
      %v1140 = vcvt.s32.f32 %v1124
      %v1141 = vcvt.s32.f32 %v1125
      %v1142 = vpack.c.bf16 %v1127, %v1126
      %v1143 = vpack.c.bf16 %v1129, %v1128
      %v1144 = vpack.c.bf16 %v1131, %v1130
      %v1145 = vpack.c.bf16 %v1133, %v1132
      %v1146 = vpack.c.bf16 %v1135, %v1134
      %v1147 = vpack.c.bf16 %v1137, %v1136
      %v1148 = vpack.c.bf16 %v1139, %v1138
      %v1149 = vpack.c.bf16 %v1141, %v1140
      %v1150 = vld [vmem:[%s652] sm:$0xff]
      %v1151 = vld [vmem:[%s652 + $0x8] sm:$0xff]
      %v1152 = vld [vmem:[%s652 + $0x10] sm:$0xff]
      %v1153 = vld [vmem:[%s652 + $0x18] sm:$0xff]
      %v1154 = vld [vmem:[%s652 + $0x20] sm:$0xff]
      %v1155 = vld [vmem:[%s652 + $0x28] sm:$0xff]
      %v1156 = vld [vmem:[%s652 + $0x30] sm:$0xff]
      %v1157 = vld [vmem:[%s652 + $0x38] sm:$0xff]
      %v1158 = vld [vmem:[%s652 + $0x40] sm:$0xff]
      %v1159 = vld [vmem:[%s652 + $0x48] sm:$0xff]
      %v1160 = vld [vmem:[%s652 + $0x50] sm:$0xff]
      %v1161 = vld [vmem:[%s652 + $0x58] sm:$0xff]
      %v1162 = vld [vmem:[%s652 + $0x60] sm:$0xff]
      %v1163 = vld [vmem:[%s652 + $0x68] sm:$0xff]
      %v1164 = vld [vmem:[%s652 + $0x70] sm:$0xff]
      %v1165 = vld [vmem:[%s652 + $0x78] sm:$0xff]
      %v1166 = vld [vmem:[%s1] sm:$0xf]
      %v1167 = vld [vmem:[%s1 + $0x4] sm:$0xf]
      %v1168 = vld [vmem:[%s1 + $0x8] sm:$0xf]
      %v1169 = vld [vmem:[%s1 + $0xc] sm:$0xf]
      %v1170 = vld [vmem:[%s1 + $0x10] sm:$0xf]
      %v1171 = vld [vmem:[%s1 + $0x14] sm:$0xf]
      %v1172 = vld [vmem:[%s1 + $0x18] sm:$0xf]
      %v1173 = vld [vmem:[%s1 + $0x1c] sm:$0xf]
      %v1174 = vld [vmem:[%s1 + $0x20] sm:$0xf]
      %v1175 = vld [vmem:[%s1 + $0x24] sm:$0xf]
      %v1176 = vld [vmem:[%s1 + $0x28] sm:$0xf]
      %v1177 = vld [vmem:[%s1 + $0x2c] sm:$0xf]
      %v1178 = vld [vmem:[%s1 + $0x30] sm:$0xf]
      %v1179 = vld [vmem:[%s1 + $0x34] sm:$0xf]
      %v1180 = vld [vmem:[%s1 + $0x38] sm:$0xf]
      %v1181 = vld [vmem:[%s1 + $0x3c] sm:$0xf]
      %v1182 = vpack.c.bf16 %v1151, %v1150
      %v1183 = vpack.c.bf16 %v1153, %v1152
      %v1184 = vpack.c.bf16 %v1155, %v1154
      %v1185 = vpack.c.bf16 %v1157, %v1156
      %v1186 = vpack.c.bf16 %v1159, %v1158
      %v1187 = vpack.c.bf16 %v1161, %v1160
      %v1188 = vpack.c.bf16 %v1163, %v1162
      %v1189 = vpack.c.bf16 %v1165, %v1164
      %v1190 = vld [vmem:[%s2] sm:$0x1]
      %v1192 = vlaneseq
      %v1193 = vshrl.u32 %v1192, 7
      %v1194 = vsub.s32 0, %v1193
      %v1195 = vrot.slane %v1190, %v1194
      %v1213 = vunpack.c.l.b16 %v1166
      %v1214 = vunpack.c.l.b16 %v1167
      %v1215 = vunpack.c.l.b16 %v1168
      %v1216 = vunpack.c.l.b16 %v1169
      %v1217 = vunpack.c.l.b16 %v1170
      %v1218 = vunpack.c.l.b16 %v1171
      %v1219 = vunpack.c.l.b16 %v1172
      %v1220 = vunpack.c.l.b16 %v1173
      %v1221 = vunpack.c.l.b16 %v1174
      %v1222 = vunpack.c.l.b16 %v1175
      %v1223 = vunpack.c.l.b16 %v1176
      %v1224 = vunpack.c.l.b16 %v1177
      %v1225 = vunpack.c.l.b16 %v1178
      %v1226 = vunpack.c.l.b16 %v1179
      %v1227 = vunpack.c.l.b16 %v1180
      %v1228 = vunpack.c.l.b16 %v1181
      %v1229 = vpack.c.b16 %v1214, %v1213
      %v1230 = vpack.c.b16 %v1216, %v1215
      %v1231 = vpack.c.b16 %v1218, %v1217
      %v1232 = vpack.c.b16 %v1220, %v1219
      %v1233 = vpack.c.b16 %v1222, %v1221
      %v1234 = vpack.c.b16 %v1224, %v1223
      %v1235 = vpack.c.b16 %v1226, %v1225
      %v1236 = vpack.c.b16 %v1228, %v1227
      %1245 = vmatprep.subr.bf16.mxu0 0
      %1246 = vmatpush1.bf16.msra.mxu0 %v1229
      %1247 = vmatprep.subr.bf16.mxu0 0
      %1248 = vmatpush1.bf16.msra.mxu0 %v1230
      %1249 = vmatprep.subr.bf16.mxu0 0
      %1250 = vmatpush1.bf16.msra.mxu0 %v1231
      %1251 = vmatprep.subr.bf16.mxu0 0
      %1252 = vmatpush1.bf16.msra.mxu0 %v1232
      %1253 = vmatprep.subr.bf16.mxu0 0
      %1254 = vmatpush1.bf16.msra.mxu0 %v1233
      %1255 = vmatprep.subr.bf16.mxu0 0
      %1256 = vmatpush1.bf16.msra.mxu0 %v1234
      %1257 = vmatprep.subr.bf16.mxu0 0
      %1258 = vmatpush1.bf16.msra.mxu0 %v1235
      %1259 = vmatprep.subr.bf16.mxu0 0
      %1260 = vmatpush1.bf16.msra.mxu0 %v1236
      %1261 = vmatprep.subr.bf16.mxu0 0
      %1262 = vmatpush1.bf16.msra.mxu0 0
      %1263 = vmatprep.subr.bf16.mxu0 0
      %1264 = vmatpush1.bf16.msra.mxu0 0
      %1265 = vmatprep.subr.bf16.mxu0 0
      %1266 = vmatpush1.bf16.msra.mxu0 0
      %1267 = vmatprep.subr.bf16.mxu0 0
      %1268 = vmatpush1.bf16.msra.mxu0 0
      %1269 = vmatprep.subr.bf16.mxu0 0
      %1270 = vmatpush1.bf16.msra.mxu0 0
      %1271 = vmatprep.subr.bf16.mxu0 0
      %1272 = vmatpush1.bf16.msra.mxu0 0
      %1273 = vmatprep.subr.bf16.mxu0 0
      %1274 = vmatpush1.bf16.msra.mxu0 0
      %1275 = vmatprep.subr.bf16.mxu0 0
      %1276 = vmatpush1.bf16.msra.mxu0 0
      %1277 = vmatprep.mubr.bf16.mxu0 0
      %1278 = vmatmul.mubr.bf16.gmra.mrb[0].mxu0 %v1182
      %v1279 = vpop.f32.mrb[0].mxu0
      %v1280 = vadd.f32 %v1195, %v1279
      %v1281 = vpop.f32.mrb[0].mxu0
      %v1282 = vpop.f32.mrb[0].mxu0
      %v1283 = vadd.f32 %v1195, %v1282
      %v1284 = vpop.f32.mrb[0].mxu0
      %1285 = vmatprep.mubr.bf16.mxu0 0
      %1286 = vmatmul.mubr.bf16.gmra.mrb[0].mxu0 %v1183
      %v1287 = vpop.f32.mrb[0].mxu0
      %v1288 = vadd.f32 %v1195, %v1287
      %v1289 = vpop.f32.mrb[0].mxu0
      %v1290 = vpop.f32.mrb[0].mxu0
      %v1291 = vadd.f32 %v1195, %v1290
      %v1292 = vpop.f32.mrb[0].mxu0
      %1293 = vmatprep.mubr.bf16.mxu0 0
      %1294 = vmatmul.mubr.bf16.gmra.mrb[0].mxu0 %v1184
      %v1295 = vpop.f32.mrb[0].mxu0
      %v1296 = vadd.f32 %v1195, %v1295
      %v1297 = vpop.f32.mrb[0].mxu0
      %v1298 = vpop.f32.mrb[0].mxu0
      %v1299 = vadd.f32 %v1195, %v1298
      %v1300 = vpop.f32.mrb[0].mxu0
      %1301 = vmatprep.mubr.bf16.mxu0 0
      %1302 = vmatmul.mubr.bf16.gmra.mrb[0].mxu0 %v1185
      %v1303 = vpop.f32.mrb[0].mxu0
      %v1304 = vadd.f32 %v1195, %v1303
      %v1305 = vpop.f32.mrb[0].mxu0
      %v1306 = vpop.f32.mrb[0].mxu0
      %v1307 = vadd.f32 %v1195, %v1306
      %v1308 = vpop.f32.mrb[0].mxu0
      %1309 = vmatprep.mubr.bf16.mxu0 0
      %1310 = vmatmul.mubr.bf16.gmra.mrb[0].mxu0 %v1186
      %v1311 = vpop.f32.mrb[0].mxu0
      %v1312 = vadd.f32 %v1195, %v1311
      %v1313 = vpop.f32.mrb[0].mxu0
      %v1314 = vpop.f32.mrb[0].mxu0
      %v1315 = vadd.f32 %v1195, %v1314
      %v1316 = vpop.f32.mrb[0].mxu0
      %1317 = vmatprep.mubr.bf16.mxu0 0
      %1318 = vmatmul.mubr.bf16.gmra.mrb[0].mxu0 %v1187
      %v1319 = vpop.f32.mrb[0].mxu0
      %v1320 = vadd.f32 %v1195, %v1319
      %v1321 = vpop.f32.mrb[0].mxu0
      %v1322 = vpop.f32.mrb[0].mxu0
      %v1323 = vadd.f32 %v1195, %v1322
      %v1324 = vpop.f32.mrb[0].mxu0
      %1325 = vmatprep.mubr.bf16.mxu0 0
      %1326 = vmatmul.mubr.bf16.gmra.mrb[0].mxu0 %v1188
      %v1327 = vpop.f32.mrb[0].mxu0
      %v1328 = vadd.f32 %v1195, %v1327
      %v1329 = vpop.f32.mrb[0].mxu0
      %v1330 = vpop.f32.mrb[0].mxu0
      %v1331 = vadd.f32 %v1195, %v1330
      %v1332 = vpop.f32.mrb[0].mxu0
      %1333 = vmatprep.mubr.bf16.mxu0 0
      %1334 = vmatmul.mubr.bf16.gmra.mrb[0].mxu0 %v1189
      %v1335 = vpop.f32.mrb[0].mxu0
      %v1336 = vadd.f32 %v1195, %v1335
      %v1337 = vpop.f32.mrb[0].mxu0
      %v1338 = vpop.f32.mrb[0].mxu0
      %v1339 = vadd.f32 %v1195, %v1338
      %v1340 = vpop.f32.mrb[0].mxu0
      %1341 = vdwg.mxu0
      %v1342 = vmax.f32 %v1280, 0.0
      %v1343 = vmax.f32 %v1283, 0.0
      %v1344 = vmax.f32 %v1288, 0.0
      %v1345 = vmax.f32 %v1291, 0.0
      %v1346 = vmax.f32 %v1296, 0.0
      %v1347 = vmax.f32 %v1299, 0.0
      %v1348 = vmax.f32 %v1304, 0.0
      %v1349 = vmax.f32 %v1307, 0.0
      %v1350 = vmax.f32 %v1312, 0.0
      %v1351 = vmax.f32 %v1315, 0.0
      %v1352 = vmax.f32 %v1320, 0.0
      %v1353 = vmax.f32 %v1323, 0.0
      %v1354 = vmax.f32 %v1328, 0.0
      %v1355 = vmax.f32 %v1331, 0.0
      %v1356 = vmax.f32 %v1336, 0.0
      %v1357 = vmax.f32 %v1339, 0.0
      %v1358 = vld [vmem:[%s3] sm:$0xf]
      %v1359 = vld [vmem:[%s3 + $0x4] sm:$0xf]
      %v1360 = vld [vmem:[%s3 + $0x8] sm:$0xf]
      %v1361 = vld [vmem:[%s3 + $0xc] sm:$0xf]
      %v1362 = vpack.c.bf16 %v1343, %v1342
      %v1363 = vpack.c.bf16 %v1345, %v1344
      %v1364 = vpack.c.bf16 %v1347, %v1346
      %v1365 = vpack.c.bf16 %v1349, %v1348
      %v1366 = vpack.c.bf16 %v1351, %v1350
      %v1367 = vpack.c.bf16 %v1353, %v1352
      %v1368 = vpack.c.bf16 %v1355, %v1354
      %v1369 = vpack.c.bf16 %v1357, %v1356
      %v1370 = vld [vmem:[%s4] sm:$0x1]
      %v1372 = vlaneseq
      %v1373 = vshrl.u32 %v1372, 7
      %v1374 = vsub.s32 0, %v1373
      %v1375 = vrot.slane %v1370, %v1374
      %v1381 = vunpack.c.l.b16 %v1358
      %v1382 = vunpack.c.l.b16 %v1359
      %v1383 = vunpack.c.l.b16 %v1360
      %v1384 = vunpack.c.l.b16 %v1361
      %v1385 = vpack.c.b16 %v1382, %v1381
      %v1386 = vpack.c.b16 %v1384, %v1383
      %vm1389 = vcmask 261120
      %v1391 = vsel %vm1389, %v1362, 0
      %v1394 = vsel %vm1389, %v1363, 0
      %v1397 = vsel %vm1389, %v1364, 0
      %v1400 = vsel %vm1389, %v1365, 0
      %v1403 = vsel %vm1389, %v1366, 0
      %v1406 = vsel %vm1389, %v1367, 0
      %v1409 = vsel %vm1389, %v1368, 0
      %v1412 = vsel %vm1389, %v1369, 0
      %1414 = vmatprep.subr.bf16.mxu0 0
      %1415 = vmatpush1.bf16.msra.mxu0 %v1385
      %1416 = vmatprep.subr.bf16.mxu0 0
      %1417 = vmatpush1.bf16.msra.mxu0 %v1386
      %1418 = vmatprep.subr.bf16.mxu0 0
      %1419 = vmatpush1.bf16.msra.mxu0 0
      %1420 = vmatprep.subr.bf16.mxu0 0
      %1421 = vmatpush1.bf16.msra.mxu0 0
      %1422 = vmatprep.subr.bf16.mxu0 0
      %1423 = vmatpush1.bf16.msra.mxu0 0
      %1424 = vmatprep.subr.bf16.mxu0 0
      %1425 = vmatpush1.bf16.msra.mxu0 0
      %1426 = vmatprep.subr.bf16.mxu0 0
      %1427 = vmatpush1.bf16.msra.mxu0 0
      %1428 = vmatprep.subr.bf16.mxu0 0
      %1429 = vmatpush1.bf16.msra.mxu0 0
      %1430 = vmatprep.subr.bf16.mxu0 0
      %1431 = vmatpush1.bf16.msra.mxu0 0
      %1432 = vmatprep.subr.bf16.mxu0 0
      %1433 = vmatpush1.bf16.msra.mxu0 0
      %1434 = vmatprep.subr.bf16.mxu0 0
      %1435 = vmatpush1.bf16.msra.mxu0 0
      %1436 = vmatprep.subr.bf16.mxu0 0
      %1437 = vmatpush1.bf16.msra.mxu0 0
      %1438 = vmatprep.subr.bf16.mxu0 0
      %1439 = vmatpush1.bf16.msra.mxu0 0
      %1440 = vmatprep.subr.bf16.mxu0 0
      %1441 = vmatpush1.bf16.msra.mxu0 0
      %1442 = vmatprep.subr.bf16.mxu0 0
      %1443 = vmatpush1.bf16.msra.mxu0 0
      %1444 = vmatprep.subr.bf16.mxu0 0
      %1445 = vmatpush1.bf16.msra.mxu0 0
      %1446 = vmatprep.mubr.bf16.mxu0 0
      %1447 = vmatmul.mubr.bf16.gmra.mrb[0].mxu0 %v1391
      %v1448 = vpop.f32.mrb[0].mxu0
      %v1449 = vadd.f32 %v1375, %v1448
      %v1450 = vpop.f32.mrb[0].mxu0
      %v1451 = vpop.f32.mrb[0].mxu0
      %v1452 = vadd.f32 %v1375, %v1451
      %v1453 = vpop.f32.mrb[0].mxu0
      %1454 = vmatprep.mubr.bf16.mxu0 0
      %1455 = vmatmul.mubr.bf16.gmra.mrb[0].mxu0 %v1394
      %v1456 = vpop.f32.mrb[0].mxu0
      %v1457 = vadd.f32 %v1375, %v1456
      %v1458 = vpop.f32.mrb[0].mxu0
      %v1459 = vpop.f32.mrb[0].mxu0
      %v1460 = vadd.f32 %v1375, %v1459
      %v1461 = vpop.f32.mrb[0].mxu0
      %1462 = vmatprep.mubr.bf16.mxu0 0
      %1463 = vmatmul.mubr.bf16.gmra.mrb[0].mxu0 %v1397
      %v1464 = vpop.f32.mrb[0].mxu0
      %v1465 = vadd.f32 %v1375, %v1464
      %v1466 = vpop.f32.mrb[0].mxu0
      %v1467 = vpop.f32.mrb[0].mxu0
      %v1468 = vadd.f32 %v1375, %v1467
      %v1469 = vpop.f32.mrb[0].mxu0
      %1470 = vmatprep.mubr.bf16.mxu0 0
      %1471 = vmatmul.mubr.bf16.gmra.mrb[0].mxu0 %v1400
      %v1472 = vpop.f32.mrb[0].mxu0
      %v1473 = vadd.f32 %v1375, %v1472
      %v1474 = vpop.f32.mrb[0].mxu0
      %v1475 = vpop.f32.mrb[0].mxu0
      %v1476 = vadd.f32 %v1375, %v1475
      %v1477 = vpop.f32.mrb[0].mxu0
      %1478 = vmatprep.mubr.bf16.mxu0 0
      %1479 = vmatmul.mubr.bf16.gmra.mrb[0].mxu0 %v1403
      %v1480 = vpop.f32.mrb[0].mxu0
      %v1481 = vadd.f32 %v1375, %v1480
      %v1482 = vpop.f32.mrb[0].mxu0
      %v1483 = vpop.f32.mrb[0].mxu0
      %v1484 = vadd.f32 %v1375, %v1483
      %v1485 = vpop.f32.mrb[0].mxu0
      %1486 = vmatprep.mubr.bf16.mxu0 0
      %1487 = vmatmul.mubr.bf16.gmra.mrb[0].mxu0 %v1406
      %v1488 = vpop.f32.mrb[0].mxu0
      %v1489 = vadd.f32 %v1375, %v1488
      %v1490 = vpop.f32.mrb[0].mxu0
      %v1491 = vpop.f32.mrb[0].mxu0
      %v1492 = vadd.f32 %v1375, %v1491
      %v1493 = vpop.f32.mrb[0].mxu0
      %1494 = vmatprep.mubr.bf16.mxu0 0
      %1495 = vmatmul.mubr.bf16.gmra.mrb[0].mxu0 %v1409
      %v1496 = vpop.f32.mrb[0].mxu0
      %v1497 = vadd.f32 %v1375, %v1496
      %v1498 = vpop.f32.mrb[0].mxu0
      %v1499 = vpop.f32.mrb[0].mxu0
      %v1500 = vadd.f32 %v1375, %v1499
      %v1501 = vpop.f32.mrb[0].mxu0
      %1502 = vmatprep.mubr.bf16.mxu0 0
      %1503 = vmatmul.mubr.bf16.gmra.mrb[0].mxu0 %v1412
      %v1504 = vpop.f32.mrb[0].mxu0
      %v1505 = vadd.f32 %v1375, %v1504
      %v1506 = vpop.f32.mrb[0].mxu0
      %v1507 = vpop.f32.mrb[0].mxu0
      %v1508 = vadd.f32 %v1375, %v1507
      %v1509 = vpop.f32.mrb[0].mxu0
      %1510 = vdwg.mxu0
      %v1511 = vld [vmem:[%s5] sm:$0xf]
      %v1512 = vld [vmem:[%s5 + $0x4] sm:$0xf]
      %v1513 = vld [vmem:[%s5 + $0x8] sm:$0xf]
      %v1514 = vld [vmem:[%s5 + $0xc] sm:$0xf]
      %v1515 = vld [vmem:[%s5 + $0x10] sm:$0xf]
      %v1516 = vld [vmem:[%s5 + $0x14] sm:$0xf]
      %v1517 = vld [vmem:[%s5 + $0x18] sm:$0xf]
      %v1518 = vld [vmem:[%s5 + $0x1c] sm:$0xf]
      %v1519 = vld [vmem:[%s6] sm:$0x1]
      %v1520 = vpack.c.bf16 %v1452, %v1449
      %v1521 = vpack.c.bf16 %v1460, %v1457
      %v1522 = vpack.c.bf16 %v1468, %v1465
      %v1523 = vpack.c.bf16 %v1476, %v1473
      %v1524 = vpack.c.bf16 %v1484, %v1481
      %v1525 = vpack.c.bf16 %v1492, %v1489
      %v1526 = vpack.c.bf16 %v1500, %v1497
      %v1527 = vpack.c.bf16 %v1508, %v1505
      %v1528 = vrot.slane %v1449, 7
      %v1529 = vrot.slane %v1452, 7
      %v1530 = vrot.slane %v1457, 7
      %v1531 = vrot.slane %v1460, 7
      %v1532 = vrot.slane %v1465, 7
      %v1533 = vrot.slane %v1468, 7
      %v1534 = vrot.slane %v1473, 7
      %v1535 = vrot.slane %v1476, 7
      %v1536 = vrot.slane %v1481, 7
      %v1537 = vrot.slane %v1484, 7
      %v1538 = vrot.slane %v1489, 7
      %v1539 = vrot.slane %v1492, 7
      %v1540 = vrot.slane %v1497, 7
      %v1541 = vrot.slane %v1500, 7
      %v1542 = vrot.slane %v1505, 7
      %v1543 = vrot.slane %v1508, 7
      %vm1544 = vcmp.lt.s32.totalorder %v662, 1
      %v1545 = vsel %vm1544, %v1542, %v1543
      %v1546 = vsel %vm1544, %v1541, %v1542
      %v1547 = vsel %vm1544, %v1540, %v1541
      %v1548 = vsel %vm1544, %v1539, %v1540
      %v1549 = vsel %vm1544, %v1538, %v1539
      %v1550 = vsel %vm1544, %v1537, %v1538
      %v1551 = vsel %vm1544, %v1536, %v1537
      %v1552 = vsel %vm1544, %v1535, %v1536
      %v1553 = vsel %vm1544, %v1534, %v1535
      %v1554 = vsel %vm1544, %v1533, %v1534
      %v1555 = vsel %vm1544, %v1532, %v1533
      %v1556 = vsel %vm1544, %v1531, %v1532
      %v1557 = vsel %vm1544, %v1530, %v1531
      %v1558 = vsel %vm1544, %v1529, %v1530
      %v1559 = vsel %vm1544, %v1528, %v1529
      %v1560 = vsel %vm1544, %v1543, %v1528
      %v1561 = vpack.c.bf16 %v1559, %v1560
      %v1562 = vpack.c.bf16 %v1557, %v1558
      %v1563 = vpack.c.bf16 %v1555, %v1556
      %v1564 = vpack.c.bf16 %v1553, %v1554
      %v1565 = vpack.c.bf16 %v1551, %v1552
      %v1566 = vpack.c.bf16 %v1549, %v1550
      %v1567 = vpack.c.bf16 %v1547, %v1548
      %v1568 = vpack.c.bf16 %v1545, %v1546
      %v1569 = vmul.bf16 %v1561, %v918
      %v1570 = vmul.bf16 %v1562, %v919
      %v1571 = vmul.bf16 %v1563, %v920
      %v1572 = vmul.bf16 %v1564, %v921
      %v1573 = vmul.bf16 %v1565, %v922
      %v1574 = vmul.bf16 %v1566, %v923
      %v1575 = vmul.bf16 %v1567, %v924
      %v1576 = vmul.bf16 %v1568, %v925
      %1585 = vrot.lane.b32.xlu0 %v1569, 32
      %v1586 = vpop.permute.xlu0 %1585
      %1587 = vrot.lane.b32.xlu0 %v1570, 32
      %v1588 = vpop.permute.xlu0 %1587
      %1589 = vrot.lane.b32.xlu0 %v1571, 32
      %v1590 = vpop.permute.xlu0 %1589
      %1591 = vrot.lane.b32.xlu0 %v1572, 32
      %v1592 = vpop.permute.xlu0 %1591
      %1593 = vrot.lane.b32.xlu0 %v1573, 32
      %v1594 = vpop.permute.xlu0 %1593
      %1595 = vrot.lane.b32.xlu0 %v1574, 32
      %v1596 = vpop.permute.xlu0 %1595
      %1597 = vrot.lane.b32.xlu0 %v1575, 32
      %v1598 = vpop.permute.xlu0 %1597
      %1599 = vrot.lane.b32.xlu0 %v1576, 32
      %v1600 = vpop.permute.xlu0 %1599
      %v1603 = vsel %vm1389, %v1520, %v1586
      %v1606 = vsel %vm1389, %v1521, %v1588
      %v1609 = vsel %vm1389, %v1522, %v1590
      %v1612 = vsel %vm1389, %v1523, %v1592
      %v1615 = vsel %vm1389, %v1524, %v1594
      %v1618 = vsel %vm1389, %v1525, %v1596
      %v1621 = vsel %vm1389, %v1526, %v1598
      %v1624 = vsel %vm1389, %v1527, %v1600
      %v1626 = vlaneseq
      %v1627 = vshrl.u32 %v1626, 7
      %v1628 = vsub.s32 0, %v1627
      %v1629 = vrot.slane %v1519, %v1628
      %v1639 = vunpack.c.l.b16 %v1511
      %v1640 = vunpack.c.l.b16 %v1512
      %v1641 = vunpack.c.l.b16 %v1513
      %v1642 = vunpack.c.l.b16 %v1514
      %v1643 = vunpack.c.l.b16 %v1515
      %v1644 = vunpack.c.l.b16 %v1516
      %v1645 = vunpack.c.l.b16 %v1517
      %v1646 = vunpack.c.l.b16 %v1518
      %v1647 = vpack.c.b16 %v1640, %v1639
      %v1648 = vpack.c.b16 %v1642, %v1641
      %v1649 = vpack.c.b16 %v1644, %v1643
      %v1650 = vpack.c.b16 %v1646, %v1645
      %vm1655 = vcmask 523264
      %v1656 = vsel %vm1655, %v1603, 0
      %v1658 = vsel %vm1655, %v1606, 0
      %v1660 = vsel %vm1655, %v1609, 0
      %v1662 = vsel %vm1655, %v1612, 0
      %v1664 = vsel %vm1655, %v1615, 0
      %v1666 = vsel %vm1655, %v1618, 0
      %v1668 = vsel %vm1655, %v1621, 0
      %v1670 = vsel %vm1655, %v1624, 0
      %1672 = vmatprep.subr.bf16.mxu0 0
      %1673 = vmatpush1.bf16.msra.mxu0 %v1647
      %1674 = vmatprep.subr.bf16.mxu0 0
      %1675 = vmatpush1.bf16.msra.mxu0 %v1648
      %1676 = vmatprep.subr.bf16.mxu0 0
      %1677 = vmatpush1.bf16.msra.mxu0 %v1649
      %1678 = vmatprep.subr.bf16.mxu0 0
      %1679 = vmatpush1.bf16.msra.mxu0 %v1650
      %1680 = vmatprep.subr.bf16.mxu0 0
      %1681 = vmatpush1.bf16.msra.mxu0 0
      %1682 = vmatprep.subr.bf16.mxu0 0
      %1683 = vmatpush1.bf16.msra.mxu0 0
      %1684 = vmatprep.subr.bf16.mxu0 0
      %1685 = vmatpush1.bf16.msra.mxu0 0
      %1686 = vmatprep.subr.bf16.mxu0 0
      %1687 = vmatpush1.bf16.msra.mxu0 0
      %1688 = vmatprep.subr.bf16.mxu0 0
      %1689 = vmatpush1.bf16.msra.mxu0 0
      %1690 = vmatprep.subr.bf16.mxu0 0
      %1691 = vmatpush1.bf16.msra.mxu0 0
      %1692 = vmatprep.subr.bf16.mxu0 0
      %1693 = vmatpush1.bf16.msra.mxu0 0
      %1694 = vmatprep.subr.bf16.mxu0 0
      %1695 = vmatpush1.bf16.msra.mxu0 0
      %1696 = vmatprep.subr.bf16.mxu0 0
      %1697 = vmatpush1.bf16.msra.mxu0 0
      %1698 = vmatprep.subr.bf16.mxu0 0
      %1699 = vmatpush1.bf16.msra.mxu0 0
      %1700 = vmatprep.subr.bf16.mxu0 0
      %1701 = vmatpush1.bf16.msra.mxu0 0
      %1702 = vmatprep.subr.bf16.mxu0 0
      %1703 = vmatpush1.bf16.msra.mxu0 0
      %1704 = vmatprep.mubr.bf16.mxu0 0
      %1705 = vmatmul.mubr.bf16.gmra.mrb[0].mxu0 %v1656
      %v1706 = vpop.f32.mrb[0].mxu0
      %v1707 = vadd.f32 %v1629, %v1706
      %v1708 = vpop.f32.mrb[0].mxu0
      %v1709 = vpop.f32.mrb[0].mxu0
      %v1710 = vadd.f32 %v1629, %v1709
      %v1711 = vpop.f32.mrb[0].mxu0
      %1712 = vmatprep.mubr.bf16.mxu0 0
      %1713 = vmatmul.mubr.bf16.gmra.mrb[0].mxu0 %v1658
      %v1714 = vpop.f32.mrb[0].mxu0
      %v1715 = vadd.f32 %v1629, %v1714
      %v1716 = vpop.f32.mrb[0].mxu0
      %v1717 = vpop.f32.mrb[0].mxu0
      %v1718 = vadd.f32 %v1629, %v1717
      %v1719 = vpop.f32.mrb[0].mxu0
      %1720 = vmatprep.mubr.bf16.mxu0 0
      %1721 = vmatmul.mubr.bf16.gmra.mrb[0].mxu0 %v1660
      %v1722 = vpop.f32.mrb[0].mxu0
      %v1723 = vadd.f32 %v1629, %v1722
      %v1724 = vpop.f32.mrb[0].mxu0
      %v1725 = vpop.f32.mrb[0].mxu0
      %v1726 = vadd.f32 %v1629, %v1725
      %v1727 = vpop.f32.mrb[0].mxu0
      %1728 = vmatprep.mubr.bf16.mxu0 0
      %1729 = vmatmul.mubr.bf16.gmra.mrb[0].mxu0 %v1662
      %v1730 = vpop.f32.mrb[0].mxu0
      %v1731 = vadd.f32 %v1629, %v1730
      %v1732 = vpop.f32.mrb[0].mxu0
      %v1733 = vpop.f32.mrb[0].mxu0
      %v1734 = vadd.f32 %v1629, %v1733
      %v1735 = vpop.f32.mrb[0].mxu0
      %1736 = vmatprep.mubr.bf16.mxu0 0
      %1737 = vmatmul.mubr.bf16.gmra.mrb[0].mxu0 %v1664
      %v1738 = vpop.f32.mrb[0].mxu0
      %v1739 = vadd.f32 %v1629, %v1738
      %v1740 = vpop.f32.mrb[0].mxu0
      %v1741 = vpop.f32.mrb[0].mxu0
      %v1742 = vadd.f32 %v1629, %v1741
      %v1743 = vpop.f32.mrb[0].mxu0
      %1744 = vmatprep.mubr.bf16.mxu0 0
      %1745 = vmatmul.mubr.bf16.gmra.mrb[0].mxu0 %v1666
      %v1746 = vpop.f32.mrb[0].mxu0
      %v1747 = vadd.f32 %v1629, %v1746
      %v1748 = vpop.f32.mrb[0].mxu0
      %v1749 = vpop.f32.mrb[0].mxu0
      %v1750 = vadd.f32 %v1629, %v1749
      %v1751 = vpop.f32.mrb[0].mxu0
      %1752 = vmatprep.mubr.bf16.mxu0 0
      %1753 = vmatmul.mubr.bf16.gmra.mrb[0].mxu0 %v1668
      %v1754 = vpop.f32.mrb[0].mxu0
      %v1755 = vadd.f32 %v1629, %v1754
      %v1756 = vpop.f32.mrb[0].mxu0
      %v1757 = vpop.f32.mrb[0].mxu0
      %v1758 = vadd.f32 %v1629, %v1757
      %v1759 = vpop.f32.mrb[0].mxu0
      %1760 = vmatprep.mubr.bf16.mxu0 0
      %1761 = vmatmul.mubr.bf16.gmra.mrb[0].mxu0 %v1670
      %v1762 = vpop.f32.mrb[0].mxu0
      %v1763 = vadd.f32 %v1629, %v1762
      %v1764 = vpop.f32.mrb[0].mxu0
      %v1765 = vpop.f32.mrb[0].mxu0
      %v1766 = vadd.f32 %v1629, %v1765
      %v1767 = vpop.f32.mrb[0].mxu0
      %1768 = vdwg.mxu0
      %v1769 = vxor.u32 %v1707, 2147483648
      %v1770 = vxor.u32 %v1710, 2147483648
      %v1771 = vxor.u32 %v1715, 2147483648
      %v1772 = vxor.u32 %v1718, 2147483648
      %v1773 = vxor.u32 %v1723, 2147483648
      %v1774 = vxor.u32 %v1726, 2147483648
      %v1775 = vxor.u32 %v1731, 2147483648
      %v1776 = vxor.u32 %v1734, 2147483648
      %v1777 = vxor.u32 %v1739, 2147483648
      %v1778 = vxor.u32 %v1742, 2147483648
      %v1779 = vxor.u32 %v1747, 2147483648
      %v1780 = vxor.u32 %v1750, 2147483648
      %v1781 = vxor.u32 %v1755, 2147483648
      %v1782 = vxor.u32 %v1758, 2147483648
      %v1783 = vxor.u32 %v1763, 2147483648
      %v1784 = vxor.u32 %v1766, 2147483648
      %v1785 = vmul.f32 %v1769, 1.442695
      %v1786 = vpow.pop %v1785
      %v1787 = vmul.f32 %v1770, 1.442695
      %v1788 = vpow.pop %v1787
      %v1789 = vmul.f32 %v1771, 1.442695
      %v1790 = vpow.pop %v1789
      %v1791 = vmul.f32 %v1772, 1.442695
      %v1792 = vpow.pop %v1791
      %v1793 = vmul.f32 %v1773, 1.442695
      %v1794 = vpow.pop %v1793
      %v1795 = vmul.f32 %v1774, 1.442695
      %v1796 = vpow.pop %v1795
      %v1797 = vmul.f32 %v1775, 1.442695
      %v1798 = vpow.pop %v1797
      %v1799 = vmul.f32 %v1776, 1.442695
      %v1800 = vpow.pop %v1799
      %v1801 = vmul.f32 %v1777, 1.442695
      %v1802 = vpow.pop %v1801
      %v1803 = vmul.f32 %v1778, 1.442695
      %v1804 = vpow.pop %v1803
      %v1805 = vmul.f32 %v1779, 1.442695
      %v1806 = vpow.pop %v1805
      %v1807 = vmul.f32 %v1780, 1.442695
      %v1808 = vpow.pop %v1807
      %v1809 = vmul.f32 %v1781, 1.442695
      %v1810 = vpow.pop %v1809
      %v1811 = vmul.f32 %v1782, 1.442695
      %v1812 = vpow.pop %v1811
      %v1813 = vmul.f32 %v1783, 1.442695
      %v1814 = vpow.pop %v1813
      %v1815 = vmul.f32 %v1784, 1.442695
      %v1816 = vpow.pop %v1815
      %v1817 = vadd.f32 %v1786, 1.0
      %v1818 = vadd.f32 %v1788, 1.0
      %v1819 = vadd.f32 %v1790, 1.0
      %v1820 = vadd.f32 %v1792, 1.0
      %v1821 = vadd.f32 %v1794, 1.0
      %v1822 = vadd.f32 %v1796, 1.0
      %v1823 = vadd.f32 %v1798, 1.0
      %v1824 = vadd.f32 %v1800, 1.0
      %v1825 = vadd.f32 %v1802, 1.0
      %v1826 = vadd.f32 %v1804, 1.0
      %v1827 = vadd.f32 %v1806, 1.0
      %v1828 = vadd.f32 %v1808, 1.0
      %v1829 = vadd.f32 %v1810, 1.0
      %v1830 = vadd.f32 %v1812, 1.0
      %v1831 = vadd.f32 %v1814, 1.0
      %v1832 = vadd.f32 %v1816, 1.0
      %v1833 = vrcp.pop %v1817
      %v1834 = vmul.f32 1.0, %v1833
      %v1835 = vrcp.pop %v1818
      %v1836 = vmul.f32 1.0, %v1835
      %v1837 = vrcp.pop %v1819
      %v1838 = vmul.f32 1.0, %v1837
      %v1839 = vrcp.pop %v1820
      %v1840 = vmul.f32 1.0, %v1839
      %v1841 = vrcp.pop %v1821
      %v1842 = vmul.f32 1.0, %v1841
      %v1843 = vrcp.pop %v1822
      %v1844 = vmul.f32 1.0, %v1843
      %v1845 = vrcp.pop %v1823
      %v1846 = vmul.f32 1.0, %v1845
      %v1847 = vrcp.pop %v1824
      %v1848 = vmul.f32 1.0, %v1847
      %v1849 = vrcp.pop %v1825
      %v1850 = vmul.f32 1.0, %v1849
      %v1851 = vrcp.pop %v1826
      %v1852 = vmul.f32 1.0, %v1851
      %v1853 = vrcp.pop %v1827
      %v1854 = vmul.f32 1.0, %v1853
      %v1855 = vrcp.pop %v1828
      %v1856 = vmul.f32 1.0, %v1855
      %v1857 = vrcp.pop %v1829
      %v1858 = vmul.f32 1.0, %v1857
      %v1859 = vrcp.pop %v1830
      %v1860 = vmul.f32 1.0, %v1859
      %v1861 = vrcp.pop %v1831
      %v1862 = vmul.f32 1.0, %v1861
      %v1863 = vrcp.pop %v1832
      %v1864 = vmul.f32 1.0, %v1863
      %1881 = vrot.lane.b32.xlu0 %v1449, 32
      %v1882 = vpop.permute.xlu0 %1881
      %1883 = vrot.lane.b32.xlu0 %v1452, 32
      %v1884 = vpop.permute.xlu0 %1883
      %1885 = vrot.lane.b32.xlu0 %v1457, 32
      %v1886 = vpop.permute.xlu0 %1885
      %1887 = vrot.lane.b32.xlu0 %v1460, 32
      %v1888 = vpop.permute.xlu0 %1887
      %1889 = vrot.lane.b32.xlu0 %v1465, 32
      %v1890 = vpop.permute.xlu0 %1889
      %1891 = vrot.lane.b32.xlu0 %v1468, 32
      %v1892 = vpop.permute.xlu0 %1891
      %1893 = vrot.lane.b32.xlu0 %v1473, 32
      %v1894 = vpop.permute.xlu0 %1893
      %1895 = vrot.lane.b32.xlu0 %v1476, 32
      %v1896 = vpop.permute.xlu0 %1895
      %1897 = vrot.lane.b32.xlu0 %v1481, 32
      %v1898 = vpop.permute.xlu0 %1897
      %1899 = vrot.lane.b32.xlu0 %v1484, 32
      %v1900 = vpop.permute.xlu0 %1899
      %1901 = vrot.lane.b32.xlu0 %v1489, 32
      %v1902 = vpop.permute.xlu0 %1901
      %1903 = vrot.lane.b32.xlu0 %v1492, 32
      %v1904 = vpop.permute.xlu0 %1903
      %1905 = vrot.lane.b32.xlu0 %v1497, 32
      %v1906 = vpop.permute.xlu0 %1905
      %1907 = vrot.lane.b32.xlu0 %v1500, 32
      %v1908 = vpop.permute.xlu0 %1907
      %1909 = vrot.lane.b32.xlu0 %v1505, 32
      %v1910 = vpop.permute.xlu0 %1909
      %1911 = vrot.lane.b32.xlu0 %v1508, 32
      %v1912 = vpop.permute.xlu0 %1911
      %v1929 = vsub.f32 %v1707, %v1882
      %v1930 = vsub.f32 %v1710, %v1884
      %v1931 = vsub.f32 %v1715, %v1886
      %v1932 = vsub.f32 %v1718, %v1888
      %v1933 = vsub.f32 %v1723, %v1890
      %v1934 = vsub.f32 %v1726, %v1892
      %v1935 = vsub.f32 %v1731, %v1894
      %v1936 = vsub.f32 %v1734, %v1896
      %v1937 = vsub.f32 %v1739, %v1898
      %v1938 = vsub.f32 %v1742, %v1900
      %v1939 = vsub.f32 %v1747, %v1902
      %v1940 = vsub.f32 %v1750, %v1904
      %v1941 = vsub.f32 %v1755, %v1906
      %v1942 = vsub.f32 %v1758, %v1908
      %v1943 = vsub.f32 %v1763, %v1910
      %v1944 = vsub.f32 %v1766, %v1912
      %1961 = vrot.lane.b32.xlu0 %v1929, 96
      %v1962 = vpop.permute.xlu0 %1961
      %1963 = vrot.lane.b32.xlu0 %v1930, 96
      %v1964 = vpop.permute.xlu0 %1963
      %1965 = vrot.lane.b32.xlu0 %v1931, 96
      %v1966 = vpop.permute.xlu0 %1965
      %1967 = vrot.lane.b32.xlu0 %v1932, 96
      %v1968 = vpop.permute.xlu0 %1967
      %1969 = vrot.lane.b32.xlu0 %v1933, 96
      %v1970 = vpop.permute.xlu0 %1969
      %1971 = vrot.lane.b32.xlu0 %v1934, 96
      %v1972 = vpop.permute.xlu0 %1971
      %1973 = vrot.lane.b32.xlu0 %v1935, 96
      %v1974 = vpop.permute.xlu0 %1973
      %1975 = vrot.lane.b32.xlu0 %v1936, 96
      %v1976 = vpop.permute.xlu0 %1975
      %1977 = vrot.lane.b32.xlu0 %v1937, 96
      %v1978 = vpop.permute.xlu0 %1977
      %1979 = vrot.lane.b32.xlu0 %v1938, 96
      %v1980 = vpop.permute.xlu0 %1979
      %1981 = vrot.lane.b32.xlu0 %v1939, 96
      %v1982 = vpop.permute.xlu0 %1981
      %1983 = vrot.lane.b32.xlu0 %v1940, 96
      %v1984 = vpop.permute.xlu0 %1983
      %1985 = vrot.lane.b32.xlu0 %v1941, 96
      %v1986 = vpop.permute.xlu0 %1985
      %1987 = vrot.lane.b32.xlu0 %v1942, 96
      %v1988 = vpop.permute.xlu0 %1987
      %1989 = vrot.lane.b32.xlu0 %v1943, 96
      %v1990 = vpop.permute.xlu0 %1989
      %1991 = vrot.lane.b32.xlu0 %v1944, 96
      %v1992 = vpop.permute.xlu0 %1991
      %v2009 = vmul.f32 %v1834, %v1962
      %v2010 = vmul.f32 %v1836, %v1964
      %v2011 = vmul.f32 %v1838, %v1966
      %v2012 = vmul.f32 %v1840, %v1968
      %v2013 = vmul.f32 %v1842, %v1970
      %v2014 = vmul.f32 %v1844, %v1972
      %v2015 = vmul.f32 %v1846, %v1974
      %v2016 = vmul.f32 %v1848, %v1976
      %v2017 = vmul.f32 %v1850, %v1978
      %v2018 = vmul.f32 %v1852, %v1980
      %v2019 = vmul.f32 %v1854, %v1982
      %v2020 = vmul.f32 %v1856, %v1984
      %v2021 = vmul.f32 %v1858, %v1986
      %v2022 = vmul.f32 %v1860, %v1988
      %v2023 = vmul.f32 %v1862, %v1990
      %v2024 = vmul.f32 %v1864, %v1992
      %v2025 = vadd.f32 %v1449, %v2009
      %v2026 = vadd.f32 %v1452, %v2010
      %v2027 = vadd.f32 %v1457, %v2011
      %v2028 = vadd.f32 %v1460, %v2012
      %v2029 = vadd.f32 %v1465, %v2013
      %v2030 = vadd.f32 %v1468, %v2014
      %v2031 = vadd.f32 %v1473, %v2015
      %v2032 = vadd.f32 %v1476, %v2016
      %v2033 = vadd.f32 %v1481, %v2017
      %v2034 = vadd.f32 %v1484, %v2018
      %v2035 = vadd.f32 %v1489, %v2019
      %v2036 = vadd.f32 %v1492, %v2020
      %v2037 = vadd.f32 %v1497, %v2021
      %v2038 = vadd.f32 %v1500, %v2022
      %v2039 = vadd.f32 %v1505, %v2023
      %v2040 = vadd.f32 %v1508, %v2024
      %s2041 = scalar_lea.vmem %s5, 32
      %v2042 = vld [vmem:[%s2041] sm:$0xf]
      %v2043 = vld [vmem:[%s2041 + $0x4] sm:$0xf]
      %v2044 = vld [vmem:[%s2041 + $0x8] sm:$0xf]
      %v2045 = vld [vmem:[%s2041 + $0xc] sm:$0xf]
      %v2046 = vld [vmem:[%s2041 + $0x10] sm:$0xf]
      %v2047 = vld [vmem:[%s2041 + $0x14] sm:$0xf]
      %v2048 = vld [vmem:[%s2041 + $0x18] sm:$0xf]
      %v2049 = vld [vmem:[%s2041 + $0x1c] sm:$0xf]
      %s2050 = scalar_lea.vmem %s6, 1
      %v2051 = vld [vmem:[%s2050] sm:$0x1]
      %v2052 = vpack.c.bf16 %v2026, %v2025
      %v2053 = vpack.c.bf16 %v2028, %v2027
      %v2054 = vpack.c.bf16 %v2030, %v2029
      %v2055 = vpack.c.bf16 %v2032, %v2031
      %v2056 = vpack.c.bf16 %v2034, %v2033
      %v2057 = vpack.c.bf16 %v2036, %v2035
      %v2058 = vpack.c.bf16 %v2038, %v2037
      %v2059 = vpack.c.bf16 %v2040, %v2039
      %v2060 = vrot.slane %v2025, 6
      %v2061 = vrot.slane %v2026, 6
      %v2062 = vrot.slane %v2027, 6
      %v2063 = vrot.slane %v2028, 6
      %v2064 = vrot.slane %v2029, 6
      %v2065 = vrot.slane %v2030, 6
      %v2066 = vrot.slane %v2031, 6
      %v2067 = vrot.slane %v2032, 6
      %v2068 = vrot.slane %v2033, 6
      %v2069 = vrot.slane %v2034, 6
      %v2070 = vrot.slane %v2035, 6
      %v2071 = vrot.slane %v2036, 6
      %v2072 = vrot.slane %v2037, 6
      %v2073 = vrot.slane %v2038, 6
      %v2074 = vrot.slane %v2039, 6
      %v2075 = vrot.slane %v2040, 6
      %vm2076 = vcmp.lt.s32.totalorder %v662, 2
      %v2077 = vsel %vm2076, %v2074, %v2075
      %v2078 = vsel %vm2076, %v2073, %v2074
      %v2079 = vsel %vm2076, %v2072, %v2073
      %v2080 = vsel %vm2076, %v2071, %v2072
      %v2081 = vsel %vm2076, %v2070, %v2071
      %v2082 = vsel %vm2076, %v2069, %v2070
      %v2083 = vsel %vm2076, %v2068, %v2069
      %v2084 = vsel %vm2076, %v2067, %v2068
      %v2085 = vsel %vm2076, %v2066, %v2067
      %v2086 = vsel %vm2076, %v2065, %v2066
      %v2087 = vsel %vm2076, %v2064, %v2065
      %v2088 = vsel %vm2076, %v2063, %v2064
      %v2089 = vsel %vm2076, %v2062, %v2063
      %v2090 = vsel %vm2076, %v2061, %v2062
      %v2091 = vsel %vm2076, %v2060, %v2061
      %v2092 = vsel %vm2076, %v2075, %v2060
      %v2093 = vpack.c.bf16 %v2091, %v2092
      %v2094 = vpack.c.bf16 %v2089, %v2090
      %v2095 = vpack.c.bf16 %v2087, %v2088
      %v2096 = vpack.c.bf16 %v2085, %v2086
      %v2097 = vpack.c.bf16 %v2083, %v2084
      %v2098 = vpack.c.bf16 %v2081, %v2082
      %v2099 = vpack.c.bf16 %v2079, %v2080
      %v2100 = vpack.c.bf16 %v2077, %v2078
      %v2101 = vmul.bf16 %v2093, %v974
      %v2102 = vmul.bf16 %v2094, %v975
      %v2103 = vmul.bf16 %v2095, %v976
      %v2104 = vmul.bf16 %v2096, %v977
      %v2105 = vmul.bf16 %v2097, %v978
      %v2106 = vmul.bf16 %v2098, %v979
      %v2107 = vmul.bf16 %v2099, %v980
      %v2108 = vmul.bf16 %v2100, %v981
      %2117 = vrot.lane.b32.xlu0 %v2101, 32
      %v2118 = vpop.permute.xlu0 %2117
      %2119 = vrot.lane.b32.xlu0 %v2102, 32
      %v2120 = vpop.permute.xlu0 %2119
      %2121 = vrot.lane.b32.xlu0 %v2103, 32
      %v2122 = vpop.permute.xlu0 %2121
      %2123 = vrot.lane.b32.xlu0 %v2104, 32
      %v2124 = vpop.permute.xlu0 %2123
      %2125 = vrot.lane.b32.xlu0 %v2105, 32
      %v2126 = vpop.permute.xlu0 %2125
      %2127 = vrot.lane.b32.xlu0 %v2106, 32
      %v2128 = vpop.permute.xlu0 %2127
      %2129 = vrot.lane.b32.xlu0 %v2107, 32
      %v2130 = vpop.permute.xlu0 %2129
      %2131 = vrot.lane.b32.xlu0 %v2108, 32
      %v2132 = vpop.permute.xlu0 %2131
      %v2135 = vsel %vm1389, %v2052, %v2118
      %v2138 = vsel %vm1389, %v2053, %v2120
      %v2141 = vsel %vm1389, %v2054, %v2122
      %v2144 = vsel %vm1389, %v2055, %v2124
      %v2147 = vsel %vm1389, %v2056, %v2126
      %v2150 = vsel %vm1389, %v2057, %v2128
      %v2153 = vsel %vm1389, %v2058, %v2130
      %v2156 = vsel %vm1389, %v2059, %v2132
      %v2158 = vlaneseq
      %v2159 = vshrl.u32 %v2158, 7
      %v2160 = vsub.s32 0, %v2159
      %v2161 = vrot.slane %v2051, %v2160
      %v2171 = vunpack.c.l.b16 %v2042
      %v2172 = vunpack.c.l.b16 %v2043
      %v2173 = vunpack.c.l.b16 %v2044
      %v2174 = vunpack.c.l.b16 %v2045
      %v2175 = vunpack.c.l.b16 %v2046
      %v2176 = vunpack.c.l.b16 %v2047
      %v2177 = vunpack.c.l.b16 %v2048
      %v2178 = vunpack.c.l.b16 %v2049
      %v2179 = vpack.c.b16 %v2172, %v2171
      %v2180 = vpack.c.b16 %v2174, %v2173
      %v2181 = vpack.c.b16 %v2176, %v2175
      %v2182 = vpack.c.b16 %v2178, %v2177
      %v2187 = vsel %vm1655, %v2135, 0
      %v2189 = vsel %vm1655, %v2138, 0
      %v2191 = vsel %vm1655, %v2141, 0
      %v2193 = vsel %vm1655, %v2144, 0
      %v2195 = vsel %vm1655, %v2147, 0
      %v2197 = vsel %vm1655, %v2150, 0
      %v2199 = vsel %vm1655, %v2153, 0
      %v2201 = vsel %vm1655, %v2156, 0
      %2203 = vmatprep.subr.bf16.mxu0 0
      %2204 = vmatpush1.bf16.msra.mxu0 %v2179
      %2205 = vmatprep.subr.bf16.mxu0 0
      %2206 = vmatpush1.bf16.msra.mxu0 %v2180
      %2207 = vmatprep.subr.bf16.mxu0 0
      %2208 = vmatpush1.bf16.msra.mxu0 %v2181
      %2209 = vmatprep.subr.bf16.mxu0 0
      %2210 = vmatpush1.bf16.msra.mxu0 %v2182
      %2211 = vmatprep.subr.bf16.mxu0 0
      %2212 = vmatpush1.bf16.msra.mxu0 0
      %2213 = vmatprep.subr.bf16.mxu0 0
      %2214 = vmatpush1.bf16.msra.mxu0 0
      %2215 = vmatprep.subr.bf16.mxu0 0
      %2216 = vmatpush1.bf16.msra.mxu0 0
      %2217 = vmatprep.subr.bf16.mxu0 0
      %2218 = vmatpush1.bf16.msra.mxu0 0
      %2219 = vmatprep.subr.bf16.mxu0 0
      %2220 = vmatpush1.bf16.msra.mxu0 0
      %2221 = vmatprep.subr.bf16.mxu0 0
      %2222 = vmatpush1.bf16.msra.mxu0 0
      %2223 = vmatprep.subr.bf16.mxu0 0
      %2224 = vmatpush1.bf16.msra.mxu0 0
      %2225 = vmatprep.subr.bf16.mxu0 0
      %2226 = vmatpush1.bf16.msra.mxu0 0
      %2227 = vmatprep.subr.bf16.mxu0 0
      %2228 = vmatpush1.bf16.msra.mxu0 0
      %2229 = vmatprep.subr.bf16.mxu0 0
      %2230 = vmatpush1.bf16.msra.mxu0 0
      %2231 = vmatprep.subr.bf16.mxu0 0
      %2232 = vmatpush1.bf16.msra.mxu0 0
      %2233 = vmatprep.subr.bf16.mxu0 0
      %2234 = vmatpush1.bf16.msra.mxu0 0
      %2235 = vmatprep.mubr.bf16.mxu0 0
      %2236 = vmatmul.mubr.bf16.gmra.mrb[0].mxu0 %v2187
      %v2237 = vpop.f32.mrb[0].mxu0
      %v2238 = vadd.f32 %v2161, %v2237
      %v2239 = vpop.f32.mrb[0].mxu0
      %v2240 = vpop.f32.mrb[0].mxu0
      %v2241 = vadd.f32 %v2161, %v2240
      %v2242 = vpop.f32.mrb[0].mxu0
      %2243 = vmatprep.mubr.bf16.mxu0 0
      %2244 = vmatmul.mubr.bf16.gmra.mrb[0].mxu0 %v2189
      %v2245 = vpop.f32.mrb[0].mxu0
      %v2246 = vadd.f32 %v2161, %v2245
      %v2247 = vpop.f32.mrb[0].mxu0
      %v2248 = vpop.f32.mrb[0].mxu0
      %v2249 = vadd.f32 %v2161, %v2248
      %v2250 = vpop.f32.mrb[0].mxu0
      %2251 = vmatprep.mubr.bf16.mxu0 0
      %2252 = vmatmul.mubr.bf16.gmra.mrb[0].mxu0 %v2191
      %v2253 = vpop.f32.mrb[0].mxu0
      %v2254 = vadd.f32 %v2161, %v2253
      %v2255 = vpop.f32.mrb[0].mxu0
      %v2256 = vpop.f32.mrb[0].mxu0
      %v2257 = vadd.f32 %v2161, %v2256
      %v2258 = vpop.f32.mrb[0].mxu0
      %2259 = vmatprep.mubr.bf16.mxu0 0
      %2260 = vmatmul.mubr.bf16.gmra.mrb[0].mxu0 %v2193
      %v2261 = vpop.f32.mrb[0].mxu0
      %v2262 = vadd.f32 %v2161, %v2261
      %v2263 = vpop.f32.mrb[0].mxu0
      %v2264 = vpop.f32.mrb[0].mxu0
      %v2265 = vadd.f32 %v2161, %v2264
      %v2266 = vpop.f32.mrb[0].mxu0
      %2267 = vmatprep.mubr.bf16.mxu0 0
      %2268 = vmatmul.mubr.bf16.gmra.mrb[0].mxu0 %v2195
      %v2269 = vpop.f32.mrb[0].mxu0
      %v2270 = vadd.f32 %v2161, %v2269
      %v2271 = vpop.f32.mrb[0].mxu0
      %v2272 = vpop.f32.mrb[0].mxu0
      %v2273 = vadd.f32 %v2161, %v2272
      %v2274 = vpop.f32.mrb[0].mxu0
      %2275 = vmatprep.mubr.bf16.mxu0 0
      %2276 = vmatmul.mubr.bf16.gmra.mrb[0].mxu0 %v2197
      %v2277 = vpop.f32.mrb[0].mxu0
      %v2278 = vadd.f32 %v2161, %v2277
      %v2279 = vpop.f32.mrb[0].mxu0
      %v2280 = vpop.f32.mrb[0].mxu0
      %v2281 = vadd.f32 %v2161, %v2280
      %v2282 = vpop.f32.mrb[0].mxu0
      %2283 = vmatprep.mubr.bf16.mxu0 0
      %2284 = vmatmul.mubr.bf16.gmra.mrb[0].mxu0 %v2199
      %v2285 = vpop.f32.mrb[0].mxu0
      %v2286 = vadd.f32 %v2161, %v2285
      %v2287 = vpop.f32.mrb[0].mxu0
      %v2288 = vpop.f32.mrb[0].mxu0
      %v2289 = vadd.f32 %v2161, %v2288
      %v2290 = vpop.f32.mrb[0].mxu0
      %2291 = vmatprep.mubr.bf16.mxu0 0
      %2292 = vmatmul.mubr.bf16.gmra.mrb[0].mxu0 %v2201
      %v2293 = vpop.f32.mrb[0].mxu0
      %v2294 = vadd.f32 %v2161, %v2293
      %v2295 = vpop.f32.mrb[0].mxu0
      %v2296 = vpop.f32.mrb[0].mxu0
      %v2297 = vadd.f32 %v2161, %v2296
      %v2298 = vpop.f32.mrb[0].mxu0
      %2299 = vdwg.mxu0
      %v2300 = vxor.u32 %v2238, 2147483648
      %v2301 = vxor.u32 %v2241, 2147483648
      %v2302 = vxor.u32 %v2246, 2147483648
      %v2303 = vxor.u32 %v2249, 2147483648
      %v2304 = vxor.u32 %v2254, 2147483648
      %v2305 = vxor.u32 %v2257, 2147483648
      %v2306 = vxor.u32 %v2262, 2147483648
      %v2307 = vxor.u32 %v2265, 2147483648
      %v2308 = vxor.u32 %v2270, 2147483648
      %v2309 = vxor.u32 %v2273, 2147483648
      %v2310 = vxor.u32 %v2278, 2147483648
      %v2311 = vxor.u32 %v2281, 2147483648
      %v2312 = vxor.u32 %v2286, 2147483648
      %v2313 = vxor.u32 %v2289, 2147483648
      %v2314 = vxor.u32 %v2294, 2147483648
      %v2315 = vxor.u32 %v2297, 2147483648
      %v2316 = vmul.f32 %v2300, 1.442695
      %v2317 = vpow.pop %v2316
      %v2318 = vmul.f32 %v2301, 1.442695
      %v2319 = vpow.pop %v2318
      %v2320 = vmul.f32 %v2302, 1.442695
      %v2321 = vpow.pop %v2320
      %v2322 = vmul.f32 %v2303, 1.442695
      %v2323 = vpow.pop %v2322
      %v2324 = vmul.f32 %v2304, 1.442695
      %v2325 = vpow.pop %v2324
      %v2326 = vmul.f32 %v2305, 1.442695
      %v2327 = vpow.pop %v2326
      %v2328 = vmul.f32 %v2306, 1.442695
      %v2329 = vpow.pop %v2328
      %v2330 = vmul.f32 %v2307, 1.442695
      %v2331 = vpow.pop %v2330
      %v2332 = vmul.f32 %v2308, 1.442695
      %v2333 = vpow.pop %v2332
      %v2334 = vmul.f32 %v2309, 1.442695
      %v2335 = vpow.pop %v2334
      %v2336 = vmul.f32 %v2310, 1.442695
      %v2337 = vpow.pop %v2336
      %v2338 = vmul.f32 %v2311, 1.442695
      %v2339 = vpow.pop %v2338
      %v2340 = vmul.f32 %v2312, 1.442695
      %v2341 = vpow.pop %v2340
      %v2342 = vmul.f32 %v2313, 1.442695
      %v2343 = vpow.pop %v2342
      %v2344 = vmul.f32 %v2314, 1.442695
      %v2345 = vpow.pop %v2344
      %v2346 = vmul.f32 %v2315, 1.442695
      %v2347 = vpow.pop %v2346
      %v2348 = vadd.f32 %v2317, 1.0
      %v2349 = vadd.f32 %v2319, 1.0
      %v2350 = vadd.f32 %v2321, 1.0
      %v2351 = vadd.f32 %v2323, 1.0
      %v2352 = vadd.f32 %v2325, 1.0
      %v2353 = vadd.f32 %v2327, 1.0
      %v2354 = vadd.f32 %v2329, 1.0
      %v2355 = vadd.f32 %v2331, 1.0
      %v2356 = vadd.f32 %v2333, 1.0
      %v2357 = vadd.f32 %v2335, 1.0
      %v2358 = vadd.f32 %v2337, 1.0
      %v2359 = vadd.f32 %v2339, 1.0
      %v2360 = vadd.f32 %v2341, 1.0
      %v2361 = vadd.f32 %v2343, 1.0
      %v2362 = vadd.f32 %v2345, 1.0
      %v2363 = vadd.f32 %v2347, 1.0
      %v2364 = vrcp.pop %v2348
      %v2365 = vmul.f32 1.0, %v2364
      %v2366 = vrcp.pop %v2349
      %v2367 = vmul.f32 1.0, %v2366
      %v2368 = vrcp.pop %v2350
      %v2369 = vmul.f32 1.0, %v2368
      %v2370 = vrcp.pop %v2351
      %v2371 = vmul.f32 1.0, %v2370
      %v2372 = vrcp.pop %v2352
      %v2373 = vmul.f32 1.0, %v2372
      %v2374 = vrcp.pop %v2353
      %v2375 = vmul.f32 1.0, %v2374
      %v2376 = vrcp.pop %v2354
      %v2377 = vmul.f32 1.0, %v2376
      %v2378 = vrcp.pop %v2355
      %v2379 = vmul.f32 1.0, %v2378
      %v2380 = vrcp.pop %v2356
      %v2381 = vmul.f32 1.0, %v2380
      %v2382 = vrcp.pop %v2357
      %v2383 = vmul.f32 1.0, %v2382
      %v2384 = vrcp.pop %v2358
      %v2385 = vmul.f32 1.0, %v2384
      %v2386 = vrcp.pop %v2359
      %v2387 = vmul.f32 1.0, %v2386
      %v2388 = vrcp.pop %v2360
      %v2389 = vmul.f32 1.0, %v2388
      %v2390 = vrcp.pop %v2361
      %v2391 = vmul.f32 1.0, %v2390
      %v2392 = vrcp.pop %v2362
      %v2393 = vmul.f32 1.0, %v2392
      %v2394 = vrcp.pop %v2363
      %v2395 = vmul.f32 1.0, %v2394
      %2412 = vrot.lane.b32.xlu0 %v2025, 32
      %v2413 = vpop.permute.xlu0 %2412
      %2414 = vrot.lane.b32.xlu0 %v2026, 32
      %v2415 = vpop.permute.xlu0 %2414
      %2416 = vrot.lane.b32.xlu0 %v2027, 32
      %v2417 = vpop.permute.xlu0 %2416
      %2418 = vrot.lane.b32.xlu0 %v2028, 32
      %v2419 = vpop.permute.xlu0 %2418
      %2420 = vrot.lane.b32.xlu0 %v2029, 32
      %v2421 = vpop.permute.xlu0 %2420
      %2422 = vrot.lane.b32.xlu0 %v2030, 32
      %v2423 = vpop.permute.xlu0 %2422
      %2424 = vrot.lane.b32.xlu0 %v2031, 32
      %v2425 = vpop.permute.xlu0 %2424
      %2426 = vrot.lane.b32.xlu0 %v2032, 32
      %v2427 = vpop.permute.xlu0 %2426
      %2428 = vrot.lane.b32.xlu0 %v2033, 32
      %v2429 = vpop.permute.xlu0 %2428
      %2430 = vrot.lane.b32.xlu0 %v2034, 32
      %v2431 = vpop.permute.xlu0 %2430
      %2432 = vrot.lane.b32.xlu0 %v2035, 32
      %v2433 = vpop.permute.xlu0 %2432
      %2434 = vrot.lane.b32.xlu0 %v2036, 32
      %v2435 = vpop.permute.xlu0 %2434
      %2436 = vrot.lane.b32.xlu0 %v2037, 32
      %v2437 = vpop.permute.xlu0 %2436
      %2438 = vrot.lane.b32.xlu0 %v2038, 32
      %v2439 = vpop.permute.xlu0 %2438
      %2440 = vrot.lane.b32.xlu0 %v2039, 32
      %v2441 = vpop.permute.xlu0 %2440
      %2442 = vrot.lane.b32.xlu0 %v2040, 32
      %v2443 = vpop.permute.xlu0 %2442
      %v2460 = vsub.f32 %v2238, %v2413
      %v2461 = vsub.f32 %v2241, %v2415
      %v2462 = vsub.f32 %v2246, %v2417
      %v2463 = vsub.f32 %v2249, %v2419
      %v2464 = vsub.f32 %v2254, %v2421
      %v2465 = vsub.f32 %v2257, %v2423
      %v2466 = vsub.f32 %v2262, %v2425
      %v2467 = vsub.f32 %v2265, %v2427
      %v2468 = vsub.f32 %v2270, %v2429
      %v2469 = vsub.f32 %v2273, %v2431
      %v2470 = vsub.f32 %v2278, %v2433
      %v2471 = vsub.f32 %v2281, %v2435
      %v2472 = vsub.f32 %v2286, %v2437
      %v2473 = vsub.f32 %v2289, %v2439
      %v2474 = vsub.f32 %v2294, %v2441
      %v2475 = vsub.f32 %v2297, %v2443
      %2492 = vrot.lane.b32.xlu0 %v2460, 96
      %v2493 = vpop.permute.xlu0 %2492
      %2494 = vrot.lane.b32.xlu0 %v2461, 96
      %v2495 = vpop.permute.xlu0 %2494
      %2496 = vrot.lane.b32.xlu0 %v2462, 96
      %v2497 = vpop.permute.xlu0 %2496
      %2498 = vrot.lane.b32.xlu0 %v2463, 96
      %v2499 = vpop.permute.xlu0 %2498
      %2500 = vrot.lane.b32.xlu0 %v2464, 96
      %v2501 = vpop.permute.xlu0 %2500
      %2502 = vrot.lane.b32.xlu0 %v2465, 96
      %v2503 = vpop.permute.xlu0 %2502
      %2504 = vrot.lane.b32.xlu0 %v2466, 96
      %v2505 = vpop.permute.xlu0 %2504
      %2506 = vrot.lane.b32.xlu0 %v2467, 96
      %v2507 = vpop.permute.xlu0 %2506
      %2508 = vrot.lane.b32.xlu0 %v2468, 96
      %v2509 = vpop.permute.xlu0 %2508
      %2510 = vrot.lane.b32.xlu0 %v2469, 96
      %v2511 = vpop.permute.xlu0 %2510
      %2512 = vrot.lane.b32.xlu0 %v2470, 96
      %v2513 = vpop.permute.xlu0 %2512
      %2514 = vrot.lane.b32.xlu0 %v2471, 96
      %v2515 = vpop.permute.xlu0 %2514
      %2516 = vrot.lane.b32.xlu0 %v2472, 96
      %v2517 = vpop.permute.xlu0 %2516
      %2518 = vrot.lane.b32.xlu0 %v2473, 96
      %v2519 = vpop.permute.xlu0 %2518
      %2520 = vrot.lane.b32.xlu0 %v2474, 96
      %v2521 = vpop.permute.xlu0 %2520
      %2522 = vrot.lane.b32.xlu0 %v2475, 96
      %v2523 = vpop.permute.xlu0 %2522
      %v2540 = vmul.f32 %v2365, %v2493
      %v2541 = vmul.f32 %v2367, %v2495
      %v2542 = vmul.f32 %v2369, %v2497
      %v2543 = vmul.f32 %v2371, %v2499
      %v2544 = vmul.f32 %v2373, %v2501
      %v2545 = vmul.f32 %v2375, %v2503
      %v2546 = vmul.f32 %v2377, %v2505
      %v2547 = vmul.f32 %v2379, %v2507
      %v2548 = vmul.f32 %v2381, %v2509
      %v2549 = vmul.f32 %v2383, %v2511
      %v2550 = vmul.f32 %v2385, %v2513
      %v2551 = vmul.f32 %v2387, %v2515
      %v2552 = vmul.f32 %v2389, %v2517
      %v2553 = vmul.f32 %v2391, %v2519
      %v2554 = vmul.f32 %v2393, %v2521
      %v2555 = vmul.f32 %v2395, %v2523
      %v2556 = vadd.f32 %v2025, %v2540
      %v2557 = vadd.f32 %v2026, %v2541
      %v2558 = vadd.f32 %v2027, %v2542
      %v2559 = vadd.f32 %v2028, %v2543
      %v2560 = vadd.f32 %v2029, %v2544
      %v2561 = vadd.f32 %v2030, %v2545
      %v2562 = vadd.f32 %v2031, %v2546
      %v2563 = vadd.f32 %v2032, %v2547
      %v2564 = vadd.f32 %v2033, %v2548
      %v2565 = vadd.f32 %v2034, %v2549
      %v2566 = vadd.f32 %v2035, %v2550
      %v2567 = vadd.f32 %v2036, %v2551
      %v2568 = vadd.f32 %v2037, %v2552
      %v2569 = vadd.f32 %v2038, %v2553
      %v2570 = vadd.f32 %v2039, %v2554
      %v2571 = vadd.f32 %v2040, %v2555
      %s2572 = scalar_lea.vmem %s5, 64
      %v2573 = vld [vmem:[%s2572] sm:$0xf]
      %v2574 = vld [vmem:[%s2572 + $0x4] sm:$0xf]
      %v2575 = vld [vmem:[%s2572 + $0x8] sm:$0xf]
      %v2576 = vld [vmem:[%s2572 + $0xc] sm:$0xf]
      %v2577 = vld [vmem:[%s2572 + $0x10] sm:$0xf]
      %v2578 = vld [vmem:[%s2572 + $0x14] sm:$0xf]
      %v2579 = vld [vmem:[%s2572 + $0x18] sm:$0xf]
      %v2580 = vld [vmem:[%s2572 + $0x1c] sm:$0xf]
      %s2581 = scalar_lea.vmem %s6, 2
      %v2582 = vld [vmem:[%s2581] sm:$0x1]
      %v2583 = vpack.c.bf16 %v2557, %v2556
      %v2584 = vpack.c.bf16 %v2559, %v2558
      %v2585 = vpack.c.bf16 %v2561, %v2560
      %v2586 = vpack.c.bf16 %v2563, %v2562
      %v2587 = vpack.c.bf16 %v2565, %v2564
      %v2588 = vpack.c.bf16 %v2567, %v2566
      %v2589 = vpack.c.bf16 %v2569, %v2568
      %v2590 = vpack.c.bf16 %v2571, %v2570
      %v2591 = vrot.slane %v2556, 4
      %v2592 = vrot.slane %v2557, 4
      %v2593 = vrot.slane %v2558, 4
      %v2594 = vrot.slane %v2559, 4
      %v2595 = vrot.slane %v2560, 4
      %v2596 = vrot.slane %v2561, 4
      %v2597 = vrot.slane %v2562, 4
      %v2598 = vrot.slane %v2563, 4
      %v2599 = vrot.slane %v2564, 4
      %v2600 = vrot.slane %v2565, 4
      %v2601 = vrot.slane %v2566, 4
      %v2602 = vrot.slane %v2567, 4
      %v2603 = vrot.slane %v2568, 4
      %v2604 = vrot.slane %v2569, 4
      %v2605 = vrot.slane %v2570, 4
      %v2606 = vrot.slane %v2571, 4
      %vm2607 = vcmp.lt.s32.totalorder %v662, 4
      %v2608 = vsel %vm2607, %v2605, %v2606
      %v2609 = vsel %vm2607, %v2604, %v2605
      %v2610 = vsel %vm2607, %v2603, %v2604
      %v2611 = vsel %vm2607, %v2602, %v2603
      %v2612 = vsel %vm2607, %v2601, %v2602
      %v2613 = vsel %vm2607, %v2600, %v2601
      %v2614 = vsel %vm2607, %v2599, %v2600
      %v2615 = vsel %vm2607, %v2598, %v2599
      %v2616 = vsel %vm2607, %v2597, %v2598
      %v2617 = vsel %vm2607, %v2596, %v2597
      %v2618 = vsel %vm2607, %v2595, %v2596
      %v2619 = vsel %vm2607, %v2594, %v2595
      %v2620 = vsel %vm2607, %v2593, %v2594
      %v2621 = vsel %vm2607, %v2592, %v2593
      %v2622 = vsel %vm2607, %v2591, %v2592
      %v2623 = vsel %vm2607, %v2606, %v2591
      %v2624 = vpack.c.bf16 %v2622, %v2623
      %v2625 = vpack.c.bf16 %v2620, %v2621
      %v2626 = vpack.c.bf16 %v2618, %v2619
      %v2627 = vpack.c.bf16 %v2616, %v2617
      %v2628 = vpack.c.bf16 %v2614, %v2615
      %v2629 = vpack.c.bf16 %v2612, %v2613
      %v2630 = vpack.c.bf16 %v2610, %v2611
      %v2631 = vpack.c.bf16 %v2608, %v2609
      %v2632 = vmul.bf16 %v2624, %v1030
      %v2633 = vmul.bf16 %v2625, %v1031
      %v2634 = vmul.bf16 %v2626, %v1032
      %v2635 = vmul.bf16 %v2627, %v1033
      %v2636 = vmul.bf16 %v2628, %v1034
      %v2637 = vmul.bf16 %v2629, %v1035
      %v2638 = vmul.bf16 %v2630, %v1036
      %v2639 = vmul.bf16 %v2631, %v1037
      %2648 = vrot.lane.b32.xlu0 %v2632, 32
      %v2649 = vpop.permute.xlu0 %2648
      %2650 = vrot.lane.b32.xlu0 %v2633, 32
      %v2651 = vpop.permute.xlu0 %2650
      %2652 = vrot.lane.b32.xlu0 %v2634, 32
      %v2653 = vpop.permute.xlu0 %2652
      %2654 = vrot.lane.b32.xlu0 %v2635, 32
      %v2655 = vpop.permute.xlu0 %2654
      %2656 = vrot.lane.b32.xlu0 %v2636, 32
      %v2657 = vpop.permute.xlu0 %2656
      %2658 = vrot.lane.b32.xlu0 %v2637, 32
      %v2659 = vpop.permute.xlu0 %2658
      %2660 = vrot.lane.b32.xlu0 %v2638, 32
      %v2661 = vpop.permute.xlu0 %2660
      %2662 = vrot.lane.b32.xlu0 %v2639, 32
      %v2663 = vpop.permute.xlu0 %2662
      %v2666 = vsel %vm1389, %v2583, %v2649
      %v2669 = vsel %vm1389, %v2584, %v2651
      %v2672 = vsel %vm1389, %v2585, %v2653
      %v2675 = vsel %vm1389, %v2586, %v2655
      %v2678 = vsel %vm1389, %v2587, %v2657
      %v2681 = vsel %vm1389, %v2588, %v2659
      %v2684 = vsel %vm1389, %v2589, %v2661
      %v2687 = vsel %vm1389, %v2590, %v2663
      %v2689 = vlaneseq
      %v2690 = vshrl.u32 %v2689, 7
      %v2691 = vsub.s32 0, %v2690
      %v2692 = vrot.slane %v2582, %v2691
      %v2702 = vunpack.c.l.b16 %v2573
      %v2703 = vunpack.c.l.b16 %v2574
      %v2704 = vunpack.c.l.b16 %v2575
      %v2705 = vunpack.c.l.b16 %v2576
      %v2706 = vunpack.c.l.b16 %v2577
      %v2707 = vunpack.c.l.b16 %v2578
      %v2708 = vunpack.c.l.b16 %v2579
      %v2709 = vunpack.c.l.b16 %v2580
      %v2710 = vpack.c.b16 %v2703, %v2702
      %v2711 = vpack.c.b16 %v2705, %v2704
      %v2712 = vpack.c.b16 %v2707, %v2706
      %v2713 = vpack.c.b16 %v2709, %v2708
      %v2718 = vsel %vm1655, %v2666, 0
      %v2720 = vsel %vm1655, %v2669, 0
      %v2722 = vsel %vm1655, %v2672, 0
      %v2724 = vsel %vm1655, %v2675, 0
      %v2726 = vsel %vm1655, %v2678, 0
      %v2728 = vsel %vm1655, %v2681, 0
      %v2730 = vsel %vm1655, %v2684, 0
      %v2732 = vsel %vm1655, %v2687, 0
      %2734 = vmatprep.subr.bf16.mxu0 0
      %2735 = vmatpush1.bf16.msra.mxu0 %v2710
      %2736 = vmatprep.subr.bf16.mxu0 0
      %2737 = vmatpush1.bf16.msra.mxu0 %v2711
      %2738 = vmatprep.subr.bf16.mxu0 0
      %2739 = vmatpush1.bf16.msra.mxu0 %v2712
      %2740 = vmatprep.subr.bf16.mxu0 0
      %2741 = vmatpush1.bf16.msra.mxu0 %v2713
      %2742 = vmatprep.subr.bf16.mxu0 0
      %2743 = vmatpush1.bf16.msra.mxu0 0
      %2744 = vmatprep.subr.bf16.mxu0 0
      %2745 = vmatpush1.bf16.msra.mxu0 0
      %2746 = vmatprep.subr.bf16.mxu0 0
      %2747 = vmatpush1.bf16.msra.mxu0 0
      %2748 = vmatprep.subr.bf16.mxu0 0
      %2749 = vmatpush1.bf16.msra.mxu0 0
      %2750 = vmatprep.subr.bf16.mxu0 0
      %2751 = vmatpush1.bf16.msra.mxu0 0
      %2752 = vmatprep.subr.bf16.mxu0 0
      %2753 = vmatpush1.bf16.msra.mxu0 0
      %2754 = vmatprep.subr.bf16.mxu0 0
      %2755 = vmatpush1.bf16.msra.mxu0 0
      %2756 = vmatprep.subr.bf16.mxu0 0
      %2757 = vmatpush1.bf16.msra.mxu0 0
      %2758 = vmatprep.subr.bf16.mxu0 0
      %2759 = vmatpush1.bf16.msra.mxu0 0
      %2760 = vmatprep.subr.bf16.mxu0 0
      %2761 = vmatpush1.bf16.msra.mxu0 0
      %2762 = vmatprep.subr.bf16.mxu0 0
      %2763 = vmatpush1.bf16.msra.mxu0 0
      %2764 = vmatprep.subr.bf16.mxu0 0
      %2765 = vmatpush1.bf16.msra.mxu0 0
      %2766 = vmatprep.mubr.bf16.mxu0 0
      %2767 = vmatmul.mubr.bf16.gmra.mrb[0].mxu0 %v2718
      %v2768 = vpop.f32.mrb[0].mxu0
      %v2769 = vadd.f32 %v2692, %v2768
      %v2770 = vpop.f32.mrb[0].mxu0
      %v2771 = vpop.f32.mrb[0].mxu0
      %v2772 = vadd.f32 %v2692, %v2771
      %v2773 = vpop.f32.mrb[0].mxu0
      %2774 = vmatprep.mubr.bf16.mxu0 0
      %2775 = vmatmul.mubr.bf16.gmra.mrb[0].mxu0 %v2720
      %v2776 = vpop.f32.mrb[0].mxu0
      %v2777 = vadd.f32 %v2692, %v2776
      %v2778 = vpop.f32.mrb[0].mxu0
      %v2779 = vpop.f32.mrb[0].mxu0
      %v2780 = vadd.f32 %v2692, %v2779
      %v2781 = vpop.f32.mrb[0].mxu0
      %2782 = vmatprep.mubr.bf16.mxu0 0
      %2783 = vmatmul.mubr.bf16.gmra.mrb[0].mxu0 %v2722
      %v2784 = vpop.f32.mrb[0].mxu0
      %v2785 = vadd.f32 %v2692, %v2784
      %v2786 = vpop.f32.mrb[0].mxu0
      %v2787 = vpop.f32.mrb[0].mxu0
      %v2788 = vadd.f32 %v2692, %v2787
      %v2789 = vpop.f32.mrb[0].mxu0
      %2790 = vmatprep.mubr.bf16.mxu0 0
      %2791 = vmatmul.mubr.bf16.gmra.mrb[0].mxu0 %v2724
      %v2792 = vpop.f32.mrb[0].mxu0
      %v2793 = vadd.f32 %v2692, %v2792
      %v2794 = vpop.f32.mrb[0].mxu0
      %v2795 = vpop.f32.mrb[0].mxu0
      %v2796 = vadd.f32 %v2692, %v2795
      %v2797 = vpop.f32.mrb[0].mxu0
      %2798 = vmatprep.mubr.bf16.mxu0 0
      %2799 = vmatmul.mubr.bf16.gmra.mrb[0].mxu0 %v2726
      %v2800 = vpop.f32.mrb[0].mxu0
      %v2801 = vadd.f32 %v2692, %v2800
      %v2802 = vpop.f32.mrb[0].mxu0
      %v2803 = vpop.f32.mrb[0].mxu0
      %v2804 = vadd.f32 %v2692, %v2803
      %v2805 = vpop.f32.mrb[0].mxu0
      %2806 = vmatprep.mubr.bf16.mxu0 0
      %2807 = vmatmul.mubr.bf16.gmra.mrb[0].mxu0 %v2728
      %v2808 = vpop.f32.mrb[0].mxu0
      %v2809 = vadd.f32 %v2692, %v2808
      %v2810 = vpop.f32.mrb[0].mxu0
      %v2811 = vpop.f32.mrb[0].mxu0
      %v2812 = vadd.f32 %v2692, %v2811
      %v2813 = vpop.f32.mrb[0].mxu0
      %2814 = vmatprep.mubr.bf16.mxu0 0
      %2815 = vmatmul.mubr.bf16.gmra.mrb[0].mxu0 %v2730
      %v2816 = vpop.f32.mrb[0].mxu0
      %v2817 = vadd.f32 %v2692, %v2816
      %v2818 = vpop.f32.mrb[0].mxu0
      %v2819 = vpop.f32.mrb[0].mxu0
      %v2820 = vadd.f32 %v2692, %v2819
      %v2821 = vpop.f32.mrb[0].mxu0
      %2822 = vmatprep.mubr.bf16.mxu0 0
      %2823 = vmatmul.mubr.bf16.gmra.mrb[0].mxu0 %v2732
      %v2824 = vpop.f32.mrb[0].mxu0
      %v2825 = vadd.f32 %v2692, %v2824
      %v2826 = vpop.f32.mrb[0].mxu0
      %v2827 = vpop.f32.mrb[0].mxu0
      %v2828 = vadd.f32 %v2692, %v2827
      %v2829 = vpop.f32.mrb[0].mxu0
      %2830 = vdwg.mxu0
      %v2831 = vxor.u32 %v2769, 2147483648
      %v2832 = vxor.u32 %v2772, 2147483648
      %v2833 = vxor.u32 %v2777, 2147483648
      %v2834 = vxor.u32 %v2780, 2147483648
      %v2835 = vxor.u32 %v2785, 2147483648
      %v2836 = vxor.u32 %v2788, 2147483648
      %v2837 = vxor.u32 %v2793, 2147483648
      %v2838 = vxor.u32 %v2796, 2147483648
      %v2839 = vxor.u32 %v2801, 2147483648
      %v2840 = vxor.u32 %v2804, 2147483648
      %v2841 = vxor.u32 %v2809, 2147483648
      %v2842 = vxor.u32 %v2812, 2147483648
      %v2843 = vxor.u32 %v2817, 2147483648
      %v2844 = vxor.u32 %v2820, 2147483648
      %v2845 = vxor.u32 %v2825, 2147483648
      %v2846 = vxor.u32 %v2828, 2147483648
      %v2847 = vmul.f32 %v2831, 1.442695
      %v2848 = vpow.pop %v2847
      %v2849 = vmul.f32 %v2832, 1.442695
      %v2850 = vpow.pop %v2849
      %v2851 = vmul.f32 %v2833, 1.442695
      %v2852 = vpow.pop %v2851
      %v2853 = vmul.f32 %v2834, 1.442695
      %v2854 = vpow.pop %v2853
      %v2855 = vmul.f32 %v2835, 1.442695
      %v2856 = vpow.pop %v2855
      %v2857 = vmul.f32 %v2836, 1.442695
      %v2858 = vpow.pop %v2857
      %v2859 = vmul.f32 %v2837, 1.442695
      %v2860 = vpow.pop %v2859
      %v2861 = vmul.f32 %v2838, 1.442695
      %v2862 = vpow.pop %v2861
      %v2863 = vmul.f32 %v2839, 1.442695
      %v2864 = vpow.pop %v2863
      %v2865 = vmul.f32 %v2840, 1.442695
      %v2866 = vpow.pop %v2865
      %v2867 = vmul.f32 %v2841, 1.442695
      %v2868 = vpow.pop %v2867
      %v2869 = vmul.f32 %v2842, 1.442695
      %v2870 = vpow.pop %v2869
      %v2871 = vmul.f32 %v2843, 1.442695
      %v2872 = vpow.pop %v2871
      %v2873 = vmul.f32 %v2844, 1.442695
      %v2874 = vpow.pop %v2873
      %v2875 = vmul.f32 %v2845, 1.442695
      %v2876 = vpow.pop %v2875
      %v2877 = vmul.f32 %v2846, 1.442695
      %v2878 = vpow.pop %v2877
      %v2879 = vadd.f32 %v2848, 1.0
      %v2880 = vadd.f32 %v2850, 1.0
      %v2881 = vadd.f32 %v2852, 1.0
      %v2882 = vadd.f32 %v2854, 1.0
      %v2883 = vadd.f32 %v2856, 1.0
      %v2884 = vadd.f32 %v2858, 1.0
      %v2885 = vadd.f32 %v2860, 1.0
      %v2886 = vadd.f32 %v2862, 1.0
      %v2887 = vadd.f32 %v2864, 1.0
      %v2888 = vadd.f32 %v2866, 1.0
      %v2889 = vadd.f32 %v2868, 1.0
      %v2890 = vadd.f32 %v2870, 1.0
      %v2891 = vadd.f32 %v2872, 1.0
      %v2892 = vadd.f32 %v2874, 1.0
      %v2893 = vadd.f32 %v2876, 1.0
      %v2894 = vadd.f32 %v2878, 1.0
      %v2895 = vrcp.pop %v2879
      %v2896 = vmul.f32 1.0, %v2895
      %v2897 = vrcp.pop %v2880
      %v2898 = vmul.f32 1.0, %v2897
      %v2899 = vrcp.pop %v2881
      %v2900 = vmul.f32 1.0, %v2899
      %v2901 = vrcp.pop %v2882
      %v2902 = vmul.f32 1.0, %v2901
      %v2903 = vrcp.pop %v2883
      %v2904 = vmul.f32 1.0, %v2903
      %v2905 = vrcp.pop %v2884
      %v2906 = vmul.f32 1.0, %v2905
      %v2907 = vrcp.pop %v2885
      %v2908 = vmul.f32 1.0, %v2907
      %v2909 = vrcp.pop %v2886
      %v2910 = vmul.f32 1.0, %v2909
      %v2911 = vrcp.pop %v2887
      %v2912 = vmul.f32 1.0, %v2911
      %v2913 = vrcp.pop %v2888
      %v2914 = vmul.f32 1.0, %v2913
      %v2915 = vrcp.pop %v2889
      %v2916 = vmul.f32 1.0, %v2915
      %v2917 = vrcp.pop %v2890
      %v2918 = vmul.f32 1.0, %v2917
      %v2919 = vrcp.pop %v2891
      %v2920 = vmul.f32 1.0, %v2919
      %v2921 = vrcp.pop %v2892
      %v2922 = vmul.f32 1.0, %v2921
      %v2923 = vrcp.pop %v2893
      %v2924 = vmul.f32 1.0, %v2923
      %v2925 = vrcp.pop %v2894
      %v2926 = vmul.f32 1.0, %v2925
      %2943 = vrot.lane.b32.xlu0 %v2556, 32
      %v2944 = vpop.permute.xlu0 %2943
      %2945 = vrot.lane.b32.xlu0 %v2557, 32
      %v2946 = vpop.permute.xlu0 %2945
      %2947 = vrot.lane.b32.xlu0 %v2558, 32
      %v2948 = vpop.permute.xlu0 %2947
      %2949 = vrot.lane.b32.xlu0 %v2559, 32
      %v2950 = vpop.permute.xlu0 %2949
      %2951 = vrot.lane.b32.xlu0 %v2560, 32
      %v2952 = vpop.permute.xlu0 %2951
      %2953 = vrot.lane.b32.xlu0 %v2561, 32
      %v2954 = vpop.permute.xlu0 %2953
      %2955 = vrot.lane.b32.xlu0 %v2562, 32
      %v2956 = vpop.permute.xlu0 %2955
      %2957 = vrot.lane.b32.xlu0 %v2563, 32
      %v2958 = vpop.permute.xlu0 %2957
      %2959 = vrot.lane.b32.xlu0 %v2564, 32
      %v2960 = vpop.permute.xlu0 %2959
      %2961 = vrot.lane.b32.xlu0 %v2565, 32
      %v2962 = vpop.permute.xlu0 %2961
      %2963 = vrot.lane.b32.xlu0 %v2566, 32
      %v2964 = vpop.permute.xlu0 %2963
      %2965 = vrot.lane.b32.xlu0 %v2567, 32
      %v2966 = vpop.permute.xlu0 %2965
      %2967 = vrot.lane.b32.xlu0 %v2568, 32
      %v2968 = vpop.permute.xlu0 %2967
      %2969 = vrot.lane.b32.xlu0 %v2569, 32
      %v2970 = vpop.permute.xlu0 %2969
      %2971 = vrot.lane.b32.xlu0 %v2570, 32
      %v2972 = vpop.permute.xlu0 %2971
      %2973 = vrot.lane.b32.xlu0 %v2571, 32
      %v2974 = vpop.permute.xlu0 %2973
      %v2991 = vsub.f32 %v2769, %v2944
      %v2992 = vsub.f32 %v2772, %v2946
      %v2993 = vsub.f32 %v2777, %v2948
      %v2994 = vsub.f32 %v2780, %v2950
      %v2995 = vsub.f32 %v2785, %v2952
      %v2996 = vsub.f32 %v2788, %v2954
      %v2997 = vsub.f32 %v2793, %v2956
      %v2998 = vsub.f32 %v2796, %v2958
      %v2999 = vsub.f32 %v2801, %v2960
      %v3000 = vsub.f32 %v2804, %v2962
      %v3001 = vsub.f32 %v2809, %v2964
      %v3002 = vsub.f32 %v2812, %v2966
      %v3003 = vsub.f32 %v2817, %v2968
      %v3004 = vsub.f32 %v2820, %v2970
      %v3005 = vsub.f32 %v2825, %v2972
      %v3006 = vsub.f32 %v2828, %v2974
      %3023 = vrot.lane.b32.xlu0 %v2991, 96
      %v3024 = vpop.permute.xlu0 %3023
      %3025 = vrot.lane.b32.xlu0 %v2992, 96
      %v3026 = vpop.permute.xlu0 %3025
      %3027 = vrot.lane.b32.xlu0 %v2993, 96
      %v3028 = vpop.permute.xlu0 %3027
      %3029 = vrot.lane.b32.xlu0 %v2994, 96
      %v3030 = vpop.permute.xlu0 %3029
      %3031 = vrot.lane.b32.xlu0 %v2995, 96
      %v3032 = vpop.permute.xlu0 %3031
      %3033 = vrot.lane.b32.xlu0 %v2996, 96
      %v3034 = vpop.permute.xlu0 %3033
      %3035 = vrot.lane.b32.xlu0 %v2997, 96
      %v3036 = vpop.permute.xlu0 %3035
      %3037 = vrot.lane.b32.xlu0 %v2998, 96
      %v3038 = vpop.permute.xlu0 %3037
      %3039 = vrot.lane.b32.xlu0 %v2999, 96
      %v3040 = vpop.permute.xlu0 %3039
      %3041 = vrot.lane.b32.xlu0 %v3000, 96
      %v3042 = vpop.permute.xlu0 %3041
      %3043 = vrot.lane.b32.xlu0 %v3001, 96
      %v3044 = vpop.permute.xlu0 %3043
      %3045 = vrot.lane.b32.xlu0 %v3002, 96
      %v3046 = vpop.permute.xlu0 %3045
      %3047 = vrot.lane.b32.xlu0 %v3003, 96
      %v3048 = vpop.permute.xlu0 %3047
      %3049 = vrot.lane.b32.xlu0 %v3004, 96
      %v3050 = vpop.permute.xlu0 %3049
      %3051 = vrot.lane.b32.xlu0 %v3005, 96
      %v3052 = vpop.permute.xlu0 %3051
      %3053 = vrot.lane.b32.xlu0 %v3006, 96
      %v3054 = vpop.permute.xlu0 %3053
      %v3071 = vmul.f32 %v2896, %v3024
      %v3072 = vmul.f32 %v2898, %v3026
      %v3073 = vmul.f32 %v2900, %v3028
      %v3074 = vmul.f32 %v2902, %v3030
      %v3075 = vmul.f32 %v2904, %v3032
      %v3076 = vmul.f32 %v2906, %v3034
      %v3077 = vmul.f32 %v2908, %v3036
      %v3078 = vmul.f32 %v2910, %v3038
      %v3079 = vmul.f32 %v2912, %v3040
      %v3080 = vmul.f32 %v2914, %v3042
      %v3081 = vmul.f32 %v2916, %v3044
      %v3082 = vmul.f32 %v2918, %v3046
      %v3083 = vmul.f32 %v2920, %v3048
      %v3084 = vmul.f32 %v2922, %v3050
      %v3085 = vmul.f32 %v2924, %v3052
      %v3086 = vmul.f32 %v2926, %v3054
      %v3087 = vadd.f32 %v2556, %v3071
      %v3088 = vadd.f32 %v2557, %v3072
      %v3089 = vadd.f32 %v2558, %v3073
      %v3090 = vadd.f32 %v2559, %v3074
      %v3091 = vadd.f32 %v2560, %v3075
      %v3092 = vadd.f32 %v2561, %v3076
      %v3093 = vadd.f32 %v2562, %v3077
      %v3094 = vadd.f32 %v2563, %v3078
      %v3095 = vadd.f32 %v2564, %v3079
      %v3096 = vadd.f32 %v2565, %v3080
      %v3097 = vadd.f32 %v2566, %v3081
      %v3098 = vadd.f32 %v2567, %v3082
      %v3099 = vadd.f32 %v2568, %v3083
      %v3100 = vadd.f32 %v2569, %v3084
      %v3101 = vadd.f32 %v2570, %v3085
      %v3102 = vadd.f32 %v2571, %v3086
      %s3103 = scalar_lea.vmem %s5, 96
      %v3104 = vld [vmem:[%s3103] sm:$0xf]
      %v3105 = vld [vmem:[%s3103 + $0x4] sm:$0xf]
      %v3106 = vld [vmem:[%s3103 + $0x8] sm:$0xf]
      %v3107 = vld [vmem:[%s3103 + $0xc] sm:$0xf]
      %v3108 = vld [vmem:[%s3103 + $0x10] sm:$0xf]
      %v3109 = vld [vmem:[%s3103 + $0x14] sm:$0xf]
      %v3110 = vld [vmem:[%s3103 + $0x18] sm:$0xf]
      %v3111 = vld [vmem:[%s3103 + $0x1c] sm:$0xf]
      %s3112 = scalar_lea.vmem %s6, 3
      %v3113 = vld [vmem:[%s3112] sm:$0x1]
      %v3114 = vpack.c.bf16 %v3088, %v3087
      %v3115 = vpack.c.bf16 %v3090, %v3089
      %v3116 = vpack.c.bf16 %v3092, %v3091
      %v3117 = vpack.c.bf16 %v3094, %v3093
      %v3118 = vpack.c.bf16 %v3096, %v3095
      %v3119 = vpack.c.bf16 %v3098, %v3097
      %v3120 = vpack.c.bf16 %v3100, %v3099
      %v3121 = vpack.c.bf16 %v3102, %v3101
      %v3122 = vpack.c.bf16 %v3087, %v3102
      %v3123 = vpack.c.bf16 %v3089, %v3088
      %v3124 = vpack.c.bf16 %v3091, %v3090
      %v3125 = vpack.c.bf16 %v3093, %v3092
      %v3126 = vpack.c.bf16 %v3095, %v3094
      %v3127 = vpack.c.bf16 %v3097, %v3096
      %v3128 = vpack.c.bf16 %v3099, %v3098
      %v3129 = vpack.c.bf16 %v3101, %v3100
      %v3130 = vmul.bf16 %v3122, %v1086
      %v3131 = vmul.bf16 %v3123, %v1087
      %v3132 = vmul.bf16 %v3124, %v1088
      %v3133 = vmul.bf16 %v3125, %v1089
      %v3134 = vmul.bf16 %v3126, %v1090
      %v3135 = vmul.bf16 %v3127, %v1091
      %v3136 = vmul.bf16 %v3128, %v1092
      %v3137 = vmul.bf16 %v3129, %v1093
      %3146 = vrot.lane.b32.xlu0 %v3130, 32
      %v3147 = vpop.permute.xlu0 %3146
      %3148 = vrot.lane.b32.xlu0 %v3131, 32
      %v3149 = vpop.permute.xlu0 %3148
      %3150 = vrot.lane.b32.xlu0 %v3132, 32
      %v3151 = vpop.permute.xlu0 %3150
      %3152 = vrot.lane.b32.xlu0 %v3133, 32
      %v3153 = vpop.permute.xlu0 %3152
      %3154 = vrot.lane.b32.xlu0 %v3134, 32
      %v3155 = vpop.permute.xlu0 %3154
      %3156 = vrot.lane.b32.xlu0 %v3135, 32
      %v3157 = vpop.permute.xlu0 %3156
      %3158 = vrot.lane.b32.xlu0 %v3136, 32
      %v3159 = vpop.permute.xlu0 %3158
      %3160 = vrot.lane.b32.xlu0 %v3137, 32
      %v3161 = vpop.permute.xlu0 %3160
      %v3164 = vsel %vm1389, %v3114, %v3147
      %v3167 = vsel %vm1389, %v3115, %v3149
      %v3170 = vsel %vm1389, %v3116, %v3151
      %v3173 = vsel %vm1389, %v3117, %v3153
      %v3176 = vsel %vm1389, %v3118, %v3155
      %v3179 = vsel %vm1389, %v3119, %v3157
      %v3182 = vsel %vm1389, %v3120, %v3159
      %v3185 = vsel %vm1389, %v3121, %v3161
      %v3187 = vlaneseq
      %v3188 = vshrl.u32 %v3187, 7
      %v3189 = vsub.s32 0, %v3188
      %v3190 = vrot.slane %v3113, %v3189
      %v3200 = vunpack.c.l.b16 %v3104
      %v3201 = vunpack.c.l.b16 %v3105
      %v3202 = vunpack.c.l.b16 %v3106
      %v3203 = vunpack.c.l.b16 %v3107
      %v3204 = vunpack.c.l.b16 %v3108
      %v3205 = vunpack.c.l.b16 %v3109
      %v3206 = vunpack.c.l.b16 %v3110
      %v3207 = vunpack.c.l.b16 %v3111
      %v3208 = vpack.c.b16 %v3201, %v3200
      %v3209 = vpack.c.b16 %v3203, %v3202
      %v3210 = vpack.c.b16 %v3205, %v3204
      %v3211 = vpack.c.b16 %v3207, %v3206
      %v3216 = vsel %vm1655, %v3164, 0
      %v3218 = vsel %vm1655, %v3167, 0
      %v3220 = vsel %vm1655, %v3170, 0
      %v3222 = vsel %vm1655, %v3173, 0
      %v3224 = vsel %vm1655, %v3176, 0
      %v3226 = vsel %vm1655, %v3179, 0
      %v3228 = vsel %vm1655, %v3182, 0
      %v3230 = vsel %vm1655, %v3185, 0
      %3232 = vmatprep.subr.bf16.mxu0 0
      %3233 = vmatpush1.bf16.msra.mxu0 %v3208
      %3234 = vmatprep.subr.bf16.mxu0 0
      %3235 = vmatpush1.bf16.msra.mxu0 %v3209
      %3236 = vmatprep.subr.bf16.mxu0 0
      %3237 = vmatpush1.bf16.msra.mxu0 %v3210
      %3238 = vmatprep.subr.bf16.mxu0 0
      %3239 = vmatpush1.bf16.msra.mxu0 %v3211
      %3240 = vmatprep.subr.bf16.mxu0 0
      %3241 = vmatpush1.bf16.msra.mxu0 0
      %3242 = vmatprep.subr.bf16.mxu0 0
      %3243 = vmatpush1.bf16.msra.mxu0 0
      %3244 = vmatprep.subr.bf16.mxu0 0
      %3245 = vmatpush1.bf16.msra.mxu0 0
      %3246 = vmatprep.subr.bf16.mxu0 0
      %3247 = vmatpush1.bf16.msra.mxu0 0
      %3248 = vmatprep.subr.bf16.mxu0 0
      %3249 = vmatpush1.bf16.msra.mxu0 0
      %3250 = vmatprep.subr.bf16.mxu0 0
      %3251 = vmatpush1.bf16.msra.mxu0 0
      %3252 = vmatprep.subr.bf16.mxu0 0
      %3253 = vmatpush1.bf16.msra.mxu0 0
      %3254 = vmatprep.subr.bf16.mxu0 0
      %3255 = vmatpush1.bf16.msra.mxu0 0
      %3256 = vmatprep.subr.bf16.mxu0 0
      %3257 = vmatpush1.bf16.msra.mxu0 0
      %3258 = vmatprep.subr.bf16.mxu0 0
      %3259 = vmatpush1.bf16.msra.mxu0 0
      %3260 = vmatprep.subr.bf16.mxu0 0
      %3261 = vmatpush1.bf16.msra.mxu0 0
      %3262 = vmatprep.subr.bf16.mxu0 0
      %3263 = vmatpush1.bf16.msra.mxu0 0
      %3264 = vmatprep.mubr.bf16.mxu0 0
      %3265 = vmatmul.mubr.bf16.gmra.mrb[0].mxu0 %v3216
      %v3266 = vpop.f32.mrb[0].mxu0
      %v3267 = vadd.f32 %v3190, %v3266
      %v3268 = vpop.f32.mrb[0].mxu0
      %v3269 = vpop.f32.mrb[0].mxu0
      %v3270 = vadd.f32 %v3190, %v3269
      %v3271 = vpop.f32.mrb[0].mxu0
      %3272 = vmatprep.mubr.bf16.mxu0 0
      %3273 = vmatmul.mubr.bf16.gmra.mrb[0].mxu0 %v3218
      %v3274 = vpop.f32.mrb[0].mxu0
      %v3275 = vadd.f32 %v3190, %v3274
      %v3276 = vpop.f32.mrb[0].mxu0
      %v3277 = vpop.f32.mrb[0].mxu0
      %v3278 = vadd.f32 %v3190, %v3277
      %v3279 = vpop.f32.mrb[0].mxu0
      %3280 = vmatprep.mubr.bf16.mxu0 0
      %3281 = vmatmul.mubr.bf16.gmra.mrb[0].mxu0 %v3220
      %v3282 = vpop.f32.mrb[0].mxu0
      %v3283 = vadd.f32 %v3190, %v3282
      %v3284 = vpop.f32.mrb[0].mxu0
      %v3285 = vpop.f32.mrb[0].mxu0
      %v3286 = vadd.f32 %v3190, %v3285
      %v3287 = vpop.f32.mrb[0].mxu0
      %3288 = vmatprep.mubr.bf16.mxu0 0
      %3289 = vmatmul.mubr.bf16.gmra.mrb[0].mxu0 %v3222
      %v3290 = vpop.f32.mrb[0].mxu0
      %v3291 = vadd.f32 %v3190, %v3290
      %v3292 = vpop.f32.mrb[0].mxu0
      %v3293 = vpop.f32.mrb[0].mxu0
      %v3294 = vadd.f32 %v3190, %v3293
      %v3295 = vpop.f32.mrb[0].mxu0
      %3296 = vmatprep.mubr.bf16.mxu0 0
      %3297 = vmatmul.mubr.bf16.gmra.mrb[0].mxu0 %v3224
      %v3298 = vpop.f32.mrb[0].mxu0
      %v3299 = vadd.f32 %v3190, %v3298
      %v3300 = vpop.f32.mrb[0].mxu0
      %v3301 = vpop.f32.mrb[0].mxu0
      %v3302 = vadd.f32 %v3190, %v3301
      %v3303 = vpop.f32.mrb[0].mxu0
      %3304 = vmatprep.mubr.bf16.mxu0 0
      %3305 = vmatmul.mubr.bf16.gmra.mrb[0].mxu0 %v3226
      %v3306 = vpop.f32.mrb[0].mxu0
      %v3307 = vadd.f32 %v3190, %v3306
      %v3308 = vpop.f32.mrb[0].mxu0
      %v3309 = vpop.f32.mrb[0].mxu0
      %v3310 = vadd.f32 %v3190, %v3309
      %v3311 = vpop.f32.mrb[0].mxu0
      %3312 = vmatprep.mubr.bf16.mxu0 0
      %3313 = vmatmul.mubr.bf16.gmra.mrb[0].mxu0 %v3228
      %v3314 = vpop.f32.mrb[0].mxu0
      %v3315 = vadd.f32 %v3190, %v3314
      %v3316 = vpop.f32.mrb[0].mxu0
      %v3317 = vpop.f32.mrb[0].mxu0
      %v3318 = vadd.f32 %v3190, %v3317
      %v3319 = vpop.f32.mrb[0].mxu0
      %3320 = vmatprep.mubr.bf16.mxu0 0
      %3321 = vmatmul.mubr.bf16.gmra.mrb[0].mxu0 %v3230
      %v3322 = vpop.f32.mrb[0].mxu0
      %v3323 = vadd.f32 %v3190, %v3322
      %v3324 = vpop.f32.mrb[0].mxu0
      %v3325 = vpop.f32.mrb[0].mxu0
      %v3326 = vadd.f32 %v3190, %v3325
      %v3327 = vpop.f32.mrb[0].mxu0
      %3328 = vdwg.mxu0
      %v3329 = vxor.u32 %v3267, 2147483648
      %v3330 = vxor.u32 %v3270, 2147483648
      %v3331 = vxor.u32 %v3275, 2147483648
      %v3332 = vxor.u32 %v3278, 2147483648
      %v3333 = vxor.u32 %v3283, 2147483648
      %v3334 = vxor.u32 %v3286, 2147483648
      %v3335 = vxor.u32 %v3291, 2147483648
      %v3336 = vxor.u32 %v3294, 2147483648
      %v3337 = vxor.u32 %v3299, 2147483648
      %v3338 = vxor.u32 %v3302, 2147483648
      %v3339 = vxor.u32 %v3307, 2147483648
      %v3340 = vxor.u32 %v3310, 2147483648
      %v3341 = vxor.u32 %v3315, 2147483648
      %v3342 = vxor.u32 %v3318, 2147483648
      %v3343 = vxor.u32 %v3323, 2147483648
      %v3344 = vxor.u32 %v3326, 2147483648
      %v3345 = vmul.f32 %v3329, 1.442695
      %v3346 = vpow.pop %v3345
      %v3347 = vmul.f32 %v3330, 1.442695
      %v3348 = vpow.pop %v3347
      %v3349 = vmul.f32 %v3331, 1.442695
      %v3350 = vpow.pop %v3349
      %v3351 = vmul.f32 %v3332, 1.442695
      %v3352 = vpow.pop %v3351
      %v3353 = vmul.f32 %v3333, 1.442695
      %v3354 = vpow.pop %v3353
      %v3355 = vmul.f32 %v3334, 1.442695
      %v3356 = vpow.pop %v3355
      %v3357 = vmul.f32 %v3335, 1.442695
      %v3358 = vpow.pop %v3357
      %v3359 = vmul.f32 %v3336, 1.442695
      %v3360 = vpow.pop %v3359
      %v3361 = vmul.f32 %v3337, 1.442695
      %v3362 = vpow.pop %v3361
      %v3363 = vmul.f32 %v3338, 1.442695
      %v3364 = vpow.pop %v3363
      %v3365 = vmul.f32 %v3339, 1.442695
      %v3366 = vpow.pop %v3365
      %v3367 = vmul.f32 %v3340, 1.442695
      %v3368 = vpow.pop %v3367
      %v3369 = vmul.f32 %v3341, 1.442695
      %v3370 = vpow.pop %v3369
      %v3371 = vmul.f32 %v3342, 1.442695
      %v3372 = vpow.pop %v3371
      %v3373 = vmul.f32 %v3343, 1.442695
      %v3374 = vpow.pop %v3373
      %v3375 = vmul.f32 %v3344, 1.442695
      %v3376 = vpow.pop %v3375
      %v3377 = vadd.f32 %v3346, 1.0
      %v3378 = vadd.f32 %v3348, 1.0
      %v3379 = vadd.f32 %v3350, 1.0
      %v3380 = vadd.f32 %v3352, 1.0
      %v3381 = vadd.f32 %v3354, 1.0
      %v3382 = vadd.f32 %v3356, 1.0
      %v3383 = vadd.f32 %v3358, 1.0
      %v3384 = vadd.f32 %v3360, 1.0
      %v3385 = vadd.f32 %v3362, 1.0
      %v3386 = vadd.f32 %v3364, 1.0
      %v3387 = vadd.f32 %v3366, 1.0
      %v3388 = vadd.f32 %v3368, 1.0
      %v3389 = vadd.f32 %v3370, 1.0
      %v3390 = vadd.f32 %v3372, 1.0
      %v3391 = vadd.f32 %v3374, 1.0
      %v3392 = vadd.f32 %v3376, 1.0
      %v3393 = vrcp.pop %v3377
      %v3394 = vmul.f32 1.0, %v3393
      %v3395 = vrcp.pop %v3378
      %v3396 = vmul.f32 1.0, %v3395
      %v3397 = vrcp.pop %v3379
      %v3398 = vmul.f32 1.0, %v3397
      %v3399 = vrcp.pop %v3380
      %v3400 = vmul.f32 1.0, %v3399
      %v3401 = vrcp.pop %v3381
      %v3402 = vmul.f32 1.0, %v3401
      %v3403 = vrcp.pop %v3382
      %v3404 = vmul.f32 1.0, %v3403
      %v3405 = vrcp.pop %v3383
      %v3406 = vmul.f32 1.0, %v3405
      %v3407 = vrcp.pop %v3384
      %v3408 = vmul.f32 1.0, %v3407
      %v3409 = vrcp.pop %v3385
      %v3410 = vmul.f32 1.0, %v3409
      %v3411 = vrcp.pop %v3386
      %v3412 = vmul.f32 1.0, %v3411
      %v3413 = vrcp.pop %v3387
      %v3414 = vmul.f32 1.0, %v3413
      %v3415 = vrcp.pop %v3388
      %v3416 = vmul.f32 1.0, %v3415
      %v3417 = vrcp.pop %v3389
      %v3418 = vmul.f32 1.0, %v3417
      %v3419 = vrcp.pop %v3390
      %v3420 = vmul.f32 1.0, %v3419
      %v3421 = vrcp.pop %v3391
      %v3422 = vmul.f32 1.0, %v3421
      %v3423 = vrcp.pop %v3392
      %v3424 = vmul.f32 1.0, %v3423
      %3441 = vrot.lane.b32.xlu0 %v3087, 32
      %v3442 = vpop.permute.xlu0 %3441
      %3443 = vrot.lane.b32.xlu0 %v3088, 32
      %v3444 = vpop.permute.xlu0 %3443
      %3445 = vrot.lane.b32.xlu0 %v3089, 32
      %v3446 = vpop.permute.xlu0 %3445
      %3447 = vrot.lane.b32.xlu0 %v3090, 32
      %v3448 = vpop.permute.xlu0 %3447
      %3449 = vrot.lane.b32.xlu0 %v3091, 32
      %v3450 = vpop.permute.xlu0 %3449
      %3451 = vrot.lane.b32.xlu0 %v3092, 32
      %v3452 = vpop.permute.xlu0 %3451
      %3453 = vrot.lane.b32.xlu0 %v3093, 32
      %v3454 = vpop.permute.xlu0 %3453
      %3455 = vrot.lane.b32.xlu0 %v3094, 32
      %v3456 = vpop.permute.xlu0 %3455
      %3457 = vrot.lane.b32.xlu0 %v3095, 32
      %v3458 = vpop.permute.xlu0 %3457
      %3459 = vrot.lane.b32.xlu0 %v3096, 32
      %v3460 = vpop.permute.xlu0 %3459
      %3461 = vrot.lane.b32.xlu0 %v3097, 32
      %v3462 = vpop.permute.xlu0 %3461
      %3463 = vrot.lane.b32.xlu0 %v3098, 32
      %v3464 = vpop.permute.xlu0 %3463
      %3465 = vrot.lane.b32.xlu0 %v3099, 32
      %v3466 = vpop.permute.xlu0 %3465
      %3467 = vrot.lane.b32.xlu0 %v3100, 32
      %v3468 = vpop.permute.xlu0 %3467
      %3469 = vrot.lane.b32.xlu0 %v3101, 32
      %v3470 = vpop.permute.xlu0 %3469
      %3471 = vrot.lane.b32.xlu0 %v3102, 32
      %v3472 = vpop.permute.xlu0 %3471
      %v3489 = vsub.f32 %v3267, %v3442
      %v3490 = vsub.f32 %v3270, %v3444
      %v3491 = vsub.f32 %v3275, %v3446
      %v3492 = vsub.f32 %v3278, %v3448
      %v3493 = vsub.f32 %v3283, %v3450
      %v3494 = vsub.f32 %v3286, %v3452
      %v3495 = vsub.f32 %v3291, %v3454
      %v3496 = vsub.f32 %v3294, %v3456
      %v3497 = vsub.f32 %v3299, %v3458
      %v3498 = vsub.f32 %v3302, %v3460
      %v3499 = vsub.f32 %v3307, %v3462
      %v3500 = vsub.f32 %v3310, %v3464
      %v3501 = vsub.f32 %v3315, %v3466
      %v3502 = vsub.f32 %v3318, %v3468
      %v3503 = vsub.f32 %v3323, %v3470
      %v3504 = vsub.f32 %v3326, %v3472
      %3521 = vrot.lane.b32.xlu0 %v3489, 96
      %v3522 = vpop.permute.xlu0 %3521
      %3523 = vrot.lane.b32.xlu0 %v3490, 96
      %v3524 = vpop.permute.xlu0 %3523
      %3525 = vrot.lane.b32.xlu0 %v3491, 96
      %v3526 = vpop.permute.xlu0 %3525
      %3527 = vrot.lane.b32.xlu0 %v3492, 96
      %v3528 = vpop.permute.xlu0 %3527
      %3529 = vrot.lane.b32.xlu0 %v3493, 96
      %v3530 = vpop.permute.xlu0 %3529
      %3531 = vrot.lane.b32.xlu0 %v3494, 96
      %v3532 = vpop.permute.xlu0 %3531
      %3533 = vrot.lane.b32.xlu0 %v3495, 96
      %v3534 = vpop.permute.xlu0 %3533
      %3535 = vrot.lane.b32.xlu0 %v3496, 96
      %v3536 = vpop.permute.xlu0 %3535
      %3537 = vrot.lane.b32.xlu0 %v3497, 96
      %v3538 = vpop.permute.xlu0 %3537
      %3539 = vrot.lane.b32.xlu0 %v3498, 96
      %v3540 = vpop.permute.xlu0 %3539
      %3541 = vrot.lane.b32.xlu0 %v3499, 96
      %v3542 = vpop.permute.xlu0 %3541
      %3543 = vrot.lane.b32.xlu0 %v3500, 96
      %v3544 = vpop.permute.xlu0 %3543
      %3545 = vrot.lane.b32.xlu0 %v3501, 96
      %v3546 = vpop.permute.xlu0 %3545
      %3547 = vrot.lane.b32.xlu0 %v3502, 96
      %v3548 = vpop.permute.xlu0 %3547
      %3549 = vrot.lane.b32.xlu0 %v3503, 96
      %v3550 = vpop.permute.xlu0 %3549
      %3551 = vrot.lane.b32.xlu0 %v3504, 96
      %v3552 = vpop.permute.xlu0 %3551
      %v3569 = vmul.f32 %v3394, %v3522
      %v3570 = vmul.f32 %v3396, %v3524
      %v3571 = vmul.f32 %v3398, %v3526
      %v3572 = vmul.f32 %v3400, %v3528
      %v3573 = vmul.f32 %v3402, %v3530
      %v3574 = vmul.f32 %v3404, %v3532
      %v3575 = vmul.f32 %v3406, %v3534
      %v3576 = vmul.f32 %v3408, %v3536
      %v3577 = vmul.f32 %v3410, %v3538
      %v3578 = vmul.f32 %v3412, %v3540
      %v3579 = vmul.f32 %v3414, %v3542
      %v3580 = vmul.f32 %v3416, %v3544
      %v3581 = vmul.f32 %v3418, %v3546
      %v3582 = vmul.f32 %v3420, %v3548
      %v3583 = vmul.f32 %v3422, %v3550
      %v3584 = vmul.f32 %v3424, %v3552
      %v3585 = vadd.f32 %v3087, %v3569
      %v3586 = vadd.f32 %v3088, %v3570
      %v3587 = vadd.f32 %v3089, %v3571
      %v3588 = vadd.f32 %v3090, %v3572
      %v3589 = vadd.f32 %v3091, %v3573
      %v3590 = vadd.f32 %v3092, %v3574
      %v3591 = vadd.f32 %v3093, %v3575
      %v3592 = vadd.f32 %v3094, %v3576
      %v3593 = vadd.f32 %v3095, %v3577
      %v3594 = vadd.f32 %v3096, %v3578
      %v3595 = vadd.f32 %v3097, %v3579
      %v3596 = vadd.f32 %v3098, %v3580
      %v3597 = vadd.f32 %v3099, %v3581
      %v3598 = vadd.f32 %v3100, %v3582
      %v3599 = vadd.f32 %v3101, %v3583
      %v3600 = vadd.f32 %v3102, %v3584
      %s3601 = scalar_lea.vmem %s5, 128
      %v3602 = vld [vmem:[%s3601] sm:$0xf]
      %v3603 = vld [vmem:[%s3601 + $0x4] sm:$0xf]
      %v3604 = vld [vmem:[%s3601 + $0x8] sm:$0xf]
      %v3605 = vld [vmem:[%s3601 + $0xc] sm:$0xf]
      %v3606 = vld [vmem:[%s3601 + $0x10] sm:$0xf]
      %v3607 = vld [vmem:[%s3601 + $0x14] sm:$0xf]
      %v3608 = vld [vmem:[%s3601 + $0x18] sm:$0xf]
      %v3609 = vld [vmem:[%s3601 + $0x1c] sm:$0xf]
      %s3610 = scalar_lea.vmem %s6, 4
      %v3611 = vld [vmem:[%s3610] sm:$0x1]
      %v3612 = vpack.c.bf16 %v3586, %v3585
      %v3613 = vpack.c.bf16 %v3588, %v3587
      %v3614 = vpack.c.bf16 %v3590, %v3589
      %v3615 = vpack.c.bf16 %v3592, %v3591
      %v3616 = vpack.c.bf16 %v3594, %v3593
      %v3617 = vpack.c.bf16 %v3596, %v3595
      %v3618 = vpack.c.bf16 %v3598, %v3597
      %v3619 = vpack.c.bf16 %v3600, %v3599
      %v3620 = vmul.bf16 %v3619, %v1142
      %v3621 = vmul.bf16 %v3612, %v1143
      %v3622 = vmul.bf16 %v3613, %v1144
      %v3623 = vmul.bf16 %v3614, %v1145
      %v3624 = vmul.bf16 %v3615, %v1146
      %v3625 = vmul.bf16 %v3616, %v1147
      %v3626 = vmul.bf16 %v3617, %v1148
      %v3627 = vmul.bf16 %v3618, %v1149
      %3636 = vrot.lane.b32.xlu0 %v3620, 32
      %v3637 = vpop.permute.xlu0 %3636
      %3638 = vrot.lane.b32.xlu0 %v3621, 32
      %v3639 = vpop.permute.xlu0 %3638
      %3640 = vrot.lane.b32.xlu0 %v3622, 32
      %v3641 = vpop.permute.xlu0 %3640
      %3642 = vrot.lane.b32.xlu0 %v3623, 32
      %v3643 = vpop.permute.xlu0 %3642
      %3644 = vrot.lane.b32.xlu0 %v3624, 32
      %v3645 = vpop.permute.xlu0 %3644
      %3646 = vrot.lane.b32.xlu0 %v3625, 32
      %v3647 = vpop.permute.xlu0 %3646
      %3648 = vrot.lane.b32.xlu0 %v3626, 32
      %v3649 = vpop.permute.xlu0 %3648
      %3650 = vrot.lane.b32.xlu0 %v3627, 32
      %v3651 = vpop.permute.xlu0 %3650
      %v3654 = vsel %vm1389, %v3612, %v3637
      %v3657 = vsel %vm1389, %v3613, %v3639
      %v3660 = vsel %vm1389, %v3614, %v3641
      %v3663 = vsel %vm1389, %v3615, %v3643
      %v3666 = vsel %vm1389, %v3616, %v3645
      %v3669 = vsel %vm1389, %v3617, %v3647
      %v3672 = vsel %vm1389, %v3618, %v3649
      %v3675 = vsel %vm1389, %v3619, %v3651
      %v3677 = vlaneseq
      %v3678 = vshrl.u32 %v3677, 7
      %v3679 = vsub.s32 0, %v3678
      %v3680 = vrot.slane %v3611, %v3679
      %v3690 = vunpack.c.l.b16 %v3602
      %v3691 = vunpack.c.l.b16 %v3603
      %v3692 = vunpack.c.l.b16 %v3604
      %v3693 = vunpack.c.l.b16 %v3605
      %v3694 = vunpack.c.l.b16 %v3606
      %v3695 = vunpack.c.l.b16 %v3607
      %v3696 = vunpack.c.l.b16 %v3608
      %v3697 = vunpack.c.l.b16 %v3609
      %v3698 = vpack.c.b16 %v3691, %v3690
      %v3699 = vpack.c.b16 %v3693, %v3692
      %v3700 = vpack.c.b16 %v3695, %v3694
      %v3701 = vpack.c.b16 %v3697, %v3696
      %v3706 = vsel %vm1655, %v3654, 0
      %v3708 = vsel %vm1655, %v3657, 0
      %v3710 = vsel %vm1655, %v3660, 0
      %v3712 = vsel %vm1655, %v3663, 0
      %v3714 = vsel %vm1655, %v3666, 0
      %v3716 = vsel %vm1655, %v3669, 0
      %v3718 = vsel %vm1655, %v3672, 0
      %v3720 = vsel %vm1655, %v3675, 0
      %3722 = vmatprep.subr.bf16.mxu0 0
      %3723 = vmatpush1.bf16.msra.mxu0 %v3698
      %3724 = vmatprep.subr.bf16.mxu0 0
      %3725 = vmatpush1.bf16.msra.mxu0 %v3699
      %3726 = vmatprep.subr.bf16.mxu0 0
      %3727 = vmatpush1.bf16.msra.mxu0 %v3700
      %3728 = vmatprep.subr.bf16.mxu0 0
      %3729 = vmatpush1.bf16.msra.mxu0 %v3701
      %3730 = vmatprep.subr.bf16.mxu0 0
      %3731 = vmatpush1.bf16.msra.mxu0 0
      %3732 = vmatprep.subr.bf16.mxu0 0
      %3733 = vmatpush1.bf16.msra.mxu0 0
      %3734 = vmatprep.subr.bf16.mxu0 0
      %3735 = vmatpush1.bf16.msra.mxu0 0
      %3736 = vmatprep.subr.bf16.mxu0 0
      %3737 = vmatpush1.bf16.msra.mxu0 0
      %3738 = vmatprep.subr.bf16.mxu0 0
      %3739 = vmatpush1.bf16.msra.mxu0 0
      %3740 = vmatprep.subr.bf16.mxu0 0
      %3741 = vmatpush1.bf16.msra.mxu0 0
      %3742 = vmatprep.subr.bf16.mxu0 0
      %3743 = vmatpush1.bf16.msra.mxu0 0
      %3744 = vmatprep.subr.bf16.mxu0 0
      %3745 = vmatpush1.bf16.msra.mxu0 0
      %3746 = vmatprep.subr.bf16.mxu0 0
      %3747 = vmatpush1.bf16.msra.mxu0 0
      %3748 = vmatprep.subr.bf16.mxu0 0
      %3749 = vmatpush1.bf16.msra.mxu0 0
      %3750 = vmatprep.subr.bf16.mxu0 0
      %3751 = vmatpush1.bf16.msra.mxu0 0
      %3752 = vmatprep.subr.bf16.mxu0 0
      %3753 = vmatpush1.bf16.msra.mxu0 0
      %3754 = vmatprep.mubr.bf16.mxu0 0
      %3755 = vmatmul.mubr.bf16.gmra.mrb[0].mxu0 %v3706
      %v3756 = vpop.f32.mrb[0].mxu0
      %v3757 = vadd.f32 %v3680, %v3756
      %v3758 = vpop.f32.mrb[0].mxu0
      %v3759 = vpop.f32.mrb[0].mxu0
      %v3760 = vadd.f32 %v3680, %v3759
      %v3761 = vpop.f32.mrb[0].mxu0
      %3762 = vmatprep.mubr.bf16.mxu0 0
      %3763 = vmatmul.mubr.bf16.gmra.mrb[0].mxu0 %v3708
      %v3764 = vpop.f32.mrb[0].mxu0
      %v3765 = vadd.f32 %v3680, %v3764
      %v3766 = vpop.f32.mrb[0].mxu0
      %v3767 = vpop.f32.mrb[0].mxu0
      %v3768 = vadd.f32 %v3680, %v3767
      %v3769 = vpop.f32.mrb[0].mxu0
      %3770 = vmatprep.mubr.bf16.mxu0 0
      %3771 = vmatmul.mubr.bf16.gmra.mrb[0].mxu0 %v3710
      %v3772 = vpop.f32.mrb[0].mxu0
      %v3773 = vadd.f32 %v3680, %v3772
      %v3774 = vpop.f32.mrb[0].mxu0
      %v3775 = vpop.f32.mrb[0].mxu0
      %v3776 = vadd.f32 %v3680, %v3775
      %v3777 = vpop.f32.mrb[0].mxu0
      %3778 = vmatprep.mubr.bf16.mxu0 0
      %3779 = vmatmul.mubr.bf16.gmra.mrb[0].mxu0 %v3712
      %v3780 = vpop.f32.mrb[0].mxu0
      %v3781 = vadd.f32 %v3680, %v3780
      %v3782 = vpop.f32.mrb[0].mxu0
      %v3783 = vpop.f32.mrb[0].mxu0
      %v3784 = vadd.f32 %v3680, %v3783
      %v3785 = vpop.f32.mrb[0].mxu0
      %3786 = vmatprep.mubr.bf16.mxu0 0
      %3787 = vmatmul.mubr.bf16.gmra.mrb[0].mxu0 %v3714
      %v3788 = vpop.f32.mrb[0].mxu0
      %v3789 = vadd.f32 %v3680, %v3788
      %v3790 = vpop.f32.mrb[0].mxu0
      %v3791 = vpop.f32.mrb[0].mxu0
      %v3792 = vadd.f32 %v3680, %v3791
      %v3793 = vpop.f32.mrb[0].mxu0
      %3794 = vmatprep.mubr.bf16.mxu0 0
      %3795 = vmatmul.mubr.bf16.gmra.mrb[0].mxu0 %v3716
      %v3796 = vpop.f32.mrb[0].mxu0
      %v3797 = vadd.f32 %v3680, %v3796
      %v3798 = vpop.f32.mrb[0].mxu0
      %v3799 = vpop.f32.mrb[0].mxu0
      %v3800 = vadd.f32 %v3680, %v3799
      %v3801 = vpop.f32.mrb[0].mxu0
      %3802 = vmatprep.mubr.bf16.mxu0 0
      %3803 = vmatmul.mubr.bf16.gmra.mrb[0].mxu0 %v3718
      %v3804 = vpop.f32.mrb[0].mxu0
      %v3805 = vadd.f32 %v3680, %v3804
      %v3806 = vpop.f32.mrb[0].mxu0
      %v3807 = vpop.f32.mrb[0].mxu0
      %v3808 = vadd.f32 %v3680, %v3807
      %v3809 = vpop.f32.mrb[0].mxu0
      %3810 = vmatprep.mubr.bf16.mxu0 0
      %3811 = vmatmul.mubr.bf16.gmra.mrb[0].mxu0 %v3720
      %v3812 = vpop.f32.mrb[0].mxu0
      %v3813 = vadd.f32 %v3680, %v3812
      %v3814 = vpop.f32.mrb[0].mxu0
      %v3815 = vpop.f32.mrb[0].mxu0
      %v3816 = vadd.f32 %v3680, %v3815
      %v3817 = vpop.f32.mrb[0].mxu0
      %3818 = vdwg.mxu0
      %v3819 = vxor.u32 %v3757, 2147483648
      %v3820 = vxor.u32 %v3760, 2147483648
      %v3821 = vxor.u32 %v3765, 2147483648
      %v3822 = vxor.u32 %v3768, 2147483648
      %v3823 = vxor.u32 %v3773, 2147483648
      %v3824 = vxor.u32 %v3776, 2147483648
      %v3825 = vxor.u32 %v3781, 2147483648
      %v3826 = vxor.u32 %v3784, 2147483648
      %v3827 = vxor.u32 %v3789, 2147483648
      %v3828 = vxor.u32 %v3792, 2147483648
      %v3829 = vxor.u32 %v3797, 2147483648
      %v3830 = vxor.u32 %v3800, 2147483648
      %v3831 = vxor.u32 %v3805, 2147483648
      %v3832 = vxor.u32 %v3808, 2147483648
      %v3833 = vxor.u32 %v3813, 2147483648
      %v3834 = vxor.u32 %v3816, 2147483648
      %v3835 = vmul.f32 %v3819, 1.442695
      %v3836 = vpow.pop %v3835
      %v3837 = vmul.f32 %v3820, 1.442695
      %v3838 = vpow.pop %v3837
      %v3839 = vmul.f32 %v3821, 1.442695
      %v3840 = vpow.pop %v3839
      %v3841 = vmul.f32 %v3822, 1.442695
      %v3842 = vpow.pop %v3841
      %v3843 = vmul.f32 %v3823, 1.442695
      %v3844 = vpow.pop %v3843
      %v3845 = vmul.f32 %v3824, 1.442695
      %v3846 = vpow.pop %v3845
      %v3847 = vmul.f32 %v3825, 1.442695
      %v3848 = vpow.pop %v3847
      %v3849 = vmul.f32 %v3826, 1.442695
      %v3850 = vpow.pop %v3849
      %v3851 = vmul.f32 %v3827, 1.442695
      %v3852 = vpow.pop %v3851
      %v3853 = vmul.f32 %v3828, 1.442695
      %v3854 = vpow.pop %v3853
      %v3855 = vmul.f32 %v3829, 1.442695
      %v3856 = vpow.pop %v3855
      %v3857 = vmul.f32 %v3830, 1.442695
      %v3858 = vpow.pop %v3857
      %v3859 = vmul.f32 %v3831, 1.442695
      %v3860 = vpow.pop %v3859
      %v3861 = vmul.f32 %v3832, 1.442695
      %v3862 = vpow.pop %v3861
      %v3863 = vmul.f32 %v3833, 1.442695
      %v3864 = vpow.pop %v3863
      %v3865 = vmul.f32 %v3834, 1.442695
      %v3866 = vpow.pop %v3865
      %v3867 = vadd.f32 %v3836, 1.0
      %v3868 = vadd.f32 %v3838, 1.0
      %v3869 = vadd.f32 %v3840, 1.0
      %v3870 = vadd.f32 %v3842, 1.0
      %v3871 = vadd.f32 %v3844, 1.0
      %v3872 = vadd.f32 %v3846, 1.0
      %v3873 = vadd.f32 %v3848, 1.0
      %v3874 = vadd.f32 %v3850, 1.0
      %v3875 = vadd.f32 %v3852, 1.0
      %v3876 = vadd.f32 %v3854, 1.0
      %v3877 = vadd.f32 %v3856, 1.0
      %v3878 = vadd.f32 %v3858, 1.0
      %v3879 = vadd.f32 %v3860, 1.0
      %v3880 = vadd.f32 %v3862, 1.0
      %v3881 = vadd.f32 %v3864, 1.0
      %v3882 = vadd.f32 %v3866, 1.0
      %v3883 = vrcp.pop %v3867
      %v3884 = vmul.f32 1.0, %v3883
      %v3885 = vrcp.pop %v3868
      %v3886 = vmul.f32 1.0, %v3885
      %v3887 = vrcp.pop %v3869
      %v3888 = vmul.f32 1.0, %v3887
      %v3889 = vrcp.pop %v3870
      %v3890 = vmul.f32 1.0, %v3889
      %v3891 = vrcp.pop %v3871
      %v3892 = vmul.f32 1.0, %v3891
      %v3893 = vrcp.pop %v3872
      %v3894 = vmul.f32 1.0, %v3893
      %v3895 = vrcp.pop %v3873
      %v3896 = vmul.f32 1.0, %v3895
      %v3897 = vrcp.pop %v3874
      %v3898 = vmul.f32 1.0, %v3897
      %v3899 = vrcp.pop %v3875
      %v3900 = vmul.f32 1.0, %v3899
      %v3901 = vrcp.pop %v3876
      %v3902 = vmul.f32 1.0, %v3901
      %v3903 = vrcp.pop %v3877
      %v3904 = vmul.f32 1.0, %v3903
      %v3905 = vrcp.pop %v3878
      %v3906 = vmul.f32 1.0, %v3905
      %v3907 = vrcp.pop %v3879
      %v3908 = vmul.f32 1.0, %v3907
      %v3909 = vrcp.pop %v3880
      %v3910 = vmul.f32 1.0, %v3909
      %v3911 = vrcp.pop %v3881
      %v3912 = vmul.f32 1.0, %v3911
      %v3913 = vrcp.pop %v3882
      %v3914 = vmul.f32 1.0, %v3913
      %3931 = vrot.lane.b32.xlu0 %v3585, 32
      %v3932 = vpop.permute.xlu0 %3931
      %3933 = vrot.lane.b32.xlu0 %v3586, 32
      %v3934 = vpop.permute.xlu0 %3933
      %3935 = vrot.lane.b32.xlu0 %v3587, 32
      %v3936 = vpop.permute.xlu0 %3935
      %3937 = vrot.lane.b32.xlu0 %v3588, 32
      %v3938 = vpop.permute.xlu0 %3937
      %3939 = vrot.lane.b32.xlu0 %v3589, 32
      %v3940 = vpop.permute.xlu0 %3939
      %3941 = vrot.lane.b32.xlu0 %v3590, 32
      %v3942 = vpop.permute.xlu0 %3941
      %3943 = vrot.lane.b32.xlu0 %v3591, 32
      %v3944 = vpop.permute.xlu0 %3943
      %3945 = vrot.lane.b32.xlu0 %v3592, 32
      %v3946 = vpop.permute.xlu0 %3945
      %3947 = vrot.lane.b32.xlu0 %v3593, 32
      %v3948 = vpop.permute.xlu0 %3947
      %3949 = vrot.lane.b32.xlu0 %v3594, 32
      %v3950 = vpop.permute.xlu0 %3949
      %3951 = vrot.lane.b32.xlu0 %v3595, 32
      %v3952 = vpop.permute.xlu0 %3951
      %3953 = vrot.lane.b32.xlu0 %v3596, 32
      %v3954 = vpop.permute.xlu0 %3953
      %3955 = vrot.lane.b32.xlu0 %v3597, 32
      %v3956 = vpop.permute.xlu0 %3955
      %3957 = vrot.lane.b32.xlu0 %v3598, 32
      %v3958 = vpop.permute.xlu0 %3957
      %3959 = vrot.lane.b32.xlu0 %v3599, 32
      %v3960 = vpop.permute.xlu0 %3959
      %3961 = vrot.lane.b32.xlu0 %v3600, 32
      %v3962 = vpop.permute.xlu0 %3961
      %v3979 = vsub.f32 %v3757, %v3932
      %v3980 = vsub.f32 %v3760, %v3934
      %v3981 = vsub.f32 %v3765, %v3936
      %v3982 = vsub.f32 %v3768, %v3938
      %v3983 = vsub.f32 %v3773, %v3940
      %v3984 = vsub.f32 %v3776, %v3942
      %v3985 = vsub.f32 %v3781, %v3944
      %v3986 = vsub.f32 %v3784, %v3946
      %v3987 = vsub.f32 %v3789, %v3948
      %v3988 = vsub.f32 %v3792, %v3950
      %v3989 = vsub.f32 %v3797, %v3952
      %v3990 = vsub.f32 %v3800, %v3954
      %v3991 = vsub.f32 %v3805, %v3956
      %v3992 = vsub.f32 %v3808, %v3958
      %v3993 = vsub.f32 %v3813, %v3960
      %v3994 = vsub.f32 %v3816, %v3962
      %4011 = vrot.lane.b32.xlu0 %v3979, 96
      %v4012 = vpop.permute.xlu0 %4011
      %4013 = vrot.lane.b32.xlu0 %v3980, 96
      %v4014 = vpop.permute.xlu0 %4013
      %4015 = vrot.lane.b32.xlu0 %v3981, 96
      %v4016 = vpop.permute.xlu0 %4015
      %4017 = vrot.lane.b32.xlu0 %v3982, 96
      %v4018 = vpop.permute.xlu0 %4017
      %4019 = vrot.lane.b32.xlu0 %v3983, 96
      %v4020 = vpop.permute.xlu0 %4019
      %4021 = vrot.lane.b32.xlu0 %v3984, 96
      %v4022 = vpop.permute.xlu0 %4021
      %4023 = vrot.lane.b32.xlu0 %v3985, 96
      %v4024 = vpop.permute.xlu0 %4023
      %4025 = vrot.lane.b32.xlu0 %v3986, 96
      %v4026 = vpop.permute.xlu0 %4025
      %4027 = vrot.lane.b32.xlu0 %v3987, 96
      %v4028 = vpop.permute.xlu0 %4027
      %4029 = vrot.lane.b32.xlu0 %v3988, 96
      %v4030 = vpop.permute.xlu0 %4029
      %4031 = vrot.lane.b32.xlu0 %v3989, 96
      %v4032 = vpop.permute.xlu0 %4031
      %4033 = vrot.lane.b32.xlu0 %v3990, 96
      %v4034 = vpop.permute.xlu0 %4033
      %4035 = vrot.lane.b32.xlu0 %v3991, 96
      %v4036 = vpop.permute.xlu0 %4035
      %4037 = vrot.lane.b32.xlu0 %v3992, 96
      %v4038 = vpop.permute.xlu0 %4037
      %4039 = vrot.lane.b32.xlu0 %v3993, 96
      %v4040 = vpop.permute.xlu0 %4039
      %4041 = vrot.lane.b32.xlu0 %v3994, 96
      %v4042 = vpop.permute.xlu0 %4041
      %v4059 = vmul.f32 %v3884, %v4012
      %v4060 = vmul.f32 %v3886, %v4014
      %v4061 = vmul.f32 %v3888, %v4016
      %v4062 = vmul.f32 %v3890, %v4018
      %v4063 = vmul.f32 %v3892, %v4020
      %v4064 = vmul.f32 %v3894, %v4022
      %v4065 = vmul.f32 %v3896, %v4024
      %v4066 = vmul.f32 %v3898, %v4026
      %v4067 = vmul.f32 %v3900, %v4028
      %v4068 = vmul.f32 %v3902, %v4030
      %v4069 = vmul.f32 %v3904, %v4032
      %v4070 = vmul.f32 %v3906, %v4034
      %v4071 = vmul.f32 %v3908, %v4036
      %v4072 = vmul.f32 %v3910, %v4038
      %v4073 = vmul.f32 %v3912, %v4040
      %v4074 = vmul.f32 %v3914, %v4042
      %v4075 = vadd.f32 %v3585, %v4059
      %v4076 = vadd.f32 %v3586, %v4060
      %v4077 = vadd.f32 %v3587, %v4061
      %v4078 = vadd.f32 %v3588, %v4062
      %v4079 = vadd.f32 %v3589, %v4063
      %v4080 = vadd.f32 %v3590, %v4064
      %v4081 = vadd.f32 %v3591, %v4065
      %v4082 = vadd.f32 %v3592, %v4066
      %v4083 = vadd.f32 %v3593, %v4067
      %v4084 = vadd.f32 %v3594, %v4068
      %v4085 = vadd.f32 %v3595, %v4069
      %v4086 = vadd.f32 %v3596, %v4070
      %v4087 = vadd.f32 %v3597, %v4071
      %v4088 = vadd.f32 %v3598, %v4072
      %v4089 = vadd.f32 %v3599, %v4073
      %v4090 = vadd.f32 %v3600, %v4074
      %s4091 = scalar_lea.vmem %s5, 160
      %v4092 = vld [vmem:[%s4091] sm:$0xf]
      %v4093 = vld [vmem:[%s4091 + $0x4] sm:$0xf]
      %v4094 = vld [vmem:[%s4091 + $0x8] sm:$0xf]
      %v4095 = vld [vmem:[%s4091 + $0xc] sm:$0xf]
      %s4096 = scalar_lea.vmem %s6, 5
      %v4097 = vld [vmem:[%s4096] sm:$0x1]
      %v4098 = vpack.c.bf16 %v4076, %v4075
      %v4099 = vpack.c.bf16 %v4078, %v4077
      %v4100 = vpack.c.bf16 %v4080, %v4079
      %v4101 = vpack.c.bf16 %v4082, %v4081
      %v4102 = vpack.c.bf16 %v4084, %v4083
      %v4103 = vpack.c.bf16 %v4086, %v4085
      %v4104 = vpack.c.bf16 %v4088, %v4087
      %v4105 = vpack.c.bf16 %v4090, %v4089
      %v4107 = vlaneseq
      %v4108 = vshrl.u32 %v4107, 7
      %v4109 = vsub.s32 0, %v4108
      %v4110 = vrot.slane %v4097, %v4109
      %v4116 = vunpack.c.l.b16 %v4092
      %v4117 = vunpack.c.l.b16 %v4093
      %v4118 = vunpack.c.l.b16 %v4094
      %v4119 = vunpack.c.l.b16 %v4095
      %v4120 = vpack.c.b16 %v4117, %v4116
      %v4121 = vpack.c.b16 %v4119, %v4118
      %v4125 = vsel %vm1389, %v4098, 0
      %v4128 = vsel %vm1389, %v4099, 0
      %v4131 = vsel %vm1389, %v4100, 0
      %v4134 = vsel %vm1389, %v4101, 0
      %v4137 = vsel %vm1389, %v4102, 0
      %v4140 = vsel %vm1389, %v4103, 0
      %v4143 = vsel %vm1389, %v4104, 0
      %v4146 = vsel %vm1389, %v4105, 0
      %4148 = vmatprep.subr.bf16.mxu0 0
      %4149 = vmatpush1.bf16.msra.mxu0 %v4120
      %4150 = vmatprep.subr.bf16.mxu0 0
      %4151 = vmatpush1.bf16.msra.mxu0 %v4121
      %4152 = vmatprep.subr.bf16.mxu0 0
      %4153 = vmatpush1.bf16.msra.mxu0 0
      %4154 = vmatprep.subr.bf16.mxu0 0
      %4155 = vmatpush1.bf16.msra.mxu0 0
      %4156 = vmatprep.subr.bf16.mxu0 0
      %4157 = vmatpush1.bf16.msra.mxu0 0
      %4158 = vmatprep.subr.bf16.mxu0 0
      %4159 = vmatpush1.bf16.msra.mxu0 0
      %4160 = vmatprep.subr.bf16.mxu0 0
      %4161 = vmatpush1.bf16.msra.mxu0 0
      %4162 = vmatprep.subr.bf16.mxu0 0
      %4163 = vmatpush1.bf16.msra.mxu0 0
      %4164 = vmatprep.subr.bf16.mxu0 0
      %4165 = vmatpush1.bf16.msra.mxu0 0
      %4166 = vmatprep.subr.bf16.mxu0 0
      %4167 = vmatpush1.bf16.msra.mxu0 0
      %4168 = vmatprep.subr.bf16.mxu0 0
      %4169 = vmatpush1.bf16.msra.mxu0 0
      %4170 = vmatprep.subr.bf16.mxu0 0
      %4171 = vmatpush1.bf16.msra.mxu0 0
      %4172 = vmatprep.subr.bf16.mxu0 0
      %4173 = vmatpush1.bf16.msra.mxu0 0
      %4174 = vmatprep.subr.bf16.mxu0 0
      %4175 = vmatpush1.bf16.msra.mxu0 0
      %4176 = vmatprep.subr.bf16.mxu0 0
      %4177 = vmatpush1.bf16.msra.mxu0 0
      %4178 = vmatprep.subr.bf16.mxu0 0
      %4179 = vmatpush1.bf16.msra.mxu0 0
      %4180 = vmatprep.mubr.bf16.mxu0 0
      %4181 = vmatmul.mubr.bf16.gmra.mrb[0].mxu0 %v4125
      %v4182 = vpop.f32.mrb[0].mxu0
      %v4183 = vadd.f32 %v4110, %v4182
      %v4184 = vpop.f32.mrb[0].mxu0
      %v4185 = vpop.f32.mrb[0].mxu0
      %v4186 = vadd.f32 %v4110, %v4185
      %v4187 = vpop.f32.mrb[0].mxu0
      %4188 = vmatprep.mubr.bf16.mxu0 0
      %4189 = vmatmul.mubr.bf16.gmra.mrb[0].mxu0 %v4128
      %v4190 = vpop.f32.mrb[0].mxu0
      %v4191 = vadd.f32 %v4110, %v4190
      %v4192 = vpop.f32.mrb[0].mxu0
      %v4193 = vpop.f32.mrb[0].mxu0
      %v4194 = vadd.f32 %v4110, %v4193
      %v4195 = vpop.f32.mrb[0].mxu0
      %4196 = vmatprep.mubr.bf16.mxu0 0
      %4197 = vmatmul.mubr.bf16.gmra.mrb[0].mxu0 %v4131
      %v4198 = vpop.f32.mrb[0].mxu0
      %v4199 = vadd.f32 %v4110, %v4198
      %v4200 = vpop.f32.mrb[0].mxu0
      %v4201 = vpop.f32.mrb[0].mxu0
      %v4202 = vadd.f32 %v4110, %v4201
      %v4203 = vpop.f32.mrb[0].mxu0
      %4204 = vmatprep.mubr.bf16.mxu0 0
      %4205 = vmatmul.mubr.bf16.gmra.mrb[0].mxu0 %v4134
      %v4206 = vpop.f32.mrb[0].mxu0
      %v4207 = vadd.f32 %v4110, %v4206
      %v4208 = vpop.f32.mrb[0].mxu0
      %v4209 = vpop.f32.mrb[0].mxu0
      %v4210 = vadd.f32 %v4110, %v4209
      %v4211 = vpop.f32.mrb[0].mxu0
      %4212 = vmatprep.mubr.bf16.mxu0 0
      %4213 = vmatmul.mubr.bf16.gmra.mrb[0].mxu0 %v4137
      %v4214 = vpop.f32.mrb[0].mxu0
      %v4215 = vadd.f32 %v4110, %v4214
      %v4216 = vpop.f32.mrb[0].mxu0
      %v4217 = vpop.f32.mrb[0].mxu0
      %v4218 = vadd.f32 %v4110, %v4217
      %v4219 = vpop.f32.mrb[0].mxu0
      %4220 = vmatprep.mubr.bf16.mxu0 0
      %4221 = vmatmul.mubr.bf16.gmra.mrb[0].mxu0 %v4140
      %v4222 = vpop.f32.mrb[0].mxu0
      %v4223 = vadd.f32 %v4110, %v4222
      %v4224 = vpop.f32.mrb[0].mxu0
      %v4225 = vpop.f32.mrb[0].mxu0
      %v4226 = vadd.f32 %v4110, %v4225
      %v4227 = vpop.f32.mrb[0].mxu0
      %4228 = vmatprep.mubr.bf16.mxu0 0
      %4229 = vmatmul.mubr.bf16.gmra.mrb[0].mxu0 %v4143
      %v4230 = vpop.f32.mrb[0].mxu0
      %v4231 = vadd.f32 %v4110, %v4230
      %v4232 = vpop.f32.mrb[0].mxu0
      %v4233 = vpop.f32.mrb[0].mxu0
      %v4234 = vadd.f32 %v4110, %v4233
      %v4235 = vpop.f32.mrb[0].mxu0
      %4236 = vmatprep.mubr.bf16.mxu0 0
      %4237 = vmatmul.mubr.bf16.gmra.mrb[0].mxu0 %v4146
      %v4238 = vpop.f32.mrb[0].mxu0
      %v4239 = vadd.f32 %v4110, %v4238
      %v4240 = vpop.f32.mrb[0].mxu0
      %v4241 = vpop.f32.mrb[0].mxu0
      %v4242 = vadd.f32 %v4110, %v4241
      %v4243 = vpop.f32.mrb[0].mxu0
      %4244 = vdwg.mxu0
      %v4245 = vxor.u32 %v4183, 2147483648
      %v4246 = vxor.u32 %v4186, 2147483648
      %v4247 = vxor.u32 %v4191, 2147483648
      %v4248 = vxor.u32 %v4194, 2147483648
      %v4249 = vxor.u32 %v4199, 2147483648
      %v4250 = vxor.u32 %v4202, 2147483648
      %v4251 = vxor.u32 %v4207, 2147483648
      %v4252 = vxor.u32 %v4210, 2147483648
      %v4253 = vxor.u32 %v4215, 2147483648
      %v4254 = vxor.u32 %v4218, 2147483648
      %v4255 = vxor.u32 %v4223, 2147483648
      %v4256 = vxor.u32 %v4226, 2147483648
      %v4257 = vxor.u32 %v4231, 2147483648
      %v4258 = vxor.u32 %v4234, 2147483648
      %v4259 = vxor.u32 %v4239, 2147483648
      %v4260 = vxor.u32 %v4242, 2147483648
      %v4261 = vmul.f32 %v4245, 1.442695
      %v4262 = vpow.pop %v4261
      %v4263 = vmul.f32 %v4246, 1.442695
      %v4264 = vpow.pop %v4263
      %v4265 = vmul.f32 %v4247, 1.442695
      %v4266 = vpow.pop %v4265
      %v4267 = vmul.f32 %v4248, 1.442695
      %v4268 = vpow.pop %v4267
      %v4269 = vmul.f32 %v4249, 1.442695
      %v4270 = vpow.pop %v4269
      %v4271 = vmul.f32 %v4250, 1.442695
      %v4272 = vpow.pop %v4271
      %v4273 = vmul.f32 %v4251, 1.442695
      %v4274 = vpow.pop %v4273
      %v4275 = vmul.f32 %v4252, 1.442695
      %v4276 = vpow.pop %v4275
      %v4277 = vmul.f32 %v4253, 1.442695
      %v4278 = vpow.pop %v4277
      %v4279 = vmul.f32 %v4254, 1.442695
      %v4280 = vpow.pop %v4279
      %v4281 = vmul.f32 %v4255, 1.442695
      %v4282 = vpow.pop %v4281
      %v4283 = vmul.f32 %v4256, 1.442695
      %v4284 = vpow.pop %v4283
      %v4285 = vmul.f32 %v4257, 1.442695
      %v4286 = vpow.pop %v4285
      %v4287 = vmul.f32 %v4258, 1.442695
      %v4288 = vpow.pop %v4287
      %v4289 = vmul.f32 %v4259, 1.442695
      %v4290 = vpow.pop %v4289
      %v4291 = vmul.f32 %v4260, 1.442695
      %v4292 = vpow.pop %v4291
      %v4293 = vadd.f32 %v4262, 1.0
      %v4294 = vadd.f32 %v4264, 1.0
      %v4295 = vadd.f32 %v4266, 1.0
      %v4296 = vadd.f32 %v4268, 1.0
      %v4297 = vadd.f32 %v4270, 1.0
      %v4298 = vadd.f32 %v4272, 1.0
      %v4299 = vadd.f32 %v4274, 1.0
      %v4300 = vadd.f32 %v4276, 1.0
      %v4301 = vadd.f32 %v4278, 1.0
      %v4302 = vadd.f32 %v4280, 1.0
      %v4303 = vadd.f32 %v4282, 1.0
      %v4304 = vadd.f32 %v4284, 1.0
      %v4305 = vadd.f32 %v4286, 1.0
      %v4306 = vadd.f32 %v4288, 1.0
      %v4307 = vadd.f32 %v4290, 1.0
      %v4308 = vadd.f32 %v4292, 1.0
      %v4309 = vrcp.pop %v4293
      %v4310 = vmul.f32 1.0, %v4309
      %v4311 = vrcp.pop %v4294
      %v4312 = vmul.f32 1.0, %v4311
      %v4313 = vrcp.pop %v4295
      %v4314 = vmul.f32 1.0, %v4313
      %v4315 = vrcp.pop %v4296
      %v4316 = vmul.f32 1.0, %v4315
      %v4317 = vrcp.pop %v4297
      %v4318 = vmul.f32 1.0, %v4317
      %v4319 = vrcp.pop %v4298
      %v4320 = vmul.f32 1.0, %v4319
      %v4321 = vrcp.pop %v4299
      %v4322 = vmul.f32 1.0, %v4321
      %v4323 = vrcp.pop %v4300
      %v4324 = vmul.f32 1.0, %v4323
      %v4325 = vrcp.pop %v4301
      %v4326 = vmul.f32 1.0, %v4325
      %v4327 = vrcp.pop %v4302
      %v4328 = vmul.f32 1.0, %v4327
      %v4329 = vrcp.pop %v4303
      %v4330 = vmul.f32 1.0, %v4329
      %v4331 = vrcp.pop %v4304
      %v4332 = vmul.f32 1.0, %v4331
      %v4333 = vrcp.pop %v4305
      %v4334 = vmul.f32 1.0, %v4333
      %v4335 = vrcp.pop %v4306
      %v4336 = vmul.f32 1.0, %v4335
      %v4337 = vrcp.pop %v4307
      %v4338 = vmul.f32 1.0, %v4337
      %v4339 = vrcp.pop %v4308
      %v4340 = vmul.f32 1.0, %v4339
      %4357 = vrot.lane.b32.xlu0 %v4075, 32
      %v4358 = vpop.permute.xlu0 %4357
      %4359 = vrot.lane.b32.xlu0 %v4076, 32
      %v4360 = vpop.permute.xlu0 %4359
      %4361 = vrot.lane.b32.xlu0 %v4077, 32
      %v4362 = vpop.permute.xlu0 %4361
      %4363 = vrot.lane.b32.xlu0 %v4078, 32
      %v4364 = vpop.permute.xlu0 %4363
      %4365 = vrot.lane.b32.xlu0 %v4079, 32
      %v4366 = vpop.permute.xlu0 %4365
      %4367 = vrot.lane.b32.xlu0 %v4080, 32
      %v4368 = vpop.permute.xlu0 %4367
      %4369 = vrot.lane.b32.xlu0 %v4081, 32
      %v4370 = vpop.permute.xlu0 %4369
      %4371 = vrot.lane.b32.xlu0 %v4082, 32
      %v4372 = vpop.permute.xlu0 %4371
      %4373 = vrot.lane.b32.xlu0 %v4083, 32
      %v4374 = vpop.permute.xlu0 %4373
      %4375 = vrot.lane.b32.xlu0 %v4084, 32
      %v4376 = vpop.permute.xlu0 %4375
      %4377 = vrot.lane.b32.xlu0 %v4085, 32
      %v4378 = vpop.permute.xlu0 %4377
      %4379 = vrot.lane.b32.xlu0 %v4086, 32
      %v4380 = vpop.permute.xlu0 %4379
      %4381 = vrot.lane.b32.xlu0 %v4087, 32
      %v4382 = vpop.permute.xlu0 %4381
      %4383 = vrot.lane.b32.xlu0 %v4088, 32
      %v4384 = vpop.permute.xlu0 %4383
      %4385 = vrot.lane.b32.xlu0 %v4089, 32
      %v4386 = vpop.permute.xlu0 %4385
      %4387 = vrot.lane.b32.xlu0 %v4090, 32
      %v4388 = vpop.permute.xlu0 %4387
      %v4405 = vsub.f32 %v4183, %v4358
      %v4406 = vsub.f32 %v4186, %v4360
      %v4407 = vsub.f32 %v4191, %v4362
      %v4408 = vsub.f32 %v4194, %v4364
      %v4409 = vsub.f32 %v4199, %v4366
      %v4410 = vsub.f32 %v4202, %v4368
      %v4411 = vsub.f32 %v4207, %v4370
      %v4412 = vsub.f32 %v4210, %v4372
      %v4413 = vsub.f32 %v4215, %v4374
      %v4414 = vsub.f32 %v4218, %v4376
      %v4415 = vsub.f32 %v4223, %v4378
      %v4416 = vsub.f32 %v4226, %v4380
      %v4417 = vsub.f32 %v4231, %v4382
      %v4418 = vsub.f32 %v4234, %v4384
      %v4419 = vsub.f32 %v4239, %v4386
      %v4420 = vsub.f32 %v4242, %v4388
      %4437 = vrot.lane.b32.xlu0 %v4405, 96
      %v4438 = vpop.permute.xlu0 %4437
      %4439 = vrot.lane.b32.xlu0 %v4406, 96
      %v4440 = vpop.permute.xlu0 %4439
      %4441 = vrot.lane.b32.xlu0 %v4407, 96
      %v4442 = vpop.permute.xlu0 %4441
      %4443 = vrot.lane.b32.xlu0 %v4408, 96
      %v4444 = vpop.permute.xlu0 %4443
      %4445 = vrot.lane.b32.xlu0 %v4409, 96
      %v4446 = vpop.permute.xlu0 %4445
      %4447 = vrot.lane.b32.xlu0 %v4410, 96
      %v4448 = vpop.permute.xlu0 %4447
      %4449 = vrot.lane.b32.xlu0 %v4411, 96
      %v4450 = vpop.permute.xlu0 %4449
      %4451 = vrot.lane.b32.xlu0 %v4412, 96
      %v4452 = vpop.permute.xlu0 %4451
      %4453 = vrot.lane.b32.xlu0 %v4413, 96
      %v4454 = vpop.permute.xlu0 %4453
      %4455 = vrot.lane.b32.xlu0 %v4414, 96
      %v4456 = vpop.permute.xlu0 %4455
      %4457 = vrot.lane.b32.xlu0 %v4415, 96
      %v4458 = vpop.permute.xlu0 %4457
      %4459 = vrot.lane.b32.xlu0 %v4416, 96
      %v4460 = vpop.permute.xlu0 %4459
      %4461 = vrot.lane.b32.xlu0 %v4417, 96
      %v4462 = vpop.permute.xlu0 %4461
      %4463 = vrot.lane.b32.xlu0 %v4418, 96
      %v4464 = vpop.permute.xlu0 %4463
      %4465 = vrot.lane.b32.xlu0 %v4419, 96
      %v4466 = vpop.permute.xlu0 %4465
      %4467 = vrot.lane.b32.xlu0 %v4420, 96
      %v4468 = vpop.permute.xlu0 %4467
      %v4485 = vmul.f32 %v4310, %v4438
      %v4486 = vmul.f32 %v4312, %v4440
      %v4487 = vmul.f32 %v4314, %v4442
      %v4488 = vmul.f32 %v4316, %v4444
      %v4489 = vmul.f32 %v4318, %v4446
      %v4490 = vmul.f32 %v4320, %v4448
      %v4491 = vmul.f32 %v4322, %v4450
      %v4492 = vmul.f32 %v4324, %v4452
      %v4493 = vmul.f32 %v4326, %v4454
      %v4494 = vmul.f32 %v4328, %v4456
      %v4495 = vmul.f32 %v4330, %v4458
      %v4496 = vmul.f32 %v4332, %v4460
      %v4497 = vmul.f32 %v4334, %v4462
      %v4498 = vmul.f32 %v4336, %v4464
      %v4499 = vmul.f32 %v4338, %v4466
      %v4500 = vmul.f32 %v4340, %v4468
      %v4501 = vadd.f32 %v4075, %v4485
      %v4502 = vadd.f32 %v4076, %v4486
      %v4503 = vadd.f32 %v4077, %v4487
      %v4504 = vadd.f32 %v4078, %v4488
      %v4505 = vadd.f32 %v4079, %v4489
      %v4506 = vadd.f32 %v4080, %v4490
      %v4507 = vadd.f32 %v4081, %v4491
      %v4508 = vadd.f32 %v4082, %v4492
      %v4509 = vadd.f32 %v4083, %v4493
      %v4510 = vadd.f32 %v4084, %v4494
      %v4511 = vadd.f32 %v4085, %v4495
      %v4512 = vadd.f32 %v4086, %v4496
      %v4513 = vadd.f32 %v4087, %v4497
      %v4514 = vadd.f32 %v4088, %v4498
      %v4515 = vadd.f32 %v4089, %v4499
      %v4516 = vadd.f32 %v4090, %v4500
      %s4517 = scalar_lea.vmem %s5, 192
      %v4518 = vld [vmem:[%s4517] sm:$0xf]
      %v4519 = vld [vmem:[%s4517 + $0x4] sm:$0xf]
      %v4520 = vld [vmem:[%s4517 + $0x8] sm:$0xf]
      %v4521 = vld [vmem:[%s4517 + $0xc] sm:$0xf]
      %s4522 = scalar_lea.vmem %s6, 6
      %v4523 = vld [vmem:[%s4522] sm:$0x1]
      %v4524 = vpack.c.bf16 %v4502, %v4501
      %v4525 = vpack.c.bf16 %v4504, %v4503
      %v4526 = vpack.c.bf16 %v4506, %v4505
      %v4527 = vpack.c.bf16 %v4508, %v4507
      %v4528 = vpack.c.bf16 %v4510, %v4509
      %v4529 = vpack.c.bf16 %v4512, %v4511
      %v4530 = vpack.c.bf16 %v4514, %v4513
      %v4531 = vpack.c.bf16 %v4516, %v4515
      %v4533 = vlaneseq
      %v4534 = vshrl.u32 %v4533, 7
      %v4535 = vsub.s32 0, %v4534
      %v4536 = vrot.slane %v4523, %v4535
      %v4542 = vunpack.c.l.b16 %v4518
      %v4543 = vunpack.c.l.b16 %v4519
      %v4544 = vunpack.c.l.b16 %v4520
      %v4545 = vunpack.c.l.b16 %v4521
      %v4546 = vpack.c.b16 %v4543, %v4542
      %v4547 = vpack.c.b16 %v4545, %v4544
      %v4551 = vsel %vm1389, %v4524, 0
      %v4554 = vsel %vm1389, %v4525, 0
      %v4557 = vsel %vm1389, %v4526, 0
      %v4560 = vsel %vm1389, %v4527, 0
      %v4563 = vsel %vm1389, %v4528, 0
      %v4566 = vsel %vm1389, %v4529, 0
      %v4569 = vsel %vm1389, %v4530, 0
      %v4572 = vsel %vm1389, %v4531, 0
      %4574 = vmatprep.subr.bf16.mxu0 0
      %4575 = vmatpush1.bf16.msra.mxu0 %v4546
      %4576 = vmatprep.subr.bf16.mxu0 0
      %4577 = vmatpush1.bf16.msra.mxu0 %v4547
      %4578 = vmatprep.subr.bf16.mxu0 0
      %4579 = vmatpush1.bf16.msra.mxu0 0
      %4580 = vmatprep.subr.bf16.mxu0 0
      %4581 = vmatpush1.bf16.msra.mxu0 0
      %4582 = vmatprep.subr.bf16.mxu0 0
      %4583 = vmatpush1.bf16.msra.mxu0 0
      %4584 = vmatprep.subr.bf16.mxu0 0
      %4585 = vmatpush1.bf16.msra.mxu0 0
      %4586 = vmatprep.subr.bf16.mxu0 0
      %4587 = vmatpush1.bf16.msra.mxu0 0
      %4588 = vmatprep.subr.bf16.mxu0 0
      %4589 = vmatpush1.bf16.msra.mxu0 0
      %4590 = vmatprep.subr.bf16.mxu0 0
      %4591 = vmatpush1.bf16.msra.mxu0 0
      %4592 = vmatprep.subr.bf16.mxu0 0
      %4593 = vmatpush1.bf16.msra.mxu0 0
      %4594 = vmatprep.subr.bf16.mxu0 0
      %4595 = vmatpush1.bf16.msra.mxu0 0
      %4596 = vmatprep.subr.bf16.mxu0 0
      %4597 = vmatpush1.bf16.msra.mxu0 0
      %4598 = vmatprep.subr.bf16.mxu0 0
      %4599 = vmatpush1.bf16.msra.mxu0 0
      %4600 = vmatprep.subr.bf16.mxu0 0
      %4601 = vmatpush1.bf16.msra.mxu0 0
      %4602 = vmatprep.subr.bf16.mxu0 0
      %4603 = vmatpush1.bf16.msra.mxu0 0
      %4604 = vmatprep.subr.bf16.mxu0 0
      %4605 = vmatpush1.bf16.msra.mxu0 0
      %4606 = vmatprep.mubr.bf16.mxu0 0
      %4607 = vmatmul.mubr.bf16.gmra.mrb[0].mxu0 %v4551
      %v4608 = vpop.f32.mrb[0].mxu0
      %v4609 = vadd.f32 %v4536, %v4608
      %v4610 = vpop.f32.mrb[0].mxu0
      %v4611 = vpop.f32.mrb[0].mxu0
      %v4612 = vadd.f32 %v4536, %v4611
      %v4613 = vpop.f32.mrb[0].mxu0
      %4614 = vmatprep.mubr.bf16.mxu0 0
      %4615 = vmatmul.mubr.bf16.gmra.mrb[0].mxu0 %v4554
      %v4616 = vpop.f32.mrb[0].mxu0
      %v4617 = vadd.f32 %v4536, %v4616
      %v4618 = vpop.f32.mrb[0].mxu0
      %v4619 = vpop.f32.mrb[0].mxu0
      %v4620 = vadd.f32 %v4536, %v4619
      %v4621 = vpop.f32.mrb[0].mxu0
      %4622 = vmatprep.mubr.bf16.mxu0 0
      %4623 = vmatmul.mubr.bf16.gmra.mrb[0].mxu0 %v4557
      %v4624 = vpop.f32.mrb[0].mxu0
      %v4625 = vadd.f32 %v4536, %v4624
      %v4626 = vpop.f32.mrb[0].mxu0
      %v4627 = vpop.f32.mrb[0].mxu0
      %v4628 = vadd.f32 %v4536, %v4627
      %v4629 = vpop.f32.mrb[0].mxu0
      %4630 = vmatprep.mubr.bf16.mxu0 0
      %4631 = vmatmul.mubr.bf16.gmra.mrb[0].mxu0 %v4560
      %v4632 = vpop.f32.mrb[0].mxu0
      %v4633 = vadd.f32 %v4536, %v4632
      %v4634 = vpop.f32.mrb[0].mxu0
      %v4635 = vpop.f32.mrb[0].mxu0
      %v4636 = vadd.f32 %v4536, %v4635
      %v4637 = vpop.f32.mrb[0].mxu0
      %4638 = vmatprep.mubr.bf16.mxu0 0
      %4639 = vmatmul.mubr.bf16.gmra.mrb[0].mxu0 %v4563
      %v4640 = vpop.f32.mrb[0].mxu0
      %v4641 = vadd.f32 %v4536, %v4640
      %v4642 = vpop.f32.mrb[0].mxu0
      %v4643 = vpop.f32.mrb[0].mxu0
      %v4644 = vadd.f32 %v4536, %v4643
      %v4645 = vpop.f32.mrb[0].mxu0
      %4646 = vmatprep.mubr.bf16.mxu0 0
      %4647 = vmatmul.mubr.bf16.gmra.mrb[0].mxu0 %v4566
      %v4648 = vpop.f32.mrb[0].mxu0
      %v4649 = vadd.f32 %v4536, %v4648
      %v4650 = vpop.f32.mrb[0].mxu0
      %v4651 = vpop.f32.mrb[0].mxu0
      %v4652 = vadd.f32 %v4536, %v4651
      %v4653 = vpop.f32.mrb[0].mxu0
      %4654 = vmatprep.mubr.bf16.mxu0 0
      %4655 = vmatmul.mubr.bf16.gmra.mrb[0].mxu0 %v4569
      %v4656 = vpop.f32.mrb[0].mxu0
      %v4657 = vadd.f32 %v4536, %v4656
      %v4658 = vpop.f32.mrb[0].mxu0
      %v4659 = vpop.f32.mrb[0].mxu0
      %v4660 = vadd.f32 %v4536, %v4659
      %v4661 = vpop.f32.mrb[0].mxu0
      %4662 = vmatprep.mubr.bf16.mxu0 0
      %4663 = vmatmul.mubr.bf16.gmra.mrb[0].mxu0 %v4572
      %v4664 = vpop.f32.mrb[0].mxu0
      %v4665 = vadd.f32 %v4536, %v4664
      %v4666 = vpop.f32.mrb[0].mxu0
      %v4667 = vpop.f32.mrb[0].mxu0
      %v4668 = vadd.f32 %v4536, %v4667
      %v4669 = vpop.f32.mrb[0].mxu0
      %4670 = vdwg.mxu0
      %v4671 = vxor.u32 %v4609, 2147483648
      %v4672 = vxor.u32 %v4612, 2147483648
      %v4673 = vxor.u32 %v4617, 2147483648
      %v4674 = vxor.u32 %v4620, 2147483648
      %v4675 = vxor.u32 %v4625, 2147483648
      %v4676 = vxor.u32 %v4628, 2147483648
      %v4677 = vxor.u32 %v4633, 2147483648
      %v4678 = vxor.u32 %v4636, 2147483648
      %v4679 = vxor.u32 %v4641, 2147483648
      %v4680 = vxor.u32 %v4644, 2147483648
      %v4681 = vxor.u32 %v4649, 2147483648
      %v4682 = vxor.u32 %v4652, 2147483648
      %v4683 = vxor.u32 %v4657, 2147483648
      %v4684 = vxor.u32 %v4660, 2147483648
      %v4685 = vxor.u32 %v4665, 2147483648
      %v4686 = vxor.u32 %v4668, 2147483648
      %v4687 = vmul.f32 %v4671, 1.442695
      %v4688 = vpow.pop %v4687
      %v4689 = vmul.f32 %v4672, 1.442695
      %v4690 = vpow.pop %v4689
      %v4691 = vmul.f32 %v4673, 1.442695
      %v4692 = vpow.pop %v4691
      %v4693 = vmul.f32 %v4674, 1.442695
      %v4694 = vpow.pop %v4693
      %v4695 = vmul.f32 %v4675, 1.442695
      %v4696 = vpow.pop %v4695
      %v4697 = vmul.f32 %v4676, 1.442695
      %v4698 = vpow.pop %v4697
      %v4699 = vmul.f32 %v4677, 1.442695
      %v4700 = vpow.pop %v4699
      %v4701 = vmul.f32 %v4678, 1.442695
      %v4702 = vpow.pop %v4701
      %v4703 = vmul.f32 %v4679, 1.442695
      %v4704 = vpow.pop %v4703
      %v4705 = vmul.f32 %v4680, 1.442695
      %v4706 = vpow.pop %v4705
      %v4707 = vmul.f32 %v4681, 1.442695
      %v4708 = vpow.pop %v4707
      %v4709 = vmul.f32 %v4682, 1.442695
      %v4710 = vpow.pop %v4709
      %v4711 = vmul.f32 %v4683, 1.442695
      %v4712 = vpow.pop %v4711
      %v4713 = vmul.f32 %v4684, 1.442695
      %v4714 = vpow.pop %v4713
      %v4715 = vmul.f32 %v4685, 1.442695
      %v4716 = vpow.pop %v4715
      %v4717 = vmul.f32 %v4686, 1.442695
      %v4718 = vpow.pop %v4717
      %v4719 = vadd.f32 %v4688, 1.0
      %v4720 = vadd.f32 %v4690, 1.0
      %v4721 = vadd.f32 %v4692, 1.0
      %v4722 = vadd.f32 %v4694, 1.0
      %v4723 = vadd.f32 %v4696, 1.0
      %v4724 = vadd.f32 %v4698, 1.0
      %v4725 = vadd.f32 %v4700, 1.0
      %v4726 = vadd.f32 %v4702, 1.0
      %v4727 = vadd.f32 %v4704, 1.0
      %v4728 = vadd.f32 %v4706, 1.0
      %v4729 = vadd.f32 %v4708, 1.0
      %v4730 = vadd.f32 %v4710, 1.0
      %v4731 = vadd.f32 %v4712, 1.0
      %v4732 = vadd.f32 %v4714, 1.0
      %v4733 = vadd.f32 %v4716, 1.0
      %v4734 = vadd.f32 %v4718, 1.0
      %v4735 = vrcp.pop %v4719
      %v4736 = vmul.f32 1.0, %v4735
      %v4737 = vrcp.pop %v4720
      %v4738 = vmul.f32 1.0, %v4737
      %v4739 = vrcp.pop %v4721
      %v4740 = vmul.f32 1.0, %v4739
      %v4741 = vrcp.pop %v4722
      %v4742 = vmul.f32 1.0, %v4741
      %v4743 = vrcp.pop %v4723
      %v4744 = vmul.f32 1.0, %v4743
      %v4745 = vrcp.pop %v4724
      %v4746 = vmul.f32 1.0, %v4745
      %v4747 = vrcp.pop %v4725
      %v4748 = vmul.f32 1.0, %v4747
      %v4749 = vrcp.pop %v4726
      %v4750 = vmul.f32 1.0, %v4749
      %v4751 = vrcp.pop %v4727
      %v4752 = vmul.f32 1.0, %v4751
      %v4753 = vrcp.pop %v4728
      %v4754 = vmul.f32 1.0, %v4753
      %v4755 = vrcp.pop %v4729
      %v4756 = vmul.f32 1.0, %v4755
      %v4757 = vrcp.pop %v4730
      %v4758 = vmul.f32 1.0, %v4757
      %v4759 = vrcp.pop %v4731
      %v4760 = vmul.f32 1.0, %v4759
      %v4761 = vrcp.pop %v4732
      %v4762 = vmul.f32 1.0, %v4761
      %v4763 = vrcp.pop %v4733
      %v4764 = vmul.f32 1.0, %v4763
      %v4765 = vrcp.pop %v4734
      %v4766 = vmul.f32 1.0, %v4765
      %4783 = vrot.lane.b32.xlu0 %v4501, 32
      %v4784 = vpop.permute.xlu0 %4783
      %4785 = vrot.lane.b32.xlu0 %v4502, 32
      %v4786 = vpop.permute.xlu0 %4785
      %4787 = vrot.lane.b32.xlu0 %v4503, 32
      %v4788 = vpop.permute.xlu0 %4787
      %4789 = vrot.lane.b32.xlu0 %v4504, 32
      %v4790 = vpop.permute.xlu0 %4789
      %4791 = vrot.lane.b32.xlu0 %v4505, 32
      %v4792 = vpop.permute.xlu0 %4791
      %4793 = vrot.lane.b32.xlu0 %v4506, 32
      %v4794 = vpop.permute.xlu0 %4793
      %4795 = vrot.lane.b32.xlu0 %v4507, 32
      %v4796 = vpop.permute.xlu0 %4795
      %4797 = vrot.lane.b32.xlu0 %v4508, 32
      %v4798 = vpop.permute.xlu0 %4797
      %4799 = vrot.lane.b32.xlu0 %v4509, 32
      %v4800 = vpop.permute.xlu0 %4799
      %4801 = vrot.lane.b32.xlu0 %v4510, 32
      %v4802 = vpop.permute.xlu0 %4801
      %4803 = vrot.lane.b32.xlu0 %v4511, 32
      %v4804 = vpop.permute.xlu0 %4803
      %4805 = vrot.lane.b32.xlu0 %v4512, 32
      %v4806 = vpop.permute.xlu0 %4805
      %4807 = vrot.lane.b32.xlu0 %v4513, 32
      %v4808 = vpop.permute.xlu0 %4807
      %4809 = vrot.lane.b32.xlu0 %v4514, 32
      %v4810 = vpop.permute.xlu0 %4809
      %4811 = vrot.lane.b32.xlu0 %v4515, 32
      %v4812 = vpop.permute.xlu0 %4811
      %4813 = vrot.lane.b32.xlu0 %v4516, 32
      %v4814 = vpop.permute.xlu0 %4813
      %v4831 = vsub.f32 %v4609, %v4784
      %v4832 = vsub.f32 %v4612, %v4786
      %v4833 = vsub.f32 %v4617, %v4788
      %v4834 = vsub.f32 %v4620, %v4790
      %v4835 = vsub.f32 %v4625, %v4792
      %v4836 = vsub.f32 %v4628, %v4794
      %v4837 = vsub.f32 %v4633, %v4796
      %v4838 = vsub.f32 %v4636, %v4798
      %v4839 = vsub.f32 %v4641, %v4800
      %v4840 = vsub.f32 %v4644, %v4802
      %v4841 = vsub.f32 %v4649, %v4804
      %v4842 = vsub.f32 %v4652, %v4806
      %v4843 = vsub.f32 %v4657, %v4808
      %v4844 = vsub.f32 %v4660, %v4810
      %v4845 = vsub.f32 %v4665, %v4812
      %v4846 = vsub.f32 %v4668, %v4814
      %4863 = vrot.lane.b32.xlu0 %v4831, 96
      %v4864 = vpop.permute.xlu0 %4863
      %4865 = vrot.lane.b32.xlu0 %v4832, 96
      %v4866 = vpop.permute.xlu0 %4865
      %4867 = vrot.lane.b32.xlu0 %v4833, 96
      %v4868 = vpop.permute.xlu0 %4867
      %4869 = vrot.lane.b32.xlu0 %v4834, 96
      %v4870 = vpop.permute.xlu0 %4869
      %4871 = vrot.lane.b32.xlu0 %v4835, 96
      %v4872 = vpop.permute.xlu0 %4871
      %4873 = vrot.lane.b32.xlu0 %v4836, 96
      %v4874 = vpop.permute.xlu0 %4873
      %4875 = vrot.lane.b32.xlu0 %v4837, 96
      %v4876 = vpop.permute.xlu0 %4875
      %4877 = vrot.lane.b32.xlu0 %v4838, 96
      %v4878 = vpop.permute.xlu0 %4877
      %4879 = vrot.lane.b32.xlu0 %v4839, 96
      %v4880 = vpop.permute.xlu0 %4879
      %4881 = vrot.lane.b32.xlu0 %v4840, 96
      %v4882 = vpop.permute.xlu0 %4881
      %4883 = vrot.lane.b32.xlu0 %v4841, 96
      %v4884 = vpop.permute.xlu0 %4883
      %4885 = vrot.lane.b32.xlu0 %v4842, 96
      %v4886 = vpop.permute.xlu0 %4885
      %4887 = vrot.lane.b32.xlu0 %v4843, 96
      %v4888 = vpop.permute.xlu0 %4887
      %4889 = vrot.lane.b32.xlu0 %v4844, 96
      %v4890 = vpop.permute.xlu0 %4889
      %4891 = vrot.lane.b32.xlu0 %v4845, 96
      %v4892 = vpop.permute.xlu0 %4891
      %4893 = vrot.lane.b32.xlu0 %v4846, 96
      %v4894 = vpop.permute.xlu0 %4893
      %v4911 = vmul.f32 %v4736, %v4864
      %v4912 = vmul.f32 %v4738, %v4866
      %v4913 = vmul.f32 %v4740, %v4868
      %v4914 = vmul.f32 %v4742, %v4870
      %v4915 = vmul.f32 %v4744, %v4872
      %v4916 = vmul.f32 %v4746, %v4874
      %v4917 = vmul.f32 %v4748, %v4876
      %v4918 = vmul.f32 %v4750, %v4878
      %v4919 = vmul.f32 %v4752, %v4880
      %v4920 = vmul.f32 %v4754, %v4882
      %v4921 = vmul.f32 %v4756, %v4884
      %v4922 = vmul.f32 %v4758, %v4886
      %v4923 = vmul.f32 %v4760, %v4888
      %v4924 = vmul.f32 %v4762, %v4890
      %v4925 = vmul.f32 %v4764, %v4892
      %v4926 = vmul.f32 %v4766, %v4894
      %v4927 = vadd.f32 %v4501, %v4911
      %v4928 = vadd.f32 %v4502, %v4912
      %v4929 = vadd.f32 %v4503, %v4913
      %v4930 = vadd.f32 %v4504, %v4914
      %v4931 = vadd.f32 %v4505, %v4915
      %v4932 = vadd.f32 %v4506, %v4916
      %v4933 = vadd.f32 %v4507, %v4917
      %v4934 = vadd.f32 %v4508, %v4918
      %v4935 = vadd.f32 %v4509, %v4919
      %v4936 = vadd.f32 %v4510, %v4920
      %v4937 = vadd.f32 %v4511, %v4921
      %v4938 = vadd.f32 %v4512, %v4922
      %v4939 = vadd.f32 %v4513, %v4923
      %v4940 = vadd.f32 %v4514, %v4924
      %v4941 = vadd.f32 %v4515, %v4925
      %v4942 = vadd.f32 %v4516, %v4926
      %v4943 = vld [vmem:[%s7] sm:$0xf]
      %v4944 = vld [vmem:[%s7 + $0x4] sm:$0xf]
      %v4945 = vld [vmem:[%s7 + $0x8] sm:$0xf]
      %v4946 = vld [vmem:[%s7 + $0xc] sm:$0xf]
      %v4947 = vpack.c.bf16 %v4928, %v4927
      %v4948 = vpack.c.bf16 %v4930, %v4929
      %v4949 = vpack.c.bf16 %v4932, %v4931
      %v4950 = vpack.c.bf16 %v4934, %v4933
      %v4951 = vpack.c.bf16 %v4936, %v4935
      %v4952 = vpack.c.bf16 %v4938, %v4937
      %v4953 = vpack.c.bf16 %v4940, %v4939
      %v4954 = vpack.c.bf16 %v4942, %v4941
      %v4955 = vld [vmem:[%s8] sm:$0x1]
      %v4957 = vlaneseq
      %v4958 = vshrl.u32 %v4957, 7
      %v4959 = vsub.s32 0, %v4958
      %v4960 = vrot.slane %v4955, %v4959
      %v4966 = vunpack.c.l.b16 %v4943
      %v4967 = vunpack.c.l.b16 %v4944
      %v4968 = vunpack.c.l.b16 %v4945
      %v4969 = vunpack.c.l.b16 %v4946
      %v4970 = vpack.c.b16 %v4967, %v4966
      %v4971 = vpack.c.b16 %v4969, %v4968
      %v4975 = vsel %vm1389, %v4947, 0
      %v4978 = vsel %vm1389, %v4948, 0
      %v4981 = vsel %vm1389, %v4949, 0
      %v4984 = vsel %vm1389, %v4950, 0
      %v4987 = vsel %vm1389, %v4951, 0
      %v4990 = vsel %vm1389, %v4952, 0
      %v4993 = vsel %vm1389, %v4953, 0
      %v4996 = vsel %vm1389, %v4954, 0
      %4998 = vmatprep.subr.bf16.mxu0 0
      %4999 = vmatpush1.bf16.msra.mxu0 %v4970
      %5000 = vmatprep.subr.bf16.mxu0 0
      %5001 = vmatpush1.bf16.msra.mxu0 %v4971
      %5002 = vmatprep.subr.bf16.mxu0 0
      %5003 = vmatpush1.bf16.msra.mxu0 0
      %5004 = vmatprep.subr.bf16.mxu0 0
      %5005 = vmatpush1.bf16.msra.mxu0 0
      %5006 = vmatprep.subr.bf16.mxu0 0
      %5007 = vmatpush1.bf16.msra.mxu0 0
      %5008 = vmatprep.subr.bf16.mxu0 0
      %5009 = vmatpush1.bf16.msra.mxu0 0
      %5010 = vmatprep.subr.bf16.mxu0 0
      %5011 = vmatpush1.bf16.msra.mxu0 0
      %5012 = vmatprep.subr.bf16.mxu0 0
      %5013 = vmatpush1.bf16.msra.mxu0 0
      %5014 = vmatprep.subr.bf16.mxu0 0
      %5015 = vmatpush1.bf16.msra.mxu0 0
      %5016 = vmatprep.subr.bf16.mxu0 0
      %5017 = vmatpush1.bf16.msra.mxu0 0
      %5018 = vmatprep.subr.bf16.mxu0 0
      %5019 = vmatpush1.bf16.msra.mxu0 0
      %5020 = vmatprep.subr.bf16.mxu0 0
      %5021 = vmatpush1.bf16.msra.mxu0 0
      %5022 = vmatprep.subr.bf16.mxu0 0
      %5023 = vmatpush1.bf16.msra.mxu0 0
      %5024 = vmatprep.subr.bf16.mxu0 0
      %5025 = vmatpush1.bf16.msra.mxu0 0
      %5026 = vmatprep.subr.bf16.mxu0 0
      %5027 = vmatpush1.bf16.msra.mxu0 0
      %5028 = vmatprep.subr.bf16.mxu0 0
      %5029 = vmatpush1.bf16.msra.mxu0 0
      %5030 = vmatprep.mubr.bf16.mxu0 0
      %5031 = vmatmul.mubr.bf16.gmra.mrb[0].mxu0 %v4975
      %v5032 = vpop.f32.mrb[0].mxu0
      %v5033 = vadd.f32 %v4960, %v5032
      %v5034 = vpop.f32.mrb[0].mxu0
      %v5035 = vpop.f32.mrb[0].mxu0
      %v5036 = vadd.f32 %v4960, %v5035
      %v5037 = vpop.f32.mrb[0].mxu0
      %5038 = vmatprep.mubr.bf16.mxu0 0
      %5039 = vmatmul.mubr.bf16.gmra.mrb[0].mxu0 %v4978
      %v5040 = vpop.f32.mrb[0].mxu0
      %v5041 = vadd.f32 %v4960, %v5040
      %v5042 = vpop.f32.mrb[0].mxu0
      %v5043 = vpop.f32.mrb[0].mxu0
      %v5044 = vadd.f32 %v4960, %v5043
      %v5045 = vpop.f32.mrb[0].mxu0
      %5046 = vmatprep.mubr.bf16.mxu0 0
      %5047 = vmatmul.mubr.bf16.gmra.mrb[0].mxu0 %v4981
      %v5048 = vpop.f32.mrb[0].mxu0
      %v5049 = vadd.f32 %v4960, %v5048
      %v5050 = vpop.f32.mrb[0].mxu0
      %v5051 = vpop.f32.mrb[0].mxu0
      %v5052 = vadd.f32 %v4960, %v5051
      %v5053 = vpop.f32.mrb[0].mxu0
      %5054 = vmatprep.mubr.bf16.mxu0 0
      %5055 = vmatmul.mubr.bf16.gmra.mrb[0].mxu0 %v4984
      %v5056 = vpop.f32.mrb[0].mxu0
      %v5057 = vadd.f32 %v4960, %v5056
      %v5058 = vpop.f32.mrb[0].mxu0
      %v5059 = vpop.f32.mrb[0].mxu0
      %v5060 = vadd.f32 %v4960, %v5059
      %v5061 = vpop.f32.mrb[0].mxu0
      %5062 = vmatprep.mubr.bf16.mxu0 0
      %5063 = vmatmul.mubr.bf16.gmra.mrb[0].mxu0 %v4987
      %v5064 = vpop.f32.mrb[0].mxu0
      %v5065 = vadd.f32 %v4960, %v5064
      %v5066 = vpop.f32.mrb[0].mxu0
      %v5067 = vpop.f32.mrb[0].mxu0
      %v5068 = vadd.f32 %v4960, %v5067
      %v5069 = vpop.f32.mrb[0].mxu0
      %5070 = vmatprep.mubr.bf16.mxu0 0
      %5071 = vmatmul.mubr.bf16.gmra.mrb[0].mxu0 %v4990
      %v5072 = vpop.f32.mrb[0].mxu0
      %v5073 = vadd.f32 %v4960, %v5072
      %v5074 = vpop.f32.mrb[0].mxu0
      %v5075 = vpop.f32.mrb[0].mxu0
      %v5076 = vadd.f32 %v4960, %v5075
      %v5077 = vpop.f32.mrb[0].mxu0
      %5078 = vmatprep.mubr.bf16.mxu0 0
      %5079 = vmatmul.mubr.bf16.gmra.mrb[0].mxu0 %v4993
      %v5080 = vpop.f32.mrb[0].mxu0
      %v5081 = vadd.f32 %v4960, %v5080
      %v5082 = vpop.f32.mrb[0].mxu0
      %v5083 = vpop.f32.mrb[0].mxu0
      %v5084 = vadd.f32 %v4960, %v5083
      %v5085 = vpop.f32.mrb[0].mxu0
      %5086 = vmatprep.mubr.bf16.mxu0 0
      %5087 = vmatmul.mubr.bf16.gmra.mrb[0].mxu0 %v4996
      %v5088 = vpop.f32.mrb[0].mxu0
      %v5089 = vadd.f32 %v4960, %v5088
      %v5090 = vpop.f32.mrb[0].mxu0
      %v5091 = vpop.f32.mrb[0].mxu0
      %v5092 = vadd.f32 %v4960, %v5091
      %v5093 = vpop.f32.mrb[0].mxu0
      %5094 = vdwg.mxu0
      %v5095 = vld [vmem:[%s9] sm:$0xf]
      %v5096 = vld [vmem:[%s9 + $0x4] sm:$0xf]
      %v5097 = vld [vmem:[%s9 + $0x8] sm:$0xf]
      %v5098 = vld [vmem:[%s9 + $0xc] sm:$0xf]
      %v5099 = vld [vmem:[%s9 + $0x10] sm:$0xf]
      %v5100 = vld [vmem:[%s9 + $0x14] sm:$0xf]
      %v5101 = vld [vmem:[%s9 + $0x18] sm:$0xf]
      %v5102 = vld [vmem:[%s9 + $0x1c] sm:$0xf]
      %v5103 = vld [vmem:[%s10] sm:$0x1]
      %v5104 = vpack.c.bf16 %v5036, %v5033
      %v5105 = vpack.c.bf16 %v5044, %v5041
      %v5106 = vpack.c.bf16 %v5052, %v5049
      %v5107 = vpack.c.bf16 %v5060, %v5057
      %v5108 = vpack.c.bf16 %v5068, %v5065
      %v5109 = vpack.c.bf16 %v5076, %v5073
      %v5110 = vpack.c.bf16 %v5084, %v5081
      %v5111 = vpack.c.bf16 %v5092, %v5089
      %v5112 = vrot.slane %v5033, 7
      %v5113 = vrot.slane %v5036, 7
      %v5114 = vrot.slane %v5041, 7
      %v5115 = vrot.slane %v5044, 7
      %v5116 = vrot.slane %v5049, 7
      %v5117 = vrot.slane %v5052, 7
      %v5118 = vrot.slane %v5057, 7
      %v5119 = vrot.slane %v5060, 7
      %v5120 = vrot.slane %v5065, 7
      %v5121 = vrot.slane %v5068, 7
      %v5122 = vrot.slane %v5073, 7
      %v5123 = vrot.slane %v5076, 7
      %v5124 = vrot.slane %v5081, 7
      %v5125 = vrot.slane %v5084, 7
      %v5126 = vrot.slane %v5089, 7
      %v5127 = vrot.slane %v5092, 7
      %v5128 = vsel %vm1544, %v5126, %v5127
      %v5129 = vsel %vm1544, %v5125, %v5126
      %v5130 = vsel %vm1544, %v5124, %v5125
      %v5131 = vsel %vm1544, %v5123, %v5124
      %v5132 = vsel %vm1544, %v5122, %v5123
      %v5133 = vsel %vm1544, %v5121, %v5122
      %v5134 = vsel %vm1544, %v5120, %v5121
      %v5135 = vsel %vm1544, %v5119, %v5120
      %v5136 = vsel %vm1544, %v5118, %v5119
      %v5137 = vsel %vm1544, %v5117, %v5118
      %v5138 = vsel %vm1544, %v5116, %v5117
      %v5139 = vsel %vm1544, %v5115, %v5116
      %v5140 = vsel %vm1544, %v5114, %v5115
      %v5141 = vsel %vm1544, %v5113, %v5114
      %v5142 = vsel %vm1544, %v5112, %v5113
      %v5143 = vsel %vm1544, %v5127, %v5112
      %v5144 = vpack.c.bf16 %v5142, %v5143
      %v5145 = vpack.c.bf16 %v5140, %v5141
      %v5146 = vpack.c.bf16 %v5138, %v5139
      %v5147 = vpack.c.bf16 %v5136, %v5137
      %v5148 = vpack.c.bf16 %v5134, %v5135
      %v5149 = vpack.c.bf16 %v5132, %v5133
      %v5150 = vpack.c.bf16 %v5130, %v5131
      %v5151 = vpack.c.bf16 %v5128, %v5129
      %v5152 = vmul.bf16 %v5144, %v918
      %v5153 = vmul.bf16 %v5145, %v919
      %v5154 = vmul.bf16 %v5146, %v920
      %v5155 = vmul.bf16 %v5147, %v921
      %v5156 = vmul.bf16 %v5148, %v922
      %v5157 = vmul.bf16 %v5149, %v923
      %v5158 = vmul.bf16 %v5150, %v924
      %v5159 = vmul.bf16 %v5151, %v925
      %5168 = vrot.lane.b32.xlu0 %v5152, 32
      %v5169 = vpop.permute.xlu0 %5168
      %5170 = vrot.lane.b32.xlu0 %v5153, 32
      %v5171 = vpop.permute.xlu0 %5170
      %5172 = vrot.lane.b32.xlu0 %v5154, 32
      %v5173 = vpop.permute.xlu0 %5172
      %5174 = vrot.lane.b32.xlu0 %v5155, 32
      %v5175 = vpop.permute.xlu0 %5174
      %5176 = vrot.lane.b32.xlu0 %v5156, 32
      %v5177 = vpop.permute.xlu0 %5176
      %5178 = vrot.lane.b32.xlu0 %v5157, 32
      %v5179 = vpop.permute.xlu0 %5178
      %5180 = vrot.lane.b32.xlu0 %v5158, 32
      %v5181 = vpop.permute.xlu0 %5180
      %5182 = vrot.lane.b32.xlu0 %v5159, 32
      %v5183 = vpop.permute.xlu0 %5182
      %v5186 = vsel %vm1389, %v5104, %v5169
      %v5189 = vsel %vm1389, %v5105, %v5171
      %v5192 = vsel %vm1389, %v5106, %v5173
      %v5195 = vsel %vm1389, %v5107, %v5175
      %v5198 = vsel %vm1389, %v5108, %v5177
      %v5201 = vsel %vm1389, %v5109, %v5179
      %v5204 = vsel %vm1389, %v5110, %v5181
      %v5207 = vsel %vm1389, %v5111, %v5183
      %v5209 = vlaneseq
      %v5210 = vshrl.u32 %v5209, 7
      %v5211 = vsub.s32 0, %v5210
      %v5212 = vrot.slane %v5103, %v5211
      %v5222 = vunpack.c.l.b16 %v5095
      %v5223 = vunpack.c.l.b16 %v5096
      %v5224 = vunpack.c.l.b16 %v5097
      %v5225 = vunpack.c.l.b16 %v5098
      %v5226 = vunpack.c.l.b16 %v5099
      %v5227 = vunpack.c.l.b16 %v5100
      %v5228 = vunpack.c.l.b16 %v5101
      %v5229 = vunpack.c.l.b16 %v5102
      %v5230 = vpack.c.b16 %v5223, %v5222
      %v5231 = vpack.c.b16 %v5225, %v5224
      %v5232 = vpack.c.b16 %v5227, %v5226
      %v5233 = vpack.c.b16 %v5229, %v5228
      %v5238 = vsel %vm1655, %v5186, 0
      %v5240 = vsel %vm1655, %v5189, 0
      %v5242 = vsel %vm1655, %v5192, 0
      %v5244 = vsel %vm1655, %v5195, 0
      %v5246 = vsel %vm1655, %v5198, 0
      %v5248 = vsel %vm1655, %v5201, 0
      %v5250 = vsel %vm1655, %v5204, 0
      %v5252 = vsel %vm1655, %v5207, 0
      %5254 = vmatprep.subr.bf16.mxu0 0
      %5255 = vmatpush1.bf16.msra.mxu0 %v5230
      %5256 = vmatprep.subr.bf16.mxu0 0
      %5257 = vmatpush1.bf16.msra.mxu0 %v5231
      %5258 = vmatprep.subr.bf16.mxu0 0
      %5259 = vmatpush1.bf16.msra.mxu0 %v5232
      %5260 = vmatprep.subr.bf16.mxu0 0
      %5261 = vmatpush1.bf16.msra.mxu0 %v5233
      %5262 = vmatprep.subr.bf16.mxu0 0
      %5263 = vmatpush1.bf16.msra.mxu0 0
      %5264 = vmatprep.subr.bf16.mxu0 0
      %5265 = vmatpush1.bf16.msra.mxu0 0
      %5266 = vmatprep.subr.bf16.mxu0 0
      %5267 = vmatpush1.bf16.msra.mxu0 0
      %5268 = vmatprep.subr.bf16.mxu0 0
      %5269 = vmatpush1.bf16.msra.mxu0 0
      %5270 = vmatprep.subr.bf16.mxu0 0
      %5271 = vmatpush1.bf16.msra.mxu0 0
      %5272 = vmatprep.subr.bf16.mxu0 0
      %5273 = vmatpush1.bf16.msra.mxu0 0
      %5274 = vmatprep.subr.bf16.mxu0 0
      %5275 = vmatpush1.bf16.msra.mxu0 0
      %5276 = vmatprep.subr.bf16.mxu0 0
      %5277 = vmatpush1.bf16.msra.mxu0 0
      %5278 = vmatprep.subr.bf16.mxu0 0
      %5279 = vmatpush1.bf16.msra.mxu0 0
      %5280 = vmatprep.subr.bf16.mxu0 0
      %5281 = vmatpush1.bf16.msra.mxu0 0
      %5282 = vmatprep.subr.bf16.mxu0 0
      %5283 = vmatpush1.bf16.msra.mxu0 0
      %5284 = vmatprep.subr.bf16.mxu0 0
      %5285 = vmatpush1.bf16.msra.mxu0 0
      %5286 = vmatprep.mubr.bf16.mxu0 0
      %5287 = vmatmul.mubr.bf16.gmra.mrb[0].mxu0 %v5238
      %v5288 = vpop.f32.mrb[0].mxu0
      %v5289 = vadd.f32 %v5212, %v5288
      %v5290 = vpop.f32.mrb[0].mxu0
      %v5291 = vpop.f32.mrb[0].mxu0
      %v5292 = vadd.f32 %v5212, %v5291
      %v5293 = vpop.f32.mrb[0].mxu0
      %5294 = vmatprep.mubr.bf16.mxu0 0
      %5295 = vmatmul.mubr.bf16.gmra.mrb[0].mxu0 %v5240
      %v5296 = vpop.f32.mrb[0].mxu0
      %v5297 = vadd.f32 %v5212, %v5296
      %v5298 = vpop.f32.mrb[0].mxu0
      %v5299 = vpop.f32.mrb[0].mxu0
      %v5300 = vadd.f32 %v5212, %v5299
      %v5301 = vpop.f32.mrb[0].mxu0
      %5302 = vmatprep.mubr.bf16.mxu0 0
      %5303 = vmatmul.mubr.bf16.gmra.mrb[0].mxu0 %v5242
      %v5304 = vpop.f32.mrb[0].mxu0
      %v5305 = vadd.f32 %v5212, %v5304
      %v5306 = vpop.f32.mrb[0].mxu0
      %v5307 = vpop.f32.mrb[0].mxu0
      %v5308 = vadd.f32 %v5212, %v5307
      %v5309 = vpop.f32.mrb[0].mxu0
      %5310 = vmatprep.mubr.bf16.mxu0 0
      %5311 = vmatmul.mubr.bf16.gmra.mrb[0].mxu0 %v5244
      %v5312 = vpop.f32.mrb[0].mxu0
      %v5313 = vadd.f32 %v5212, %v5312
      %v5314 = vpop.f32.mrb[0].mxu0
      %v5315 = vpop.f32.mrb[0].mxu0
      %v5316 = vadd.f32 %v5212, %v5315
      %v5317 = vpop.f32.mrb[0].mxu0
      %5318 = vmatprep.mubr.bf16.mxu0 0
      %5319 = vmatmul.mubr.bf16.gmra.mrb[0].mxu0 %v5246
      %v5320 = vpop.f32.mrb[0].mxu0
      %v5321 = vadd.f32 %v5212, %v5320
      %v5322 = vpop.f32.mrb[0].mxu0
      %v5323 = vpop.f32.mrb[0].mxu0
      %v5324 = vadd.f32 %v5212, %v5323
      %v5325 = vpop.f32.mrb[0].mxu0
      %5326 = vmatprep.mubr.bf16.mxu0 0
      %5327 = vmatmul.mubr.bf16.gmra.mrb[0].mxu0 %v5248
      %v5328 = vpop.f32.mrb[0].mxu0
      %v5329 = vadd.f32 %v5212, %v5328
      %v5330 = vpop.f32.mrb[0].mxu0
      %v5331 = vpop.f32.mrb[0].mxu0
      %v5332 = vadd.f32 %v5212, %v5331
      %v5333 = vpop.f32.mrb[0].mxu0
      %5334 = vmatprep.mubr.bf16.mxu0 0
      %5335 = vmatmul.mubr.bf16.gmra.mrb[0].mxu0 %v5250
      %v5336 = vpop.f32.mrb[0].mxu0
      %v5337 = vadd.f32 %v5212, %v5336
      %v5338 = vpop.f32.mrb[0].mxu0
      %v5339 = vpop.f32.mrb[0].mxu0
      %v5340 = vadd.f32 %v5212, %v5339
      %v5341 = vpop.f32.mrb[0].mxu0
      %5342 = vmatprep.mubr.bf16.mxu0 0
      %5343 = vmatmul.mubr.bf16.gmra.mrb[0].mxu0 %v5252
      %v5344 = vpop.f32.mrb[0].mxu0
      %v5345 = vadd.f32 %v5212, %v5344
      %v5346 = vpop.f32.mrb[0].mxu0
      %v5347 = vpop.f32.mrb[0].mxu0
      %v5348 = vadd.f32 %v5212, %v5347
      %v5349 = vpop.f32.mrb[0].mxu0
      %5350 = vdwg.mxu0
      %v5351 = vxor.u32 %v5289, 2147483648
      %v5352 = vxor.u32 %v5292, 2147483648
      %v5353 = vxor.u32 %v5297, 2147483648
      %v5354 = vxor.u32 %v5300, 2147483648
      %v5355 = vxor.u32 %v5305, 2147483648
      %v5356 = vxor.u32 %v5308, 2147483648
      %v5357 = vxor.u32 %v5313, 2147483648
      %v5358 = vxor.u32 %v5316, 2147483648
      %v5359 = vxor.u32 %v5321, 2147483648
      %v5360 = vxor.u32 %v5324, 2147483648
      %v5361 = vxor.u32 %v5329, 2147483648
      %v5362 = vxor.u32 %v5332, 2147483648
      %v5363 = vxor.u32 %v5337, 2147483648
      %v5364 = vxor.u32 %v5340, 2147483648
      %v5365 = vxor.u32 %v5345, 2147483648
      %v5366 = vxor.u32 %v5348, 2147483648
      %v5367 = vmul.f32 %v5351, 1.442695
      %v5368 = vpow.pop %v5367
      %v5369 = vmul.f32 %v5352, 1.442695
      %v5370 = vpow.pop %v5369
      %v5371 = vmul.f32 %v5353, 1.442695
      %v5372 = vpow.pop %v5371
      %v5373 = vmul.f32 %v5354, 1.442695
      %v5374 = vpow.pop %v5373
      %v5375 = vmul.f32 %v5355, 1.442695
      %v5376 = vpow.pop %v5375
      %v5377 = vmul.f32 %v5356, 1.442695
      %v5378 = vpow.pop %v5377
      %v5379 = vmul.f32 %v5357, 1.442695
      %v5380 = vpow.pop %v5379
      %v5381 = vmul.f32 %v5358, 1.442695
      %v5382 = vpow.pop %v5381
      %v5383 = vmul.f32 %v5359, 1.442695
      %v5384 = vpow.pop %v5383
      %v5385 = vmul.f32 %v5360, 1.442695
      %v5386 = vpow.pop %v5385
      %v5387 = vmul.f32 %v5361, 1.442695
      %v5388 = vpow.pop %v5387
      %v5389 = vmul.f32 %v5362, 1.442695
      %v5390 = vpow.pop %v5389
      %v5391 = vmul.f32 %v5363, 1.442695
      %v5392 = vpow.pop %v5391
      %v5393 = vmul.f32 %v5364, 1.442695
      %v5394 = vpow.pop %v5393
      %v5395 = vmul.f32 %v5365, 1.442695
      %v5396 = vpow.pop %v5395
      %v5397 = vmul.f32 %v5366, 1.442695
      %v5398 = vpow.pop %v5397
      %v5399 = vadd.f32 %v5368, 1.0
      %v5400 = vadd.f32 %v5370, 1.0
      %v5401 = vadd.f32 %v5372, 1.0
      %v5402 = vadd.f32 %v5374, 1.0
      %v5403 = vadd.f32 %v5376, 1.0
      %v5404 = vadd.f32 %v5378, 1.0
      %v5405 = vadd.f32 %v5380, 1.0
      %v5406 = vadd.f32 %v5382, 1.0
      %v5407 = vadd.f32 %v5384, 1.0
      %v5408 = vadd.f32 %v5386, 1.0
      %v5409 = vadd.f32 %v5388, 1.0
      %v5410 = vadd.f32 %v5390, 1.0
      %v5411 = vadd.f32 %v5392, 1.0
      %v5412 = vadd.f32 %v5394, 1.0
      %v5413 = vadd.f32 %v5396, 1.0
      %v5414 = vadd.f32 %v5398, 1.0
      %v5415 = vrcp.pop %v5399
      %v5416 = vmul.f32 1.0, %v5415
      %v5417 = vrcp.pop %v5400
      %v5418 = vmul.f32 1.0, %v5417
      %v5419 = vrcp.pop %v5401
      %v5420 = vmul.f32 1.0, %v5419
      %v5421 = vrcp.pop %v5402
      %v5422 = vmul.f32 1.0, %v5421
      %v5423 = vrcp.pop %v5403
      %v5424 = vmul.f32 1.0, %v5423
      %v5425 = vrcp.pop %v5404
      %v5426 = vmul.f32 1.0, %v5425
      %v5427 = vrcp.pop %v5405
      %v5428 = vmul.f32 1.0, %v5427
      %v5429 = vrcp.pop %v5406
      %v5430 = vmul.f32 1.0, %v5429
      %v5431 = vrcp.pop %v5407
      %v5432 = vmul.f32 1.0, %v5431
      %v5433 = vrcp.pop %v5408
      %v5434 = vmul.f32 1.0, %v5433
      %v5435 = vrcp.pop %v5409
      %v5436 = vmul.f32 1.0, %v5435
      %v5437 = vrcp.pop %v5410
      %v5438 = vmul.f32 1.0, %v5437
      %v5439 = vrcp.pop %v5411
      %v5440 = vmul.f32 1.0, %v5439
      %v5441 = vrcp.pop %v5412
      %v5442 = vmul.f32 1.0, %v5441
      %v5443 = vrcp.pop %v5413
      %v5444 = vmul.f32 1.0, %v5443
      %v5445 = vrcp.pop %v5414
      %v5446 = vmul.f32 1.0, %v5445
      %5463 = vrot.lane.b32.xlu0 %v5033, 32
      %v5464 = vpop.permute.xlu0 %5463
      %5465 = vrot.lane.b32.xlu0 %v5036, 32
      %v5466 = vpop.permute.xlu0 %5465
      %5467 = vrot.lane.b32.xlu0 %v5041, 32
      %v5468 = vpop.permute.xlu0 %5467
      %5469 = vrot.lane.b32.xlu0 %v5044, 32
      %v5470 = vpop.permute.xlu0 %5469
      %5471 = vrot.lane.b32.xlu0 %v5049, 32
      %v5472 = vpop.permute.xlu0 %5471
      %5473 = vrot.lane.b32.xlu0 %v5052, 32
      %v5474 = vpop.permute.xlu0 %5473
      %5475 = vrot.lane.b32.xlu0 %v5057, 32
      %v5476 = vpop.permute.xlu0 %5475
      %5477 = vrot.lane.b32.xlu0 %v5060, 32
      %v5478 = vpop.permute.xlu0 %5477
      %5479 = vrot.lane.b32.xlu0 %v5065, 32
      %v5480 = vpop.permute.xlu0 %5479
      %5481 = vrot.lane.b32.xlu0 %v5068, 32
      %v5482 = vpop.permute.xlu0 %5481
      %5483 = vrot.lane.b32.xlu0 %v5073, 32
      %v5484 = vpop.permute.xlu0 %5483
      %5485 = vrot.lane.b32.xlu0 %v5076, 32
      %v5486 = vpop.permute.xlu0 %5485
      %5487 = vrot.lane.b32.xlu0 %v5081, 32
      %v5488 = vpop.permute.xlu0 %5487
      %5489 = vrot.lane.b32.xlu0 %v5084, 32
      %v5490 = vpop.permute.xlu0 %5489
      %5491 = vrot.lane.b32.xlu0 %v5089, 32
      %v5492 = vpop.permute.xlu0 %5491
      %5493 = vrot.lane.b32.xlu0 %v5092, 32
      %v5494 = vpop.permute.xlu0 %5493
      %v5511 = vsub.f32 %v5289, %v5464
      %v5512 = vsub.f32 %v5292, %v5466
      %v5513 = vsub.f32 %v5297, %v5468
      %v5514 = vsub.f32 %v5300, %v5470
      %v5515 = vsub.f32 %v5305, %v5472
      %v5516 = vsub.f32 %v5308, %v5474
      %v5517 = vsub.f32 %v5313, %v5476
      %v5518 = vsub.f32 %v5316, %v5478
      %v5519 = vsub.f32 %v5321, %v5480
      %v5520 = vsub.f32 %v5324, %v5482
      %v5521 = vsub.f32 %v5329, %v5484
      %v5522 = vsub.f32 %v5332, %v5486
      %v5523 = vsub.f32 %v5337, %v5488
      %v5524 = vsub.f32 %v5340, %v5490
      %v5525 = vsub.f32 %v5345, %v5492
      %v5526 = vsub.f32 %v5348, %v5494
      %5543 = vrot.lane.b32.xlu0 %v5511, 96
      %v5544 = vpop.permute.xlu0 %5543
      %5545 = vrot.lane.b32.xlu0 %v5512, 96
      %v5546 = vpop.permute.xlu0 %5545
      %5547 = vrot.lane.b32.xlu0 %v5513, 96
      %v5548 = vpop.permute.xlu0 %5547
      %5549 = vrot.lane.b32.xlu0 %v5514, 96
      %v5550 = vpop.permute.xlu0 %5549
      %5551 = vrot.lane.b32.xlu0 %v5515, 96
      %v5552 = vpop.permute.xlu0 %5551
      %5553 = vrot.lane.b32.xlu0 %v5516, 96
      %v5554 = vpop.permute.xlu0 %5553
      %5555 = vrot.lane.b32.xlu0 %v5517, 96
      %v5556 = vpop.permute.xlu0 %5555
      %5557 = vrot.lane.b32.xlu0 %v5518, 96
      %v5558 = vpop.permute.xlu0 %5557
      %5559 = vrot.lane.b32.xlu0 %v5519, 96
      %v5560 = vpop.permute.xlu0 %5559
      %5561 = vrot.lane.b32.xlu0 %v5520, 96
      %v5562 = vpop.permute.xlu0 %5561
      %5563 = vrot.lane.b32.xlu0 %v5521, 96
      %v5564 = vpop.permute.xlu0 %5563
      %5565 = vrot.lane.b32.xlu0 %v5522, 96
      %v5566 = vpop.permute.xlu0 %5565
      %5567 = vrot.lane.b32.xlu0 %v5523, 96
      %v5568 = vpop.permute.xlu0 %5567
      %5569 = vrot.lane.b32.xlu0 %v5524, 96
      %v5570 = vpop.permute.xlu0 %5569
      %5571 = vrot.lane.b32.xlu0 %v5525, 96
      %v5572 = vpop.permute.xlu0 %5571
      %5573 = vrot.lane.b32.xlu0 %v5526, 96
      %v5574 = vpop.permute.xlu0 %5573
      %v5591 = vmul.f32 %v5416, %v5544
      %v5592 = vmul.f32 %v5418, %v5546
      %v5593 = vmul.f32 %v5420, %v5548
      %v5594 = vmul.f32 %v5422, %v5550
      %v5595 = vmul.f32 %v5424, %v5552
      %v5596 = vmul.f32 %v5426, %v5554
      %v5597 = vmul.f32 %v5428, %v5556
      %v5598 = vmul.f32 %v5430, %v5558
      %v5599 = vmul.f32 %v5432, %v5560
      %v5600 = vmul.f32 %v5434, %v5562
      %v5601 = vmul.f32 %v5436, %v5564
      %v5602 = vmul.f32 %v5438, %v5566
      %v5603 = vmul.f32 %v5440, %v5568
      %v5604 = vmul.f32 %v5442, %v5570
      %v5605 = vmul.f32 %v5444, %v5572
      %v5606 = vmul.f32 %v5446, %v5574
      %v5607 = vadd.f32 %v5033, %v5591
      %v5608 = vadd.f32 %v5036, %v5592
      %v5609 = vadd.f32 %v5041, %v5593
      %v5610 = vadd.f32 %v5044, %v5594
      %v5611 = vadd.f32 %v5049, %v5595
      %v5612 = vadd.f32 %v5052, %v5596
      %v5613 = vadd.f32 %v5057, %v5597
      %v5614 = vadd.f32 %v5060, %v5598
      %v5615 = vadd.f32 %v5065, %v5599
      %v5616 = vadd.f32 %v5068, %v5600
      %v5617 = vadd.f32 %v5073, %v5601
      %v5618 = vadd.f32 %v5076, %v5602
      %v5619 = vadd.f32 %v5081, %v5603
      %v5620 = vadd.f32 %v5084, %v5604
      %v5621 = vadd.f32 %v5089, %v5605
      %v5622 = vadd.f32 %v5092, %v5606
      %s5623 = scalar_lea.vmem %s9, 32
      %v5624 = vld [vmem:[%s5623] sm:$0xf]
      %v5625 = vld [vmem:[%s5623 + $0x4] sm:$0xf]
      %v5626 = vld [vmem:[%s5623 + $0x8] sm:$0xf]
      %v5627 = vld [vmem:[%s5623 + $0xc] sm:$0xf]
      %v5628 = vld [vmem:[%s5623 + $0x10] sm:$0xf]
      %v5629 = vld [vmem:[%s5623 + $0x14] sm:$0xf]
      %v5630 = vld [vmem:[%s5623 + $0x18] sm:$0xf]
      %v5631 = vld [vmem:[%s5623 + $0x1c] sm:$0xf]
      %s5632 = scalar_lea.vmem %s10, 1
      %v5633 = vld [vmem:[%s5632] sm:$0x1]
      %v5634 = vpack.c.bf16 %v5608, %v5607
      %v5635 = vpack.c.bf16 %v5610, %v5609
      %v5636 = vpack.c.bf16 %v5612, %v5611
      %v5637 = vpack.c.bf16 %v5614, %v5613
      %v5638 = vpack.c.bf16 %v5616, %v5615
      %v5639 = vpack.c.bf16 %v5618, %v5617
      %v5640 = vpack.c.bf16 %v5620, %v5619
      %v5641 = vpack.c.bf16 %v5622, %v5621
      %v5642 = vrot.slane %v5607, 6
      %v5643 = vrot.slane %v5608, 6
      %v5644 = vrot.slane %v5609, 6
      %v5645 = vrot.slane %v5610, 6
      %v5646 = vrot.slane %v5611, 6
      %v5647 = vrot.slane %v5612, 6
      %v5648 = vrot.slane %v5613, 6
      %v5649 = vrot.slane %v5614, 6
      %v5650 = vrot.slane %v5615, 6
      %v5651 = vrot.slane %v5616, 6
      %v5652 = vrot.slane %v5617, 6
      %v5653 = vrot.slane %v5618, 6
      %v5654 = vrot.slane %v5619, 6
      %v5655 = vrot.slane %v5620, 6
      %v5656 = vrot.slane %v5621, 6
      %v5657 = vrot.slane %v5622, 6
      %v5658 = vsel %vm2076, %v5656, %v5657
      %v5659 = vsel %vm2076, %v5655, %v5656
      %v5660 = vsel %vm2076, %v5654, %v5655
      %v5661 = vsel %vm2076, %v5653, %v5654
      %v5662 = vsel %vm2076, %v5652, %v5653
      %v5663 = vsel %vm2076, %v5651, %v5652
      %v5664 = vsel %vm2076, %v5650, %v5651
      %v5665 = vsel %vm2076, %v5649, %v5650
      %v5666 = vsel %vm2076, %v5648, %v5649
      %v5667 = vsel %vm2076, %v5647, %v5648
      %v5668 = vsel %vm2076, %v5646, %v5647
      %v5669 = vsel %vm2076, %v5645, %v5646
      %v5670 = vsel %vm2076, %v5644, %v5645
      %v5671 = vsel %vm2076, %v5643, %v5644
      %v5672 = vsel %vm2076, %v5642, %v5643
      %v5673 = vsel %vm2076, %v5657, %v5642
      %v5674 = vpack.c.bf16 %v5672, %v5673
      %v5675 = vpack.c.bf16 %v5670, %v5671
      %v5676 = vpack.c.bf16 %v5668, %v5669
      %v5677 = vpack.c.bf16 %v5666, %v5667
      %v5678 = vpack.c.bf16 %v5664, %v5665
      %v5679 = vpack.c.bf16 %v5662, %v5663
      %v5680 = vpack.c.bf16 %v5660, %v5661
      %v5681 = vpack.c.bf16 %v5658, %v5659
      %v5682 = vmul.bf16 %v5674, %v974
      %v5683 = vmul.bf16 %v5675, %v975
      %v5684 = vmul.bf16 %v5676, %v976
      %v5685 = vmul.bf16 %v5677, %v977
      %v5686 = vmul.bf16 %v5678, %v978
      %v5687 = vmul.bf16 %v5679, %v979
      %v5688 = vmul.bf16 %v5680, %v980
      %v5689 = vmul.bf16 %v5681, %v981
      %5698 = vrot.lane.b32.xlu0 %v5682, 32
      %v5699 = vpop.permute.xlu0 %5698
      %5700 = vrot.lane.b32.xlu0 %v5683, 32
      %v5701 = vpop.permute.xlu0 %5700
      %5702 = vrot.lane.b32.xlu0 %v5684, 32
      %v5703 = vpop.permute.xlu0 %5702
      %5704 = vrot.lane.b32.xlu0 %v5685, 32
      %v5705 = vpop.permute.xlu0 %5704
      %5706 = vrot.lane.b32.xlu0 %v5686, 32
      %v5707 = vpop.permute.xlu0 %5706
      %5708 = vrot.lane.b32.xlu0 %v5687, 32
      %v5709 = vpop.permute.xlu0 %5708
      %5710 = vrot.lane.b32.xlu0 %v5688, 32
      %v5711 = vpop.permute.xlu0 %5710
      %5712 = vrot.lane.b32.xlu0 %v5689, 32
      %v5713 = vpop.permute.xlu0 %5712
      %v5716 = vsel %vm1389, %v5634, %v5699
      %v5719 = vsel %vm1389, %v5635, %v5701
      %v5722 = vsel %vm1389, %v5636, %v5703
      %v5725 = vsel %vm1389, %v5637, %v5705
      %v5728 = vsel %vm1389, %v5638, %v5707
      %v5731 = vsel %vm1389, %v5639, %v5709
      %v5734 = vsel %vm1389, %v5640, %v5711
      %v5737 = vsel %vm1389, %v5641, %v5713
      %v5739 = vlaneseq
      %v5740 = vshrl.u32 %v5739, 7
      %v5741 = vsub.s32 0, %v5740
      %v5742 = vrot.slane %v5633, %v5741
      %v5752 = vunpack.c.l.b16 %v5624
      %v5753 = vunpack.c.l.b16 %v5625
      %v5754 = vunpack.c.l.b16 %v5626
      %v5755 = vunpack.c.l.b16 %v5627
      %v5756 = vunpack.c.l.b16 %v5628
      %v5757 = vunpack.c.l.b16 %v5629
      %v5758 = vunpack.c.l.b16 %v5630
      %v5759 = vunpack.c.l.b16 %v5631
      %v5760 = vpack.c.b16 %v5753, %v5752
      %v5761 = vpack.c.b16 %v5755, %v5754
      %v5762 = vpack.c.b16 %v5757, %v5756
      %v5763 = vpack.c.b16 %v5759, %v5758
      %v5768 = vsel %vm1655, %v5716, 0
      %v5770 = vsel %vm1655, %v5719, 0
      %v5772 = vsel %vm1655, %v5722, 0
      %v5774 = vsel %vm1655, %v5725, 0
      %v5776 = vsel %vm1655, %v5728, 0
      %v5778 = vsel %vm1655, %v5731, 0
      %v5780 = vsel %vm1655, %v5734, 0
      %v5782 = vsel %vm1655, %v5737, 0
      %5784 = vmatprep.subr.bf16.mxu0 0
      %5785 = vmatpush1.bf16.msra.mxu0 %v5760
      %5786 = vmatprep.subr.bf16.mxu0 0
      %5787 = vmatpush1.bf16.msra.mxu0 %v5761
      %5788 = vmatprep.subr.bf16.mxu0 0
      %5789 = vmatpush1.bf16.msra.mxu0 %v5762
      %5790 = vmatprep.subr.bf16.mxu0 0
      %5791 = vmatpush1.bf16.msra.mxu0 %v5763
      %5792 = vmatprep.subr.bf16.mxu0 0
      %5793 = vmatpush1.bf16.msra.mxu0 0
      %5794 = vmatprep.subr.bf16.mxu0 0
      %5795 = vmatpush1.bf16.msra.mxu0 0
      %5796 = vmatprep.subr.bf16.mxu0 0
      %5797 = vmatpush1.bf16.msra.mxu0 0
      %5798 = vmatprep.subr.bf16.mxu0 0
      %5799 = vmatpush1.bf16.msra.mxu0 0
      %5800 = vmatprep.subr.bf16.mxu0 0
      %5801 = vmatpush1.bf16.msra.mxu0 0
      %5802 = vmatprep.subr.bf16.mxu0 0
      %5803 = vmatpush1.bf16.msra.mxu0 0
      %5804 = vmatprep.subr.bf16.mxu0 0
      %5805 = vmatpush1.bf16.msra.mxu0 0
      %5806 = vmatprep.subr.bf16.mxu0 0
      %5807 = vmatpush1.bf16.msra.mxu0 0
      %5808 = vmatprep.subr.bf16.mxu0 0
      %5809 = vmatpush1.bf16.msra.mxu0 0
      %5810 = vmatprep.subr.bf16.mxu0 0
      %5811 = vmatpush1.bf16.msra.mxu0 0
      %5812 = vmatprep.subr.bf16.mxu0 0
      %5813 = vmatpush1.bf16.msra.mxu0 0
      %5814 = vmatprep.subr.bf16.mxu0 0
      %5815 = vmatpush1.bf16.msra.mxu0 0
      %5816 = vmatprep.mubr.bf16.mxu0 0
      %5817 = vmatmul.mubr.bf16.gmra.mrb[0].mxu0 %v5768
      %v5818 = vpop.f32.mrb[0].mxu0
      %v5819 = vadd.f32 %v5742, %v5818
      %v5820 = vpop.f32.mrb[0].mxu0
      %v5821 = vpop.f32.mrb[0].mxu0
      %v5822 = vadd.f32 %v5742, %v5821
      %v5823 = vpop.f32.mrb[0].mxu0
      %5824 = vmatprep.mubr.bf16.mxu0 0
      %5825 = vmatmul.mubr.bf16.gmra.mrb[0].mxu0 %v5770
      %v5826 = vpop.f32.mrb[0].mxu0
      %v5827 = vadd.f32 %v5742, %v5826
      %v5828 = vpop.f32.mrb[0].mxu0
      %v5829 = vpop.f32.mrb[0].mxu0
      %v5830 = vadd.f32 %v5742, %v5829
      %v5831 = vpop.f32.mrb[0].mxu0
      %5832 = vmatprep.mubr.bf16.mxu0 0
      %5833 = vmatmul.mubr.bf16.gmra.mrb[0].mxu0 %v5772
      %v5834 = vpop.f32.mrb[0].mxu0
      %v5835 = vadd.f32 %v5742, %v5834
      %v5836 = vpop.f32.mrb[0].mxu0
      %v5837 = vpop.f32.mrb[0].mxu0
      %v5838 = vadd.f32 %v5742, %v5837
      %v5839 = vpop.f32.mrb[0].mxu0
      %5840 = vmatprep.mubr.bf16.mxu0 0
      %5841 = vmatmul.mubr.bf16.gmra.mrb[0].mxu0 %v5774
      %v5842 = vpop.f32.mrb[0].mxu0
      %v5843 = vadd.f32 %v5742, %v5842
      %v5844 = vpop.f32.mrb[0].mxu0
      %v5845 = vpop.f32.mrb[0].mxu0
      %v5846 = vadd.f32 %v5742, %v5845
      %v5847 = vpop.f32.mrb[0].mxu0
      %5848 = vmatprep.mubr.bf16.mxu0 0
      %5849 = vmatmul.mubr.bf16.gmra.mrb[0].mxu0 %v5776
      %v5850 = vpop.f32.mrb[0].mxu0
      %v5851 = vadd.f32 %v5742, %v5850
      %v5852 = vpop.f32.mrb[0].mxu0
      %v5853 = vpop.f32.mrb[0].mxu0
      %v5854 = vadd.f32 %v5742, %v5853
      %v5855 = vpop.f32.mrb[0].mxu0
      %5856 = vmatprep.mubr.bf16.mxu0 0
      %5857 = vmatmul.mubr.bf16.gmra.mrb[0].mxu0 %v5778
      %v5858 = vpop.f32.mrb[0].mxu0
      %v5859 = vadd.f32 %v5742, %v5858
      %v5860 = vpop.f32.mrb[0].mxu0
      %v5861 = vpop.f32.mrb[0].mxu0
      %v5862 = vadd.f32 %v5742, %v5861
      %v5863 = vpop.f32.mrb[0].mxu0
      %5864 = vmatprep.mubr.bf16.mxu0 0
      %5865 = vmatmul.mubr.bf16.gmra.mrb[0].mxu0 %v5780
      %v5866 = vpop.f32.mrb[0].mxu0
      %v5867 = vadd.f32 %v5742, %v5866
      %v5868 = vpop.f32.mrb[0].mxu0
      %v5869 = vpop.f32.mrb[0].mxu0
      %v5870 = vadd.f32 %v5742, %v5869
      %v5871 = vpop.f32.mrb[0].mxu0
      %5872 = vmatprep.mubr.bf16.mxu0 0
      %5873 = vmatmul.mubr.bf16.gmra.mrb[0].mxu0 %v5782
      %v5874 = vpop.f32.mrb[0].mxu0
      %v5875 = vadd.f32 %v5742, %v5874
      %v5876 = vpop.f32.mrb[0].mxu0
      %v5877 = vpop.f32.mrb[0].mxu0
      %v5878 = vadd.f32 %v5742, %v5877
      %v5879 = vpop.f32.mrb[0].mxu0
      %5880 = vdwg.mxu0
      %v5881 = vxor.u32 %v5819, 2147483648
      %v5882 = vxor.u32 %v5822, 2147483648
      %v5883 = vxor.u32 %v5827, 2147483648
      %v5884 = vxor.u32 %v5830, 2147483648
      %v5885 = vxor.u32 %v5835, 2147483648
      %v5886 = vxor.u32 %v5838, 2147483648
      %v5887 = vxor.u32 %v5843, 2147483648
      %v5888 = vxor.u32 %v5846, 2147483648
      %v5889 = vxor.u32 %v5851, 2147483648
      %v5890 = vxor.u32 %v5854, 2147483648
      %v5891 = vxor.u32 %v5859, 2147483648
      %v5892 = vxor.u32 %v5862, 2147483648
      %v5893 = vxor.u32 %v5867, 2147483648
      %v5894 = vxor.u32 %v5870, 2147483648
      %v5895 = vxor.u32 %v5875, 2147483648
      %v5896 = vxor.u32 %v5878, 2147483648
      %v5897 = vmul.f32 %v5881, 1.442695
      %v5898 = vpow.pop %v5897
      %v5899 = vmul.f32 %v5882, 1.442695
      %v5900 = vpow.pop %v5899
      %v5901 = vmul.f32 %v5883, 1.442695
      %v5902 = vpow.pop %v5901
      %v5903 = vmul.f32 %v5884, 1.442695
      %v5904 = vpow.pop %v5903
      %v5905 = vmul.f32 %v5885, 1.442695
      %v5906 = vpow.pop %v5905
      %v5907 = vmul.f32 %v5886, 1.442695
      %v5908 = vpow.pop %v5907
      %v5909 = vmul.f32 %v5887, 1.442695
      %v5910 = vpow.pop %v5909
      %v5911 = vmul.f32 %v5888, 1.442695
      %v5912 = vpow.pop %v5911
      %v5913 = vmul.f32 %v5889, 1.442695
      %v5914 = vpow.pop %v5913
      %v5915 = vmul.f32 %v5890, 1.442695
      %v5916 = vpow.pop %v5915
      %v5917 = vmul.f32 %v5891, 1.442695
      %v5918 = vpow.pop %v5917
      %v5919 = vmul.f32 %v5892, 1.442695
      %v5920 = vpow.pop %v5919
      %v5921 = vmul.f32 %v5893, 1.442695
      %v5922 = vpow.pop %v5921
      %v5923 = vmul.f32 %v5894, 1.442695
      %v5924 = vpow.pop %v5923
      %v5925 = vmul.f32 %v5895, 1.442695
      %v5926 = vpow.pop %v5925
      %v5927 = vmul.f32 %v5896, 1.442695
      %v5928 = vpow.pop %v5927
      %v5929 = vadd.f32 %v5898, 1.0
      %v5930 = vadd.f32 %v5900, 1.0
      %v5931 = vadd.f32 %v5902, 1.0
      %v5932 = vadd.f32 %v5904, 1.0
      %v5933 = vadd.f32 %v5906, 1.0
      %v5934 = vadd.f32 %v5908, 1.0
      %v5935 = vadd.f32 %v5910, 1.0
      %v5936 = vadd.f32 %v5912, 1.0
      %v5937 = vadd.f32 %v5914, 1.0
      %v5938 = vadd.f32 %v5916, 1.0
      %v5939 = vadd.f32 %v5918, 1.0
      %v5940 = vadd.f32 %v5920, 1.0
      %v5941 = vadd.f32 %v5922, 1.0
      %v5942 = vadd.f32 %v5924, 1.0
      %v5943 = vadd.f32 %v5926, 1.0
      %v5944 = vadd.f32 %v5928, 1.0
      %v5945 = vrcp.pop %v5929
      %v5946 = vmul.f32 1.0, %v5945
      %v5947 = vrcp.pop %v5930
      %v5948 = vmul.f32 1.0, %v5947
      %v5949 = vrcp.pop %v5931
      %v5950 = vmul.f32 1.0, %v5949
      %v5951 = vrcp.pop %v5932
      %v5952 = vmul.f32 1.0, %v5951
      %v5953 = vrcp.pop %v5933
      %v5954 = vmul.f32 1.0, %v5953
      %v5955 = vrcp.pop %v5934
      %v5956 = vmul.f32 1.0, %v5955
      %v5957 = vrcp.pop %v5935
      %v5958 = vmul.f32 1.0, %v5957
      %v5959 = vrcp.pop %v5936
      %v5960 = vmul.f32 1.0, %v5959
      %v5961 = vrcp.pop %v5937
      %v5962 = vmul.f32 1.0, %v5961
      %v5963 = vrcp.pop %v5938
      %v5964 = vmul.f32 1.0, %v5963
      %v5965 = vrcp.pop %v5939
      %v5966 = vmul.f32 1.0, %v5965
      %v5967 = vrcp.pop %v5940
      %v5968 = vmul.f32 1.0, %v5967
      %v5969 = vrcp.pop %v5941
      %v5970 = vmul.f32 1.0, %v5969
      %v5971 = vrcp.pop %v5942
      %v5972 = vmul.f32 1.0, %v5971
      %v5973 = vrcp.pop %v5943
      %v5974 = vmul.f32 1.0, %v5973
      %v5975 = vrcp.pop %v5944
      %v5976 = vmul.f32 1.0, %v5975
      %5993 = vrot.lane.b32.xlu0 %v5607, 32
      %v5994 = vpop.permute.xlu0 %5993
      %5995 = vrot.lane.b32.xlu0 %v5608, 32
      %v5996 = vpop.permute.xlu0 %5995
      %5997 = vrot.lane.b32.xlu0 %v5609, 32
      %v5998 = vpop.permute.xlu0 %5997
      %5999 = vrot.lane.b32.xlu0 %v5610, 32
      %v6000 = vpop.permute.xlu0 %5999
      %6001 = vrot.lane.b32.xlu0 %v5611, 32
      %v6002 = vpop.permute.xlu0 %6001
      %6003 = vrot.lane.b32.xlu0 %v5612, 32
      %v6004 = vpop.permute.xlu0 %6003
      %6005 = vrot.lane.b32.xlu0 %v5613, 32
      %v6006 = vpop.permute.xlu0 %6005
      %6007 = vrot.lane.b32.xlu0 %v5614, 32
      %v6008 = vpop.permute.xlu0 %6007
      %6009 = vrot.lane.b32.xlu0 %v5615, 32
      %v6010 = vpop.permute.xlu0 %6009
      %6011 = vrot.lane.b32.xlu0 %v5616, 32
      %v6012 = vpop.permute.xlu0 %6011
      %6013 = vrot.lane.b32.xlu0 %v5617, 32
      %v6014 = vpop.permute.xlu0 %6013
      %6015 = vrot.lane.b32.xlu0 %v5618, 32
      %v6016 = vpop.permute.xlu0 %6015
      %6017 = vrot.lane.b32.xlu0 %v5619, 32
      %v6018 = vpop.permute.xlu0 %6017
      %6019 = vrot.lane.b32.xlu0 %v5620, 32
      %v6020 = vpop.permute.xlu0 %6019
      %6021 = vrot.lane.b32.xlu0 %v5621, 32
      %v6022 = vpop.permute.xlu0 %6021
      %6023 = vrot.lane.b32.xlu0 %v5622, 32
      %v6024 = vpop.permute.xlu0 %6023
      %v6041 = vsub.f32 %v5819, %v5994
      %v6042 = vsub.f32 %v5822, %v5996
      %v6043 = vsub.f32 %v5827, %v5998
      %v6044 = vsub.f32 %v5830, %v6000
      %v6045 = vsub.f32 %v5835, %v6002
      %v6046 = vsub.f32 %v5838, %v6004
      %v6047 = vsub.f32 %v5843, %v6006
      %v6048 = vsub.f32 %v5846, %v6008
      %v6049 = vsub.f32 %v5851, %v6010
      %v6050 = vsub.f32 %v5854, %v6012
      %v6051 = vsub.f32 %v5859, %v6014
      %v6052 = vsub.f32 %v5862, %v6016
      %v6053 = vsub.f32 %v5867, %v6018
      %v6054 = vsub.f32 %v5870, %v6020
      %v6055 = vsub.f32 %v5875, %v6022
      %v6056 = vsub.f32 %v5878, %v6024
      %6073 = vrot.lane.b32.xlu0 %v6041, 96
      %v6074 = vpop.permute.xlu0 %6073
      %6075 = vrot.lane.b32.xlu0 %v6042, 96
      %v6076 = vpop.permute.xlu0 %6075
      %6077 = vrot.lane.b32.xlu0 %v6043, 96
      %v6078 = vpop.permute.xlu0 %6077
      %6079 = vrot.lane.b32.xlu0 %v6044, 96
      %v6080 = vpop.permute.xlu0 %6079
      %6081 = vrot.lane.b32.xlu0 %v6045, 96
      %v6082 = vpop.permute.xlu0 %6081
      %6083 = vrot.lane.b32.xlu0 %v6046, 96
      %v6084 = vpop.permute.xlu0 %6083
      %6085 = vrot.lane.b32.xlu0 %v6047, 96
      %v6086 = vpop.permute.xlu0 %6085
      %6087 = vrot.lane.b32.xlu0 %v6048, 96
      %v6088 = vpop.permute.xlu0 %6087
      %6089 = vrot.lane.b32.xlu0 %v6049, 96
      %v6090 = vpop.permute.xlu0 %6089
      %6091 = vrot.lane.b32.xlu0 %v6050, 96
      %v6092 = vpop.permute.xlu0 %6091
      %6093 = vrot.lane.b32.xlu0 %v6051, 96
      %v6094 = vpop.permute.xlu0 %6093
      %6095 = vrot.lane.b32.xlu0 %v6052, 96
      %v6096 = vpop.permute.xlu0 %6095
      %6097 = vrot.lane.b32.xlu0 %v6053, 96
      %v6098 = vpop.permute.xlu0 %6097
      %6099 = vrot.lane.b32.xlu0 %v6054, 96
      %v6100 = vpop.permute.xlu0 %6099
      %6101 = vrot.lane.b32.xlu0 %v6055, 96
      %v6102 = vpop.permute.xlu0 %6101
      %6103 = vrot.lane.b32.xlu0 %v6056, 96
      %v6104 = vpop.permute.xlu0 %6103
      %v6121 = vmul.f32 %v5946, %v6074
      %v6122 = vmul.f32 %v5948, %v6076
      %v6123 = vmul.f32 %v5950, %v6078
      %v6124 = vmul.f32 %v5952, %v6080
      %v6125 = vmul.f32 %v5954, %v6082
      %v6126 = vmul.f32 %v5956, %v6084
      %v6127 = vmul.f32 %v5958, %v6086
      %v6128 = vmul.f32 %v5960, %v6088
      %v6129 = vmul.f32 %v5962, %v6090
      %v6130 = vmul.f32 %v5964, %v6092
      %v6131 = vmul.f32 %v5966, %v6094
      %v6132 = vmul.f32 %v5968, %v6096
      %v6133 = vmul.f32 %v5970, %v6098
      %v6134 = vmul.f32 %v5972, %v6100
      %v6135 = vmul.f32 %v5974, %v6102
      %v6136 = vmul.f32 %v5976, %v6104
      %v6137 = vadd.f32 %v5607, %v6121
      %v6138 = vadd.f32 %v5608, %v6122
      %v6139 = vadd.f32 %v5609, %v6123
      %v6140 = vadd.f32 %v5610, %v6124
      %v6141 = vadd.f32 %v5611, %v6125
      %v6142 = vadd.f32 %v5612, %v6126
      %v6143 = vadd.f32 %v5613, %v6127
      %v6144 = vadd.f32 %v5614, %v6128
      %v6145 = vadd.f32 %v5615, %v6129
      %v6146 = vadd.f32 %v5616, %v6130
      %v6147 = vadd.f32 %v5617, %v6131
      %v6148 = vadd.f32 %v5618, %v6132
      %v6149 = vadd.f32 %v5619, %v6133
      %v6150 = vadd.f32 %v5620, %v6134
      %v6151 = vadd.f32 %v5621, %v6135
      %v6152 = vadd.f32 %v5622, %v6136
      %s6153 = scalar_lea.vmem %s9, 64
      %v6154 = vld [vmem:[%s6153] sm:$0xf]
      %v6155 = vld [vmem:[%s6153 + $0x4] sm:$0xf]
      %v6156 = vld [vmem:[%s6153 + $0x8] sm:$0xf]
      %v6157 = vld [vmem:[%s6153 + $0xc] sm:$0xf]
      %v6158 = vld [vmem:[%s6153 + $0x10] sm:$0xf]
      %v6159 = vld [vmem:[%s6153 + $0x14] sm:$0xf]
      %v6160 = vld [vmem:[%s6153 + $0x18] sm:$0xf]
      %v6161 = vld [vmem:[%s6153 + $0x1c] sm:$0xf]
      %s6162 = scalar_lea.vmem %s10, 2
      %v6163 = vld [vmem:[%s6162] sm:$0x1]
      %v6164 = vpack.c.bf16 %v6138, %v6137
      %v6165 = vpack.c.bf16 %v6140, %v6139
      %v6166 = vpack.c.bf16 %v6142, %v6141
      %v6167 = vpack.c.bf16 %v6144, %v6143
      %v6168 = vpack.c.bf16 %v6146, %v6145
      %v6169 = vpack.c.bf16 %v6148, %v6147
      %v6170 = vpack.c.bf16 %v6150, %v6149
      %v6171 = vpack.c.bf16 %v6152, %v6151
      %v6172 = vrot.slane %v6137, 4
      %v6173 = vrot.slane %v6138, 4
      %v6174 = vrot.slane %v6139, 4
      %v6175 = vrot.slane %v6140, 4
      %v6176 = vrot.slane %v6141, 4
      %v6177 = vrot.slane %v6142, 4
      %v6178 = vrot.slane %v6143, 4
      %v6179 = vrot.slane %v6144, 4
      %v6180 = vrot.slane %v6145, 4
      %v6181 = vrot.slane %v6146, 4
      %v6182 = vrot.slane %v6147, 4
      %v6183 = vrot.slane %v6148, 4
      %v6184 = vrot.slane %v6149, 4
      %v6185 = vrot.slane %v6150, 4
      %v6186 = vrot.slane %v6151, 4
      %v6187 = vrot.slane %v6152, 4
      %v6188 = vsel %vm2607, %v6186, %v6187
      %v6189 = vsel %vm2607, %v6185, %v6186
      %v6190 = vsel %vm2607, %v6184, %v6185
      %v6191 = vsel %vm2607, %v6183, %v6184
      %v6192 = vsel %vm2607, %v6182, %v6183
      %v6193 = vsel %vm2607, %v6181, %v6182
      %v6194 = vsel %vm2607, %v6180, %v6181
      %v6195 = vsel %vm2607, %v6179, %v6180
      %v6196 = vsel %vm2607, %v6178, %v6179
      %v6197 = vsel %vm2607, %v6177, %v6178
      %v6198 = vsel %vm2607, %v6176, %v6177
      %v6199 = vsel %vm2607, %v6175, %v6176
      %v6200 = vsel %vm2607, %v6174, %v6175
      %v6201 = vsel %vm2607, %v6173, %v6174
      %v6202 = vsel %vm2607, %v6172, %v6173
      %v6203 = vsel %vm2607, %v6187, %v6172
      %v6204 = vpack.c.bf16 %v6202, %v6203
      %v6205 = vpack.c.bf16 %v6200, %v6201
      %v6206 = vpack.c.bf16 %v6198, %v6199
      %v6207 = vpack.c.bf16 %v6196, %v6197
      %v6208 = vpack.c.bf16 %v6194, %v6195
      %v6209 = vpack.c.bf16 %v6192, %v6193
      %v6210 = vpack.c.bf16 %v6190, %v6191
      %v6211 = vpack.c.bf16 %v6188, %v6189
      %v6212 = vmul.bf16 %v6204, %v1030
      %v6213 = vmul.bf16 %v6205, %v1031
      %v6214 = vmul.bf16 %v6206, %v1032
      %v6215 = vmul.bf16 %v6207, %v1033
      %v6216 = vmul.bf16 %v6208, %v1034
      %v6217 = vmul.bf16 %v6209, %v1035
      %v6218 = vmul.bf16 %v6210, %v1036
      %v6219 = vmul.bf16 %v6211, %v1037
      %6228 = vrot.lane.b32.xlu0 %v6212, 32
      %v6229 = vpop.permute.xlu0 %6228
      %6230 = vrot.lane.b32.xlu0 %v6213, 32
      %v6231 = vpop.permute.xlu0 %6230
      %6232 = vrot.lane.b32.xlu0 %v6214, 32
      %v6233 = vpop.permute.xlu0 %6232
      %6234 = vrot.lane.b32.xlu0 %v6215, 32
      %v6235 = vpop.permute.xlu0 %6234
      %6236 = vrot.lane.b32.xlu0 %v6216, 32
      %v6237 = vpop.permute.xlu0 %6236
      %6238 = vrot.lane.b32.xlu0 %v6217, 32
      %v6239 = vpop.permute.xlu0 %6238
      %6240 = vrot.lane.b32.xlu0 %v6218, 32
      %v6241 = vpop.permute.xlu0 %6240
      %6242 = vrot.lane.b32.xlu0 %v6219, 32
      %v6243 = vpop.permute.xlu0 %6242
      %v6246 = vsel %vm1389, %v6164, %v6229
      %v6249 = vsel %vm1389, %v6165, %v6231
      %v6252 = vsel %vm1389, %v6166, %v6233
      %v6255 = vsel %vm1389, %v6167, %v6235
      %v6258 = vsel %vm1389, %v6168, %v6237
      %v6261 = vsel %vm1389, %v6169, %v6239
      %v6264 = vsel %vm1389, %v6170, %v6241
      %v6267 = vsel %vm1389, %v6171, %v6243
      %v6269 = vlaneseq
      %v6270 = vshrl.u32 %v6269, 7
      %v6271 = vsub.s32 0, %v6270
      %v6272 = vrot.slane %v6163, %v6271
      %v6282 = vunpack.c.l.b16 %v6154
      %v6283 = vunpack.c.l.b16 %v6155
      %v6284 = vunpack.c.l.b16 %v6156
      %v6285 = vunpack.c.l.b16 %v6157
      %v6286 = vunpack.c.l.b16 %v6158
      %v6287 = vunpack.c.l.b16 %v6159
      %v6288 = vunpack.c.l.b16 %v6160
      %v6289 = vunpack.c.l.b16 %v6161
      %v6290 = vpack.c.b16 %v6283, %v6282
      %v6291 = vpack.c.b16 %v6285, %v6284
      %v6292 = vpack.c.b16 %v6287, %v6286
      %v6293 = vpack.c.b16 %v6289, %v6288
      %v6298 = vsel %vm1655, %v6246, 0
      %v6300 = vsel %vm1655, %v6249, 0
      %v6302 = vsel %vm1655, %v6252, 0
      %v6304 = vsel %vm1655, %v6255, 0
      %v6306 = vsel %vm1655, %v6258, 0
      %v6308 = vsel %vm1655, %v6261, 0
      %v6310 = vsel %vm1655, %v6264, 0
      %v6312 = vsel %vm1655, %v6267, 0
      %6314 = vmatprep.subr.bf16.mxu0 0
      %6315 = vmatpush1.bf16.msra.mxu0 %v6290
      %6316 = vmatprep.subr.bf16.mxu0 0
      %6317 = vmatpush1.bf16.msra.mxu0 %v6291
      %6318 = vmatprep.subr.bf16.mxu0 0
      %6319 = vmatpush1.bf16.msra.mxu0 %v6292
      %6320 = vmatprep.subr.bf16.mxu0 0
      %6321 = vmatpush1.bf16.msra.mxu0 %v6293
      %6322 = vmatprep.subr.bf16.mxu0 0
      %6323 = vmatpush1.bf16.msra.mxu0 0
      %6324 = vmatprep.subr.bf16.mxu0 0
      %6325 = vmatpush1.bf16.msra.mxu0 0
      %6326 = vmatprep.subr.bf16.mxu0 0
      %6327 = vmatpush1.bf16.msra.mxu0 0
      %6328 = vmatprep.subr.bf16.mxu0 0
      %6329 = vmatpush1.bf16.msra.mxu0 0
      %6330 = vmatprep.subr.bf16.mxu0 0
      %6331 = vmatpush1.bf16.msra.mxu0 0
      %6332 = vmatprep.subr.bf16.mxu0 0
      %6333 = vmatpush1.bf16.msra.mxu0 0
      %6334 = vmatprep.subr.bf16.mxu0 0
      %6335 = vmatpush1.bf16.msra.mxu0 0
      %6336 = vmatprep.subr.bf16.mxu0 0
      %6337 = vmatpush1.bf16.msra.mxu0 0
      %6338 = vmatprep.subr.bf16.mxu0 0
      %6339 = vmatpush1.bf16.msra.mxu0 0
      %6340 = vmatprep.subr.bf16.mxu0 0
      %6341 = vmatpush1.bf16.msra.mxu0 0
      %6342 = vmatprep.subr.bf16.mxu0 0
      %6343 = vmatpush1.bf16.msra.mxu0 0
      %6344 = vmatprep.subr.bf16.mxu0 0
      %6345 = vmatpush1.bf16.msra.mxu0 0
      %6346 = vmatprep.mubr.bf16.mxu0 0
      %6347 = vmatmul.mubr.bf16.gmra.mrb[0].mxu0 %v6298
      %v6348 = vpop.f32.mrb[0].mxu0
      %v6349 = vadd.f32 %v6272, %v6348
      %v6350 = vpop.f32.mrb[0].mxu0
      %v6351 = vpop.f32.mrb[0].mxu0
      %v6352 = vadd.f32 %v6272, %v6351
      %v6353 = vpop.f32.mrb[0].mxu0
      %6354 = vmatprep.mubr.bf16.mxu0 0
      %6355 = vmatmul.mubr.bf16.gmra.mrb[0].mxu0 %v6300
      %v6356 = vpop.f32.mrb[0].mxu0
      %v6357 = vadd.f32 %v6272, %v6356
      %v6358 = vpop.f32.mrb[0].mxu0
      %v6359 = vpop.f32.mrb[0].mxu0
      %v6360 = vadd.f32 %v6272, %v6359
      %v6361 = vpop.f32.mrb[0].mxu0
      %6362 = vmatprep.mubr.bf16.mxu0 0
      %6363 = vmatmul.mubr.bf16.gmra.mrb[0].mxu0 %v6302
      %v6364 = vpop.f32.mrb[0].mxu0
      %v6365 = vadd.f32 %v6272, %v6364
      %v6366 = vpop.f32.mrb[0].mxu0
      %v6367 = vpop.f32.mrb[0].mxu0
      %v6368 = vadd.f32 %v6272, %v6367
      %v6369 = vpop.f32.mrb[0].mxu0
      %6370 = vmatprep.mubr.bf16.mxu0 0
      %6371 = vmatmul.mubr.bf16.gmra.mrb[0].mxu0 %v6304
      %v6372 = vpop.f32.mrb[0].mxu0
      %v6373 = vadd.f32 %v6272, %v6372
      %v6374 = vpop.f32.mrb[0].mxu0
      %v6375 = vpop.f32.mrb[0].mxu0
      %v6376 = vadd.f32 %v6272, %v6375
      %v6377 = vpop.f32.mrb[0].mxu0
      %6378 = vmatprep.mubr.bf16.mxu0 0
      %6379 = vmatmul.mubr.bf16.gmra.mrb[0].mxu0 %v6306
      %v6380 = vpop.f32.mrb[0].mxu0
      %v6381 = vadd.f32 %v6272, %v6380
      %v6382 = vpop.f32.mrb[0].mxu0
      %v6383 = vpop.f32.mrb[0].mxu0
      %v6384 = vadd.f32 %v6272, %v6383
      %v6385 = vpop.f32.mrb[0].mxu0
      %6386 = vmatprep.mubr.bf16.mxu0 0
      %6387 = vmatmul.mubr.bf16.gmra.mrb[0].mxu0 %v6308
      %v6388 = vpop.f32.mrb[0].mxu0
      %v6389 = vadd.f32 %v6272, %v6388
      %v6390 = vpop.f32.mrb[0].mxu0
      %v6391 = vpop.f32.mrb[0].mxu0
      %v6392 = vadd.f32 %v6272, %v6391
      %v6393 = vpop.f32.mrb[0].mxu0
      %6394 = vmatprep.mubr.bf16.mxu0 0
      %6395 = vmatmul.mubr.bf16.gmra.mrb[0].mxu0 %v6310
      %v6396 = vpop.f32.mrb[0].mxu0
      %v6397 = vadd.f32 %v6272, %v6396
      %v6398 = vpop.f32.mrb[0].mxu0
      %v6399 = vpop.f32.mrb[0].mxu0
      %v6400 = vadd.f32 %v6272, %v6399
      %v6401 = vpop.f32.mrb[0].mxu0
      %6402 = vmatprep.mubr.bf16.mxu0 0
      %6403 = vmatmul.mubr.bf16.gmra.mrb[0].mxu0 %v6312
      %v6404 = vpop.f32.mrb[0].mxu0
      %v6405 = vadd.f32 %v6272, %v6404
      %v6406 = vpop.f32.mrb[0].mxu0
      %v6407 = vpop.f32.mrb[0].mxu0
      %v6408 = vadd.f32 %v6272, %v6407
      %v6409 = vpop.f32.mrb[0].mxu0
      %6410 = vdwg.mxu0
      %v6411 = vxor.u32 %v6349, 2147483648
      %v6412 = vxor.u32 %v6352, 2147483648
      %v6413 = vxor.u32 %v6357, 2147483648
      %v6414 = vxor.u32 %v6360, 2147483648
      %v6415 = vxor.u32 %v6365, 2147483648
      %v6416 = vxor.u32 %v6368, 2147483648
      %v6417 = vxor.u32 %v6373, 2147483648
      %v6418 = vxor.u32 %v6376, 2147483648
      %v6419 = vxor.u32 %v6381, 2147483648
      %v6420 = vxor.u32 %v6384, 2147483648
      %v6421 = vxor.u32 %v6389, 2147483648
      %v6422 = vxor.u32 %v6392, 2147483648
      %v6423 = vxor.u32 %v6397, 2147483648
      %v6424 = vxor.u32 %v6400, 2147483648
      %v6425 = vxor.u32 %v6405, 2147483648
      %v6426 = vxor.u32 %v6408, 2147483648
      %v6427 = vmul.f32 %v6411, 1.442695
      %v6428 = vpow.pop %v6427
      %v6429 = vmul.f32 %v6412, 1.442695
      %v6430 = vpow.pop %v6429
      %v6431 = vmul.f32 %v6413, 1.442695
      %v6432 = vpow.pop %v6431
      %v6433 = vmul.f32 %v6414, 1.442695
      %v6434 = vpow.pop %v6433
      %v6435 = vmul.f32 %v6415, 1.442695
      %v6436 = vpow.pop %v6435
      %v6437 = vmul.f32 %v6416, 1.442695
      %v6438 = vpow.pop %v6437
      %v6439 = vmul.f32 %v6417, 1.442695
      %v6440 = vpow.pop %v6439
      %v6441 = vmul.f32 %v6418, 1.442695
      %v6442 = vpow.pop %v6441
      %v6443 = vmul.f32 %v6419, 1.442695
      %v6444 = vpow.pop %v6443
      %v6445 = vmul.f32 %v6420, 1.442695
      %v6446 = vpow.pop %v6445
      %v6447 = vmul.f32 %v6421, 1.442695
      %v6448 = vpow.pop %v6447
      %v6449 = vmul.f32 %v6422, 1.442695
      %v6450 = vpow.pop %v6449
      %v6451 = vmul.f32 %v6423, 1.442695
      %v6452 = vpow.pop %v6451
      %v6453 = vmul.f32 %v6424, 1.442695
      %v6454 = vpow.pop %v6453
      %v6455 = vmul.f32 %v6425, 1.442695
      %v6456 = vpow.pop %v6455
      %v6457 = vmul.f32 %v6426, 1.442695
      %v6458 = vpow.pop %v6457
      %v6459 = vadd.f32 %v6428, 1.0
      %v6460 = vadd.f32 %v6430, 1.0
      %v6461 = vadd.f32 %v6432, 1.0
      %v6462 = vadd.f32 %v6434, 1.0
      %v6463 = vadd.f32 %v6436, 1.0
      %v6464 = vadd.f32 %v6438, 1.0
      %v6465 = vadd.f32 %v6440, 1.0
      %v6466 = vadd.f32 %v6442, 1.0
      %v6467 = vadd.f32 %v6444, 1.0
      %v6468 = vadd.f32 %v6446, 1.0
      %v6469 = vadd.f32 %v6448, 1.0
      %v6470 = vadd.f32 %v6450, 1.0
      %v6471 = vadd.f32 %v6452, 1.0
      %v6472 = vadd.f32 %v6454, 1.0
      %v6473 = vadd.f32 %v6456, 1.0
      %v6474 = vadd.f32 %v6458, 1.0
      %v6475 = vrcp.pop %v6459
      %v6476 = vmul.f32 1.0, %v6475
      %v6477 = vrcp.pop %v6460
      %v6478 = vmul.f32 1.0, %v6477
      %v6479 = vrcp.pop %v6461
      %v6480 = vmul.f32 1.0, %v6479
      %v6481 = vrcp.pop %v6462
      %v6482 = vmul.f32 1.0, %v6481
      %v6483 = vrcp.pop %v6463
      %v6484 = vmul.f32 1.0, %v6483
      %v6485 = vrcp.pop %v6464
      %v6486 = vmul.f32 1.0, %v6485
      %v6487 = vrcp.pop %v6465
      %v6488 = vmul.f32 1.0, %v6487
      %v6489 = vrcp.pop %v6466
      %v6490 = vmul.f32 1.0, %v6489
      %v6491 = vrcp.pop %v6467
      %v6492 = vmul.f32 1.0, %v6491
      %v6493 = vrcp.pop %v6468
      %v6494 = vmul.f32 1.0, %v6493
      %v6495 = vrcp.pop %v6469
      %v6496 = vmul.f32 1.0, %v6495
      %v6497 = vrcp.pop %v6470
      %v6498 = vmul.f32 1.0, %v6497
      %v6499 = vrcp.pop %v6471
      %v6500 = vmul.f32 1.0, %v6499
      %v6501 = vrcp.pop %v6472
      %v6502 = vmul.f32 1.0, %v6501
      %v6503 = vrcp.pop %v6473
      %v6504 = vmul.f32 1.0, %v6503
      %v6505 = vrcp.pop %v6474
      %v6506 = vmul.f32 1.0, %v6505
      %6523 = vrot.lane.b32.xlu0 %v6137, 32
      %v6524 = vpop.permute.xlu0 %6523
      %6525 = vrot.lane.b32.xlu0 %v6138, 32
      %v6526 = vpop.permute.xlu0 %6525
      %6527 = vrot.lane.b32.xlu0 %v6139, 32
      %v6528 = vpop.permute.xlu0 %6527
      %6529 = vrot.lane.b32.xlu0 %v6140, 32
      %v6530 = vpop.permute.xlu0 %6529
      %6531 = vrot.lane.b32.xlu0 %v6141, 32
      %v6532 = vpop.permute.xlu0 %6531
      %6533 = vrot.lane.b32.xlu0 %v6142, 32
      %v6534 = vpop.permute.xlu0 %6533
      %6535 = vrot.lane.b32.xlu0 %v6143, 32
      %v6536 = vpop.permute.xlu0 %6535
      %6537 = vrot.lane.b32.xlu0 %v6144, 32
      %v6538 = vpop.permute.xlu0 %6537
      %6539 = vrot.lane.b32.xlu0 %v6145, 32
      %v6540 = vpop.permute.xlu0 %6539
      %6541 = vrot.lane.b32.xlu0 %v6146, 32
      %v6542 = vpop.permute.xlu0 %6541
      %6543 = vrot.lane.b32.xlu0 %v6147, 32
      %v6544 = vpop.permute.xlu0 %6543
      %6545 = vrot.lane.b32.xlu0 %v6148, 32
      %v6546 = vpop.permute.xlu0 %6545
      %6547 = vrot.lane.b32.xlu0 %v6149, 32
      %v6548 = vpop.permute.xlu0 %6547
      %6549 = vrot.lane.b32.xlu0 %v6150, 32
      %v6550 = vpop.permute.xlu0 %6549
      %6551 = vrot.lane.b32.xlu0 %v6151, 32
      %v6552 = vpop.permute.xlu0 %6551
      %6553 = vrot.lane.b32.xlu0 %v6152, 32
      %v6554 = vpop.permute.xlu0 %6553
      %v6571 = vsub.f32 %v6349, %v6524
      %v6572 = vsub.f32 %v6352, %v6526
      %v6573 = vsub.f32 %v6357, %v6528
      %v6574 = vsub.f32 %v6360, %v6530
      %v6575 = vsub.f32 %v6365, %v6532
      %v6576 = vsub.f32 %v6368, %v6534
      %v6577 = vsub.f32 %v6373, %v6536
      %v6578 = vsub.f32 %v6376, %v6538
      %v6579 = vsub.f32 %v6381, %v6540
      %v6580 = vsub.f32 %v6384, %v6542
      %v6581 = vsub.f32 %v6389, %v6544
      %v6582 = vsub.f32 %v6392, %v6546
      %v6583 = vsub.f32 %v6397, %v6548
      %v6584 = vsub.f32 %v6400, %v6550
      %v6585 = vsub.f32 %v6405, %v6552
      %v6586 = vsub.f32 %v6408, %v6554
      %6603 = vrot.lane.b32.xlu0 %v6571, 96
      %v6604 = vpop.permute.xlu0 %6603
      %6605 = vrot.lane.b32.xlu0 %v6572, 96
      %v6606 = vpop.permute.xlu0 %6605
      %6607 = vrot.lane.b32.xlu0 %v6573, 96
      %v6608 = vpop.permute.xlu0 %6607
      %6609 = vrot.lane.b32.xlu0 %v6574, 96
      %v6610 = vpop.permute.xlu0 %6609
      %6611 = vrot.lane.b32.xlu0 %v6575, 96
      %v6612 = vpop.permute.xlu0 %6611
      %6613 = vrot.lane.b32.xlu0 %v6576, 96
      %v6614 = vpop.permute.xlu0 %6613
      %6615 = vrot.lane.b32.xlu0 %v6577, 96
      %v6616 = vpop.permute.xlu0 %6615
      %6617 = vrot.lane.b32.xlu0 %v6578, 96
      %v6618 = vpop.permute.xlu0 %6617
      %6619 = vrot.lane.b32.xlu0 %v6579, 96
      %v6620 = vpop.permute.xlu0 %6619
      %6621 = vrot.lane.b32.xlu0 %v6580, 96
      %v6622 = vpop.permute.xlu0 %6621
      %6623 = vrot.lane.b32.xlu0 %v6581, 96
      %v6624 = vpop.permute.xlu0 %6623
      %6625 = vrot.lane.b32.xlu0 %v6582, 96
      %v6626 = vpop.permute.xlu0 %6625
      %6627 = vrot.lane.b32.xlu0 %v6583, 96
      %v6628 = vpop.permute.xlu0 %6627
      %6629 = vrot.lane.b32.xlu0 %v6584, 96
      %v6630 = vpop.permute.xlu0 %6629
      %6631 = vrot.lane.b32.xlu0 %v6585, 96
      %v6632 = vpop.permute.xlu0 %6631
      %6633 = vrot.lane.b32.xlu0 %v6586, 96
      %v6634 = vpop.permute.xlu0 %6633
      %v6651 = vmul.f32 %v6476, %v6604
      %v6652 = vmul.f32 %v6478, %v6606
      %v6653 = vmul.f32 %v6480, %v6608
      %v6654 = vmul.f32 %v6482, %v6610
      %v6655 = vmul.f32 %v6484, %v6612
      %v6656 = vmul.f32 %v6486, %v6614
      %v6657 = vmul.f32 %v6488, %v6616
      %v6658 = vmul.f32 %v6490, %v6618
      %v6659 = vmul.f32 %v6492, %v6620
      %v6660 = vmul.f32 %v6494, %v6622
      %v6661 = vmul.f32 %v6496, %v6624
      %v6662 = vmul.f32 %v6498, %v6626
      %v6663 = vmul.f32 %v6500, %v6628
      %v6664 = vmul.f32 %v6502, %v6630
      %v6665 = vmul.f32 %v6504, %v6632
      %v6666 = vmul.f32 %v6506, %v6634
      %v6667 = vadd.f32 %v6137, %v6651
      %v6668 = vadd.f32 %v6138, %v6652
      %v6669 = vadd.f32 %v6139, %v6653
      %v6670 = vadd.f32 %v6140, %v6654
      %v6671 = vadd.f32 %v6141, %v6655
      %v6672 = vadd.f32 %v6142, %v6656
      %v6673 = vadd.f32 %v6143, %v6657
      %v6674 = vadd.f32 %v6144, %v6658
      %v6675 = vadd.f32 %v6145, %v6659
      %v6676 = vadd.f32 %v6146, %v6660
      %v6677 = vadd.f32 %v6147, %v6661
      %v6678 = vadd.f32 %v6148, %v6662
      %v6679 = vadd.f32 %v6149, %v6663
      %v6680 = vadd.f32 %v6150, %v6664
      %v6681 = vadd.f32 %v6151, %v6665
      %v6682 = vadd.f32 %v6152, %v6666
      %s6683 = scalar_lea.vmem %s9, 96
      %v6684 = vld [vmem:[%s6683] sm:$0xf]
      %v6685 = vld [vmem:[%s6683 + $0x4] sm:$0xf]
      %v6686 = vld [vmem:[%s6683 + $0x8] sm:$0xf]
      %v6687 = vld [vmem:[%s6683 + $0xc] sm:$0xf]
      %v6688 = vld [vmem:[%s6683 + $0x10] sm:$0xf]
      %v6689 = vld [vmem:[%s6683 + $0x14] sm:$0xf]
      %v6690 = vld [vmem:[%s6683 + $0x18] sm:$0xf]
      %v6691 = vld [vmem:[%s6683 + $0x1c] sm:$0xf]
      %s6692 = scalar_lea.vmem %s10, 3
      %v6693 = vld [vmem:[%s6692] sm:$0x1]
      %v6694 = vpack.c.bf16 %v6668, %v6667
      %v6695 = vpack.c.bf16 %v6670, %v6669
      %v6696 = vpack.c.bf16 %v6672, %v6671
      %v6697 = vpack.c.bf16 %v6674, %v6673
      %v6698 = vpack.c.bf16 %v6676, %v6675
      %v6699 = vpack.c.bf16 %v6678, %v6677
      %v6700 = vpack.c.bf16 %v6680, %v6679
      %v6701 = vpack.c.bf16 %v6682, %v6681
      %v6702 = vpack.c.bf16 %v6667, %v6682
      %v6703 = vpack.c.bf16 %v6669, %v6668
      %v6704 = vpack.c.bf16 %v6671, %v6670
      %v6705 = vpack.c.bf16 %v6673, %v6672
      %v6706 = vpack.c.bf16 %v6675, %v6674
      %v6707 = vpack.c.bf16 %v6677, %v6676
      %v6708 = vpack.c.bf16 %v6679, %v6678
      %v6709 = vpack.c.bf16 %v6681, %v6680
      %v6710 = vmul.bf16 %v6702, %v1086
      %v6711 = vmul.bf16 %v6703, %v1087
      %v6712 = vmul.bf16 %v6704, %v1088
      %v6713 = vmul.bf16 %v6705, %v1089
      %v6714 = vmul.bf16 %v6706, %v1090
      %v6715 = vmul.bf16 %v6707, %v1091
      %v6716 = vmul.bf16 %v6708, %v1092
      %v6717 = vmul.bf16 %v6709, %v1093
      %6726 = vrot.lane.b32.xlu0 %v6710, 32
      %v6727 = vpop.permute.xlu0 %6726
      %6728 = vrot.lane.b32.xlu0 %v6711, 32
      %v6729 = vpop.permute.xlu0 %6728
      %6730 = vrot.lane.b32.xlu0 %v6712, 32
      %v6731 = vpop.permute.xlu0 %6730
      %6732 = vrot.lane.b32.xlu0 %v6713, 32
      %v6733 = vpop.permute.xlu0 %6732
      %6734 = vrot.lane.b32.xlu0 %v6714, 32
      %v6735 = vpop.permute.xlu0 %6734
      %6736 = vrot.lane.b32.xlu0 %v6715, 32
      %v6737 = vpop.permute.xlu0 %6736
      %6738 = vrot.lane.b32.xlu0 %v6716, 32
      %v6739 = vpop.permute.xlu0 %6738
      %6740 = vrot.lane.b32.xlu0 %v6717, 32
      %v6741 = vpop.permute.xlu0 %6740
      %v6744 = vsel %vm1389, %v6694, %v6727
      %v6747 = vsel %vm1389, %v6695, %v6729
      %v6750 = vsel %vm1389, %v6696, %v6731
      %v6753 = vsel %vm1389, %v6697, %v6733
      %v6756 = vsel %vm1389, %v6698, %v6735
      %v6759 = vsel %vm1389, %v6699, %v6737
      %v6762 = vsel %vm1389, %v6700, %v6739
      %v6765 = vsel %vm1389, %v6701, %v6741
      %v6767 = vlaneseq
      %v6768 = vshrl.u32 %v6767, 7
      %v6769 = vsub.s32 0, %v6768
      %v6770 = vrot.slane %v6693, %v6769
      %v6780 = vunpack.c.l.b16 %v6684
      %v6781 = vunpack.c.l.b16 %v6685
      %v6782 = vunpack.c.l.b16 %v6686
      %v6783 = vunpack.c.l.b16 %v6687
      %v6784 = vunpack.c.l.b16 %v6688
      %v6785 = vunpack.c.l.b16 %v6689
      %v6786 = vunpack.c.l.b16 %v6690
      %v6787 = vunpack.c.l.b16 %v6691
      %v6788 = vpack.c.b16 %v6781, %v6780
      %v6789 = vpack.c.b16 %v6783, %v6782
      %v6790 = vpack.c.b16 %v6785, %v6784
      %v6791 = vpack.c.b16 %v6787, %v6786
      %v6796 = vsel %vm1655, %v6744, 0
      %v6798 = vsel %vm1655, %v6747, 0
      %v6800 = vsel %vm1655, %v6750, 0
      %v6802 = vsel %vm1655, %v6753, 0
      %v6804 = vsel %vm1655, %v6756, 0
      %v6806 = vsel %vm1655, %v6759, 0
      %v6808 = vsel %vm1655, %v6762, 0
      %v6810 = vsel %vm1655, %v6765, 0
      %6812 = vmatprep.subr.bf16.mxu0 0
      %6813 = vmatpush1.bf16.msra.mxu0 %v6788
      %6814 = vmatprep.subr.bf16.mxu0 0
      %6815 = vmatpush1.bf16.msra.mxu0 %v6789
      %6816 = vmatprep.subr.bf16.mxu0 0
      %6817 = vmatpush1.bf16.msra.mxu0 %v6790
      %6818 = vmatprep.subr.bf16.mxu0 0
      %6819 = vmatpush1.bf16.msra.mxu0 %v6791
      %6820 = vmatprep.subr.bf16.mxu0 0
      %6821 = vmatpush1.bf16.msra.mxu0 0
      %6822 = vmatprep.subr.bf16.mxu0 0
      %6823 = vmatpush1.bf16.msra.mxu0 0
      %6824 = vmatprep.subr.bf16.mxu0 0
      %6825 = vmatpush1.bf16.msra.mxu0 0
      %6826 = vmatprep.subr.bf16.mxu0 0
      %6827 = vmatpush1.bf16.msra.mxu0 0
      %6828 = vmatprep.subr.bf16.mxu0 0
      %6829 = vmatpush1.bf16.msra.mxu0 0
      %6830 = vmatprep.subr.bf16.mxu0 0
      %6831 = vmatpush1.bf16.msra.mxu0 0
      %6832 = vmatprep.subr.bf16.mxu0 0
      %6833 = vmatpush1.bf16.msra.mxu0 0
      %6834 = vmatprep.subr.bf16.mxu0 0
      %6835 = vmatpush1.bf16.msra.mxu0 0
      %6836 = vmatprep.subr.bf16.mxu0 0
      %6837 = vmatpush1.bf16.msra.mxu0 0
      %6838 = vmatprep.subr.bf16.mxu0 0
      %6839 = vmatpush1.bf16.msra.mxu0 0
      %6840 = vmatprep.subr.bf16.mxu0 0
      %6841 = vmatpush1.bf16.msra.mxu0 0
      %6842 = vmatprep.subr.bf16.mxu0 0
      %6843 = vmatpush1.bf16.msra.mxu0 0
      %6844 = vmatprep.mubr.bf16.mxu0 0
      %6845 = vmatmul.mubr.bf16.gmra.mrb[0].mxu0 %v6796
      %v6846 = vpop.f32.mrb[0].mxu0
      %v6847 = vadd.f32 %v6770, %v6846
      %v6848 = vpop.f32.mrb[0].mxu0
      %v6849 = vpop.f32.mrb[0].mxu0
      %v6850 = vadd.f32 %v6770, %v6849
      %v6851 = vpop.f32.mrb[0].mxu0
      %6852 = vmatprep.mubr.bf16.mxu0 0
      %6853 = vmatmul.mubr.bf16.gmra.mrb[0].mxu0 %v6798
      %v6854 = vpop.f32.mrb[0].mxu0
      %v6855 = vadd.f32 %v6770, %v6854
      %v6856 = vpop.f32.mrb[0].mxu0
      %v6857 = vpop.f32.mrb[0].mxu0
      %v6858 = vadd.f32 %v6770, %v6857
      %v6859 = vpop.f32.mrb[0].mxu0
      %6860 = vmatprep.mubr.bf16.mxu0 0
      %6861 = vmatmul.mubr.bf16.gmra.mrb[0].mxu0 %v6800
      %v6862 = vpop.f32.mrb[0].mxu0
      %v6863 = vadd.f32 %v6770, %v6862
      %v6864 = vpop.f32.mrb[0].mxu0
      %v6865 = vpop.f32.mrb[0].mxu0
      %v6866 = vadd.f32 %v6770, %v6865
      %v6867 = vpop.f32.mrb[0].mxu0
      %6868 = vmatprep.mubr.bf16.mxu0 0
      %6869 = vmatmul.mubr.bf16.gmra.mrb[0].mxu0 %v6802
      %v6870 = vpop.f32.mrb[0].mxu0
      %v6871 = vadd.f32 %v6770, %v6870
      %v6872 = vpop.f32.mrb[0].mxu0
      %v6873 = vpop.f32.mrb[0].mxu0
      %v6874 = vadd.f32 %v6770, %v6873
      %v6875 = vpop.f32.mrb[0].mxu0
      %6876 = vmatprep.mubr.bf16.mxu0 0
      %6877 = vmatmul.mubr.bf16.gmra.mrb[0].mxu0 %v6804
      %v6878 = vpop.f32.mrb[0].mxu0
      %v6879 = vadd.f32 %v6770, %v6878
      %v6880 = vpop.f32.mrb[0].mxu0
      %v6881 = vpop.f32.mrb[0].mxu0
      %v6882 = vadd.f32 %v6770, %v6881
      %v6883 = vpop.f32.mrb[0].mxu0
      %6884 = vmatprep.mubr.bf16.mxu0 0
      %6885 = vmatmul.mubr.bf16.gmra.mrb[0].mxu0 %v6806
      %v6886 = vpop.f32.mrb[0].mxu0
      %v6887 = vadd.f32 %v6770, %v6886
      %v6888 = vpop.f32.mrb[0].mxu0
      %v6889 = vpop.f32.mrb[0].mxu0
      %v6890 = vadd.f32 %v6770, %v6889
      %v6891 = vpop.f32.mrb[0].mxu0
      %6892 = vmatprep.mubr.bf16.mxu0 0
      %6893 = vmatmul.mubr.bf16.gmra.mrb[0].mxu0 %v6808
      %v6894 = vpop.f32.mrb[0].mxu0
      %v6895 = vadd.f32 %v6770, %v6894
      %v6896 = vpop.f32.mrb[0].mxu0
      %v6897 = vpop.f32.mrb[0].mxu0
      %v6898 = vadd.f32 %v6770, %v6897
      %v6899 = vpop.f32.mrb[0].mxu0
      %6900 = vmatprep.mubr.bf16.mxu0 0
      %6901 = vmatmul.mubr.bf16.gmra.mrb[0].mxu0 %v6810
      %v6902 = vpop.f32.mrb[0].mxu0
      %v6903 = vadd.f32 %v6770, %v6902
      %v6904 = vpop.f32.mrb[0].mxu0
      %v6905 = vpop.f32.mrb[0].mxu0
      %v6906 = vadd.f32 %v6770, %v6905
      %v6907 = vpop.f32.mrb[0].mxu0
      %6908 = vdwg.mxu0
      %v6909 = vxor.u32 %v6847, 2147483648
      %v6910 = vxor.u32 %v6850, 2147483648
      %v6911 = vxor.u32 %v6855, 2147483648
      %v6912 = vxor.u32 %v6858, 2147483648
      %v6913 = vxor.u32 %v6863, 2147483648
      %v6914 = vxor.u32 %v6866, 2147483648
      %v6915 = vxor.u32 %v6871, 2147483648
      %v6916 = vxor.u32 %v6874, 2147483648
      %v6917 = vxor.u32 %v6879, 2147483648
      %v6918 = vxor.u32 %v6882, 2147483648
      %v6919 = vxor.u32 %v6887, 2147483648
      %v6920 = vxor.u32 %v6890, 2147483648
      %v6921 = vxor.u32 %v6895, 2147483648
      %v6922 = vxor.u32 %v6898, 2147483648
      %v6923 = vxor.u32 %v6903, 2147483648
      %v6924 = vxor.u32 %v6906, 2147483648
      %v6925 = vmul.f32 %v6909, 1.442695
      %v6926 = vpow.pop %v6925
      %v6927 = vmul.f32 %v6910, 1.442695
      %v6928 = vpow.pop %v6927
      %v6929 = vmul.f32 %v6911, 1.442695
      %v6930 = vpow.pop %v6929
      %v6931 = vmul.f32 %v6912, 1.442695
      %v6932 = vpow.pop %v6931
      %v6933 = vmul.f32 %v6913, 1.442695
      %v6934 = vpow.pop %v6933
      %v6935 = vmul.f32 %v6914, 1.442695
      %v6936 = vpow.pop %v6935
      %v6937 = vmul.f32 %v6915, 1.442695
      %v6938 = vpow.pop %v6937
      %v6939 = vmul.f32 %v6916, 1.442695
      %v6940 = vpow.pop %v6939
      %v6941 = vmul.f32 %v6917, 1.442695
      %v6942 = vpow.pop %v6941
      %v6943 = vmul.f32 %v6918, 1.442695
      %v6944 = vpow.pop %v6943
      %v6945 = vmul.f32 %v6919, 1.442695
      %v6946 = vpow.pop %v6945
      %v6947 = vmul.f32 %v6920, 1.442695
      %v6948 = vpow.pop %v6947
      %v6949 = vmul.f32 %v6921, 1.442695
      %v6950 = vpow.pop %v6949
      %v6951 = vmul.f32 %v6922, 1.442695
      %v6952 = vpow.pop %v6951
      %v6953 = vmul.f32 %v6923, 1.442695
      %v6954 = vpow.pop %v6953
      %v6955 = vmul.f32 %v6924, 1.442695
      %v6956 = vpow.pop %v6955
      %v6957 = vadd.f32 %v6926, 1.0
      %v6958 = vadd.f32 %v6928, 1.0
      %v6959 = vadd.f32 %v6930, 1.0
      %v6960 = vadd.f32 %v6932, 1.0
      %v6961 = vadd.f32 %v6934, 1.0
      %v6962 = vadd.f32 %v6936, 1.0
      %v6963 = vadd.f32 %v6938, 1.0
      %v6964 = vadd.f32 %v6940, 1.0
      %v6965 = vadd.f32 %v6942, 1.0
      %v6966 = vadd.f32 %v6944, 1.0
      %v6967 = vadd.f32 %v6946, 1.0
      %v6968 = vadd.f32 %v6948, 1.0
      %v6969 = vadd.f32 %v6950, 1.0
      %v6970 = vadd.f32 %v6952, 1.0
      %v6971 = vadd.f32 %v6954, 1.0
      %v6972 = vadd.f32 %v6956, 1.0
      %v6973 = vrcp.pop %v6957
      %v6974 = vmul.f32 1.0, %v6973
      %v6975 = vrcp.pop %v6958
      %v6976 = vmul.f32 1.0, %v6975
      %v6977 = vrcp.pop %v6959
      %v6978 = vmul.f32 1.0, %v6977
      %v6979 = vrcp.pop %v6960
      %v6980 = vmul.f32 1.0, %v6979
      %v6981 = vrcp.pop %v6961
      %v6982 = vmul.f32 1.0, %v6981
      %v6983 = vrcp.pop %v6962
      %v6984 = vmul.f32 1.0, %v6983
      %v6985 = vrcp.pop %v6963
      %v6986 = vmul.f32 1.0, %v6985
      %v6987 = vrcp.pop %v6964
      %v6988 = vmul.f32 1.0, %v6987
      %v6989 = vrcp.pop %v6965
      %v6990 = vmul.f32 1.0, %v6989
      %v6991 = vrcp.pop %v6966
      %v6992 = vmul.f32 1.0, %v6991
      %v6993 = vrcp.pop %v6967
      %v6994 = vmul.f32 1.0, %v6993
      %v6995 = vrcp.pop %v6968
      %v6996 = vmul.f32 1.0, %v6995
      %v6997 = vrcp.pop %v6969
      %v6998 = vmul.f32 1.0, %v6997
      %v6999 = vrcp.pop %v6970
      %v7000 = vmul.f32 1.0, %v6999
      %v7001 = vrcp.pop %v6971
      %v7002 = vmul.f32 1.0, %v7001
      %v7003 = vrcp.pop %v6972
      %v7004 = vmul.f32 1.0, %v7003
      %7021 = vrot.lane.b32.xlu0 %v6667, 32
      %v7022 = vpop.permute.xlu0 %7021
      %7023 = vrot.lane.b32.xlu0 %v6668, 32
      %v7024 = vpop.permute.xlu0 %7023
      %7025 = vrot.lane.b32.xlu0 %v6669, 32
      %v7026 = vpop.permute.xlu0 %7025
      %7027 = vrot.lane.b32.xlu0 %v6670, 32
      %v7028 = vpop.permute.xlu0 %7027
      %7029 = vrot.lane.b32.xlu0 %v6671, 32
      %v7030 = vpop.permute.xlu0 %7029
      %7031 = vrot.lane.b32.xlu0 %v6672, 32
      %v7032 = vpop.permute.xlu0 %7031
      %7033 = vrot.lane.b32.xlu0 %v6673, 32
      %v7034 = vpop.permute.xlu0 %7033
      %7035 = vrot.lane.b32.xlu0 %v6674, 32
      %v7036 = vpop.permute.xlu0 %7035
      %7037 = vrot.lane.b32.xlu0 %v6675, 32
      %v7038 = vpop.permute.xlu0 %7037
      %7039 = vrot.lane.b32.xlu0 %v6676, 32
      %v7040 = vpop.permute.xlu0 %7039
      %7041 = vrot.lane.b32.xlu0 %v6677, 32
      %v7042 = vpop.permute.xlu0 %7041
      %7043 = vrot.lane.b32.xlu0 %v6678, 32
      %v7044 = vpop.permute.xlu0 %7043
      %7045 = vrot.lane.b32.xlu0 %v6679, 32
      %v7046 = vpop.permute.xlu0 %7045
      %7047 = vrot.lane.b32.xlu0 %v6680, 32
      %v7048 = vpop.permute.xlu0 %7047
      %7049 = vrot.lane.b32.xlu0 %v6681, 32
      %v7050 = vpop.permute.xlu0 %7049
      %7051 = vrot.lane.b32.xlu0 %v6682, 32
      %v7052 = vpop.permute.xlu0 %7051
      %v7069 = vsub.f32 %v6847, %v7022
      %v7070 = vsub.f32 %v6850, %v7024
      %v7071 = vsub.f32 %v6855, %v7026
      %v7072 = vsub.f32 %v6858, %v7028
      %v7073 = vsub.f32 %v6863, %v7030
      %v7074 = vsub.f32 %v6866, %v7032
      %v7075 = vsub.f32 %v6871, %v7034
      %v7076 = vsub.f32 %v6874, %v7036
      %v7077 = vsub.f32 %v6879, %v7038
      %v7078 = vsub.f32 %v6882, %v7040
      %v7079 = vsub.f32 %v6887, %v7042
      %v7080 = vsub.f32 %v6890, %v7044
      %v7081 = vsub.f32 %v6895, %v7046
      %v7082 = vsub.f32 %v6898, %v7048
      %v7083 = vsub.f32 %v6903, %v7050
      %v7084 = vsub.f32 %v6906, %v7052
      %7101 = vrot.lane.b32.xlu0 %v7069, 96
      %v7102 = vpop.permute.xlu0 %7101
      %7103 = vrot.lane.b32.xlu0 %v7070, 96
      %v7104 = vpop.permute.xlu0 %7103
      %7105 = vrot.lane.b32.xlu0 %v7071, 96
      %v7106 = vpop.permute.xlu0 %7105
      %7107 = vrot.lane.b32.xlu0 %v7072, 96
      %v7108 = vpop.permute.xlu0 %7107
      %7109 = vrot.lane.b32.xlu0 %v7073, 96
      %v7110 = vpop.permute.xlu0 %7109
      %7111 = vrot.lane.b32.xlu0 %v7074, 96
      %v7112 = vpop.permute.xlu0 %7111
      %7113 = vrot.lane.b32.xlu0 %v7075, 96
      %v7114 = vpop.permute.xlu0 %7113
      %7115 = vrot.lane.b32.xlu0 %v7076, 96
      %v7116 = vpop.permute.xlu0 %7115
      %7117 = vrot.lane.b32.xlu0 %v7077, 96
      %v7118 = vpop.permute.xlu0 %7117
      %7119 = vrot.lane.b32.xlu0 %v7078, 96
      %v7120 = vpop.permute.xlu0 %7119
      %7121 = vrot.lane.b32.xlu0 %v7079, 96
      %v7122 = vpop.permute.xlu0 %7121
      %7123 = vrot.lane.b32.xlu0 %v7080, 96
      %v7124 = vpop.permute.xlu0 %7123
      %7125 = vrot.lane.b32.xlu0 %v7081, 96
      %v7126 = vpop.permute.xlu0 %7125
      %7127 = vrot.lane.b32.xlu0 %v7082, 96
      %v7128 = vpop.permute.xlu0 %7127
      %7129 = vrot.lane.b32.xlu0 %v7083, 96
      %v7130 = vpop.permute.xlu0 %7129
      %7131 = vrot.lane.b32.xlu0 %v7084, 96
      %v7132 = vpop.permute.xlu0 %7131
      %v7149 = vmul.f32 %v6974, %v7102
      %v7150 = vmul.f32 %v6976, %v7104
      %v7151 = vmul.f32 %v6978, %v7106
      %v7152 = vmul.f32 %v6980, %v7108
      %v7153 = vmul.f32 %v6982, %v7110
      %v7154 = vmul.f32 %v6984, %v7112
      %v7155 = vmul.f32 %v6986, %v7114
      %v7156 = vmul.f32 %v6988, %v7116
      %v7157 = vmul.f32 %v6990, %v7118
      %v7158 = vmul.f32 %v6992, %v7120
      %v7159 = vmul.f32 %v6994, %v7122
      %v7160 = vmul.f32 %v6996, %v7124
      %v7161 = vmul.f32 %v6998, %v7126
      %v7162 = vmul.f32 %v7000, %v7128
      %v7163 = vmul.f32 %v7002, %v7130
      %v7164 = vmul.f32 %v7004, %v7132
      %v7165 = vadd.f32 %v6667, %v7149
      %v7166 = vadd.f32 %v6668, %v7150
      %v7167 = vadd.f32 %v6669, %v7151
      %v7168 = vadd.f32 %v6670, %v7152
      %v7169 = vadd.f32 %v6671, %v7153
      %v7170 = vadd.f32 %v6672, %v7154
      %v7171 = vadd.f32 %v6673, %v7155
      %v7172 = vadd.f32 %v6674, %v7156
      %v7173 = vadd.f32 %v6675, %v7157
      %v7174 = vadd.f32 %v6676, %v7158
      %v7175 = vadd.f32 %v6677, %v7159
      %v7176 = vadd.f32 %v6678, %v7160
      %v7177 = vadd.f32 %v6679, %v7161
      %v7178 = vadd.f32 %v6680, %v7162
      %v7179 = vadd.f32 %v6681, %v7163
      %v7180 = vadd.f32 %v6682, %v7164
      %s7181 = scalar_lea.vmem %s9, 128
      %v7182 = vld [vmem:[%s7181] sm:$0xf]
      %v7183 = vld [vmem:[%s7181 + $0x4] sm:$0xf]
      %v7184 = vld [vmem:[%s7181 + $0x8] sm:$0xf]
      %v7185 = vld [vmem:[%s7181 + $0xc] sm:$0xf]
      %v7186 = vld [vmem:[%s7181 + $0x10] sm:$0xf]
      %v7187 = vld [vmem:[%s7181 + $0x14] sm:$0xf]
      %v7188 = vld [vmem:[%s7181 + $0x18] sm:$0xf]
      %v7189 = vld [vmem:[%s7181 + $0x1c] sm:$0xf]
      %s7190 = scalar_lea.vmem %s10, 4
      %v7191 = vld [vmem:[%s7190] sm:$0x1]
      %v7192 = vpack.c.bf16 %v7166, %v7165
      %v7193 = vpack.c.bf16 %v7168, %v7167
      %v7194 = vpack.c.bf16 %v7170, %v7169
      %v7195 = vpack.c.bf16 %v7172, %v7171
      %v7196 = vpack.c.bf16 %v7174, %v7173
      %v7197 = vpack.c.bf16 %v7176, %v7175
      %v7198 = vpack.c.bf16 %v7178, %v7177
      %v7199 = vpack.c.bf16 %v7180, %v7179
      %v7200 = vmul.bf16 %v7199, %v1142
      %v7201 = vmul.bf16 %v7192, %v1143
      %v7202 = vmul.bf16 %v7193, %v1144
      %v7203 = vmul.bf16 %v7194, %v1145
      %v7204 = vmul.bf16 %v7195, %v1146
      %v7205 = vmul.bf16 %v7196, %v1147
      %v7206 = vmul.bf16 %v7197, %v1148
      %v7207 = vmul.bf16 %v7198, %v1149
      %7216 = vrot.lane.b32.xlu0 %v7200, 32
      %v7217 = vpop.permute.xlu0 %7216
      %7218 = vrot.lane.b32.xlu0 %v7201, 32
      %v7219 = vpop.permute.xlu0 %7218
      %7220 = vrot.lane.b32.xlu0 %v7202, 32
      %v7221 = vpop.permute.xlu0 %7220
      %7222 = vrot.lane.b32.xlu0 %v7203, 32
      %v7223 = vpop.permute.xlu0 %7222
      %7224 = vrot.lane.b32.xlu0 %v7204, 32
      %v7225 = vpop.permute.xlu0 %7224
      %7226 = vrot.lane.b32.xlu0 %v7205, 32
      %v7227 = vpop.permute.xlu0 %7226
      %7228 = vrot.lane.b32.xlu0 %v7206, 32
      %v7229 = vpop.permute.xlu0 %7228
      %7230 = vrot.lane.b32.xlu0 %v7207, 32
      %v7231 = vpop.permute.xlu0 %7230
      %v7234 = vsel %vm1389, %v7192, %v7217
      %v7237 = vsel %vm1389, %v7193, %v7219
      %v7240 = vsel %vm1389, %v7194, %v7221
      %v7243 = vsel %vm1389, %v7195, %v7223
      %v7246 = vsel %vm1389, %v7196, %v7225
      %v7249 = vsel %vm1389, %v7197, %v7227
      %v7252 = vsel %vm1389, %v7198, %v7229
      %v7255 = vsel %vm1389, %v7199, %v7231
      %v7257 = vlaneseq
      %v7258 = vshrl.u32 %v7257, 7
      %v7259 = vsub.s32 0, %v7258
      %v7260 = vrot.slane %v7191, %v7259
      %v7270 = vunpack.c.l.b16 %v7182
      %v7271 = vunpack.c.l.b16 %v7183
      %v7272 = vunpack.c.l.b16 %v7184
      %v7273 = vunpack.c.l.b16 %v7185
      %v7274 = vunpack.c.l.b16 %v7186
      %v7275 = vunpack.c.l.b16 %v7187
      %v7276 = vunpack.c.l.b16 %v7188
      %v7277 = vunpack.c.l.b16 %v7189
      %v7278 = vpack.c.b16 %v7271, %v7270
      %v7279 = vpack.c.b16 %v7273, %v7272
      %v7280 = vpack.c.b16 %v7275, %v7274
      %v7281 = vpack.c.b16 %v7277, %v7276
      %v7286 = vsel %vm1655, %v7234, 0
      %v7288 = vsel %vm1655, %v7237, 0
      %v7290 = vsel %vm1655, %v7240, 0
      %v7292 = vsel %vm1655, %v7243, 0
      %v7294 = vsel %vm1655, %v7246, 0
      %v7296 = vsel %vm1655, %v7249, 0
      %v7298 = vsel %vm1655, %v7252, 0
      %v7300 = vsel %vm1655, %v7255, 0
      %7302 = vmatprep.subr.bf16.mxu0 0
      %7303 = vmatpush1.bf16.msra.mxu0 %v7278
      %7304 = vmatprep.subr.bf16.mxu0 0
      %7305 = vmatpush1.bf16.msra.mxu0 %v7279
      %7306 = vmatprep.subr.bf16.mxu0 0
      %7307 = vmatpush1.bf16.msra.mxu0 %v7280
      %7308 = vmatprep.subr.bf16.mxu0 0
      %7309 = vmatpush1.bf16.msra.mxu0 %v7281
      %7310 = vmatprep.subr.bf16.mxu0 0
      %7311 = vmatpush1.bf16.msra.mxu0 0
      %7312 = vmatprep.subr.bf16.mxu0 0
      %7313 = vmatpush1.bf16.msra.mxu0 0
      %7314 = vmatprep.subr.bf16.mxu0 0
      %7315 = vmatpush1.bf16.msra.mxu0 0
      %7316 = vmatprep.subr.bf16.mxu0 0
      %7317 = vmatpush1.bf16.msra.mxu0 0
      %7318 = vmatprep.subr.bf16.mxu0 0
      %7319 = vmatpush1.bf16.msra.mxu0 0
      %7320 = vmatprep.subr.bf16.mxu0 0
      %7321 = vmatpush1.bf16.msra.mxu0 0
      %7322 = vmatprep.subr.bf16.mxu0 0
      %7323 = vmatpush1.bf16.msra.mxu0 0
      %7324 = vmatprep.subr.bf16.mxu0 0
      %7325 = vmatpush1.bf16.msra.mxu0 0
      %7326 = vmatprep.subr.bf16.mxu0 0
      %7327 = vmatpush1.bf16.msra.mxu0 0
      %7328 = vmatprep.subr.bf16.mxu0 0
      %7329 = vmatpush1.bf16.msra.mxu0 0
      %7330 = vmatprep.subr.bf16.mxu0 0
      %7331 = vmatpush1.bf16.msra.mxu0 0
      %7332 = vmatprep.subr.bf16.mxu0 0
      %7333 = vmatpush1.bf16.msra.mxu0 0
      %7334 = vmatprep.mubr.bf16.mxu0 0
      %7335 = vmatmul.mubr.bf16.gmra.mrb[0].mxu0 %v7286
      %v7336 = vpop.f32.mrb[0].mxu0
      %v7337 = vadd.f32 %v7260, %v7336
      %v7338 = vpop.f32.mrb[0].mxu0
      %v7339 = vpop.f32.mrb[0].mxu0
      %v7340 = vadd.f32 %v7260, %v7339
      %v7341 = vpop.f32.mrb[0].mxu0
      %7342 = vmatprep.mubr.bf16.mxu0 0
      %7343 = vmatmul.mubr.bf16.gmra.mrb[0].mxu0 %v7288
      %v7344 = vpop.f32.mrb[0].mxu0
      %v7345 = vadd.f32 %v7260, %v7344
      %v7346 = vpop.f32.mrb[0].mxu0
      %v7347 = vpop.f32.mrb[0].mxu0
      %v7348 = vadd.f32 %v7260, %v7347
      %v7349 = vpop.f32.mrb[0].mxu0
      %7350 = vmatprep.mubr.bf16.mxu0 0
      %7351 = vmatmul.mubr.bf16.gmra.mrb[0].mxu0 %v7290
      %v7352 = vpop.f32.mrb[0].mxu0
      %v7353 = vadd.f32 %v7260, %v7352
      %v7354 = vpop.f32.mrb[0].mxu0
      %v7355 = vpop.f32.mrb[0].mxu0
      %v7356 = vadd.f32 %v7260, %v7355
      %v7357 = vpop.f32.mrb[0].mxu0
      %7358 = vmatprep.mubr.bf16.mxu0 0
      %7359 = vmatmul.mubr.bf16.gmra.mrb[0].mxu0 %v7292
      %v7360 = vpop.f32.mrb[0].mxu0
      %v7361 = vadd.f32 %v7260, %v7360
      %v7362 = vpop.f32.mrb[0].mxu0
      %v7363 = vpop.f32.mrb[0].mxu0
      %v7364 = vadd.f32 %v7260, %v7363
      %v7365 = vpop.f32.mrb[0].mxu0
      %7366 = vmatprep.mubr.bf16.mxu0 0
      %7367 = vmatmul.mubr.bf16.gmra.mrb[0].mxu0 %v7294
      %v7368 = vpop.f32.mrb[0].mxu0
      %v7369 = vadd.f32 %v7260, %v7368
      %v7370 = vpop.f32.mrb[0].mxu0
      %v7371 = vpop.f32.mrb[0].mxu0
      %v7372 = vadd.f32 %v7260, %v7371
      %v7373 = vpop.f32.mrb[0].mxu0
      %7374 = vmatprep.mubr.bf16.mxu0 0
      %7375 = vmatmul.mubr.bf16.gmra.mrb[0].mxu0 %v7296
      %v7376 = vpop.f32.mrb[0].mxu0
      %v7377 = vadd.f32 %v7260, %v7376
      %v7378 = vpop.f32.mrb[0].mxu0
      %v7379 = vpop.f32.mrb[0].mxu0
      %v7380 = vadd.f32 %v7260, %v7379
      %v7381 = vpop.f32.mrb[0].mxu0
      %7382 = vmatprep.mubr.bf16.mxu0 0
      %7383 = vmatmul.mubr.bf16.gmra.mrb[0].mxu0 %v7298
      %v7384 = vpop.f32.mrb[0].mxu0
      %v7385 = vadd.f32 %v7260, %v7384
      %v7386 = vpop.f32.mrb[0].mxu0
      %v7387 = vpop.f32.mrb[0].mxu0
      %v7388 = vadd.f32 %v7260, %v7387
      %v7389 = vpop.f32.mrb[0].mxu0
      %7390 = vmatprep.mubr.bf16.mxu0 0
      %7391 = vmatmul.mubr.bf16.gmra.mrb[0].mxu0 %v7300
      %v7392 = vpop.f32.mrb[0].mxu0
      %v7393 = vadd.f32 %v7260, %v7392
      %v7394 = vpop.f32.mrb[0].mxu0
      %v7395 = vpop.f32.mrb[0].mxu0
      %v7396 = vadd.f32 %v7260, %v7395
      %v7397 = vpop.f32.mrb[0].mxu0
      %7398 = vdwg.mxu0
      %v7399 = vxor.u32 %v7337, 2147483648
      %v7400 = vxor.u32 %v7340, 2147483648
      %v7401 = vxor.u32 %v7345, 2147483648
      %v7402 = vxor.u32 %v7348, 2147483648
      %v7403 = vxor.u32 %v7353, 2147483648
      %v7404 = vxor.u32 %v7356, 2147483648
      %v7405 = vxor.u32 %v7361, 2147483648
      %v7406 = vxor.u32 %v7364, 2147483648
      %v7407 = vxor.u32 %v7369, 2147483648
      %v7408 = vxor.u32 %v7372, 2147483648
      %v7409 = vxor.u32 %v7377, 2147483648
      %v7410 = vxor.u32 %v7380, 2147483648
      %v7411 = vxor.u32 %v7385, 2147483648
      %v7412 = vxor.u32 %v7388, 2147483648
      %v7413 = vxor.u32 %v7393, 2147483648
      %v7414 = vxor.u32 %v7396, 2147483648
      %v7415 = vmul.f32 %v7399, 1.442695
      %v7416 = vpow.pop %v7415
      %v7417 = vmul.f32 %v7400, 1.442695
      %v7418 = vpow.pop %v7417
      %v7419 = vmul.f32 %v7401, 1.442695
      %v7420 = vpow.pop %v7419
      %v7421 = vmul.f32 %v7402, 1.442695
      %v7422 = vpow.pop %v7421
      %v7423 = vmul.f32 %v7403, 1.442695
      %v7424 = vpow.pop %v7423
      %v7425 = vmul.f32 %v7404, 1.442695
      %v7426 = vpow.pop %v7425
      %v7427 = vmul.f32 %v7405, 1.442695
      %v7428 = vpow.pop %v7427
      %v7429 = vmul.f32 %v7406, 1.442695
      %v7430 = vpow.pop %v7429
      %v7431 = vmul.f32 %v7407, 1.442695
      %v7432 = vpow.pop %v7431
      %v7433 = vmul.f32 %v7408, 1.442695
      %v7434 = vpow.pop %v7433
      %v7435 = vmul.f32 %v7409, 1.442695
      %v7436 = vpow.pop %v7435
      %v7437 = vmul.f32 %v7410, 1.442695
      %v7438 = vpow.pop %v7437
      %v7439 = vmul.f32 %v7411, 1.442695
      %v7440 = vpow.pop %v7439
      %v7441 = vmul.f32 %v7412, 1.442695
      %v7442 = vpow.pop %v7441
      %v7443 = vmul.f32 %v7413, 1.442695
      %v7444 = vpow.pop %v7443
      %v7445 = vmul.f32 %v7414, 1.442695
      %v7446 = vpow.pop %v7445
      %v7447 = vadd.f32 %v7416, 1.0
      %v7448 = vadd.f32 %v7418, 1.0
      %v7449 = vadd.f32 %v7420, 1.0
      %v7450 = vadd.f32 %v7422, 1.0
      %v7451 = vadd.f32 %v7424, 1.0
      %v7452 = vadd.f32 %v7426, 1.0
      %v7453 = vadd.f32 %v7428, 1.0
      %v7454 = vadd.f32 %v7430, 1.0
      %v7455 = vadd.f32 %v7432, 1.0
      %v7456 = vadd.f32 %v7434, 1.0
      %v7457 = vadd.f32 %v7436, 1.0
      %v7458 = vadd.f32 %v7438, 1.0
      %v7459 = vadd.f32 %v7440, 1.0
      %v7460 = vadd.f32 %v7442, 1.0
      %v7461 = vadd.f32 %v7444, 1.0
      %v7462 = vadd.f32 %v7446, 1.0
      %v7463 = vrcp.pop %v7447
      %v7464 = vmul.f32 1.0, %v7463
      %v7465 = vrcp.pop %v7448
      %v7466 = vmul.f32 1.0, %v7465
      %v7467 = vrcp.pop %v7449
      %v7468 = vmul.f32 1.0, %v7467
      %v7469 = vrcp.pop %v7450
      %v7470 = vmul.f32 1.0, %v7469
      %v7471 = vrcp.pop %v7451
      %v7472 = vmul.f32 1.0, %v7471
      %v7473 = vrcp.pop %v7452
      %v7474 = vmul.f32 1.0, %v7473
      %v7475 = vrcp.pop %v7453
      %v7476 = vmul.f32 1.0, %v7475
      %v7477 = vrcp.pop %v7454
      %v7478 = vmul.f32 1.0, %v7477
      %v7479 = vrcp.pop %v7455
      %v7480 = vmul.f32 1.0, %v7479
      %v7481 = vrcp.pop %v7456
      %v7482 = vmul.f32 1.0, %v7481
      %v7483 = vrcp.pop %v7457
      %v7484 = vmul.f32 1.0, %v7483
      %v7485 = vrcp.pop %v7458
      %v7486 = vmul.f32 1.0, %v7485
      %v7487 = vrcp.pop %v7459
      %v7488 = vmul.f32 1.0, %v7487
      %v7489 = vrcp.pop %v7460
      %v7490 = vmul.f32 1.0, %v7489
      %v7491 = vrcp.pop %v7461
      %v7492 = vmul.f32 1.0, %v7491
      %v7493 = vrcp.pop %v7462
      %v7494 = vmul.f32 1.0, %v7493
      %7511 = vrot.lane.b32.xlu0 %v7165, 32
      %v7512 = vpop.permute.xlu0 %7511
      %7513 = vrot.lane.b32.xlu0 %v7166, 32
      %v7514 = vpop.permute.xlu0 %7513
      %7515 = vrot.lane.b32.xlu0 %v7167, 32
      %v7516 = vpop.permute.xlu0 %7515
      %7517 = vrot.lane.b32.xlu0 %v7168, 32
      %v7518 = vpop.permute.xlu0 %7517
      %7519 = vrot.lane.b32.xlu0 %v7169, 32
      %v7520 = vpop.permute.xlu0 %7519
      %7521 = vrot.lane.b32.xlu0 %v7170, 32
      %v7522 = vpop.permute.xlu0 %7521
      %7523 = vrot.lane.b32.xlu0 %v7171, 32
      %v7524 = vpop.permute.xlu0 %7523
      %7525 = vrot.lane.b32.xlu0 %v7172, 32
      %v7526 = vpop.permute.xlu0 %7525
      %7527 = vrot.lane.b32.xlu0 %v7173, 32
      %v7528 = vpop.permute.xlu0 %7527
      %7529 = vrot.lane.b32.xlu0 %v7174, 32
      %v7530 = vpop.permute.xlu0 %7529
      %7531 = vrot.lane.b32.xlu0 %v7175, 32
      %v7532 = vpop.permute.xlu0 %7531
      %7533 = vrot.lane.b32.xlu0 %v7176, 32
      %v7534 = vpop.permute.xlu0 %7533
      %7535 = vrot.lane.b32.xlu0 %v7177, 32
      %v7536 = vpop.permute.xlu0 %7535
      %7537 = vrot.lane.b32.xlu0 %v7178, 32
      %v7538 = vpop.permute.xlu0 %7537
      %7539 = vrot.lane.b32.xlu0 %v7179, 32
      %v7540 = vpop.permute.xlu0 %7539
      %7541 = vrot.lane.b32.xlu0 %v7180, 32
      %v7542 = vpop.permute.xlu0 %7541
      %v7559 = vsub.f32 %v7337, %v7512
      %v7560 = vsub.f32 %v7340, %v7514
      %v7561 = vsub.f32 %v7345, %v7516
      %v7562 = vsub.f32 %v7348, %v7518
      %v7563 = vsub.f32 %v7353, %v7520
      %v7564 = vsub.f32 %v7356, %v7522
      %v7565 = vsub.f32 %v7361, %v7524
      %v7566 = vsub.f32 %v7364, %v7526
      %v7567 = vsub.f32 %v7369, %v7528
      %v7568 = vsub.f32 %v7372, %v7530
      %v7569 = vsub.f32 %v7377, %v7532
      %v7570 = vsub.f32 %v7380, %v7534
      %v7571 = vsub.f32 %v7385, %v7536
      %v7572 = vsub.f32 %v7388, %v7538
      %v7573 = vsub.f32 %v7393, %v7540
      %v7574 = vsub.f32 %v7396, %v7542
      %7591 = vrot.lane.b32.xlu0 %v7559, 96
      %v7592 = vpop.permute.xlu0 %7591
      %7593 = vrot.lane.b32.xlu0 %v7560, 96
      %v7594 = vpop.permute.xlu0 %7593
      %7595 = vrot.lane.b32.xlu0 %v7561, 96
      %v7596 = vpop.permute.xlu0 %7595
      %7597 = vrot.lane.b32.xlu0 %v7562, 96
      %v7598 = vpop.permute.xlu0 %7597
      %7599 = vrot.lane.b32.xlu0 %v7563, 96
      %v7600 = vpop.permute.xlu0 %7599
      %7601 = vrot.lane.b32.xlu0 %v7564, 96
      %v7602 = vpop.permute.xlu0 %7601
      %7603 = vrot.lane.b32.xlu0 %v7565, 96
      %v7604 = vpop.permute.xlu0 %7603
      %7605 = vrot.lane.b32.xlu0 %v7566, 96
      %v7606 = vpop.permute.xlu0 %7605
      %7607 = vrot.lane.b32.xlu0 %v7567, 96
      %v7608 = vpop.permute.xlu0 %7607
      %7609 = vrot.lane.b32.xlu0 %v7568, 96
      %v7610 = vpop.permute.xlu0 %7609
      %7611 = vrot.lane.b32.xlu0 %v7569, 96
      %v7612 = vpop.permute.xlu0 %7611
      %7613 = vrot.lane.b32.xlu0 %v7570, 96
      %v7614 = vpop.permute.xlu0 %7613
      %7615 = vrot.lane.b32.xlu0 %v7571, 96
      %v7616 = vpop.permute.xlu0 %7615
      %7617 = vrot.lane.b32.xlu0 %v7572, 96
      %v7618 = vpop.permute.xlu0 %7617
      %7619 = vrot.lane.b32.xlu0 %v7573, 96
      %v7620 = vpop.permute.xlu0 %7619
      %7621 = vrot.lane.b32.xlu0 %v7574, 96
      %v7622 = vpop.permute.xlu0 %7621
      %v7639 = vmul.f32 %v7464, %v7592
      %v7640 = vmul.f32 %v7466, %v7594
      %v7641 = vmul.f32 %v7468, %v7596
      %v7642 = vmul.f32 %v7470, %v7598
      %v7643 = vmul.f32 %v7472, %v7600
      %v7644 = vmul.f32 %v7474, %v7602
      %v7645 = vmul.f32 %v7476, %v7604
      %v7646 = vmul.f32 %v7478, %v7606
      %v7647 = vmul.f32 %v7480, %v7608
      %v7648 = vmul.f32 %v7482, %v7610
      %v7649 = vmul.f32 %v7484, %v7612
      %v7650 = vmul.f32 %v7486, %v7614
      %v7651 = vmul.f32 %v7488, %v7616
      %v7652 = vmul.f32 %v7490, %v7618
      %v7653 = vmul.f32 %v7492, %v7620
      %v7654 = vmul.f32 %v7494, %v7622
      %v7655 = vadd.f32 %v7165, %v7639
      %v7656 = vadd.f32 %v7166, %v7640
      %v7657 = vadd.f32 %v7167, %v7641
      %v7658 = vadd.f32 %v7168, %v7642
      %v7659 = vadd.f32 %v7169, %v7643
      %v7660 = vadd.f32 %v7170, %v7644
      %v7661 = vadd.f32 %v7171, %v7645
      %v7662 = vadd.f32 %v7172, %v7646
      %v7663 = vadd.f32 %v7173, %v7647
      %v7664 = vadd.f32 %v7174, %v7648
      %v7665 = vadd.f32 %v7175, %v7649
      %v7666 = vadd.f32 %v7176, %v7650
      %v7667 = vadd.f32 %v7177, %v7651
      %v7668 = vadd.f32 %v7178, %v7652
      %v7669 = vadd.f32 %v7179, %v7653
      %v7670 = vadd.f32 %v7180, %v7654
      %s7671 = scalar_lea.vmem %s9, 160
      %v7672 = vld [vmem:[%s7671] sm:$0xf]
      %v7673 = vld [vmem:[%s7671 + $0x4] sm:$0xf]
      %v7674 = vld [vmem:[%s7671 + $0x8] sm:$0xf]
      %v7675 = vld [vmem:[%s7671 + $0xc] sm:$0xf]
      %s7676 = scalar_lea.vmem %s10, 5
      %v7677 = vld [vmem:[%s7676] sm:$0x1]
      %v7678 = vpack.c.bf16 %v7656, %v7655
      %v7679 = vpack.c.bf16 %v7658, %v7657
      %v7680 = vpack.c.bf16 %v7660, %v7659
      %v7681 = vpack.c.bf16 %v7662, %v7661
      %v7682 = vpack.c.bf16 %v7664, %v7663
      %v7683 = vpack.c.bf16 %v7666, %v7665
      %v7684 = vpack.c.bf16 %v7668, %v7667
      %v7685 = vpack.c.bf16 %v7670, %v7669
      %v7687 = vlaneseq
      %v7688 = vshrl.u32 %v7687, 7
      %v7689 = vsub.s32 0, %v7688
      %v7690 = vrot.slane %v7677, %v7689
      %v7696 = vunpack.c.l.b16 %v7672
      %v7697 = vunpack.c.l.b16 %v7673
      %v7698 = vunpack.c.l.b16 %v7674
      %v7699 = vunpack.c.l.b16 %v7675
      %v7700 = vpack.c.b16 %v7697, %v7696
      %v7701 = vpack.c.b16 %v7699, %v7698
      %v7705 = vsel %vm1389, %v7678, 0
      %v7708 = vsel %vm1389, %v7679, 0
      %v7711 = vsel %vm1389, %v7680, 0
      %v7714 = vsel %vm1389, %v7681, 0
      %v7717 = vsel %vm1389, %v7682, 0
      %v7720 = vsel %vm1389, %v7683, 0
      %v7723 = vsel %vm1389, %v7684, 0
      %v7726 = vsel %vm1389, %v7685, 0
      %7728 = vmatprep.subr.bf16.mxu0 0
      %7729 = vmatpush1.bf16.msra.mxu0 %v7700
      %7730 = vmatprep.subr.bf16.mxu0 0
      %7731 = vmatpush1.bf16.msra.mxu0 %v7701
      %7732 = vmatprep.subr.bf16.mxu0 0
      %7733 = vmatpush1.bf16.msra.mxu0 0
      %7734 = vmatprep.subr.bf16.mxu0 0
      %7735 = vmatpush1.bf16.msra.mxu0 0
      %7736 = vmatprep.subr.bf16.mxu0 0
      %7737 = vmatpush1.bf16.msra.mxu0 0
      %7738 = vmatprep.subr.bf16.mxu0 0
      %7739 = vmatpush1.bf16.msra.mxu0 0
      %7740 = vmatprep.subr.bf16.mxu0 0
      %7741 = vmatpush1.bf16.msra.mxu0 0
      %7742 = vmatprep.subr.bf16.mxu0 0
      %7743 = vmatpush1.bf16.msra.mxu0 0
      %7744 = vmatprep.subr.bf16.mxu0 0
      %7745 = vmatpush1.bf16.msra.mxu0 0
      %7746 = vmatprep.subr.bf16.mxu0 0
      %7747 = vmatpush1.bf16.msra.mxu0 0
      %7748 = vmatprep.subr.bf16.mxu0 0
      %7749 = vmatpush1.bf16.msra.mxu0 0
      %7750 = vmatprep.subr.bf16.mxu0 0
      %7751 = vmatpush1.bf16.msra.mxu0 0
      %7752 = vmatprep.subr.bf16.mxu0 0
      %7753 = vmatpush1.bf16.msra.mxu0 0
      %7754 = vmatprep.subr.bf16.mxu0 0
      %7755 = vmatpush1.bf16.msra.mxu0 0
      %7756 = vmatprep.subr.bf16.mxu0 0
      %7757 = vmatpush1.bf16.msra.mxu0 0
      %7758 = vmatprep.subr.bf16.mxu0 0
      %7759 = vmatpush1.bf16.msra.mxu0 0
      %7760 = vmatprep.mubr.bf16.mxu0 0
      %7761 = vmatmul.mubr.bf16.gmra.mrb[0].mxu0 %v7705
      %v7762 = vpop.f32.mrb[0].mxu0
      %v7763 = vadd.f32 %v7690, %v7762
      %v7764 = vpop.f32.mrb[0].mxu0
      %v7765 = vpop.f32.mrb[0].mxu0
      %v7766 = vadd.f32 %v7690, %v7765
      %v7767 = vpop.f32.mrb[0].mxu0
      %7768 = vmatprep.mubr.bf16.mxu0 0
      %7769 = vmatmul.mubr.bf16.gmra.mrb[0].mxu0 %v7708
      %v7770 = vpop.f32.mrb[0].mxu0
      %v7771 = vadd.f32 %v7690, %v7770
      %v7772 = vpop.f32.mrb[0].mxu0
      %v7773 = vpop.f32.mrb[0].mxu0
      %v7774 = vadd.f32 %v7690, %v7773
      %v7775 = vpop.f32.mrb[0].mxu0
      %7776 = vmatprep.mubr.bf16.mxu0 0
      %7777 = vmatmul.mubr.bf16.gmra.mrb[0].mxu0 %v7711
      %v7778 = vpop.f32.mrb[0].mxu0
      %v7779 = vadd.f32 %v7690, %v7778
      %v7780 = vpop.f32.mrb[0].mxu0
      %v7781 = vpop.f32.mrb[0].mxu0
      %v7782 = vadd.f32 %v7690, %v7781
      %v7783 = vpop.f32.mrb[0].mxu0
      %7784 = vmatprep.mubr.bf16.mxu0 0
      %7785 = vmatmul.mubr.bf16.gmra.mrb[0].mxu0 %v7714
      %v7786 = vpop.f32.mrb[0].mxu0
      %v7787 = vadd.f32 %v7690, %v7786
      %v7788 = vpop.f32.mrb[0].mxu0
      %v7789 = vpop.f32.mrb[0].mxu0
      %v7790 = vadd.f32 %v7690, %v7789
      %v7791 = vpop.f32.mrb[0].mxu0
      %7792 = vmatprep.mubr.bf16.mxu0 0
      %7793 = vmatmul.mubr.bf16.gmra.mrb[0].mxu0 %v7717
      %v7794 = vpop.f32.mrb[0].mxu0
      %v7795 = vadd.f32 %v7690, %v7794
      %v7796 = vpop.f32.mrb[0].mxu0
      %v7797 = vpop.f32.mrb[0].mxu0
      %v7798 = vadd.f32 %v7690, %v7797
      %v7799 = vpop.f32.mrb[0].mxu0
      %7800 = vmatprep.mubr.bf16.mxu0 0
      %7801 = vmatmul.mubr.bf16.gmra.mrb[0].mxu0 %v7720
      %v7802 = vpop.f32.mrb[0].mxu0
      %v7803 = vadd.f32 %v7690, %v7802
      %v7804 = vpop.f32.mrb[0].mxu0
      %v7805 = vpop.f32.mrb[0].mxu0
      %v7806 = vadd.f32 %v7690, %v7805
      %v7807 = vpop.f32.mrb[0].mxu0
      %7808 = vmatprep.mubr.bf16.mxu0 0
      %7809 = vmatmul.mubr.bf16.gmra.mrb[0].mxu0 %v7723
      %v7810 = vpop.f32.mrb[0].mxu0
      %v7811 = vadd.f32 %v7690, %v7810
      %v7812 = vpop.f32.mrb[0].mxu0
      %v7813 = vpop.f32.mrb[0].mxu0
      %v7814 = vadd.f32 %v7690, %v7813
      %v7815 = vpop.f32.mrb[0].mxu0
      %7816 = vmatprep.mubr.bf16.mxu0 0
      %7817 = vmatmul.mubr.bf16.gmra.mrb[0].mxu0 %v7726
      %v7818 = vpop.f32.mrb[0].mxu0
      %v7819 = vadd.f32 %v7690, %v7818
      %v7820 = vpop.f32.mrb[0].mxu0
      %v7821 = vpop.f32.mrb[0].mxu0
      %v7822 = vadd.f32 %v7690, %v7821
      %v7823 = vpop.f32.mrb[0].mxu0
      %7824 = vdwg.mxu0
      %v7825 = vxor.u32 %v7763, 2147483648
      %v7826 = vxor.u32 %v7766, 2147483648
      %v7827 = vxor.u32 %v7771, 2147483648
      %v7828 = vxor.u32 %v7774, 2147483648
      %v7829 = vxor.u32 %v7779, 2147483648
      %v7830 = vxor.u32 %v7782, 2147483648
      %v7831 = vxor.u32 %v7787, 2147483648
      %v7832 = vxor.u32 %v7790, 2147483648
      %v7833 = vxor.u32 %v7795, 2147483648
      %v7834 = vxor.u32 %v7798, 2147483648
      %v7835 = vxor.u32 %v7803, 2147483648
      %v7836 = vxor.u32 %v7806, 2147483648
      %v7837 = vxor.u32 %v7811, 2147483648
      %v7838 = vxor.u32 %v7814, 2147483648
      %v7839 = vxor.u32 %v7819, 2147483648
      %v7840 = vxor.u32 %v7822, 2147483648
      %v7841 = vmul.f32 %v7825, 1.442695
      %v7842 = vpow.pop %v7841
      %v7843 = vmul.f32 %v7826, 1.442695
      %v7844 = vpow.pop %v7843
      %v7845 = vmul.f32 %v7827, 1.442695
      %v7846 = vpow.pop %v7845
      %v7847 = vmul.f32 %v7828, 1.442695
      %v7848 = vpow.pop %v7847
      %v7849 = vmul.f32 %v7829, 1.442695
      %v7850 = vpow.pop %v7849
      %v7851 = vmul.f32 %v7830, 1.442695
      %v7852 = vpow.pop %v7851
      %v7853 = vmul.f32 %v7831, 1.442695
      %v7854 = vpow.pop %v7853
      %v7855 = vmul.f32 %v7832, 1.442695
      %v7856 = vpow.pop %v7855
      %v7857 = vmul.f32 %v7833, 1.442695
      %v7858 = vpow.pop %v7857
      %v7859 = vmul.f32 %v7834, 1.442695
      %v7860 = vpow.pop %v7859
      %v7861 = vmul.f32 %v7835, 1.442695
      %v7862 = vpow.pop %v7861
      %v7863 = vmul.f32 %v7836, 1.442695
      %v7864 = vpow.pop %v7863
      %v7865 = vmul.f32 %v7837, 1.442695
      %v7866 = vpow.pop %v7865
      %v7867 = vmul.f32 %v7838, 1.442695
      %v7868 = vpow.pop %v7867
      %v7869 = vmul.f32 %v7839, 1.442695
      %v7870 = vpow.pop %v7869
      %v7871 = vmul.f32 %v7840, 1.442695
      %v7872 = vpow.pop %v7871
      %v7873 = vadd.f32 %v7842, 1.0
      %v7874 = vadd.f32 %v7844, 1.0
      %v7875 = vadd.f32 %v7846, 1.0
      %v7876 = vadd.f32 %v7848, 1.0
      %v7877 = vadd.f32 %v7850, 1.0
      %v7878 = vadd.f32 %v7852, 1.0
      %v7879 = vadd.f32 %v7854, 1.0
      %v7880 = vadd.f32 %v7856, 1.0
      %v7881 = vadd.f32 %v7858, 1.0
      %v7882 = vadd.f32 %v7860, 1.0
      %v7883 = vadd.f32 %v7862, 1.0
      %v7884 = vadd.f32 %v7864, 1.0
      %v7885 = vadd.f32 %v7866, 1.0
      %v7886 = vadd.f32 %v7868, 1.0
      %v7887 = vadd.f32 %v7870, 1.0
      %v7888 = vadd.f32 %v7872, 1.0
      %v7889 = vrcp.pop %v7873
      %v7890 = vmul.f32 1.0, %v7889
      %v7891 = vrcp.pop %v7874
      %v7892 = vmul.f32 1.0, %v7891
      %v7893 = vrcp.pop %v7875
      %v7894 = vmul.f32 1.0, %v7893
      %v7895 = vrcp.pop %v7876
      %v7896 = vmul.f32 1.0, %v7895
      %v7897 = vrcp.pop %v7877
      %v7898 = vmul.f32 1.0, %v7897
      %v7899 = vrcp.pop %v7878
      %v7900 = vmul.f32 1.0, %v7899
      %v7901 = vrcp.pop %v7879
      %v7902 = vmul.f32 1.0, %v7901
      %v7903 = vrcp.pop %v7880
      %v7904 = vmul.f32 1.0, %v7903
      %v7905 = vrcp.pop %v7881
      %v7906 = vmul.f32 1.0, %v7905
      %v7907 = vrcp.pop %v7882
      %v7908 = vmul.f32 1.0, %v7907
      %v7909 = vrcp.pop %v7883
      %v7910 = vmul.f32 1.0, %v7909
      %v7911 = vrcp.pop %v7884
      %v7912 = vmul.f32 1.0, %v7911
      %v7913 = vrcp.pop %v7885
      %v7914 = vmul.f32 1.0, %v7913
      %v7915 = vrcp.pop %v7886
      %v7916 = vmul.f32 1.0, %v7915
      %v7917 = vrcp.pop %v7887
      %v7918 = vmul.f32 1.0, %v7917
      %v7919 = vrcp.pop %v7888
      %v7920 = vmul.f32 1.0, %v7919
      %7937 = vrot.lane.b32.xlu0 %v7655, 32
      %v7938 = vpop.permute.xlu0 %7937
      %7939 = vrot.lane.b32.xlu0 %v7656, 32
      %v7940 = vpop.permute.xlu0 %7939
      %7941 = vrot.lane.b32.xlu0 %v7657, 32
      %v7942 = vpop.permute.xlu0 %7941
      %7943 = vrot.lane.b32.xlu0 %v7658, 32
      %v7944 = vpop.permute.xlu0 %7943
      %7945 = vrot.lane.b32.xlu0 %v7659, 32
      %v7946 = vpop.permute.xlu0 %7945
      %7947 = vrot.lane.b32.xlu0 %v7660, 32
      %v7948 = vpop.permute.xlu0 %7947
      %7949 = vrot.lane.b32.xlu0 %v7661, 32
      %v7950 = vpop.permute.xlu0 %7949
      %7951 = vrot.lane.b32.xlu0 %v7662, 32
      %v7952 = vpop.permute.xlu0 %7951
      %7953 = vrot.lane.b32.xlu0 %v7663, 32
      %v7954 = vpop.permute.xlu0 %7953
      %7955 = vrot.lane.b32.xlu0 %v7664, 32
      %v7956 = vpop.permute.xlu0 %7955
      %7957 = vrot.lane.b32.xlu0 %v7665, 32
      %v7958 = vpop.permute.xlu0 %7957
      %7959 = vrot.lane.b32.xlu0 %v7666, 32
      %v7960 = vpop.permute.xlu0 %7959
      %7961 = vrot.lane.b32.xlu0 %v7667, 32
      %v7962 = vpop.permute.xlu0 %7961
      %7963 = vrot.lane.b32.xlu0 %v7668, 32
      %v7964 = vpop.permute.xlu0 %7963
      %7965 = vrot.lane.b32.xlu0 %v7669, 32
      %v7966 = vpop.permute.xlu0 %7965
      %7967 = vrot.lane.b32.xlu0 %v7670, 32
      %v7968 = vpop.permute.xlu0 %7967
      %v7985 = vsub.f32 %v7763, %v7938
      %v7986 = vsub.f32 %v7766, %v7940
      %v7987 = vsub.f32 %v7771, %v7942
      %v7988 = vsub.f32 %v7774, %v7944
      %v7989 = vsub.f32 %v7779, %v7946
      %v7990 = vsub.f32 %v7782, %v7948
      %v7991 = vsub.f32 %v7787, %v7950
      %v7992 = vsub.f32 %v7790, %v7952
      %v7993 = vsub.f32 %v7795, %v7954
      %v7994 = vsub.f32 %v7798, %v7956
      %v7995 = vsub.f32 %v7803, %v7958
      %v7996 = vsub.f32 %v7806, %v7960
      %v7997 = vsub.f32 %v7811, %v7962
      %v7998 = vsub.f32 %v7814, %v7964
      %v7999 = vsub.f32 %v7819, %v7966
      %v8000 = vsub.f32 %v7822, %v7968
      %8017 = vrot.lane.b32.xlu0 %v7985, 96
      %v8018 = vpop.permute.xlu0 %8017
      %8019 = vrot.lane.b32.xlu0 %v7986, 96
      %v8020 = vpop.permute.xlu0 %8019
      %8021 = vrot.lane.b32.xlu0 %v7987, 96
      %v8022 = vpop.permute.xlu0 %8021
      %8023 = vrot.lane.b32.xlu0 %v7988, 96
      %v8024 = vpop.permute.xlu0 %8023
      %8025 = vrot.lane.b32.xlu0 %v7989, 96
      %v8026 = vpop.permute.xlu0 %8025
      %8027 = vrot.lane.b32.xlu0 %v7990, 96
      %v8028 = vpop.permute.xlu0 %8027
      %8029 = vrot.lane.b32.xlu0 %v7991, 96
      %v8030 = vpop.permute.xlu0 %8029
      %8031 = vrot.lane.b32.xlu0 %v7992, 96
      %v8032 = vpop.permute.xlu0 %8031
      %8033 = vrot.lane.b32.xlu0 %v7993, 96
      %v8034 = vpop.permute.xlu0 %8033
      %8035 = vrot.lane.b32.xlu0 %v7994, 96
      %v8036 = vpop.permute.xlu0 %8035
      %8037 = vrot.lane.b32.xlu0 %v7995, 96
      %v8038 = vpop.permute.xlu0 %8037
      %8039 = vrot.lane.b32.xlu0 %v7996, 96
      %v8040 = vpop.permute.xlu0 %8039
      %8041 = vrot.lane.b32.xlu0 %v7997, 96
      %v8042 = vpop.permute.xlu0 %8041
      %8043 = vrot.lane.b32.xlu0 %v7998, 96
      %v8044 = vpop.permute.xlu0 %8043
      %8045 = vrot.lane.b32.xlu0 %v7999, 96
      %v8046 = vpop.permute.xlu0 %8045
      %8047 = vrot.lane.b32.xlu0 %v8000, 96
      %v8048 = vpop.permute.xlu0 %8047
      %v8065 = vmul.f32 %v7890, %v8018
      %v8066 = vmul.f32 %v7892, %v8020
      %v8067 = vmul.f32 %v7894, %v8022
      %v8068 = vmul.f32 %v7896, %v8024
      %v8069 = vmul.f32 %v7898, %v8026
      %v8070 = vmul.f32 %v7900, %v8028
      %v8071 = vmul.f32 %v7902, %v8030
      %v8072 = vmul.f32 %v7904, %v8032
      %v8073 = vmul.f32 %v7906, %v8034
      %v8074 = vmul.f32 %v7908, %v8036
      %v8075 = vmul.f32 %v7910, %v8038
      %v8076 = vmul.f32 %v7912, %v8040
      %v8077 = vmul.f32 %v7914, %v8042
      %v8078 = vmul.f32 %v7916, %v8044
      %v8079 = vmul.f32 %v7918, %v8046
      %v8080 = vmul.f32 %v7920, %v8048
      %v8081 = vadd.f32 %v7655, %v8065
      %v8082 = vadd.f32 %v7656, %v8066
      %v8083 = vadd.f32 %v7657, %v8067
      %v8084 = vadd.f32 %v7658, %v8068
      %v8085 = vadd.f32 %v7659, %v8069
      %v8086 = vadd.f32 %v7660, %v8070
      %v8087 = vadd.f32 %v7661, %v8071
      %v8088 = vadd.f32 %v7662, %v8072
      %v8089 = vadd.f32 %v7663, %v8073
      %v8090 = vadd.f32 %v7664, %v8074
      %v8091 = vadd.f32 %v7665, %v8075
      %v8092 = vadd.f32 %v7666, %v8076
      %v8093 = vadd.f32 %v7667, %v8077
      %v8094 = vadd.f32 %v7668, %v8078
      %v8095 = vadd.f32 %v7669, %v8079
      %v8096 = vadd.f32 %v7670, %v8080
      %s8097 = scalar_lea.vmem %s9, 192
      %v8098 = vld [vmem:[%s8097] sm:$0xf]
      %v8099 = vld [vmem:[%s8097 + $0x4] sm:$0xf]
      %v8100 = vld [vmem:[%s8097 + $0x8] sm:$0xf]
      %v8101 = vld [vmem:[%s8097 + $0xc] sm:$0xf]
      %s8102 = scalar_lea.vmem %s10, 6
      %v8103 = vld [vmem:[%s8102] sm:$0x1]
      %v8104 = vpack.c.bf16 %v8082, %v8081
      %v8105 = vpack.c.bf16 %v8084, %v8083
      %v8106 = vpack.c.bf16 %v8086, %v8085
      %v8107 = vpack.c.bf16 %v8088, %v8087
      %v8108 = vpack.c.bf16 %v8090, %v8089
      %v8109 = vpack.c.bf16 %v8092, %v8091
      %v8110 = vpack.c.bf16 %v8094, %v8093
      %v8111 = vpack.c.bf16 %v8096, %v8095
      %v8113 = vlaneseq
      %v8114 = vshrl.u32 %v8113, 7
      %v8115 = vsub.s32 0, %v8114
      %v8116 = vrot.slane %v8103, %v8115
      %v8122 = vunpack.c.l.b16 %v8098
      %v8123 = vunpack.c.l.b16 %v8099
      %v8124 = vunpack.c.l.b16 %v8100
      %v8125 = vunpack.c.l.b16 %v8101
      %v8126 = vpack.c.b16 %v8123, %v8122
      %v8127 = vpack.c.b16 %v8125, %v8124
      %v8131 = vsel %vm1389, %v8104, 0
      %v8134 = vsel %vm1389, %v8105, 0
      %v8137 = vsel %vm1389, %v8106, 0
      %v8140 = vsel %vm1389, %v8107, 0
      %v8143 = vsel %vm1389, %v8108, 0
      %v8146 = vsel %vm1389, %v8109, 0
      %v8149 = vsel %vm1389, %v8110, 0
      %v8152 = vsel %vm1389, %v8111, 0
      %8154 = vmatprep.subr.bf16.mxu0 0
      %8155 = vmatpush1.bf16.msra.mxu0 %v8126
      %8156 = vmatprep.subr.bf16.mxu0 0
      %8157 = vmatpush1.bf16.msra.mxu0 %v8127
      %8158 = vmatprep.subr.bf16.mxu0 0
      %8159 = vmatpush1.bf16.msra.mxu0 0
      %8160 = vmatprep.subr.bf16.mxu0 0
      %8161 = vmatpush1.bf16.msra.mxu0 0
      %8162 = vmatprep.subr.bf16.mxu0 0
      %8163 = vmatpush1.bf16.msra.mxu0 0
      %8164 = vmatprep.subr.bf16.mxu0 0
      %8165 = vmatpush1.bf16.msra.mxu0 0
      %8166 = vmatprep.subr.bf16.mxu0 0
      %8167 = vmatpush1.bf16.msra.mxu0 0
      %8168 = vmatprep.subr.bf16.mxu0 0
      %8169 = vmatpush1.bf16.msra.mxu0 0
      %8170 = vmatprep.subr.bf16.mxu0 0
      %8171 = vmatpush1.bf16.msra.mxu0 0
      %8172 = vmatprep.subr.bf16.mxu0 0
      %8173 = vmatpush1.bf16.msra.mxu0 0
      %8174 = vmatprep.subr.bf16.mxu0 0
      %8175 = vmatpush1.bf16.msra.mxu0 0
      %8176 = vmatprep.subr.bf16.mxu0 0
      %8177 = vmatpush1.bf16.msra.mxu0 0
      %8178 = vmatprep.subr.bf16.mxu0 0
      %8179 = vmatpush1.bf16.msra.mxu0 0
      %8180 = vmatprep.subr.bf16.mxu0 0
      %8181 = vmatpush1.bf16.msra.mxu0 0
      %8182 = vmatprep.subr.bf16.mxu0 0
      %8183 = vmatpush1.bf16.msra.mxu0 0
      %8184 = vmatprep.subr.bf16.mxu0 0
      %8185 = vmatpush1.bf16.msra.mxu0 0
      %8186 = vmatprep.mubr.bf16.mxu0 0
      %8187 = vmatmul.mubr.bf16.gmra.mrb[0].mxu0 %v8131
      %v8188 = vpop.f32.mrb[0].mxu0
      %v8189 = vadd.f32 %v8116, %v8188
      %v8190 = vpop.f32.mrb[0].mxu0
      %v8191 = vpop.f32.mrb[0].mxu0
      %v8192 = vadd.f32 %v8116, %v8191
      %v8193 = vpop.f32.mrb[0].mxu0
      %8194 = vmatprep.mubr.bf16.mxu0 0
      %8195 = vmatmul.mubr.bf16.gmra.mrb[0].mxu0 %v8134
      %v8196 = vpop.f32.mrb[0].mxu0
      %v8197 = vadd.f32 %v8116, %v8196
      %v8198 = vpop.f32.mrb[0].mxu0
      %v8199 = vpop.f32.mrb[0].mxu0
      %v8200 = vadd.f32 %v8116, %v8199
      %v8201 = vpop.f32.mrb[0].mxu0
      %8202 = vmatprep.mubr.bf16.mxu0 0
      %8203 = vmatmul.mubr.bf16.gmra.mrb[0].mxu0 %v8137
      %v8204 = vpop.f32.mrb[0].mxu0
      %v8205 = vadd.f32 %v8116, %v8204
      %v8206 = vpop.f32.mrb[0].mxu0
      %v8207 = vpop.f32.mrb[0].mxu0
      %v8208 = vadd.f32 %v8116, %v8207
      %v8209 = vpop.f32.mrb[0].mxu0
      %8210 = vmatprep.mubr.bf16.mxu0 0
      %8211 = vmatmul.mubr.bf16.gmra.mrb[0].mxu0 %v8140
      %v8212 = vpop.f32.mrb[0].mxu0
      %v8213 = vadd.f32 %v8116, %v8212
      %v8214 = vpop.f32.mrb[0].mxu0
      %v8215 = vpop.f32.mrb[0].mxu0
      %v8216 = vadd.f32 %v8116, %v8215
      %v8217 = vpop.f32.mrb[0].mxu0
      %8218 = vmatprep.mubr.bf16.mxu0 0
      %8219 = vmatmul.mubr.bf16.gmra.mrb[0].mxu0 %v8143
      %v8220 = vpop.f32.mrb[0].mxu0
      %v8221 = vadd.f32 %v8116, %v8220
      %v8222 = vpop.f32.mrb[0].mxu0
      %v8223 = vpop.f32.mrb[0].mxu0
      %v8224 = vadd.f32 %v8116, %v8223
      %v8225 = vpop.f32.mrb[0].mxu0
      %8226 = vmatprep.mubr.bf16.mxu0 0
      %8227 = vmatmul.mubr.bf16.gmra.mrb[0].mxu0 %v8146
      %v8228 = vpop.f32.mrb[0].mxu0
      %v8229 = vadd.f32 %v8116, %v8228
      %v8230 = vpop.f32.mrb[0].mxu0
      %v8231 = vpop.f32.mrb[0].mxu0
      %v8232 = vadd.f32 %v8116, %v8231
      %v8233 = vpop.f32.mrb[0].mxu0
      %8234 = vmatprep.mubr.bf16.mxu0 0
      %8235 = vmatmul.mubr.bf16.gmra.mrb[0].mxu0 %v8149
      %v8236 = vpop.f32.mrb[0].mxu0
      %v8237 = vadd.f32 %v8116, %v8236
      %v8238 = vpop.f32.mrb[0].mxu0
      %v8239 = vpop.f32.mrb[0].mxu0
      %v8240 = vadd.f32 %v8116, %v8239
      %v8241 = vpop.f32.mrb[0].mxu0
      %8242 = vmatprep.mubr.bf16.mxu0 0
      %8243 = vmatmul.mubr.bf16.gmra.mrb[0].mxu0 %v8152
      %v8244 = vpop.f32.mrb[0].mxu0
      %v8245 = vadd.f32 %v8116, %v8244
      %v8246 = vpop.f32.mrb[0].mxu0
      %v8247 = vpop.f32.mrb[0].mxu0
      %v8248 = vadd.f32 %v8116, %v8247
      %v8249 = vpop.f32.mrb[0].mxu0
      %8250 = vdwg.mxu0
      %v8251 = vxor.u32 %v8189, 2147483648
      %v8252 = vxor.u32 %v8192, 2147483648
      %v8253 = vxor.u32 %v8197, 2147483648
      %v8254 = vxor.u32 %v8200, 2147483648
      %v8255 = vxor.u32 %v8205, 2147483648
      %v8256 = vxor.u32 %v8208, 2147483648
      %v8257 = vxor.u32 %v8213, 2147483648
      %v8258 = vxor.u32 %v8216, 2147483648
      %v8259 = vxor.u32 %v8221, 2147483648
      %v8260 = vxor.u32 %v8224, 2147483648
      %v8261 = vxor.u32 %v8229, 2147483648
      %v8262 = vxor.u32 %v8232, 2147483648
      %v8263 = vxor.u32 %v8237, 2147483648
      %v8264 = vxor.u32 %v8240, 2147483648
      %v8265 = vxor.u32 %v8245, 2147483648
      %v8266 = vxor.u32 %v8248, 2147483648
      %v8267 = vmul.f32 %v8251, 1.442695
      %v8268 = vpow.pop %v8267
      %v8269 = vmul.f32 %v8252, 1.442695
      %v8270 = vpow.pop %v8269
      %v8271 = vmul.f32 %v8253, 1.442695
      %v8272 = vpow.pop %v8271
      %v8273 = vmul.f32 %v8254, 1.442695
      %v8274 = vpow.pop %v8273
      %v8275 = vmul.f32 %v8255, 1.442695
      %v8276 = vpow.pop %v8275
      %v8277 = vmul.f32 %v8256, 1.442695
      %v8278 = vpow.pop %v8277
      %v8279 = vmul.f32 %v8257, 1.442695
      %v8280 = vpow.pop %v8279
      %v8281 = vmul.f32 %v8258, 1.442695
      %v8282 = vpow.pop %v8281
      %v8283 = vmul.f32 %v8259, 1.442695
      %v8284 = vpow.pop %v8283
      %v8285 = vmul.f32 %v8260, 1.442695
      %v8286 = vpow.pop %v8285
      %v8287 = vmul.f32 %v8261, 1.442695
      %v8288 = vpow.pop %v8287
      %v8289 = vmul.f32 %v8262, 1.442695
      %v8290 = vpow.pop %v8289
      %v8291 = vmul.f32 %v8263, 1.442695
      %v8292 = vpow.pop %v8291
      %v8293 = vmul.f32 %v8264, 1.442695
      %v8294 = vpow.pop %v8293
      %v8295 = vmul.f32 %v8265, 1.442695
      %v8296 = vpow.pop %v8295
      %v8297 = vmul.f32 %v8266, 1.442695
      %v8298 = vpow.pop %v8297
      %v8299 = vadd.f32 %v8268, 1.0
      %v8300 = vadd.f32 %v8270, 1.0
      %v8301 = vadd.f32 %v8272, 1.0
      %v8302 = vadd.f32 %v8274, 1.0
      %v8303 = vadd.f32 %v8276, 1.0
      %v8304 = vadd.f32 %v8278, 1.0
      %v8305 = vadd.f32 %v8280, 1.0
      %v8306 = vadd.f32 %v8282, 1.0
      %v8307 = vadd.f32 %v8284, 1.0
      %v8308 = vadd.f32 %v8286, 1.0
      %v8309 = vadd.f32 %v8288, 1.0
      %v8310 = vadd.f32 %v8290, 1.0
      %v8311 = vadd.f32 %v8292, 1.0
      %v8312 = vadd.f32 %v8294, 1.0
      %v8313 = vadd.f32 %v8296, 1.0
      %v8314 = vadd.f32 %v8298, 1.0
      %v8315 = vrcp.pop %v8299
      %v8316 = vmul.f32 1.0, %v8315
      %v8317 = vrcp.pop %v8300
      %v8318 = vmul.f32 1.0, %v8317
      %v8319 = vrcp.pop %v8301
      %v8320 = vmul.f32 1.0, %v8319
      %v8321 = vrcp.pop %v8302
      %v8322 = vmul.f32 1.0, %v8321
      %v8323 = vrcp.pop %v8303
      %v8324 = vmul.f32 1.0, %v8323
      %v8325 = vrcp.pop %v8304
      %v8326 = vmul.f32 1.0, %v8325
      %v8327 = vrcp.pop %v8305
      %v8328 = vmul.f32 1.0, %v8327
      %v8329 = vrcp.pop %v8306
      %v8330 = vmul.f32 1.0, %v8329
      %v8331 = vrcp.pop %v8307
      %v8332 = vmul.f32 1.0, %v8331
      %v8333 = vrcp.pop %v8308
      %v8334 = vmul.f32 1.0, %v8333
      %v8335 = vrcp.pop %v8309
      %v8336 = vmul.f32 1.0, %v8335
      %v8337 = vrcp.pop %v8310
      %v8338 = vmul.f32 1.0, %v8337
      %v8339 = vrcp.pop %v8311
      %v8340 = vmul.f32 1.0, %v8339
      %v8341 = vrcp.pop %v8312
      %v8342 = vmul.f32 1.0, %v8341
      %v8343 = vrcp.pop %v8313
      %v8344 = vmul.f32 1.0, %v8343
      %v8345 = vrcp.pop %v8314
      %v8346 = vmul.f32 1.0, %v8345
      %8363 = vrot.lane.b32.xlu0 %v8081, 32
      %v8364 = vpop.permute.xlu0 %8363
      %8365 = vrot.lane.b32.xlu0 %v8082, 32
      %v8366 = vpop.permute.xlu0 %8365
      %8367 = vrot.lane.b32.xlu0 %v8083, 32
      %v8368 = vpop.permute.xlu0 %8367
      %8369 = vrot.lane.b32.xlu0 %v8084, 32
      %v8370 = vpop.permute.xlu0 %8369
      %8371 = vrot.lane.b32.xlu0 %v8085, 32
      %v8372 = vpop.permute.xlu0 %8371
      %8373 = vrot.lane.b32.xlu0 %v8086, 32
      %v8374 = vpop.permute.xlu0 %8373
      %8375 = vrot.lane.b32.xlu0 %v8087, 32
      %v8376 = vpop.permute.xlu0 %8375
      %8377 = vrot.lane.b32.xlu0 %v8088, 32
      %v8378 = vpop.permute.xlu0 %8377
      %8379 = vrot.lane.b32.xlu0 %v8089, 32
      %v8380 = vpop.permute.xlu0 %8379
      %8381 = vrot.lane.b32.xlu0 %v8090, 32
      %v8382 = vpop.permute.xlu0 %8381
      %8383 = vrot.lane.b32.xlu0 %v8091, 32
      %v8384 = vpop.permute.xlu0 %8383
      %8385 = vrot.lane.b32.xlu0 %v8092, 32
      %v8386 = vpop.permute.xlu0 %8385
      %8387 = vrot.lane.b32.xlu0 %v8093, 32
      %v8388 = vpop.permute.xlu0 %8387
      %8389 = vrot.lane.b32.xlu0 %v8094, 32
      %v8390 = vpop.permute.xlu0 %8389
      %8391 = vrot.lane.b32.xlu0 %v8095, 32
      %v8392 = vpop.permute.xlu0 %8391
      %8393 = vrot.lane.b32.xlu0 %v8096, 32
      %v8394 = vpop.permute.xlu0 %8393
      %v8411 = vsub.f32 %v8189, %v8364
      %v8412 = vsub.f32 %v8192, %v8366
      %v8413 = vsub.f32 %v8197, %v8368
      %v8414 = vsub.f32 %v8200, %v8370
      %v8415 = vsub.f32 %v8205, %v8372
      %v8416 = vsub.f32 %v8208, %v8374
      %v8417 = vsub.f32 %v8213, %v8376
      %v8418 = vsub.f32 %v8216, %v8378
      %v8419 = vsub.f32 %v8221, %v8380
      %v8420 = vsub.f32 %v8224, %v8382
      %v8421 = vsub.f32 %v8229, %v8384
      %v8422 = vsub.f32 %v8232, %v8386
      %v8423 = vsub.f32 %v8237, %v8388
      %v8424 = vsub.f32 %v8240, %v8390
      %v8425 = vsub.f32 %v8245, %v8392
      %v8426 = vsub.f32 %v8248, %v8394
      %8443 = vrot.lane.b32.xlu0 %v8411, 96
      %v8444 = vpop.permute.xlu0 %8443
      %8445 = vrot.lane.b32.xlu0 %v8412, 96
      %v8446 = vpop.permute.xlu0 %8445
      %8447 = vrot.lane.b32.xlu0 %v8413, 96
      %v8448 = vpop.permute.xlu0 %8447
      %8449 = vrot.lane.b32.xlu0 %v8414, 96
      %v8450 = vpop.permute.xlu0 %8449
      %8451 = vrot.lane.b32.xlu0 %v8415, 96
      %v8452 = vpop.permute.xlu0 %8451
      %8453 = vrot.lane.b32.xlu0 %v8416, 96
      %v8454 = vpop.permute.xlu0 %8453
      %8455 = vrot.lane.b32.xlu0 %v8417, 96
      %v8456 = vpop.permute.xlu0 %8455
      %8457 = vrot.lane.b32.xlu0 %v8418, 96
      %v8458 = vpop.permute.xlu0 %8457
      %8459 = vrot.lane.b32.xlu0 %v8419, 96
      %v8460 = vpop.permute.xlu0 %8459
      %8461 = vrot.lane.b32.xlu0 %v8420, 96
      %v8462 = vpop.permute.xlu0 %8461
      %8463 = vrot.lane.b32.xlu0 %v8421, 96
      %v8464 = vpop.permute.xlu0 %8463
      %8465 = vrot.lane.b32.xlu0 %v8422, 96
      %v8466 = vpop.permute.xlu0 %8465
      %8467 = vrot.lane.b32.xlu0 %v8423, 96
      %v8468 = vpop.permute.xlu0 %8467
      %8469 = vrot.lane.b32.xlu0 %v8424, 96
      %v8470 = vpop.permute.xlu0 %8469
      %8471 = vrot.lane.b32.xlu0 %v8425, 96
      %v8472 = vpop.permute.xlu0 %8471
      %8473 = vrot.lane.b32.xlu0 %v8426, 96
      %v8474 = vpop.permute.xlu0 %8473
      %v8491 = vmul.f32 %v8316, %v8444
      %v8492 = vmul.f32 %v8318, %v8446
      %v8493 = vmul.f32 %v8320, %v8448
      %v8494 = vmul.f32 %v8322, %v8450
      %v8495 = vmul.f32 %v8324, %v8452
      %v8496 = vmul.f32 %v8326, %v8454
      %v8497 = vmul.f32 %v8328, %v8456
      %v8498 = vmul.f32 %v8330, %v8458
      %v8499 = vmul.f32 %v8332, %v8460
      %v8500 = vmul.f32 %v8334, %v8462
      %v8501 = vmul.f32 %v8336, %v8464
      %v8502 = vmul.f32 %v8338, %v8466
      %v8503 = vmul.f32 %v8340, %v8468
      %v8504 = vmul.f32 %v8342, %v8470
      %v8505 = vmul.f32 %v8344, %v8472
      %v8506 = vmul.f32 %v8346, %v8474
      %v8507 = vadd.f32 %v8081, %v8491
      %v8508 = vadd.f32 %v8082, %v8492
      %v8509 = vadd.f32 %v8083, %v8493
      %v8510 = vadd.f32 %v8084, %v8494
      %v8511 = vadd.f32 %v8085, %v8495
      %v8512 = vadd.f32 %v8086, %v8496
      %v8513 = vadd.f32 %v8087, %v8497
      %v8514 = vadd.f32 %v8088, %v8498
      %v8515 = vadd.f32 %v8089, %v8499
      %v8516 = vadd.f32 %v8090, %v8500
      %v8517 = vadd.f32 %v8091, %v8501
      %v8518 = vadd.f32 %v8092, %v8502
      %v8519 = vadd.f32 %v8093, %v8503
      %v8520 = vadd.f32 %v8094, %v8504
      %v8521 = vadd.f32 %v8095, %v8505
      %v8522 = vadd.f32 %v8096, %v8506
      %v8523 = vld [vmem:[%s11] sm:$0xf]
      %v8524 = vld [vmem:[%s11 + $0x4] sm:$0xf]
      %v8525 = vld [vmem:[%s11 + $0x8] sm:$0xf]
      %v8526 = vld [vmem:[%s11 + $0xc] sm:$0xf]
      %v8527 = vpack.c.bf16 %v8508, %v8507
      %v8528 = vpack.c.bf16 %v8510, %v8509
      %v8529 = vpack.c.bf16 %v8512, %v8511
      %v8530 = vpack.c.bf16 %v8514, %v8513
      %v8531 = vpack.c.bf16 %v8516, %v8515
      %v8532 = vpack.c.bf16 %v8518, %v8517
      %v8533 = vpack.c.bf16 %v8520, %v8519
      %v8534 = vpack.c.bf16 %v8522, %v8521
      %v8535 = vld [vmem:[%s12] sm:$0x1]
      %v8537 = vlaneseq
      %v8538 = vshrl.u32 %v8537, 7
      %v8539 = vsub.s32 0, %v8538
      %v8540 = vrot.slane %v8535, %v8539
      %v8546 = vunpack.c.l.b16 %v8523
      %v8547 = vunpack.c.l.b16 %v8524
      %v8548 = vunpack.c.l.b16 %v8525
      %v8549 = vunpack.c.l.b16 %v8526
      %v8550 = vpack.c.b16 %v8547, %v8546
      %v8551 = vpack.c.b16 %v8549, %v8548
      %v8555 = vsel %vm1389, %v8527, 0
      %v8558 = vsel %vm1389, %v8528, 0
      %v8561 = vsel %vm1389, %v8529, 0
      %v8564 = vsel %vm1389, %v8530, 0
      %v8567 = vsel %vm1389, %v8531, 0
      %v8570 = vsel %vm1389, %v8532, 0
      %v8573 = vsel %vm1389, %v8533, 0
      %v8576 = vsel %vm1389, %v8534, 0
      %8578 = vmatprep.subr.bf16.mxu0 0
      %8579 = vmatpush1.bf16.msra.mxu0 %v8550
      %8580 = vmatprep.subr.bf16.mxu0 0
      %8581 = vmatpush1.bf16.msra.mxu0 %v8551
      %8582 = vmatprep.subr.bf16.mxu0 0
      %8583 = vmatpush1.bf16.msra.mxu0 0
      %8584 = vmatprep.subr.bf16.mxu0 0
      %8585 = vmatpush1.bf16.msra.mxu0 0
      %8586 = vmatprep.subr.bf16.mxu0 0
      %8587 = vmatpush1.bf16.msra.mxu0 0
      %8588 = vmatprep.subr.bf16.mxu0 0
      %8589 = vmatpush1.bf16.msra.mxu0 0
      %8590 = vmatprep.subr.bf16.mxu0 0
      %8591 = vmatpush1.bf16.msra.mxu0 0
      %8592 = vmatprep.subr.bf16.mxu0 0
      %8593 = vmatpush1.bf16.msra.mxu0 0
      %8594 = vmatprep.subr.bf16.mxu0 0
      %8595 = vmatpush1.bf16.msra.mxu0 0
      %8596 = vmatprep.subr.bf16.mxu0 0
      %8597 = vmatpush1.bf16.msra.mxu0 0
      %8598 = vmatprep.subr.bf16.mxu0 0
      %8599 = vmatpush1.bf16.msra.mxu0 0
      %8600 = vmatprep.subr.bf16.mxu0 0
      %8601 = vmatpush1.bf16.msra.mxu0 0
      %8602 = vmatprep.subr.bf16.mxu0 0
      %8603 = vmatpush1.bf16.msra.mxu0 0
      %8604 = vmatprep.subr.bf16.mxu0 0
      %8605 = vmatpush1.bf16.msra.mxu0 0
      %8606 = vmatprep.subr.bf16.mxu0 0
      %8607 = vmatpush1.bf16.msra.mxu0 0
      %8608 = vmatprep.subr.bf16.mxu0 0
      %8609 = vmatpush1.bf16.msra.mxu0 0
      %8610 = vmatprep.mubr.bf16.mxu0 0
      %8611 = vmatmul.mubr.bf16.gmra.mrb[0].mxu0 %v8555
      %v8612 = vpop.f32.mrb[0].mxu0
      %v8613 = vadd.f32 %v8540, %v8612
      %v8614 = vpop.f32.mrb[0].mxu0
      %v8615 = vpop.f32.mrb[0].mxu0
      %v8616 = vadd.f32 %v8540, %v8615
      %v8617 = vpop.f32.mrb[0].mxu0
      %8618 = vmatprep.mubr.bf16.mxu0 0
      %8619 = vmatmul.mubr.bf16.gmra.mrb[0].mxu0 %v8558
      %v8620 = vpop.f32.mrb[0].mxu0
      %v8621 = vadd.f32 %v8540, %v8620
      %v8622 = vpop.f32.mrb[0].mxu0
      %v8623 = vpop.f32.mrb[0].mxu0
      %v8624 = vadd.f32 %v8540, %v8623
      %v8625 = vpop.f32.mrb[0].mxu0
      %8626 = vmatprep.mubr.bf16.mxu0 0
      %8627 = vmatmul.mubr.bf16.gmra.mrb[0].mxu0 %v8561
      %v8628 = vpop.f32.mrb[0].mxu0
      %v8629 = vadd.f32 %v8540, %v8628
      %v8630 = vpop.f32.mrb[0].mxu0
      %v8631 = vpop.f32.mrb[0].mxu0
      %v8632 = vadd.f32 %v8540, %v8631
      %v8633 = vpop.f32.mrb[0].mxu0
      %8634 = vmatprep.mubr.bf16.mxu0 0
      %8635 = vmatmul.mubr.bf16.gmra.mrb[0].mxu0 %v8564
      %v8636 = vpop.f32.mrb[0].mxu0
      %v8637 = vadd.f32 %v8540, %v8636
      %v8638 = vpop.f32.mrb[0].mxu0
      %v8639 = vpop.f32.mrb[0].mxu0
      %v8640 = vadd.f32 %v8540, %v8639
      %v8641 = vpop.f32.mrb[0].mxu0
      %8642 = vmatprep.mubr.bf16.mxu0 0
      %8643 = vmatmul.mubr.bf16.gmra.mrb[0].mxu0 %v8567
      %v8644 = vpop.f32.mrb[0].mxu0
      %v8645 = vadd.f32 %v8540, %v8644
      %v8646 = vpop.f32.mrb[0].mxu0
      %v8647 = vpop.f32.mrb[0].mxu0
      %v8648 = vadd.f32 %v8540, %v8647
      %v8649 = vpop.f32.mrb[0].mxu0
      %8650 = vmatprep.mubr.bf16.mxu0 0
      %8651 = vmatmul.mubr.bf16.gmra.mrb[0].mxu0 %v8570
      %v8652 = vpop.f32.mrb[0].mxu0
      %v8653 = vadd.f32 %v8540, %v8652
      %v8654 = vpop.f32.mrb[0].mxu0
      %v8655 = vpop.f32.mrb[0].mxu0
      %v8656 = vadd.f32 %v8540, %v8655
      %v8657 = vpop.f32.mrb[0].mxu0
      %8658 = vmatprep.mubr.bf16.mxu0 0
      %8659 = vmatmul.mubr.bf16.gmra.mrb[0].mxu0 %v8573
      %v8660 = vpop.f32.mrb[0].mxu0
      %v8661 = vadd.f32 %v8540, %v8660
      %v8662 = vpop.f32.mrb[0].mxu0
      %v8663 = vpop.f32.mrb[0].mxu0
      %v8664 = vadd.f32 %v8540, %v8663
      %v8665 = vpop.f32.mrb[0].mxu0
      %8666 = vmatprep.mubr.bf16.mxu0 0
      %8667 = vmatmul.mubr.bf16.gmra.mrb[0].mxu0 %v8576
      %v8668 = vpop.f32.mrb[0].mxu0
      %v8669 = vadd.f32 %v8540, %v8668
      %v8670 = vpop.f32.mrb[0].mxu0
      %v8671 = vpop.f32.mrb[0].mxu0
      %v8672 = vadd.f32 %v8540, %v8671
      %v8673 = vpop.f32.mrb[0].mxu0
      %8674 = vdwg.mxu0
      %v8675 = vmax.f32 %v8613, 0.0
      %v8676 = vmax.f32 %v8616, 0.0
      %v8677 = vmax.f32 %v8621, 0.0
      %v8678 = vmax.f32 %v8624, 0.0
      %v8679 = vmax.f32 %v8629, 0.0
      %v8680 = vmax.f32 %v8632, 0.0
      %v8681 = vmax.f32 %v8637, 0.0
      %v8682 = vmax.f32 %v8640, 0.0
      %v8683 = vmax.f32 %v8645, 0.0
      %v8684 = vmax.f32 %v8648, 0.0
      %v8685 = vmax.f32 %v8653, 0.0
      %v8686 = vmax.f32 %v8656, 0.0
      %v8687 = vmax.f32 %v8661, 0.0
      %v8688 = vmax.f32 %v8664, 0.0
      %v8689 = vmax.f32 %v8669, 0.0
      %v8690 = vmax.f32 %v8672, 0.0
      %v8691 = vld [vmem:[%s13] sm:$0xf]
      %v8692 = vld [vmem:[%s13 + $0x4] sm:$0xf]
      %v8693 = vld [vmem:[%s13 + $0x8] sm:$0xf]
      %v8694 = vld [vmem:[%s13 + $0xc] sm:$0xf]
      %v8695 = vpack.c.bf16 %v8676, %v8675
      %v8696 = vpack.c.bf16 %v8678, %v8677
      %v8697 = vpack.c.bf16 %v8680, %v8679
      %v8698 = vpack.c.bf16 %v8682, %v8681
      %v8699 = vpack.c.bf16 %v8684, %v8683
      %v8700 = vpack.c.bf16 %v8686, %v8685
      %v8701 = vpack.c.bf16 %v8688, %v8687
      %v8702 = vpack.c.bf16 %v8690, %v8689
      %v8703 = vld [vmem:[%s14] sm:$0x1]
      %v8705 = vlaneseq
      %v8706 = vshrl.u32 %v8705, 7
      %v8707 = vsub.s32 0, %v8706
      %v8708 = vrot.slane %v8703, %v8707
      %v8714 = vunpack.c.l.b16 %v8691
      %v8715 = vunpack.c.l.b16 %v8692
      %v8716 = vunpack.c.l.b16 %v8693
      %v8717 = vunpack.c.l.b16 %v8694
      %v8718 = vpack.c.b16 %v8715, %v8714
      %v8719 = vpack.c.b16 %v8717, %v8716
      %v8723 = vsel %vm1389, %v8695, 0
      %v8726 = vsel %vm1389, %v8696, 0
      %v8729 = vsel %vm1389, %v8697, 0
      %v8732 = vsel %vm1389, %v8698, 0
      %v8735 = vsel %vm1389, %v8699, 0
      %v8738 = vsel %vm1389, %v8700, 0
      %v8741 = vsel %vm1389, %v8701, 0
      %v8744 = vsel %vm1389, %v8702, 0
      %8746 = vmatprep.subr.bf16.mxu0 0
      %8747 = vmatpush1.bf16.msra.mxu0 %v8718
      %8748 = vmatprep.subr.bf16.mxu0 0
      %8749 = vmatpush1.bf16.msra.mxu0 %v8719
      %8750 = vmatprep.subr.bf16.mxu0 0
      %8751 = vmatpush1.bf16.msra.mxu0 0
      %8752 = vmatprep.subr.bf16.mxu0 0
      %8753 = vmatpush1.bf16.msra.mxu0 0
      %8754 = vmatprep.subr.bf16.mxu0 0
      %8755 = vmatpush1.bf16.msra.mxu0 0
      %8756 = vmatprep.subr.bf16.mxu0 0
      %8757 = vmatpush1.bf16.msra.mxu0 0
      %8758 = vmatprep.subr.bf16.mxu0 0
      %8759 = vmatpush1.bf16.msra.mxu0 0
      %8760 = vmatprep.subr.bf16.mxu0 0
      %8761 = vmatpush1.bf16.msra.mxu0 0
      %8762 = vmatprep.subr.bf16.mxu0 0
      %8763 = vmatpush1.bf16.msra.mxu0 0
      %8764 = vmatprep.subr.bf16.mxu0 0
      %8765 = vmatpush1.bf16.msra.mxu0 0
      %8766 = vmatprep.subr.bf16.mxu0 0
      %8767 = vmatpush1.bf16.msra.mxu0 0
      %8768 = vmatprep.subr.bf16.mxu0 0
      %8769 = vmatpush1.bf16.msra.mxu0 0
      %8770 = vmatprep.subr.bf16.mxu0 0
      %8771 = vmatpush1.bf16.msra.mxu0 0
      %8772 = vmatprep.subr.bf16.mxu0 0
      %8773 = vmatpush1.bf16.msra.mxu0 0
      %8774 = vmatprep.subr.bf16.mxu0 0
      %8775 = vmatpush1.bf16.msra.mxu0 0
      %8776 = vmatprep.subr.bf16.mxu0 0
      %8777 = vmatpush1.bf16.msra.mxu0 0
      %8778 = vmatprep.mubr.bf16.mxu0 0
      %8779 = vmatmul.mubr.bf16.gmra.mrb[0].mxu0 %v8723
      %v8780 = vpop.f32.mrb[0].mxu0
      %v8781 = vadd.f32 %v8708, %v8780
      %v8782 = vpop.f32.mrb[0].mxu0
      %v8783 = vpop.f32.mrb[0].mxu0
      %v8784 = vadd.f32 %v8708, %v8783
      %v8785 = vpop.f32.mrb[0].mxu0
      %8786 = vmatprep.mubr.bf16.mxu0 0
      %8787 = vmatmul.mubr.bf16.gmra.mrb[0].mxu0 %v8726
      %v8788 = vpop.f32.mrb[0].mxu0
      %v8789 = vadd.f32 %v8708, %v8788
      %v8790 = vpop.f32.mrb[0].mxu0
      %v8791 = vpop.f32.mrb[0].mxu0
      %v8792 = vadd.f32 %v8708, %v8791
      %v8793 = vpop.f32.mrb[0].mxu0
      %8794 = vmatprep.mubr.bf16.mxu0 0
      %8795 = vmatmul.mubr.bf16.gmra.mrb[0].mxu0 %v8729
      %v8796 = vpop.f32.mrb[0].mxu0
      %v8797 = vadd.f32 %v8708, %v8796
      %v8798 = vpop.f32.mrb[0].mxu0
      %v8799 = vpop.f32.mrb[0].mxu0
      %v8800 = vadd.f32 %v8708, %v8799
      %v8801 = vpop.f32.mrb[0].mxu0
      %8802 = vmatprep.mubr.bf16.mxu0 0
      %8803 = vmatmul.mubr.bf16.gmra.mrb[0].mxu0 %v8732
      %v8804 = vpop.f32.mrb[0].mxu0
      %v8805 = vadd.f32 %v8708, %v8804
      %v8806 = vpop.f32.mrb[0].mxu0
      %v8807 = vpop.f32.mrb[0].mxu0
      %v8808 = vadd.f32 %v8708, %v8807
      %v8809 = vpop.f32.mrb[0].mxu0
      %8810 = vmatprep.mubr.bf16.mxu0 0
      %8811 = vmatmul.mubr.bf16.gmra.mrb[0].mxu0 %v8735
      %v8812 = vpop.f32.mrb[0].mxu0
      %v8813 = vadd.f32 %v8708, %v8812
      %v8814 = vpop.f32.mrb[0].mxu0
      %v8815 = vpop.f32.mrb[0].mxu0
      %v8816 = vadd.f32 %v8708, %v8815
      %v8817 = vpop.f32.mrb[0].mxu0
      %8818 = vmatprep.mubr.bf16.mxu0 0
      %8819 = vmatmul.mubr.bf16.gmra.mrb[0].mxu0 %v8738
      %v8820 = vpop.f32.mrb[0].mxu0
      %v8821 = vadd.f32 %v8708, %v8820
      %v8822 = vpop.f32.mrb[0].mxu0
      %v8823 = vpop.f32.mrb[0].mxu0
      %v8824 = vadd.f32 %v8708, %v8823
      %v8825 = vpop.f32.mrb[0].mxu0
      %8826 = vmatprep.mubr.bf16.mxu0 0
      %8827 = vmatmul.mubr.bf16.gmra.mrb[0].mxu0 %v8741
      %v8828 = vpop.f32.mrb[0].mxu0
      %v8829 = vadd.f32 %v8708, %v8828
      %v8830 = vpop.f32.mrb[0].mxu0
      %v8831 = vpop.f32.mrb[0].mxu0
      %v8832 = vadd.f32 %v8708, %v8831
      %v8833 = vpop.f32.mrb[0].mxu0
      %8834 = vmatprep.mubr.bf16.mxu0 0
      %8835 = vmatmul.mubr.bf16.gmra.mrb[0].mxu0 %v8744
      %v8836 = vpop.f32.mrb[0].mxu0
      %v8837 = vadd.f32 %v8708, %v8836
      %v8838 = vpop.f32.mrb[0].mxu0
      %v8839 = vpop.f32.mrb[0].mxu0
      %v8840 = vadd.f32 %v8708, %v8839
      %v8841 = vpop.f32.mrb[0].mxu0
      %8842 = vdwg.mxu0
      %v8843 = vmax.f32 %v8781, 0.0
      %v8844 = vmax.f32 %v8784, 0.0
      %v8845 = vmax.f32 %v8789, 0.0
      %v8846 = vmax.f32 %v8792, 0.0
      %v8847 = vmax.f32 %v8797, 0.0
      %v8848 = vmax.f32 %v8800, 0.0
      %v8849 = vmax.f32 %v8805, 0.0
      %v8850 = vmax.f32 %v8808, 0.0
      %v8851 = vmax.f32 %v8813, 0.0
      %v8852 = vmax.f32 %v8816, 0.0
      %v8853 = vmax.f32 %v8821, 0.0
      %v8854 = vmax.f32 %v8824, 0.0
      %v8855 = vmax.f32 %v8829, 0.0
      %v8856 = vmax.f32 %v8832, 0.0
      %v8857 = vmax.f32 %v8837, 0.0
      %v8858 = vmax.f32 %v8840, 0.0
      %v8859 = vld [vmem:[%s15] sm:$0xf]
      %v8860 = vld [vmem:[%s15 + $0x4] sm:$0xf]
      %v8861 = vld [vmem:[%s15 + $0x8] sm:$0xf]
      %v8862 = vld [vmem:[%s15 + $0xc] sm:$0xf]
      %v8863 = vpack.c.bf16 %v8844, %v8843
      %v8864 = vpack.c.bf16 %v8846, %v8845
      %v8865 = vpack.c.bf16 %v8848, %v8847
      %v8866 = vpack.c.bf16 %v8850, %v8849
      %v8867 = vpack.c.bf16 %v8852, %v8851
      %v8868 = vpack.c.bf16 %v8854, %v8853
      %v8869 = vpack.c.bf16 %v8856, %v8855
      %v8870 = vpack.c.bf16 %v8858, %v8857
      %v8871 = vld [vmem:[%s16] sm:$0x1]
      %v8873 = vlaneseq
      %v8874 = vshrl.u32 %v8873, 7
      %v8875 = vsub.s32 0, %v8874
      %v8876 = vrot.slane %v8871, %v8875
      %v8882 = vunpack.c.l.b16 %v8859
      %v8883 = vunpack.c.l.b16 %v8860
      %v8884 = vunpack.c.l.b16 %v8861
      %v8885 = vunpack.c.l.b16 %v8862
      %v8886 = vpack.c.b16 %v8883, %v8882
      %v8887 = vpack.c.b16 %v8885, %v8884
      %v8891 = vsel %vm1389, %v8863, 0
      %v8894 = vsel %vm1389, %v8864, 0
      %v8897 = vsel %vm1389, %v8865, 0
      %v8900 = vsel %vm1389, %v8866, 0
      %v8903 = vsel %vm1389, %v8867, 0
      %v8906 = vsel %vm1389, %v8868, 0
      %v8909 = vsel %vm1389, %v8869, 0
      %v8912 = vsel %vm1389, %v8870, 0
      %8914 = vmatprep.subr.bf16.mxu0 0
      %8915 = vmatpush1.bf16.msra.mxu0 %v8886
      %8916 = vmatprep.subr.bf16.mxu0 0
      %8917 = vmatpush1.bf16.msra.mxu0 %v8887
      %8918 = vmatprep.subr.bf16.mxu0 0
      %8919 = vmatpush1.bf16.msra.mxu0 0
      %8920 = vmatprep.subr.bf16.mxu0 0
      %8921 = vmatpush1.bf16.msra.mxu0 0
      %8922 = vmatprep.subr.bf16.mxu0 0
      %8923 = vmatpush1.bf16.msra.mxu0 0
      %8924 = vmatprep.subr.bf16.mxu0 0
      %8925 = vmatpush1.bf16.msra.mxu0 0
      %8926 = vmatprep.subr.bf16.mxu0 0
      %8927 = vmatpush1.bf16.msra.mxu0 0
      %8928 = vmatprep.subr.bf16.mxu0 0
      %8929 = vmatpush1.bf16.msra.mxu0 0
      %8930 = vmatprep.subr.bf16.mxu0 0
      %8931 = vmatpush1.bf16.msra.mxu0 0
      %8932 = vmatprep.subr.bf16.mxu0 0
      %8933 = vmatpush1.bf16.msra.mxu0 0
      %8934 = vmatprep.subr.bf16.mxu0 0
      %8935 = vmatpush1.bf16.msra.mxu0 0
      %8936 = vmatprep.subr.bf16.mxu0 0
      %8937 = vmatpush1.bf16.msra.mxu0 0
      %8938 = vmatprep.subr.bf16.mxu0 0
      %8939 = vmatpush1.bf16.msra.mxu0 0
      %8940 = vmatprep.subr.bf16.mxu0 0
      %8941 = vmatpush1.bf16.msra.mxu0 0
      %8942 = vmatprep.subr.bf16.mxu0 0
      %8943 = vmatpush1.bf16.msra.mxu0 0
      %8944 = vmatprep.subr.bf16.mxu0 0
      %8945 = vmatpush1.bf16.msra.mxu0 0
      %8946 = vmatprep.mubr.bf16.mxu0 0
      %8947 = vmatmul.mubr.bf16.gmra.mrb[0].mxu0 %v8891
      %v8948 = vpop.f32.mrb[0].mxu0
      %v8949 = vadd.f32 %v8876, %v8948
      %v8950 = vpop.f32.mrb[0].mxu0
      %v8951 = vpop.f32.mrb[0].mxu0
      %v8952 = vadd.f32 %v8876, %v8951
      %v8953 = vpop.f32.mrb[0].mxu0
      %8954 = vmatprep.mubr.bf16.mxu0 0
      %8955 = vmatmul.mubr.bf16.gmra.mrb[0].mxu0 %v8894
      %v8956 = vpop.f32.mrb[0].mxu0
      %v8957 = vadd.f32 %v8876, %v8956
      %v8958 = vpop.f32.mrb[0].mxu0
      %v8959 = vpop.f32.mrb[0].mxu0
      %v8960 = vadd.f32 %v8876, %v8959
      %v8961 = vpop.f32.mrb[0].mxu0
      %8962 = vmatprep.mubr.bf16.mxu0 0
      %8963 = vmatmul.mubr.bf16.gmra.mrb[0].mxu0 %v8897
      %v8964 = vpop.f32.mrb[0].mxu0
      %v8965 = vadd.f32 %v8876, %v8964
      %v8966 = vpop.f32.mrb[0].mxu0
      %v8967 = vpop.f32.mrb[0].mxu0
      %v8968 = vadd.f32 %v8876, %v8967
      %v8969 = vpop.f32.mrb[0].mxu0
      %8970 = vmatprep.mubr.bf16.mxu0 0
      %8971 = vmatmul.mubr.bf16.gmra.mrb[0].mxu0 %v8900
      %v8972 = vpop.f32.mrb[0].mxu0
      %v8973 = vadd.f32 %v8876, %v8972
      %v8974 = vpop.f32.mrb[0].mxu0
      %v8975 = vpop.f32.mrb[0].mxu0
      %v8976 = vadd.f32 %v8876, %v8975
      %v8977 = vpop.f32.mrb[0].mxu0
      %8978 = vmatprep.mubr.bf16.mxu0 0
      %8979 = vmatmul.mubr.bf16.gmra.mrb[0].mxu0 %v8903
      %v8980 = vpop.f32.mrb[0].mxu0
      %v8981 = vadd.f32 %v8876, %v8980
      %v8982 = vpop.f32.mrb[0].mxu0
      %v8983 = vpop.f32.mrb[0].mxu0
      %v8984 = vadd.f32 %v8876, %v8983
      %v8985 = vpop.f32.mrb[0].mxu0
      %8986 = vmatprep.mubr.bf16.mxu0 0
      %8987 = vmatmul.mubr.bf16.gmra.mrb[0].mxu0 %v8906
      %v8988 = vpop.f32.mrb[0].mxu0
      %v8989 = vadd.f32 %v8876, %v8988
      %v8990 = vpop.f32.mrb[0].mxu0
      %v8991 = vpop.f32.mrb[0].mxu0
      %v8992 = vadd.f32 %v8876, %v8991
      %v8993 = vpop.f32.mrb[0].mxu0
      %8994 = vmatprep.mubr.bf16.mxu0 0
      %8995 = vmatmul.mubr.bf16.gmra.mrb[0].mxu0 %v8909
      %v8996 = vpop.f32.mrb[0].mxu0
      %v8997 = vadd.f32 %v8876, %v8996
      %v8998 = vpop.f32.mrb[0].mxu0
      %v8999 = vpop.f32.mrb[0].mxu0
      %v9000 = vadd.f32 %v8876, %v8999
      %v9001 = vpop.f32.mrb[0].mxu0
      %9002 = vmatprep.mubr.bf16.mxu0 0
      %9003 = vmatmul.mubr.bf16.gmra.mrb[0].mxu0 %v8912
      %v9004 = vpop.f32.mrb[0].mxu0
      %v9005 = vadd.f32 %v8876, %v9004
      %v9006 = vpop.f32.mrb[0].mxu0
      %v9007 = vpop.f32.mrb[0].mxu0
      %v9008 = vadd.f32 %v8876, %v9007
      %v9009 = vpop.f32.mrb[0].mxu0
      %9010 = vdwg.mxu0
      %v9011 = vmax.f32 %v8949, 0.0
      %v9012 = vmax.f32 %v8952, 0.0
      %v9013 = vmax.f32 %v8957, 0.0
      %v9014 = vmax.f32 %v8960, 0.0
      %v9015 = vmax.f32 %v8965, 0.0
      %v9016 = vmax.f32 %v8968, 0.0
      %v9017 = vmax.f32 %v8973, 0.0
      %v9018 = vmax.f32 %v8976, 0.0
      %v9019 = vmax.f32 %v8981, 0.0
      %v9020 = vmax.f32 %v8984, 0.0
      %v9021 = vmax.f32 %v8989, 0.0
      %v9022 = vmax.f32 %v8992, 0.0
      %v9023 = vmax.f32 %v8997, 0.0
      %v9024 = vmax.f32 %v9000, 0.0
      %v9025 = vmax.f32 %v9005, 0.0
      %v9026 = vmax.f32 %v9008, 0.0
      %v9027 = vld [vmem:[%s17] sm:$0xf]
      %v9028 = vld [vmem:[%s17 + $0x4] sm:$0xf]
      %v9029 = vld [vmem:[%s17 + $0x8] sm:$0xf]
      %v9030 = vld [vmem:[%s17 + $0xc] sm:$0xf]
      %v9031 = vpack.c.bf16 %v9012, %v9011
      %v9032 = vpack.c.bf16 %v9014, %v9013
      %v9033 = vpack.c.bf16 %v9016, %v9015
      %v9034 = vpack.c.bf16 %v9018, %v9017
      %v9035 = vpack.c.bf16 %v9020, %v9019
      %v9036 = vpack.c.bf16 %v9022, %v9021
      %v9037 = vpack.c.bf16 %v9024, %v9023
      %v9038 = vpack.c.bf16 %v9026, %v9025
      %v9039 = vld [vmem:[%s18] sm:$0x1]
      %v9041 = vlaneseq
      %v9042 = vshrl.u32 %v9041, 7
      %v9043 = vsub.s32 0, %v9042
      %v9044 = vrot.slane %v9039, %v9043
      %v9050 = vunpack.c.l.b16 %v9027
      %v9051 = vunpack.c.l.b16 %v9028
      %v9052 = vunpack.c.l.b16 %v9029
      %v9053 = vunpack.c.l.b16 %v9030
      %v9054 = vpack.c.b16 %v9051, %v9050
      %v9055 = vpack.c.b16 %v9053, %v9052
      %v9059 = vsel %vm1389, %v9031, 0
      %v9062 = vsel %vm1389, %v9032, 0
      %v9065 = vsel %vm1389, %v9033, 0
      %v9068 = vsel %vm1389, %v9034, 0
      %v9071 = vsel %vm1389, %v9035, 0
      %v9074 = vsel %vm1389, %v9036, 0
      %v9077 = vsel %vm1389, %v9037, 0
      %v9080 = vsel %vm1389, %v9038, 0
      %9082 = vmatprep.subr.bf16.mxu0 0
      %9083 = vmatpush1.bf16.msra.mxu0 %v9054
      %9084 = vmatprep.subr.bf16.mxu0 0
      %9085 = vmatpush1.bf16.msra.mxu0 %v9055
      %9086 = vmatprep.subr.bf16.mxu0 0
      %9087 = vmatpush1.bf16.msra.mxu0 0
      %9088 = vmatprep.subr.bf16.mxu0 0
      %9089 = vmatpush1.bf16.msra.mxu0 0
      %9090 = vmatprep.subr.bf16.mxu0 0
      %9091 = vmatpush1.bf16.msra.mxu0 0
      %9092 = vmatprep.subr.bf16.mxu0 0
      %9093 = vmatpush1.bf16.msra.mxu0 0
      %9094 = vmatprep.subr.bf16.mxu0 0
      %9095 = vmatpush1.bf16.msra.mxu0 0
      %9096 = vmatprep.subr.bf16.mxu0 0
      %9097 = vmatpush1.bf16.msra.mxu0 0
      %9098 = vmatprep.subr.bf16.mxu0 0
      %9099 = vmatpush1.bf16.msra.mxu0 0
      %9100 = vmatprep.subr.bf16.mxu0 0
      %9101 = vmatpush1.bf16.msra.mxu0 0
      %9102 = vmatprep.subr.bf16.mxu0 0
      %9103 = vmatpush1.bf16.msra.mxu0 0
      %9104 = vmatprep.subr.bf16.mxu0 0
      %9105 = vmatpush1.bf16.msra.mxu0 0
      %9106 = vmatprep.subr.bf16.mxu0 0
      %9107 = vmatpush1.bf16.msra.mxu0 0
      %9108 = vmatprep.subr.bf16.mxu0 0
      %9109 = vmatpush1.bf16.msra.mxu0 0
      %9110 = vmatprep.subr.bf16.mxu0 0
      %9111 = vmatpush1.bf16.msra.mxu0 0
      %9112 = vmatprep.subr.bf16.mxu0 0
      %9113 = vmatpush1.bf16.msra.mxu0 0
      %9114 = vmatprep.mubr.bf16.mxu0 0
      %9115 = vmatmul.mubr.bf16.gmra.mrb[0].mxu0 %v9059
      %v9116 = vpop.f32.mrb[0].mxu0
      %v9117 = vadd.f32 %v9044, %v9116
      %v9118 = vpop.f32.mrb[0].mxu0
      %v9119 = vpop.f32.mrb[0].mxu0
      %v9120 = vadd.f32 %v9044, %v9119
      %v9121 = vpop.f32.mrb[0].mxu0
      %9122 = vmatprep.mubr.bf16.mxu0 0
      %9123 = vmatmul.mubr.bf16.gmra.mrb[0].mxu0 %v9062
      %v9124 = vpop.f32.mrb[0].mxu0
      %v9125 = vadd.f32 %v9044, %v9124
      %v9126 = vpop.f32.mrb[0].mxu0
      %v9127 = vpop.f32.mrb[0].mxu0
      %v9128 = vadd.f32 %v9044, %v9127
      %v9129 = vpop.f32.mrb[0].mxu0
      %9130 = vmatprep.mubr.bf16.mxu0 0
      %9131 = vmatmul.mubr.bf16.gmra.mrb[0].mxu0 %v9065
      %v9132 = vpop.f32.mrb[0].mxu0
      %v9133 = vadd.f32 %v9044, %v9132
      %v9134 = vpop.f32.mrb[0].mxu0
      %v9135 = vpop.f32.mrb[0].mxu0
      %v9136 = vadd.f32 %v9044, %v9135
      %v9137 = vpop.f32.mrb[0].mxu0
      %9138 = vmatprep.mubr.bf16.mxu0 0
      %9139 = vmatmul.mubr.bf16.gmra.mrb[0].mxu0 %v9068
      %v9140 = vpop.f32.mrb[0].mxu0
      %v9141 = vadd.f32 %v9044, %v9140
      %v9142 = vpop.f32.mrb[0].mxu0
      %v9143 = vpop.f32.mrb[0].mxu0
      %v9144 = vadd.f32 %v9044, %v9143
      %v9145 = vpop.f32.mrb[0].mxu0
      %9146 = vmatprep.mubr.bf16.mxu0 0
      %9147 = vmatmul.mubr.bf16.gmra.mrb[0].mxu0 %v9071
      %v9148 = vpop.f32.mrb[0].mxu0
      %v9149 = vadd.f32 %v9044, %v9148
      %v9150 = vpop.f32.mrb[0].mxu0
      %v9151 = vpop.f32.mrb[0].mxu0
      %v9152 = vadd.f32 %v9044, %v9151
      %v9153 = vpop.f32.mrb[0].mxu0
      %9154 = vmatprep.mubr.bf16.mxu0 0
      %9155 = vmatmul.mubr.bf16.gmra.mrb[0].mxu0 %v9074
      %v9156 = vpop.f32.mrb[0].mxu0
      %v9157 = vadd.f32 %v9044, %v9156
      %v9158 = vpop.f32.mrb[0].mxu0
      %v9159 = vpop.f32.mrb[0].mxu0
      %v9160 = vadd.f32 %v9044, %v9159
      %v9161 = vpop.f32.mrb[0].mxu0
      %9162 = vmatprep.mubr.bf16.mxu0 0
      %9163 = vmatmul.mubr.bf16.gmra.mrb[0].mxu0 %v9077
      %v9164 = vpop.f32.mrb[0].mxu0
      %v9165 = vadd.f32 %v9044, %v9164
      %v9166 = vpop.f32.mrb[0].mxu0
      %v9167 = vpop.f32.mrb[0].mxu0
      %v9168 = vadd.f32 %v9044, %v9167
      %v9169 = vpop.f32.mrb[0].mxu0
      %9170 = vmatprep.mubr.bf16.mxu0 0
      %9171 = vmatmul.mubr.bf16.gmra.mrb[0].mxu0 %v9080
      %v9172 = vpop.f32.mrb[0].mxu0
      %v9173 = vadd.f32 %v9044, %v9172
      %v9174 = vpop.f32.mrb[0].mxu0
      %v9175 = vpop.f32.mrb[0].mxu0
      %v9176 = vadd.f32 %v9044, %v9175
      %v9177 = vpop.f32.mrb[0].mxu0
      %9178 = vdwg.mxu0
      %v9179 = vmax.f32 %v9117, 0.0
      %v9180 = vmax.f32 %v9120, 0.0
      %v9181 = vmax.f32 %v9125, 0.0
      %v9182 = vmax.f32 %v9128, 0.0
      %v9183 = vmax.f32 %v9133, 0.0
      %v9184 = vmax.f32 %v9136, 0.0
      %v9185 = vmax.f32 %v9141, 0.0
      %v9186 = vmax.f32 %v9144, 0.0
      %v9187 = vmax.f32 %v9149, 0.0
      %v9188 = vmax.f32 %v9152, 0.0
      %v9189 = vmax.f32 %v9157, 0.0
      %v9190 = vmax.f32 %v9160, 0.0
      %v9191 = vmax.f32 %v9165, 0.0
      %v9192 = vmax.f32 %v9168, 0.0
      %v9193 = vmax.f32 %v9173, 0.0
      %v9194 = vmax.f32 %v9176, 0.0
      %v9195 = vld [vmem:[%s19] sm:$0xf]
      %v9196 = vld [vmem:[%s19 + $0x4] sm:$0xf]
      %v9197 = vld [vmem:[%s19 + $0x8] sm:$0xf]
      %v9198 = vld [vmem:[%s19 + $0xc] sm:$0xf]
      %v9199 = vld [vmem:[%s19 + $0x10] sm:$0xf]
      %v9200 = vld [vmem:[%s19 + $0x14] sm:$0xf]
      %v9201 = vld [vmem:[%s19 + $0x18] sm:$0xf]
      %v9202 = vld [vmem:[%s19 + $0x1c] sm:$0xf]
      %v9203 = vpack.c.bf16 %v9180, %v9179
      %v9204 = vpack.c.bf16 %v9182, %v9181
      %v9205 = vpack.c.bf16 %v9184, %v9183
      %v9206 = vpack.c.bf16 %v9186, %v9185
      %v9207 = vpack.c.bf16 %v9188, %v9187
      %v9208 = vpack.c.bf16 %v9190, %v9189
      %v9209 = vpack.c.bf16 %v9192, %v9191
      %v9210 = vpack.c.bf16 %v9194, %v9193
      %v9211 = vld [vmem:[%s20] sm:$0x1]
      %v9213 = vlaneseq
      %v9214 = vshrl.u32 %v9213, 7
      %v9215 = vsub.s32 0, %v9214
      %v9216 = vrot.slane %v9211, %v9215
      %v9226 = vunpack.c.l.b16 %v9195
      %v9227 = vunpack.c.l.b16 %v9196
      %v9228 = vunpack.c.l.b16 %v9197
      %v9229 = vunpack.c.l.b16 %v9198
      %v9230 = vunpack.c.l.b16 %v9199
      %v9231 = vunpack.c.l.b16 %v9200
      %v9232 = vunpack.c.l.b16 %v9201
      %v9233 = vunpack.c.l.b16 %v9202
      %v9234 = vpack.c.b16 %v9227, %v9226
      %v9235 = vpack.c.b16 %v9229, %v9228
      %v9236 = vpack.c.b16 %v9231, %v9230
      %v9237 = vpack.c.b16 %v9233, %v9232
      %v9243 = vsel %vm1655, %v9203, 0
      %v9246 = vsel %vm1655, %v9204, 0
      %v9249 = vsel %vm1655, %v9205, 0
      %v9252 = vsel %vm1655, %v9206, 0
      %v9255 = vsel %vm1655, %v9207, 0
      %v9258 = vsel %vm1655, %v9208, 0
      %v9261 = vsel %vm1655, %v9209, 0
      %v9264 = vsel %vm1655, %v9210, 0
      %9266 = vmatprep.subr.bf16.mxu0 0
      %9267 = vmatpush1.bf16.msra.mxu0 %v9234
      %9268 = vmatprep.subr.bf16.mxu0 0
      %9269 = vmatpush1.bf16.msra.mxu0 %v9235
      %9270 = vmatprep.subr.bf16.mxu0 0
      %9271 = vmatpush1.bf16.msra.mxu0 %v9236
      %9272 = vmatprep.subr.bf16.mxu0 0
      %9273 = vmatpush1.bf16.msra.mxu0 %v9237
      %9274 = vmatprep.subr.bf16.mxu0 0
      %9275 = vmatpush1.bf16.msra.mxu0 0
      %9276 = vmatprep.subr.bf16.mxu0 0
      %9277 = vmatpush1.bf16.msra.mxu0 0
      %9278 = vmatprep.subr.bf16.mxu0 0
      %9279 = vmatpush1.bf16.msra.mxu0 0
      %9280 = vmatprep.subr.bf16.mxu0 0
      %9281 = vmatpush1.bf16.msra.mxu0 0
      %9282 = vmatprep.subr.bf16.mxu0 0
      %9283 = vmatpush1.bf16.msra.mxu0 0
      %9284 = vmatprep.subr.bf16.mxu0 0
      %9285 = vmatpush1.bf16.msra.mxu0 0
      %9286 = vmatprep.subr.bf16.mxu0 0
      %9287 = vmatpush1.bf16.msra.mxu0 0
      %9288 = vmatprep.subr.bf16.mxu0 0
      %9289 = vmatpush1.bf16.msra.mxu0 0
      %9290 = vmatprep.subr.bf16.mxu0 0
      %9291 = vmatpush1.bf16.msra.mxu0 0
      %9292 = vmatprep.subr.bf16.mxu0 0
      %9293 = vmatpush1.bf16.msra.mxu0 0
      %9294 = vmatprep.subr.bf16.mxu0 0
      %9295 = vmatpush1.bf16.msra.mxu0 0
      %9296 = vmatprep.subr.bf16.mxu0 0
      %9297 = vmatpush1.bf16.msra.mxu0 0
      %9298 = vmatprep.mubr.bf16.mxu0 0
      %9299 = vmatmul.mubr.bf16.gmra.mrb[0].mxu0 %v9243
      %v9300 = vpop.f32.mrb[0].mxu0
      %v9301 = vadd.f32 %v9216, %v9300
      %v9302 = vpop.f32.mrb[0].mxu0
      %v9303 = vpop.f32.mrb[0].mxu0
      %v9304 = vadd.f32 %v9216, %v9303
      %v9305 = vpop.f32.mrb[0].mxu0
      %9306 = vmatprep.mubr.bf16.mxu0 0
      %9307 = vmatmul.mubr.bf16.gmra.mrb[0].mxu0 %v9246
      %v9308 = vpop.f32.mrb[0].mxu0
      %v9309 = vadd.f32 %v9216, %v9308
      %v9310 = vpop.f32.mrb[0].mxu0
      %v9311 = vpop.f32.mrb[0].mxu0
      %v9312 = vadd.f32 %v9216, %v9311
      %v9313 = vpop.f32.mrb[0].mxu0
      %9314 = vmatprep.mubr.bf16.mxu0 0
      %9315 = vmatmul.mubr.bf16.gmra.mrb[0].mxu0 %v9249
      %v9316 = vpop.f32.mrb[0].mxu0
      %v9317 = vadd.f32 %v9216, %v9316
      %v9318 = vpop.f32.mrb[0].mxu0
      %v9319 = vpop.f32.mrb[0].mxu0
      %v9320 = vadd.f32 %v9216, %v9319
      %v9321 = vpop.f32.mrb[0].mxu0
      %9322 = vmatprep.mubr.bf16.mxu0 0
      %9323 = vmatmul.mubr.bf16.gmra.mrb[0].mxu0 %v9252
      %v9324 = vpop.f32.mrb[0].mxu0
      %v9325 = vadd.f32 %v9216, %v9324
      %v9326 = vpop.f32.mrb[0].mxu0
      %v9327 = vpop.f32.mrb[0].mxu0
      %v9328 = vadd.f32 %v9216, %v9327
      %v9329 = vpop.f32.mrb[0].mxu0
      %9330 = vmatprep.mubr.bf16.mxu0 0
      %9331 = vmatmul.mubr.bf16.gmra.mrb[0].mxu0 %v9255
      %v9332 = vpop.f32.mrb[0].mxu0
      %v9333 = vadd.f32 %v9216, %v9332
      %v9334 = vpop.f32.mrb[0].mxu0
      %v9335 = vpop.f32.mrb[0].mxu0
      %v9336 = vadd.f32 %v9216, %v9335
      %v9337 = vpop.f32.mrb[0].mxu0
      %9338 = vmatprep.mubr.bf16.mxu0 0
      %9339 = vmatmul.mubr.bf16.gmra.mrb[0].mxu0 %v9258
      %v9340 = vpop.f32.mrb[0].mxu0
      %v9341 = vadd.f32 %v9216, %v9340
      %v9342 = vpop.f32.mrb[0].mxu0
      %v9343 = vpop.f32.mrb[0].mxu0
      %v9344 = vadd.f32 %v9216, %v9343
      %v9345 = vpop.f32.mrb[0].mxu0
      %9346 = vmatprep.mubr.bf16.mxu0 0
      %9347 = vmatmul.mubr.bf16.gmra.mrb[0].mxu0 %v9261
      %v9348 = vpop.f32.mrb[0].mxu0
      %v9349 = vadd.f32 %v9216, %v9348
      %v9350 = vpop.f32.mrb[0].mxu0
      %v9351 = vpop.f32.mrb[0].mxu0
      %v9352 = vadd.f32 %v9216, %v9351
      %v9353 = vpop.f32.mrb[0].mxu0
      %9354 = vmatprep.mubr.bf16.mxu0 0
      %9355 = vmatmul.mubr.bf16.gmra.mrb[0].mxu0 %v9264
      %v9356 = vpop.f32.mrb[0].mxu0
      %v9357 = vadd.f32 %v9216, %v9356
      %v9358 = vpop.f32.mrb[0].mxu0
      %v9359 = vpop.f32.mrb[0].mxu0
      %v9360 = vadd.f32 %v9216, %v9359
      %v9361 = vpop.f32.mrb[0].mxu0
      %9362 = vdwg.mxu0
      %9363 = vst [vmem:[%s658] sm:$0xff] %v9301
      %9364 = vst [vmem:[%s658 + $0x8] sm:$0xff] %v9304
      %9365 = vst [vmem:[%s658 + $0x10] sm:$0xff] %v9309
      %9366 = vst [vmem:[%s658 + $0x18] sm:$0xff] %v9312
      %9367 = vst [vmem:[%s658 + $0x20] sm:$0xff] %v9317
      %9368 = vst [vmem:[%s658 + $0x28] sm:$0xff] %v9320
      %9369 = vst [vmem:[%s658 + $0x30] sm:$0xff] %v9325
      %9370 = vst [vmem:[%s658 + $0x38] sm:$0xff] %v9328
      %9371 = vst [vmem:[%s658 + $0x40] sm:$0xff] %v9333
      %9372 = vst [vmem:[%s658 + $0x48] sm:$0xff] %v9336
      %9373 = vst [vmem:[%s658 + $0x50] sm:$0xff] %v9341
      %9374 = vst [vmem:[%s658 + $0x58] sm:$0xff] %v9344
      %9375 = vst [vmem:[%s658 + $0x60] sm:$0xff] %v9349
      %9376 = vst [vmem:[%s658 + $0x68] sm:$0xff] %v9352
      %9377 = vst [vmem:[%s658 + $0x70] sm:$0xff] %v9357
      %9378 = vst [vmem:[%s658 + $0x78] sm:$0xff] %v9360
      %s9379 = smul.u32 16, %s32
      %p9380 = scmp.lt.s32.totalorder %s9379, 31
      %s9381 = scalar_select %p9380, %s9379, 31
      %s9382 = smul.addr %s9381, 8
      %s9383 = scalar_lea.vmem %s21, %s9382
      // Predicated region
      $region105: #{seqmodel_forward.1} parent=103 // pred_check
        %p9384 = pneg %p496
      $region106: #{seqmodel_forward.1} parent=103 // pred_check_branch
        %9386 = sbr.rel (%p9384) target = $region108
      $region107: #{seqmodel_forward.1} parent=103 // pred_region
        %s9387 = smul.u32 16, %s32
      $region108: #{seqmodel_forward.1} parent=103 // pred_fallthru
        _
    $region104: #{seqmodel_forward.1} parent=5 // pred_fallthru
      _
    %p9388 = scmp.le.s32.totalorder 2, %s27
    // Predicated region
    $region109: #{seqmodel_forward.1} parent=5 // pred_check
      %p9389 = pneg %p9388
    $region110: #{seqmodel_forward.1} parent=5 // pred_check_branch
      %9391 = sbr.rel (%p9389) target = $region112
    $region111: #{seqmodel_forward.1} parent=5 // pred_region
      %s9392 = ssub.s32 %s27, 2
      // Predicated region
      $region113: #{seqmodel_forward.1} parent=111 // pred_check
        %p9393 = pneg %p502
      $region114: #{seqmodel_forward.1} parent=111 // pred_check_branch
        %9395 = sbr.rel (%p9393) target = $region116
      $region115: #{seqmodel_forward.1} parent=111 // pred_region
        %s9396 = smul.u32 16, %s33
        %p9397 = scmp.lt.s32.totalorder %s9396, 31
        %s9398 = scalar_select %p9397, %s9396, 31
        %s9399 = smul.addr %s9398, 8
        %s9400 = scalar_lea.vmem %s21, %s9399
      $region116: #{seqmodel_forward.1} parent=111 // pred_fallthru
        _
    $region112: #{seqmodel_forward.1} parent=5 // pred_fallthru
      _
  $region6: #{seqmodel_forward.1} parent=0 // loop_footer
    %s31 = sadd.s32 1, %s27
  $region7: #{seqmodel_forward.1} parent=0 // loop_footer_branch
    %26 = sbr.rel target = $region3
  $region8: #{seqmodel_forward.1} parent=0 // loop_exit
    _

</llo_original>
